<compile_context>
chip_gen: v7x
topology: tpu7x:2x2x1
jax: 0.10.0
libtpu: 0.0.40
codegen_flags: <defaults>
</compile_context>

<pallas_src>
import functools

import numpy as np

import jax
import jax.numpy as jnp
from jax import lax
from jax.experimental import pallas as pl
from jax.experimental.pallas import tpu as pltpu


_SQRT_2_OVER_PI = 0.7978845608028654


def _gelu_tanh(v):
    """tanh-approximate GELU (shared by kernel and reference)."""
    return 0.5 * v * (1.0 + jnp.tanh(_SQRT_2_OVER_PI * (v + 0.044715 * v * v * v)))


def _linear_interp_matrix(n_in, n_out):
    """1-D linear interpolation matrix, PyTorch Upsample(align_corners=False)."""
    a = np.zeros((n_out, n_in), np.float32)
    scale = n_in / n_out
    for o in range(n_out):
        src = max((o + 0.5) * scale - 0.5, 0.0)
        i0 = min(int(np.floor(src)), n_in - 1)
        i1 = min(i0 + 1, n_in - 1)
        lam = src - i0
        a[o, i0] += 1.0 - lam
        a[o, i1] += lam
    return a


# -----------------------------------------------------------------------------
# Kernel 1: fused bilinear-upsample + 3x3 conv (+ bias), channels-last layout.
# -----------------------------------------------------------------------------
def _upsample_conv_kernel(s_ref, x_ref, w_ref, b_ref, o_ref, acc_ref):
    # s_ref : (9, TH*Wo, H*W)   spatial operators (upsample + zero-pad + tap shift)
    # x_ref : (H*W, C_in)       one sample, flattened spatial, channels last
    # w_ref : (9, C_in, C_out)  conv taps
    # b_ref : (1, C_out)        conv bias
    # o_ref : (TH*Wo, C_out)
    # acc_ref: f32 VMEM scratch (TH*Wo, C_out)
    x = x_ref[...]
    acc_ref[...] = jnp.zeros_like(acc_ref)
    for k in range(9):  # statically unrolled tap loop -> 9 small MXU matmul pairs
        up_k = jnp.dot(s_ref[k], x, preferred_element_type=jnp.float32)
        acc_ref[...] += jnp.dot(up_k, w_ref[k], preferred_element_type=jnp.float32)
    o_ref[...] = (acc_ref[...] + b_ref[...]).astype(o_ref.dtype)


# -----------------------------------------------------------------------------
# Kernel 2: fused GroupNorm(num_groups) + GELU, one sample per grid step.
# -----------------------------------------------------------------------------
def _groupnorm_gelu_kernel(y_ref, a_ref, g_ref, b_ref, o_ref, *, eps):
    # y_ref : (Ho*Wo, C_out)
    # a_ref : (C_out, C_out) group-averaging matrix: 1/(cpg*Ho*Wo) within a group
    # g_ref, b_ref : (1, C_out) GroupNorm affine params
    y = y_ref[...].astype(jnp.float32)
    s = jnp.sum(y, axis=0, keepdims=True)          # per-channel sum        (1, C)
    ss = jnp.sum(y * y, axis=0, keepdims=True)     # per-channel sum of sq  (1, C)
    mean = jnp.dot(s, a_ref[...], preferred_element_type=jnp.float32)      # group mean, per channel
    mean_sq = jnp.dot(ss, a_ref[...], preferred_element_type=jnp.float32)  # group E[x^2], per channel
    var = mean_sq - mean * mean
    inv = lax.rsqrt(var + eps)
    z = (y - mean) * inv * g_ref[...] + b_ref[...]
    o_ref[...] = _gelu_tanh(z).astype(o_ref.dtype)


def upsample_block_forward(x, conv_w, conv_b, gn_gamma, gn_beta, *,
                           scale_factor=2, num_groups=32, eps=1e-5, row_tile=8):
    """UpsampleBlock forward (NCHW in, NCHW out)."""
    B, C_in, H, W = x.shape
    C_out = conv_w.shape[0]
    Ho, Wo = H * scale_factor, W * scale_factor
    P = Ho * Wo
    assert C_out % num_groups == 0, "GroupNorm requires C_out % num_groups == 0"

    # ---- host-side constant operators ---------------------------------------
    ah = _linear_interp_matrix(H, Ho)
    aw = _linear_interp_matrix(W, Wo)
    ah_pad = np.zeros((Ho + 2, H), np.float32); ah_pad[1:-1] = ah
    aw_pad = np.zeros((Wo + 2, W), np.float32); aw_pad[1:-1] = aw
    # S[k] folds upsample + zero padding + tap (dy, dx) shift into one matrix.
    s_ops = np.stack([np.kron(ah_pad[dy:dy + Ho, :], aw_pad[dx:dx + Wo, :])
                      for dy in range(3) for dx in range(3)]).astype(np.float32)
    w_taps = jnp.transpose(jnp.asarray(conv_w), (2, 3, 1, 0)).reshape(9, C_in, C_out)
    bias2 = jnp.asarray(conv_b).reshape(1, C_out)

    cpg = C_out // num_groups
    grp = np.arange(C_out) // cpg
    group_avg = (grp[:, None] == grp[None, :]).astype(np.float32) / float(cpg * P)
    gamma2 = jnp.asarray(gn_gamma).reshape(1, C_out)
    beta2 = jnp.asarray(gn_beta).reshape(1, C_out)

    # channels-last, flattened-spatial activations (lane axis = channels)
    x_flat = jnp.transpose(x, (0, 2, 3, 1)).reshape(B, H * W, C_in)

    # ---- kernel 1: upsample + conv, row-tiled over upsampled height ---------
    th = row_tile if (Ho % row_tile == 0 and (row_tile * Wo) % 8 == 0) else Ho
    rows = th * Wo
    n_tiles = Ho // th

    conv_out = pl.pallas_call(
        _upsample_conv_kernel,
        out_shape=jax.ShapeDtypeStruct((B, P, C_out), x.dtype),
        grid_spec=pltpu.PrefetchScalarGridSpec(
            num_scalar_prefetch=0,
            grid=(B, n_tiles),
            in_specs=[
                pl.BlockSpec((9, rows, H * W), lambda b, i: (0, i, 0)),    # S tile (pipelined)
                pl.BlockSpec((None, H * W, C_in), lambda b, i: (b, 0, 0)),  # x, per batch
                pl.BlockSpec((9, C_in, C_out), lambda b, i: (0, 0, 0)),     # conv taps (resident)
                pl.BlockSpec((1, C_out), lambda b, i: (0, 0)),              # bias (resident)
            ],
            out_specs=pl.BlockSpec((None, rows, C_out), lambda b, i: (b, i, 0)),
            scratch_shapes=[pltpu.VMEM((rows, C_out), jnp.float32)],
        ),
        compiler_params=pltpu.CompilerParams(
            dimension_semantics=("parallel", "parallel"),
            vmem_limit_bytes=32 * 1024 * 1024,
        ),
    )(jnp.asarray(s_ops), x_flat, w_taps, bias2)

    # ---- kernel 2: GroupNorm + GELU, one sample per grid step ---------------
    y = pl.pallas_call(
        functools.partial(_groupnorm_gelu_kernel, eps=eps),
        out_shape=jax.ShapeDtypeStruct((B, P, C_out), x.dtype),
        grid_spec=pltpu.PrefetchScalarGridSpec(
            num_scalar_prefetch=0,
            grid=(B,),
            in_specs=[
                pl.BlockSpec((None, P, C_out), lambda b: (b, 0, 0)),
                pl.BlockSpec((C_out, C_out), lambda b: (0, 0)),
                pl.BlockSpec((1, C_out), lambda b: (0, 0)),
                pl.BlockSpec((1, C_out), lambda b: (0, 0)),
            ],
            out_specs=pl.BlockSpec((None, P, C_out), lambda b: (b, 0, 0)),
        ),
        compiler_params=pltpu.CompilerParams(
            dimension_semantics=("parallel",),
            vmem_limit_bytes=32 * 1024 * 1024,
        ),
    )(conv_out, jnp.asarray(group_avg), gamma2, beta2)

    return jnp.transpose(y.reshape(B, Ho, Wo, C_out), (0, 3, 1, 2))


# -----------------------------------------------------------------------------
# Pure-JAX reference (independent path: jax.image.resize + lax.conv + manual GN)
# -----------------------------------------------------------------------------
def upsample_block_reference(x, conv_w, conv_b, gn_gamma, gn_beta,
                             scale_factor=2, num_groups=32, eps=1e-5):
    B, C_in, H, W = x.shape
    C_out = conv_w.shape[0]
    Ho, Wo = H * scale_factor, W * scale_factor
    up = jax.image.resize(x, (B, C_in, Ho, Wo), method="bilinear")
    y = lax.conv_general_dilated(
        up, conv_w, window_strides=(1, 1), padding=((1, 1), (1, 1)),
        dimension_numbers=("NCHW", "OIHW", "NCHW"),
        precision=lax.Precision.HIGHEST)
    y = y + conv_b[None, :, None, None]
    cpg = C_out // num_groups
    yg = y.reshape(B, num_groups, cpg, Ho, Wo)
    mean = yg.mean(axis=(2, 3, 4), keepdims=True)
    var = yg.var(axis=(2, 3, 4), keepdims=True)
    yn = ((yg - mean) / jnp.sqrt(var + eps)).reshape(B, C_out, Ho, Wo)
    yn = yn * gn_gamma[None, :, None, None] + gn_beta[None, :, None, None]
    return _gelu_tanh(yn)


if __name__ == "__main__":
    B, C_in, H, W = 2, 4, 16, 16
    C_out, scale, groups = 128, 2, 32   # C_out=128 keeps the lane axis dense; GroupNorm(32, 128)

    key = jax.random.PRNGKey(0)
    kx, kw, kb, kg, kbt = jax.random.split(key, 5)
    x = jax.random.normal(kx, (B, C_in, H, W), jnp.float32)
    conv_w = jax.random.normal(kw, (C_out, C_in, 3, 3), jnp.float32) / np.sqrt(9.0 * C_in)
    conv_b = 0.1 * jax.random.normal(kb, (C_out,), jnp.float32)
    gn_gamma = 1.0 + 0.1 * jax.random.normal(kg, (C_out,), jnp.float32)
    gn_beta = 0.1 * jax.random.normal(kbt, (C_out,), jnp.float32)

    out = upsample_block_forward(x, conv_w, conv_b, gn_gamma, gn_beta,
                                 scale_factor=scale, num_groups=groups)
    out = jax.block_until_ready(out)

    ref = upsample_block_reference(x, conv_w, conv_b, gn_gamma, gn_beta,
                                   scale_factor=scale, num_groups=groups)
    assert out.shape == (B, C_out, H * scale, W * scale), out.shape
    max_err = jnp.max(jnp.abs(out - ref))
    # Tolerance leaves headroom for MXU pass rounding inside the kernel vs. the
    # HIGHEST-precision XLA reference; structural bugs show up as O(0.1+) errors.
    assert jnp.allclose(out, ref, atol=2e-2, rtol=2e-2), f"max abs err = {max_err}"
    print("KERNEL_OK")
</pallas_src>

<mosaic_0001>
module attributes {stable_mosaic.version = 11 : i64} {
  func.func @_upsample_conv_kernel(%arg0: i32, %arg1: i32, %arg2: memref<9x256x256xf32, #tpu.memory_space<vmem>>, %arg3: memref<1x256x4xf32, #tpu.memory_space<vmem>>, %arg4: memref<9x4x128xf32, #tpu.memory_space<vmem>>, %arg5: memref<1x128xf32, #tpu.memory_space<vmem>>, %arg6: memref<1x256x128xf32, #tpu.memory_space<vmem>>, %arg7: memref<256x128xf32, #tpu.memory_space<vmem>>) attributes {dimension_semantics = [#tpu.dimension_semantics<parallel>, #tpu.dimension_semantics<parallel>], iteration_bounds = array<i64: 2, 4>, scalar_prefetch = 0 : i64, scratch_operands = 1 : i64, tpu.core_type = #tpu.core_type<tc>, window_params = [{transform_indices = @transform_0, window_bounds = array<i64: 9, 256, 256>}, {transform_indices = @transform_1, window_bounds = array<i64: 1, 256, 4>}, {pipeline_mode = #tpu.pipeline_mode<synchronous>, transform_indices = @transform_2, window_bounds = array<i64: 9, 4, 128>}, {pipeline_mode = #tpu.pipeline_mode<synchronous>, transform_indices = @transform_3, window_bounds = array<i64: 1, 128>}, {transform_indices = @transform_4, window_bounds = array<i64: 1, 256, 128>}]} {
    %c0 = arith.constant 0 : index
    %c0_0 = arith.constant 0 : index
    %c0_1 = arith.constant 0 : index
    %0 = vector.load %arg3[%c0, %c0_0, %c0_1] : memref<1x256x4xf32, #tpu.memory_space<vmem>>, vector<1x256x4xf32>
    %1 = vector.shape_cast %0 : vector<1x256x4xf32> to vector<256x4xf32>
    %cst = arith.constant 0.000000e+00 : f32
    %2 = vector.broadcast %cst : f32 to vector<256x128xf32>
    %c0_2 = arith.constant 0 : index
    %c0_3 = arith.constant 0 : index
    %3 = vector.load %arg7[%c0_2, %c0_3] : memref<256x128xf32, #tpu.memory_space<vmem>>, vector<256x128xf32>
    tpu.vector_store %arg7[%c0_2, %c0_3], %2 {strides = array<i32>} : memref<256x128xf32, #tpu.memory_space<vmem>>, vector<256x128xf32>,
    %c0_4 = arith.constant 0 : index
    %c0_5 = arith.constant 0 : index
    %c0_6 = arith.constant 0 : index
    %4 = vector.load %arg2[%c0_4, %c0_5, %c0_6] : memref<9x256x256xf32, #tpu.memory_space<vmem>>, vector<1x256x256xf32>
    %5 = vector.shape_cast %4 : vector<1x256x256xf32> to vector<256x256xf32>
    %cst_7 = arith.constant dense<0.000000e+00> : vector<256x4xf32>
    %6 = tpu.matmul %5, %1, %cst_7 {dimension_numbers = #tpu.dot_dimension_numbers<[1], [0], [0], [1], [0, 0, 1, 1], [], []>} : vector<256x256xf32>, vector<256x4xf32>, vector<256x4xf32> -> vector<256x4xf32>
    %c0_8 = arith.constant 0 : index
    %c0_9 = arith.constant 0 : index
    %7 = vector.load %arg7[%c0_8, %c0_9] : memref<256x128xf32, #tpu.memory_space<vmem>>, vector<256x128xf32>
    %c0_10 = arith.constant 0 : index
    %c0_11 = arith.constant 0 : index
    %c0_12 = arith.constant 0 : index
    %8 = vector.load %arg4[%c0_10, %c0_11, %c0_12] : memref<9x4x128xf32, #tpu.memory_space<vmem>>, vector<1x4x128xf32>
    %9 = vector.shape_cast %8 : vector<1x4x128xf32> to vector<4x128xf32>
    %cst_13 = arith.constant dense<0.000000e+00> : vector<256x128xf32>
    %10 = tpu.matmul %6, %9, %cst_13 {dimension_numbers = #tpu.dot_dimension_numbers<[1], [0], [0], [1], [0, 0, 1, 1], [], []>} : vector<256x4xf32>, vector<4x128xf32>, vector<256x128xf32> -> vector<256x128xf32>
    %11 = arith.addf %7, %10 : vector<256x128xf32>
    %c0_14 = arith.constant 0 : index
    %c0_15 = arith.constant 0 : index
    %12 = vector.load %arg7[%c0_14, %c0_15] : memref<256x128xf32, #tpu.memory_space<vmem>>, vector<256x128xf32>
    tpu.vector_store %arg7[%c0_14, %c0_15], %11 {strides = array<i32>} : memref<256x128xf32, #tpu.memory_space<vmem>>, vector<256x128xf32>,
    %c1 = arith.constant 1 : index
    %c0_16 = arith.constant 0 : index
    %c0_17 = arith.constant 0 : index
    %13 = vector.load %arg2[%c1, %c0_16, %c0_17] : memref<9x256x256xf32, #tpu.memory_space<vmem>>, vector<1x256x256xf32>
    %14 = vector.shape_cast %13 : vector<1x256x256xf32> to vector<256x256xf32>
    %cst_18 = arith.constant dense<0.000000e+00> : vector<256x4xf32>
    %15 = tpu.matmul %14, %1, %cst_18 {dimension_numbers = #tpu.dot_dimension_numbers<[1], [0], [0], [1], [0, 0, 1, 1], [], []>} : vector<256x256xf32>, vector<256x4xf32>, vector<256x4xf32> -> vector<256x4xf32>
    %c0_19 = arith.constant 0 : index
    %c0_20 = arith.constant 0 : index
    %16 = vector.load %arg7[%c0_19, %c0_20] : memref<256x128xf32, #tpu.memory_space<vmem>>, vector<256x128xf32>
    %c1_21 = arith.constant 1 : index
    %c0_22 = arith.constant 0 : index
    %c0_23 = arith.constant 0 : index
    %17 = vector.load %arg4[%c1_21, %c0_22, %c0_23] : memref<9x4x128xf32, #tpu.memory_space<vmem>>, vector<1x4x128xf32>
    %18 = vector.shape_cast %17 : vector<1x4x128xf32> to vector<4x128xf32>
    %cst_24 = arith.constant dense<0.000000e+00> : vector<256x128xf32>
    %19 = tpu.matmul %15, %18, %cst_24 {dimension_numbers = #tpu.dot_dimension_numbers<[1], [0], [0], [1], [0, 0, 1, 1], [], []>} : vector<256x4xf32>, vector<4x128xf32>, vector<256x128xf32> -> vector<256x128xf32>
    %20 = arith.addf %16, %19 : vector<256x128xf32>
    %c0_25 = arith.constant 0 : index
    %c0_26 = arith.constant 0 : index
    %21 = vector.load %arg7[%c0_25, %c0_26] : memref<256x128xf32, #tpu.memory_space<vmem>>, vector<256x128xf32>
    tpu.vector_store %arg7[%c0_25, %c0_26], %20 {strides = array<i32>} : memref<256x128xf32, #tpu.memory_space<vmem>>, vector<256x128xf32>,
    %c2 = arith.constant 2 : index
    %c0_27 = arith.constant 0 : index
    %c0_28 = arith.constant 0 : index
    %22 = vector.load %arg2[%c2, %c0_27, %c0_28] : memref<9x256x256xf32, #tpu.memory_space<vmem>>, vector<1x256x256xf32>
    %23 = vector.shape_cast %22 : vector<1x256x256xf32> to vector<256x256xf32>
    %cst_29 = arith.constant dense<0.000000e+00> : vector<256x4xf32>
    %24 = tpu.matmul %23, %1, %cst_29 {dimension_numbers = #tpu.dot_dimension_numbers<[1], [0], [0], [1], [0, 0, 1, 1], [], []>} : vector<256x256xf32>, vector<256x4xf32>, vector<256x4xf32> -> vector<256x4xf32>
    %c0_30 = arith.constant 0 : index
    %c0_31 = arith.constant 0 : index
    %25 = vector.load %arg7[%c0_30, %c0_31] : memref<256x128xf32, #tpu.memory_space<vmem>>, vector<256x128xf32>
    %c2_32 = arith.constant 2 : index
    %c0_33 = arith.constant 0 : index
    %c0_34 = arith.constant 0 : index
    %26 = vector.load %arg4[%c2_32, %c0_33, %c0_34] : memref<9x4x128xf32, #tpu.memory_space<vmem>>, vector<1x4x128xf32>
    %27 = vector.shape_cast %26 : vector<1x4x128xf32> to vector<4x128xf32>
    %cst_35 = arith.constant dense<0.000000e+00> : vector<256x128xf32>
    %28 = tpu.matmul %24, %27, %cst_35 {dimension_numbers = #tpu.dot_dimension_numbers<[1], [0], [0], [1], [0, 0, 1, 1], [], []>} : vector<256x4xf32>, vector<4x128xf32>, vector<256x128xf32> -> vector<256x128xf32>
    %29 = arith.addf %25, %28 : vector<256x128xf32>
    %c0_36 = arith.constant 0 : index
    %c0_37 = arith.constant 0 : index
    %30 = vector.load %arg7[%c0_36, %c0_37] : memref<256x128xf32, #tpu.memory_space<vmem>>, vector<256x128xf32>
    tpu.vector_store %arg7[%c0_36, %c0_37], %29 {strides = array<i32>} : memref<256x128xf32, #tpu.memory_space<vmem>>, vector<256x128xf32>,
    %c3 = arith.constant 3 : index
    %c0_38 = arith.constant 0 : index
    %c0_39 = arith.constant 0 : index
    %31 = vector.load %arg2[%c3, %c0_38, %c0_39] : memref<9x256x256xf32, #tpu.memory_space<vmem>>, vector<1x256x256xf32>
    %32 = vector.shape_cast %31 : vector<1x256x256xf32> to vector<256x256xf32>
    %cst_40 = arith.constant dense<0.000000e+00> : vector<256x4xf32>
    %33 = tpu.matmul %32, %1, %cst_40 {dimension_numbers = #tpu.dot_dimension_numbers<[1], [0], [0], [1], [0, 0, 1, 1], [], []>} : vector<256x256xf32>, vector<256x4xf32>, vector<256x4xf32> -> vector<256x4xf32>
    %c0_41 = arith.constant 0 : index
    %c0_42 = arith.constant 0 : index
    %34 = vector.load %arg7[%c0_41, %c0_42] : memref<256x128xf32, #tpu.memory_space<vmem>>, vector<256x128xf32>
    %c3_43 = arith.constant 3 : index
    %c0_44 = arith.constant 0 : index
    %c0_45 = arith.constant 0 : index
    %35 = vector.load %arg4[%c3_43, %c0_44, %c0_45] : memref<9x4x128xf32, #tpu.memory_space<vmem>>, vector<1x4x128xf32>
    %36 = vector.shape_cast %35 : vector<1x4x128xf32> to vector<4x128xf32>
    %cst_46 = arith.constant dense<0.000000e+00> : vector<256x128xf32>
    %37 = tpu.matmul %33, %36, %cst_46 {dimension_numbers = #tpu.dot_dimension_numbers<[1], [0], [0], [1], [0, 0, 1, 1], [], []>} : vector<256x4xf32>, vector<4x128xf32>, vector<256x128xf32> -> vector<256x128xf32>
    %38 = arith.addf %34, %37 : vector<256x128xf32>
    %c0_47 = arith.constant 0 : index
    %c0_48 = arith.constant 0 : index
    %39 = vector.load %arg7[%c0_47, %c0_48] : memref<256x128xf32, #tpu.memory_space<vmem>>, vector<256x128xf32>
    tpu.vector_store %arg7[%c0_47, %c0_48], %38 {strides = array<i32>} : memref<256x128xf32, #tpu.memory_space<vmem>>, vector<256x128xf32>,
    %c4 = arith.constant 4 : index
    %c0_49 = arith.constant 0 : index
    %c0_50 = arith.constant 0 : index
    %40 = vector.load %arg2[%c4, %c0_49, %c0_50] : memref<9x256x256xf32, #tpu.memory_space<vmem>>, vector<1x256x256xf32>
    %41 = vector.shape_cast %40 : vector<1x256x256xf32> to vector<256x256xf32>
    %cst_51 = arith.constant dense<0.000000e+00> : vector<256x4xf32>
    %42 = tpu.matmul %41, %1, %cst_51 {dimension_numbers = #tpu.dot_dimension_numbers<[1], [0], [0], [1], [0, 0, 1, 1], [], []>} : vector<256x256xf32>, vector<256x4xf32>, vector<256x4xf32> -> vector<256x4xf32>
    %c0_52 = arith.constant 0 : index
    %c0_53 = arith.constant 0 : index
    %43 = vector.load %arg7[%c0_52, %c0_53] : memref<256x128xf32, #tpu.memory_space<vmem>>, vector<256x128xf32>
    %c4_54 = arith.constant 4 : index
    %c0_55 = arith.constant 0 : index
    %c0_56 = arith.constant 0 : index
    %44 = vector.load %arg4[%c4_54, %c0_55, %c0_56] : memref<9x4x128xf32, #tpu.memory_space<vmem>>, vector<1x4x128xf32>
    %45 = vector.shape_cast %44 : vector<1x4x128xf32> to vector<4x128xf32>
    %cst_57 = arith.constant dense<0.000000e+00> : vector<256x128xf32>
    %46 = tpu.matmul %42, %45, %cst_57 {dimension_numbers = #tpu.dot_dimension_numbers<[1], [0], [0], [1], [0, 0, 1, 1], [], []>} : vector<256x4xf32>, vector<4x128xf32>, vector<256x128xf32> -> vector<256x128xf32>
    %47 = arith.addf %43, %46 : vector<256x128xf32>
    %c0_58 = arith.constant 0 : index
    %c0_59 = arith.constant 0 : index
    %48 = vector.load %arg7[%c0_58, %c0_59] : memref<256x128xf32, #tpu.memory_space<vmem>>, vector<256x128xf32>
    tpu.vector_store %arg7[%c0_58, %c0_59], %47 {strides = array<i32>} : memref<256x128xf32, #tpu.memory_space<vmem>>, vector<256x128xf32>,
    %c5 = arith.constant 5 : index
    %c0_60 = arith.constant 0 : index
    %c0_61 = arith.constant 0 : index
    %49 = vector.load %arg2[%c5, %c0_60, %c0_61] : memref<9x256x256xf32, #tpu.memory_space<vmem>>, vector<1x256x256xf32>
    %50 = vector.shape_cast %49 : vector<1x256x256xf32> to vector<256x256xf32>
    %cst_62 = arith.constant dense<0.000000e+00> : vector<256x4xf32>
    %51 = tpu.matmul %50, %1, %cst_62 {dimension_numbers = #tpu.dot_dimension_numbers<[1], [0], [0], [1], [0, 0, 1, 1], [], []>} : vector<256x256xf32>, vector<256x4xf32>, vector<256x4xf32> -> vector<256x4xf32>
    %c0_63 = arith.constant 0 : index
    %c0_64 = arith.constant 0 : index
    %52 = vector.load %arg7[%c0_63, %c0_64] : memref<256x128xf32, #tpu.memory_space<vmem>>, vector<256x128xf32>
    %c5_65 = arith.constant 5 : index
    %c0_66 = arith.constant 0 : index
    %c0_67 = arith.constant 0 : index
    %53 = vector.load %arg4[%c5_65, %c0_66, %c0_67] : memref<9x4x128xf32, #tpu.memory_space<vmem>>, vector<1x4x128xf32>
    %54 = vector.shape_cast %53 : vector<1x4x128xf32> to vector<4x128xf32>
    %cst_68 = arith.constant dense<0.000000e+00> : vector<256x128xf32>
    %55 = tpu.matmul %51, %54, %cst_68 {dimension_numbers = #tpu.dot_dimension_numbers<[1], [0], [0], [1], [0, 0, 1, 1], [], []>} : vector<256x4xf32>, vector<4x128xf32>, vector<256x128xf32> -> vector<256x128xf32>
    %56 = arith.addf %52, %55 : vector<256x128xf32>
    %c0_69 = arith.constant 0 : index
    %c0_70 = arith.constant 0 : index
    %57 = vector.load %arg7[%c0_69, %c0_70] : memref<256x128xf32, #tpu.memory_space<vmem>>, vector<256x128xf32>
    tpu.vector_store %arg7[%c0_69, %c0_70], %56 {strides = array<i32>} : memref<256x128xf32, #tpu.memory_space<vmem>>, vector<256x128xf32>,
    %c6 = arith.constant 6 : index
    %c0_71 = arith.constant 0 : index
    %c0_72 = arith.constant 0 : index
    %58 = vector.load %arg2[%c6, %c0_71, %c0_72] : memref<9x256x256xf32, #tpu.memory_space<vmem>>, vector<1x256x256xf32>
    %59 = vector.shape_cast %58 : vector<1x256x256xf32> to vector<256x256xf32>
    %cst_73 = arith.constant dense<0.000000e+00> : vector<256x4xf32>
    %60 = tpu.matmul %59, %1, %cst_73 {dimension_numbers = #tpu.dot_dimension_numbers<[1], [0], [0], [1], [0, 0, 1, 1], [], []>} : vector<256x256xf32>, vector<256x4xf32>, vector<256x4xf32> -> vector<256x4xf32>
    %c0_74 = arith.constant 0 : index
    %c0_75 = arith.constant 0 : index
    %61 = vector.load %arg7[%c0_74, %c0_75] : memref<256x128xf32, #tpu.memory_space<vmem>>, vector<256x128xf32>
    %c6_76 = arith.constant 6 : index
    %c0_77 = arith.constant 0 : index
    %c0_78 = arith.constant 0 : index
    %62 = vector.load %arg4[%c6_76, %c0_77, %c0_78] : memref<9x4x128xf32, #tpu.memory_space<vmem>>, vector<1x4x128xf32>
    %63 = vector.shape_cast %62 : vector<1x4x128xf32> to vector<4x128xf32>
    %cst_79 = arith.constant dense<0.000000e+00> : vector<256x128xf32>
    %64 = tpu.matmul %60, %63, %cst_79 {dimension_numbers = #tpu.dot_dimension_numbers<[1], [0], [0], [1], [0, 0, 1, 1], [], []>} : vector<256x4xf32>, vector<4x128xf32>, vector<256x128xf32> -> vector<256x128xf32>
    %65 = arith.addf %61, %64 : vector<256x128xf32>
    %c0_80 = arith.constant 0 : index
    %c0_81 = arith.constant 0 : index
    %66 = vector.load %arg7[%c0_80, %c0_81] : memref<256x128xf32, #tpu.memory_space<vmem>>, vector<256x128xf32>
    tpu.vector_store %arg7[%c0_80, %c0_81], %65 {strides = array<i32>} : memref<256x128xf32, #tpu.memory_space<vmem>>, vector<256x128xf32>,
    %c7 = arith.constant 7 : index
    %c0_82 = arith.constant 0 : index
    %c0_83 = arith.constant 0 : index
    %67 = vector.load %arg2[%c7, %c0_82, %c0_83] : memref<9x256x256xf32, #tpu.memory_space<vmem>>, vector<1x256x256xf32>
    %68 = vector.shape_cast %67 : vector<1x256x256xf32> to vector<256x256xf32>
    %cst_84 = arith.constant dense<0.000000e+00> : vector<256x4xf32>
    %69 = tpu.matmul %68, %1, %cst_84 {dimension_numbers = #tpu.dot_dimension_numbers<[1], [0], [0], [1], [0, 0, 1, 1], [], []>} : vector<256x256xf32>, vector<256x4xf32>, vector<256x4xf32> -> vector<256x4xf32>
    %c0_85 = arith.constant 0 : index
    %c0_86 = arith.constant 0 : index
    %70 = vector.load %arg7[%c0_85, %c0_86] : memref<256x128xf32, #tpu.memory_space<vmem>>, vector<256x128xf32>
    %c7_87 = arith.constant 7 : index
    %c0_88 = arith.constant 0 : index
    %c0_89 = arith.constant 0 : index
    %71 = vector.load %arg4[%c7_87, %c0_88, %c0_89] : memref<9x4x128xf32, #tpu.memory_space<vmem>>, vector<1x4x128xf32>
    %72 = vector.shape_cast %71 : vector<1x4x128xf32> to vector<4x128xf32>
    %cst_90 = arith.constant dense<0.000000e+00> : vector<256x128xf32>
    %73 = tpu.matmul %69, %72, %cst_90 {dimension_numbers = #tpu.dot_dimension_numbers<[1], [0], [0], [1], [0, 0, 1, 1], [], []>} : vector<256x4xf32>, vector<4x128xf32>, vector<256x128xf32> -> vector<256x128xf32>
    %74 = arith.addf %70, %73 : vector<256x128xf32>
    %c0_91 = arith.constant 0 : index
    %c0_92 = arith.constant 0 : index
    %75 = vector.load %arg7[%c0_91, %c0_92] : memref<256x128xf32, #tpu.memory_space<vmem>>, vector<256x128xf32>
    tpu.vector_store %arg7[%c0_91, %c0_92], %74 {strides = array<i32>} : memref<256x128xf32, #tpu.memory_space<vmem>>, vector<256x128xf32>,
    %c8 = arith.constant 8 : index
    %c0_93 = arith.constant 0 : index
    %c0_94 = arith.constant 0 : index
    %76 = vector.load %arg2[%c8, %c0_93, %c0_94] : memref<9x256x256xf32, #tpu.memory_space<vmem>>, vector<1x256x256xf32>
    %77 = vector.shape_cast %76 : vector<1x256x256xf32> to vector<256x256xf32>
    %cst_95 = arith.constant dense<0.000000e+00> : vector<256x4xf32>
    %78 = tpu.matmul %77, %1, %cst_95 {dimension_numbers = #tpu.dot_dimension_numbers<[1], [0], [0], [1], [0, 0, 1, 1], [], []>} : vector<256x256xf32>, vector<256x4xf32>, vector<256x4xf32> -> vector<256x4xf32>
    %c0_96 = arith.constant 0 : index
    %c0_97 = arith.constant 0 : index
    %79 = vector.load %arg7[%c0_96, %c0_97] : memref<256x128xf32, #tpu.memory_space<vmem>>, vector<256x128xf32>
    %c8_98 = arith.constant 8 : index
    %c0_99 = arith.constant 0 : index
    %c0_100 = arith.constant 0 : index
    %80 = vector.load %arg4[%c8_98, %c0_99, %c0_100] : memref<9x4x128xf32, #tpu.memory_space<vmem>>, vector<1x4x128xf32>
    %81 = vector.shape_cast %80 : vector<1x4x128xf32> to vector<4x128xf32>
    %cst_101 = arith.constant dense<0.000000e+00> : vector<256x128xf32>
    %82 = tpu.matmul %78, %81, %cst_101 {dimension_numbers = #tpu.dot_dimension_numbers<[1], [0], [0], [1], [0, 0, 1, 1], [], []>} : vector<256x4xf32>, vector<4x128xf32>, vector<256x128xf32> -> vector<256x128xf32>
    %83 = arith.addf %79, %82 : vector<256x128xf32>
    %c0_102 = arith.constant 0 : index
    %c0_103 = arith.constant 0 : index
    %84 = vector.load %arg7[%c0_102, %c0_103] : memref<256x128xf32, #tpu.memory_space<vmem>>, vector<256x128xf32>
    tpu.vector_store %arg7[%c0_102, %c0_103], %83 {strides = array<i32>} : memref<256x128xf32, #tpu.memory_space<vmem>>, vector<256x128xf32>,
    %c0_104 = arith.constant 0 : index
    %c0_105 = arith.constant 0 : index
    %85 = vector.load %arg7[%c0_104, %c0_105] : memref<256x128xf32, #tpu.memory_space<vmem>>, vector<256x128xf32>
    %c0_106 = arith.constant 0 : index
    %c0_107 = arith.constant 0 : index
    %86 = vector.load %arg5[%c0_106, %c0_107] : memref<1x128xf32, #tpu.memory_space<vmem>>, vector<1x128xf32>
    %87 = vector.broadcast %86 : vector<1x128xf32> to vector<256x128xf32>
    %88 = arith.addf %85, %87 : vector<256x128xf32>
    %c0_108 = arith.constant 0 : index
    %c0_109 = arith.constant 0 : index
    %c0_110 = arith.constant 0 : index
    %89 = vector.load %arg6[%c0_108, %c0_109, %c0_110] : memref<1x256x128xf32, #tpu.memory_space<vmem>>, vector<1x256x128xf32>
    %90 = vector.shape_cast %89 : vector<1x256x128xf32> to vector<256x128xf32>
    %91 = vector.shape_cast %88 : vector<256x128xf32> to vector<1x256x128xf32>
    tpu.vector_store %arg6[%c0_108, %c0_109, %c0_110], %91 {strides = array<i32>} : memref<1x256x128xf32, #tpu.memory_space<vmem>>, vector<1x256x128xf32>,
    return
  }
  func.func @transform_0(%arg0: i32, %arg1: i32) -> (i32, i32, i32) {
    %c0_i32 = arith.constant 0 : i32
    %c0_i32_0 = arith.constant 0 : i32
    %c0_i32_1 = arith.constant 0 : i32
    return %c0_i32, %arg1, %c0_i32_0 : i32, i32, i32
  }
  func.func @transform_1(%arg0: i32, %arg1: i32) -> (i32, i32, i32) {
    %c0_i32 = arith.constant 0 : i32
    %c0_i32_0 = arith.constant 0 : i32
    %c0_i32_1 = arith.constant 0 : i32
    return %arg0, %c0_i32, %c0_i32_0 : i32, i32, i32
  }
  func.func @transform_2(%arg0: i32, %arg1: i32) -> (i32, i32, i32) {
    %c0_i32 = arith.constant 0 : i32
    %c0_i32_0 = arith.constant 0 : i32
    %c0_i32_1 = arith.constant 0 : i32
    %c0_i32_2 = arith.constant 0 : i32
    return %c0_i32, %c0_i32_0, %c0_i32_1 : i32, i32, i32
  }
  func.func @transform_3(%arg0: i32, %arg1: i32) -> (i32, i32) {
    %c0_i32 = arith.constant 0 : i32
    %c0_i32_0 = arith.constant 0 : i32
    %c0_i32_1 = arith.constant 0 : i32
    return %c0_i32, %c0_i32_0 : i32, i32
  }
  func.func @transform_4(%arg0: i32, %arg1: i32) -> (i32, i32, i32) {
    %c0_i32 = arith.constant 0 : i32
    %c0_i32_0 = arith.constant 0 : i32
    return %arg0, %arg1, %c0_i32 : i32, i32, i32
  }
}

</mosaic_0001>

<llo_original>
// kernel: tpu_custom_call.1
$region0: #{tpu_custom_call.1}
  #allocation0 [shape = 'u32[]', space=smem, size = 0x4, offset = 0x4, fixed_abs, tag = 'smem constant byte address 0x4 - core index']
  #allocation1 [shape = 'u32[144,128]{1,0:T(1,128)}', space=vmem, size = 0x12000, scoped, tag = 'internal scratch']
  #allocation2 [shape = 'f32[256,128]{1,0:T(8,128)}', space=vmem, size = 0x20000, scoped, tag = 'scratch operand']
  #allocation10 [shape = 's32[]', space=sflag, size = 0x4, offset = 0, fixed_abs, tag = 'sflag constant byte address 0x0 - dummy sync flag']
  %s0 = inlined_call_operand.hbm [shape: f32[9,1024,256], index: 0, kind: input, shape index: {}]
  %s1 = inlined_call_operand.vmem [shape: f32[2,256,4], index: 1, kind: input, shape index: {}]
  %s2 = inlined_call_operand.hbm [shape: f32[9,4,128], index: 2, kind: input, shape index: {}]
  %s3 = inlined_call_operand.hbm [shape: f32[1,128], index: 3, kind: input, shape index: {}]
  %s4 = inlined_call_operand.hbm [shape: f32[2,1024,128], index: 4, kind: output, shape index: {}]
  %s5 = sld [smem:[#allocation0]]
  $region61: #{tpu_custom_call.1} parent=0
    _
  %s7 = ssub.s32 1, %s5
  %s8 = scalar_select 0, %s7, %s5
  $region1: #{tpu_custom_call.1} parent=0
    #allocation3 [shape = 'u8[4718592]{0}', space=vmem, size = 0x480000, scoped, tag = 'input window, operand 0']
    #allocation4 [shape = 's32[2]{0}', space=sflag, size = 0x8, scoped, tag = 'scoped memory for tpu_custom_call.1']
    #allocation5 [shape = 's32[2]{0}', space=sflag, size = 0x8, scoped, tag = 'scoped memory for tpu_custom_call.1']
    #allocation6 [shape = 'u8[18432]{0}', space=vmem, size = 0x4800, scoped, tag = 'input window, operand 2, single buffered']
    #allocation7 [shape = 's32[1]{0}', space=sflag, size = 0x4, scoped, tag = 'scoped memory for tpu_custom_call.1']
    #allocation8 [shape = 'u8[512]{0}', space=vmem, size = 0x400, scoped, tag = 'input window, operand 3, single buffered']
    #allocation9 [shape = 'u8[262144]{0}', space=vmem, size = 0x40000, scoped, tag = 'output window, operand 0']
    %9 = vsyncpa [#allocation4], 0
    %s10 = scalar_lea.sflag [#allocation4], 1
    %11 = vsyncpa %s10, 0
    %12 = vsyncpa [#allocation7], 0
    %13 = vsyncpa [#allocation5], 0
    %s14 = scalar_lea.sflag [#allocation5], 1
    %15 = vsyncpa %s14, 0
    loop: start=0, step=1, limit=10
    $region2: #{tpu_custom_call.1} parent=1 // loop_pre_header
      _
    $region3: #{tpu_custom_call.1} parent=1 // loop_header
      %s17 = sphi 0, %s21
      %p18 = scmp.ge.s32.totalorder %s17, 10
      %s24 = sphi 0, %s36
      %s25 = sphi 0, %s32
      %s26 = sphi 0, %s24
      %s27 = sphi 0, %s25
      %s28 = sphi 0, %s26
      %s29 = sphi 0, %s27
      %s39 = sphi 0, %s41
      %s42 = sphi 0, %s39
      %s43 = sphi 0, %s42
      %s59 = sphi 0, %s43
      %s65 = sphi 0, %s67
      %s68 = sphi 0, %s65
      %s69 = sphi 0, %s68
      %s85 = sphi 0, %s69
      %s89 = sphi 0, %s89
      %s91 = sphi 0, %s89
      %s92 = sphi 0, %s91
      %s106 = sphi 0, %s92
      %s110 = sphi 0, %s110
      %s112 = sphi 0, %s110
      %s113 = sphi 0, %s112
      %s127 = sphi 0, %s113
      %s135 = sphi 0, %s137
      %s138 = sphi 0, %s135
      %s139 = sphi 0, %s138
      %s155 = sphi 0, %s139
    $region4: #{tpu_custom_call.1} parent=1 // loop_header_branch
      %20 = sbr.rel (%p18) target = $region8
    $region5: #{tpu_custom_call.1} parent=1 // loop_body
      %s22 = ssub.s32 %s17, 1
      %s23 = ssub.s32 %s17, 2
      %s30 = sadd.s32 1, %s25
      %p31 = scmp.ge.s32.totalorder %s30, 4
      %s32 = scalar_select %p31, 0, %s30
      %s33 = sadd.s32 1, %s24
      %s34 = scalar_select %p31, %s33, %s24
      %p35 = scmp.ge.s32.totalorder %s34, 2
      %s36 = scalar_select %p35, 0, %s34
      %s37 = ssub.s32 %s25, %s32
      %p38 = scmp.eq.s32.totalorder %s37, 0
      %s40 = sadd.s32 %s39, 1
      %s41 = scalar_select %p38, %s39, %s40
      %p44 = pneg %p38
      %p45 = scmp.eq.s32.totalorder %s17, 7
      %p46 = por %p44, %p45
      %p47 = scmp.ne.s32.totalorder %s39, %s42
      %p48 = scmp.eq.s32.totalorder %s17, 0
      %p49 = por %p47, %p48
      %p50 = scmp.ne.s32.totalorder %s39, %s42
      %p51 = scmp.eq.s32.totalorder %s22, 7
      %p52 = por %p50, %p51
      %p53 = scmp.ne.s32.totalorder %s42, %s43
      %p54 = scmp.eq.s32.totalorder %s22, 0
      %p55 = por %p53, %p54
      %p56 = scmp.ne.s32.totalorder %s42, %s43
      %p57 = scmp.eq.s32.totalorder %s23, 7
      %p58 = por %p56, %p57
      %p60 = scmp.ne.s32.totalorder %s43, %s59
      %p61 = scmp.eq.s32.totalorder %s23, 0
      %p62 = por %p60, %p61
      %s63 = ssub.s32 %s24, %s36
      %p64 = scmp.eq.s32.totalorder %s63, 0
      %s66 = sadd.s32 %s65, 1
      %s67 = scalar_select %p64, %s65, %s66
      %p70 = pneg %p64
      %p71 = scmp.eq.s32.totalorder %s17, 7
      %p72 = por %p70, %p71
      %p73 = scmp.ne.s32.totalorder %s65, %s68
      %p74 = scmp.eq.s32.totalorder %s17, 0
      %p75 = por %p73, %p74
      %p76 = scmp.ne.s32.totalorder %s65, %s68
      %p77 = scmp.eq.s32.totalorder %s22, 7
      %p78 = por %p76, %p77
      %p79 = scmp.ne.s32.totalorder %s68, %s69
      %p80 = scmp.eq.s32.totalorder %s22, 0
      %p81 = por %p79, %p80
      %p82 = scmp.ne.s32.totalorder %s68, %s69
      %p83 = scmp.eq.s32.totalorder %s23, 7
      %p84 = por %p82, %p83
      %p86 = scmp.ne.s32.totalorder %s69, %s85
      %p87 = scmp.eq.s32.totalorder %s23, 0
      %p88 = por %p86, %p87
      %s90 = sadd.s32 %s89, 1
      %p93 = scmp.eq.s32.totalorder %s17, 7
      %p94 = scmp.ne.s32.totalorder %s89, %s91
      %p95 = scmp.eq.s32.totalorder %s17, 0
      %p96 = por %p94, %p95
      %p97 = scmp.ne.s32.totalorder %s89, %s91
      %p98 = scmp.eq.s32.totalorder %s22, 7
      %p99 = por %p97, %p98
      %p100 = scmp.ne.s32.totalorder %s91, %s92
      %p101 = scmp.eq.s32.totalorder %s22, 0
      %p102 = por %p100, %p101
      %p103 = scmp.ne.s32.totalorder %s91, %s92
      %p104 = scmp.eq.s32.totalorder %s23, 7
      %p105 = por %p103, %p104
      %p107 = scmp.ne.s32.totalorder %s92, %s106
      %p108 = scmp.eq.s32.totalorder %s23, 0
      %p109 = por %p107, %p108
      %s111 = sadd.s32 %s110, 1
      %p114 = scmp.eq.s32.totalorder %s17, 7
      %p115 = scmp.ne.s32.totalorder %s110, %s112
      %p116 = scmp.eq.s32.totalorder %s17, 0
      %p117 = por %p115, %p116
      %p118 = scmp.ne.s32.totalorder %s110, %s112
      %p119 = scmp.eq.s32.totalorder %s22, 7
      %p120 = por %p118, %p119
      %p121 = scmp.ne.s32.totalorder %s112, %s113
      %p122 = scmp.eq.s32.totalorder %s22, 0
      %p123 = por %p121, %p122
      %p124 = scmp.ne.s32.totalorder %s112, %s113
      %p125 = scmp.eq.s32.totalorder %s23, 7
      %p126 = por %p124, %p125
      %p128 = scmp.ne.s32.totalorder %s113, %s127
      %p129 = scmp.eq.s32.totalorder %s23, 0
      %p130 = por %p128, %p129
      %s131 = ssub.s32 %s24, %s36
      %s132 = ssub.s32 %s25, %s32
      %s133 = sor.u32 %s131, %s132
      %p134 = scmp.eq.s32.totalorder %s133, 0
      %s136 = sadd.s32 %s135, 1
      %s137 = scalar_select %p134, %s135, %s136
      %p140 = pneg %p134
      %p141 = scmp.eq.s32.totalorder %s17, 7
      %p142 = por %p140, %p141
      %p143 = scmp.ne.s32.totalorder %s135, %s138
      %p144 = scmp.eq.s32.totalorder %s17, 0
      %p145 = por %p143, %p144
      %p146 = scmp.ne.s32.totalorder %s135, %s138
      %p147 = scmp.eq.s32.totalorder %s22, 7
      %p148 = por %p146, %p147
      %p149 = scmp.ne.s32.totalorder %s138, %s139
      %p150 = scmp.eq.s32.totalorder %s22, 0
      %p151 = por %p149, %p150
      %p152 = scmp.ne.s32.totalorder %s138, %s139
      %p153 = scmp.eq.s32.totalorder %s23, 7
      %p154 = por %p152, %p153
      %p156 = scmp.ne.s32.totalorder %s139, %s155
      %p157 = scmp.eq.s32.totalorder %s23, 0
      %p158 = por %p156, %p157
      %p159 = scmp.le.s32.totalorder 1, %s17
      %p160 = scmp.lt.s32.totalorder %s17, 9
      %p161 = pnand %p159, %p160
      %p162 = pneg %p161
      // Predicated region
      $region9: #{tpu_custom_call.1} parent=5 // pred_check
        _
      $region10: #{tpu_custom_call.1} parent=5 // pred_check_branch
        %164 = sbr.rel (%p161) target = $region12
      $region11: #{tpu_custom_call.1} parent=5 // pred_region
        %s165 = ssub.s32 %s17, 1
        // Predicated region
        $region13: #{tpu_custom_call.1} parent=11 // pred_check
          %p166 = pneg %p102
        $region14: #{tpu_custom_call.1} parent=11 // pred_check_branch
          %168 = sbr.rel (%p166) target = $region16
        $region15: #{tpu_custom_call.1} parent=11 // pred_region
          %s170 = ssub.s32 576, 576
          %171 = vsyncadd [#allocation7], %s170
          %s172 = sshll.u32 [#allocation6], 4
          %s173 = int_to_ptr.vmem [resolvable:$true] %s172
          %178 = dma.hbm_to_vmem [thread:$0]  %s2, 576, %s173, [#allocation7], 64, 64, 4
        $region16: #{tpu_custom_call.1} parent=11 // pred_fallthru
          _
        // Predicated region
        $region17: #{tpu_custom_call.1} parent=11 // pred_check
          %p179 = pneg %p123
        $region18: #{tpu_custom_call.1} parent=11 // pred_check_branch
          %181 = sbr.rel (%p179) target = $region20
        $region19: #{tpu_custom_call.1} parent=11 // pred_region
          %s183 = ssub.s32 16, 16
          %184 = vsyncadd [#allocation7], %s183
          %s186 = sshll.u32 [#allocation8], 4
          %s187 = int_to_ptr.vmem [resolvable:$true] %s186
          %189 = dma.hbm_to_vmem [thread:$0]  %s3, 16, %s187, [#allocation7]
        $region20: #{tpu_custom_call.1} parent=11 // pred_fallthru
          _
      $region12: #{tpu_custom_call.1} parent=5 // pred_fallthru
        _
      %p190 = scmp.lt.s32.totalorder %s17, 8
      // Predicated region
      $region21: #{tpu_custom_call.1} parent=5 // pred_check
        %p191 = pneg %p190
      $region22: #{tpu_custom_call.1} parent=5 // pred_check_branch
        %193 = sbr.rel (%p191) target = $region24
      $region23: #{tpu_custom_call.1} parent=5 // pred_region
        // Predicated region
        $region25: #{tpu_custom_call.1} parent=23 // pred_check
          %p194 = pneg %p49
        $region26: #{tpu_custom_call.1} parent=23 // pred_check_branch
          %196 = sbr.rel (%p194) target = $region28
        $region27: #{tpu_custom_call.1} parent=23 // pred_region
          #allocation11 [shape = 'u32[6]{0}', space=smem, size = 0x18, scoped, tag = 'DMA stride descriptor']
          %s197 = sand.u32 %s39, 1
          %s198 = scalar_lea.sflag [#allocation4], %s197
          %s199 = sand.u32 %s39, 1
          %s200 = smul.addr %s199, 4608
          %s201 = scalar_lea.vmem [#allocation3], %s200
          %s202 = smul.u32 32, %s25
          %s204 = ssub.s32 73728, 73728
          %205 = vsyncadd %s198, %s204
          %s206 = smul.addr %s202, 2
          %s207 = smul.addr %s206, 128
          %s208 = scalar_lea.hbm %s0, %s207
          %s210 = sshll.u32 1, 14
          %s211 = sxor.u32 4294967295, %s210
          %s213 = sld [smem:[#allocation0]]
          %s214 = sadd.s32 2, %s213
          %s216 = sshll.u32 7, 26
          %s217 = sxor.u32 4294967295, %s216
          %s218 = sand.u32 0, %s217
          %s219 = sshll.u32 %s214, 26
          %s220 = sor.u32 %s218, %s219
          %s221 = sshll.u32 %s201, 4
          %s222 = int_to_ptr.vmem [resolvable:$true] %s221
          %228 = sst [smem:[#allocation11]] 32768
          %s229 = scalar_lea.smem [#allocation11], 1
          %230 = sst [smem:[%s229]] 8192
          %s231 = scalar_lea.smem [#allocation11], 2
          %232 = sst [smem:[%s231]] 32
          %s233 = scalar_lea.smem [#allocation11], 3
          %234 = sst [smem:[%s233]] 256
          %s235 = scalar_lea.smem [#allocation11], 4
          %236 = sst [smem:[%s235]] 256
          %s237 = scalar_lea.smem [#allocation11], 5
          %238 = sst [smem:[%s237]] 16
          %240 = dma.general %s208, 73728, %s222, %s198, [#allocation10], [#allocation11], %s220, 0
        $region28: #{tpu_custom_call.1} parent=23 // pred_fallthru
          _
        // Predicated region
        $region29: #{tpu_custom_call.1} parent=23 // pred_check
          %p241 = pneg %p75
        $region30: #{tpu_custom_call.1} parent=23 // pred_check_branch
          %243 = sbr.rel (%p241) target = $region32
        $region31: #{tpu_custom_call.1} parent=23 // pred_region
          %p244 = scmp.lt.s32.totalorder %s24, 1
          %s245 = scalar_select %p244, %s24, 1
          %s246 = smul.addr %s245, 32
          %s247 = smul.addr %s246, 8
          %s248 = scalar_lea.vmem %s1, %s247
        $region32: #{tpu_custom_call.1} parent=23 // pred_fallthru
          _
      $region24: #{tpu_custom_call.1} parent=5 // pred_fallthru
        _
      %p249 = scmp.le.s32.totalorder 1, %s17
      %p250 = scmp.lt.s32.totalorder %s17, 9
      %p251 = pnand %p249, %p250
      %p252 = pneg %p251
      // Predicated region
      $region33: #{tpu_custom_call.1} parent=5 // pred_check
        _
      $region34: #{tpu_custom_call.1} parent=5 // pred_check_branch
        %254 = sbr.rel (%p251) target = $region36
      $region35: #{tpu_custom_call.1} parent=5 // pred_region
        %s255 = ssub.s32 %s17, 1
        %s256 = sand.u32 %s42, 1
        %s257 = scalar_lea.sflag [#allocation4], %s256
        %s258 = sand.u32 %s42, 1
        %s259 = smul.addr %s258, 4608
        %s260 = scalar_lea.vmem [#allocation3], %s259
        // Predicated region
        $region37: #{tpu_custom_call.1} parent=35 // pred_check
          %p261 = pneg %p55
        $region38: #{tpu_custom_call.1} parent=35 // pred_check_branch
          %263 = sbr.rel (%p261) target = $region40
        $region39: #{tpu_custom_call.1} parent=35 // pred_region
          %264 = dma.done %s257, 73728
        $region40: #{tpu_custom_call.1} parent=35 // pred_fallthru
          _
        // Predicated region
        $region41: #{tpu_custom_call.1} parent=35 // pred_check
          %p265 = pneg %p102
        $region42: #{tpu_custom_call.1} parent=35 // pred_check_branch
          %267 = sbr.rel (%p265) target = $region44
        $region43: #{tpu_custom_call.1} parent=35 // pred_region
          %268 = dma.done [#allocation7], 576
        $region44: #{tpu_custom_call.1} parent=35 // pred_fallthru
          _
        // Predicated region
        $region45: #{tpu_custom_call.1} parent=35 // pred_check
          %p269 = pneg %p123
        $region46: #{tpu_custom_call.1} parent=35 // pred_check_branch
          %271 = sbr.rel (%p269) target = $region48
        $region47: #{tpu_custom_call.1} parent=35 // pred_region
          %272 = dma.done [#allocation7], 16
        $region48: #{tpu_custom_call.1} parent=35 // pred_fallthru
          _
        %s273 = sand.u32 %s42, 1
        %s274 = scalar_lea.sflag [#allocation4], %s273
        %s275 = sand.u32 %s42, 1
        %s276 = smul.addr %s275, 4608
        %s277 = scalar_lea.vmem [#allocation3], %s276
        %p278 = pneg %p55
        %p279 = pneg %p52
        %p280 = scmp.lt.s32.totalorder %s26, 1
        %s281 = scalar_select %p280, %s26, 1
        %s282 = smul.addr %s281, 32
        %s283 = smul.addr %s282, 8
        %s284 = scalar_lea.vmem %s1, %s283
        %p285 = pneg %p81
        %p286 = pneg %p78
        %p287 = pneg %p102
        %p288 = pneg %p99
        %p289 = pneg %p123
        %p290 = pneg %p120
        %p291 = pneg %p151
        %p292 = pneg %p148
        %s293 = sand.u32 %s138, 1
        %s294 = scalar_lea.sflag [#allocation5], %s293
        %s295 = sand.u32 %s138, 1
        %s296 = smul.addr %s295, 256
        %s297 = scalar_lea.vmem [#allocation9], %s296
        %s298 = smul.u32 32, %s27
        %p299 = scmp.lt.s32.totalorder %s26, 1
        %s300 = scalar_select %p299, %s26, 1
        %s301 = smul.addr %s300, 32
        %s302 = smul.addr %s301, 8
        %s303 = scalar_lea.vmem %s1, %s302
        %s304 = smul.u32 32, %s27
        %v305 = vld [vmem:[%s303] sm:$0xff]
        %v306 = vld [vmem:[%s303 + $0x8] sm:$0xff]
        %v307 = vld [vmem:[%s303 + $0x10] sm:$0xff]
        %v308 = vld [vmem:[%s303 + $0x18] sm:$0xff]
        %v309 = vld [vmem:[%s303 + $0x20] sm:$0xff]
        %v310 = vld [vmem:[%s303 + $0x28] sm:$0xff]
        %v311 = vld [vmem:[%s303 + $0x30] sm:$0xff]
        %v312 = vld [vmem:[%s303 + $0x38] sm:$0xff]
        %v313 = vld [vmem:[%s303 + $0x40] sm:$0xff]
        %v314 = vld [vmem:[%s303 + $0x48] sm:$0xff]
        %v315 = vld [vmem:[%s303 + $0x50] sm:$0xff]
        %v316 = vld [vmem:[%s303 + $0x58] sm:$0xff]
        %v317 = vld [vmem:[%s303 + $0x60] sm:$0xff]
        %v318 = vld [vmem:[%s303 + $0x68] sm:$0xff]
        %v319 = vld [vmem:[%s303 + $0x70] sm:$0xff]
        %v320 = vld [vmem:[%s303 + $0x78] sm:$0xff]
        %v321 = vld [vmem:[%s303 + $0x80] sm:$0xff]
        %v322 = vld [vmem:[%s303 + $0x88] sm:$0xff]
        %v323 = vld [vmem:[%s303 + $0x90] sm:$0xff]
        %v324 = vld [vmem:[%s303 + $0x98] sm:$0xff]
        %v325 = vld [vmem:[%s303 + $0xa0] sm:$0xff]
        %v326 = vld [vmem:[%s303 + $0xa8] sm:$0xff]
        %v327 = vld [vmem:[%s303 + $0xb0] sm:$0xff]
        %v328 = vld [vmem:[%s303 + $0xb8] sm:$0xff]
        %v329 = vld [vmem:[%s303 + $0xc0] sm:$0xff]
        %v330 = vld [vmem:[%s303 + $0xc8] sm:$0xff]
        %v331 = vld [vmem:[%s303 + $0xd0] sm:$0xff]
        %v332 = vld [vmem:[%s303 + $0xd8] sm:$0xff]
        %v333 = vld [vmem:[%s303 + $0xe0] sm:$0xff]
        %v334 = vld [vmem:[%s303 + $0xe8] sm:$0xff]
        %v335 = vld [vmem:[%s303 + $0xf0] sm:$0xff]
        %v336 = vld [vmem:[%s303 + $0xf8] sm:$0xff]
        %337 = vst [vmem:[#allocation2] sm:$0xff] 0.0
        %338 = vst [vmem:[#allocation2 + $0x8] sm:$0xff] 0.0
        %339 = vst [vmem:[#allocation2 + $0x10] sm:$0xff] 0.0
        %340 = vst [vmem:[#allocation2 + $0x18] sm:$0xff] 0.0
        %341 = vst [vmem:[#allocation2 + $0x20] sm:$0xff] 0.0
        %342 = vst [vmem:[#allocation2 + $0x28] sm:$0xff] 0.0
        %343 = vst [vmem:[#allocation2 + $0x30] sm:$0xff] 0.0
        %344 = vst [vmem:[#allocation2 + $0x38] sm:$0xff] 0.0
        %345 = vst [vmem:[#allocation2 + $0x40] sm:$0xff] 0.0
        %346 = vst [vmem:[#allocation2 + $0x48] sm:$0xff] 0.0
        %347 = vst [vmem:[#allocation2 + $0x50] sm:$0xff] 0.0
        %348 = vst [vmem:[#allocation2 + $0x58] sm:$0xff] 0.0
        %349 = vst [vmem:[#allocation2 + $0x60] sm:$0xff] 0.0
        %350 = vst [vmem:[#allocation2 + $0x68] sm:$0xff] 0.0
        %351 = vst [vmem:[#allocation2 + $0x70] sm:$0xff] 0.0
        %352 = vst [vmem:[#allocation2 + $0x78] sm:$0xff] 0.0
        %353 = vst [vmem:[#allocation2 + $0x80] sm:$0xff] 0.0
        %354 = vst [vmem:[#allocation2 + $0x88] sm:$0xff] 0.0
        %355 = vst [vmem:[#allocation2 + $0x90] sm:$0xff] 0.0
        %356 = vst [vmem:[#allocation2 + $0x98] sm:$0xff] 0.0
        %357 = vst [vmem:[#allocation2 + $0xa0] sm:$0xff] 0.0
        %358 = vst [vmem:[#allocation2 + $0xa8] sm:$0xff] 0.0
        %359 = vst [vmem:[#allocation2 + $0xb0] sm:$0xff] 0.0
        %360 = vst [vmem:[#allocation2 + $0xb8] sm:$0xff] 0.0
        %361 = vst [vmem:[#allocation2 + $0xc0] sm:$0xff] 0.0
        %362 = vst [vmem:[#allocation2 + $0xc8] sm:$0xff] 0.0
        %363 = vst [vmem:[#allocation2 + $0xd0] sm:$0xff] 0.0
        %364 = vst [vmem:[#allocation2 + $0xd8] sm:$0xff] 0.0
        %365 = vst [vmem:[#allocation2 + $0xe0] sm:$0xff] 0.0
        %366 = vst [vmem:[#allocation2 + $0xe8] sm:$0xff] 0.0
        %367 = vst [vmem:[#allocation2 + $0xf0] sm:$0xff] 0.0
        %368 = vst [vmem:[#allocation2 + $0xf8] sm:$0xff] 0.0
        %v369 = vld [vmem:[%s260] sm:$0xff]
        %v370 = vld [vmem:[%s260 + $0x8] sm:$0xff]
        %v371 = vld [vmem:[%s260 + $0x10] sm:$0xff]
        %v372 = vld [vmem:[%s260 + $0x18] sm:$0xff]
        %v373 = vld [vmem:[%s260 + $0x20] sm:$0xff]
        %v374 = vld [vmem:[%s260 + $0x28] sm:$0xff]
        %v375 = vld [vmem:[%s260 + $0x30] sm:$0xff]
        %v376 = vld [vmem:[%s260 + $0x38] sm:$0xff]
        %v377 = vld [vmem:[%s260 + $0x40] sm:$0xff]
        %v378 = vld [vmem:[%s260 + $0x48] sm:$0xff]
        %v379 = vld [vmem:[%s260 + $0x50] sm:$0xff]
        %v380 = vld [vmem:[%s260 + $0x58] sm:$0xff]
        %v381 = vld [vmem:[%s260 + $0x60] sm:$0xff]
        %v382 = vld [vmem:[%s260 + $0x68] sm:$0xff]
        %v383 = vld [vmem:[%s260 + $0x70] sm:$0xff]
        %v384 = vld [vmem:[%s260 + $0x78] sm:$0xff]
        %v385 = vld [vmem:[%s260 + $0x80] sm:$0xff]
        %v386 = vld [vmem:[%s260 + $0x88] sm:$0xff]
        %v387 = vld [vmem:[%s260 + $0x90] sm:$0xff]
        %v388 = vld [vmem:[%s260 + $0x98] sm:$0xff]
        %v389 = vld [vmem:[%s260 + $0xa0] sm:$0xff]
        %v390 = vld [vmem:[%s260 + $0xa8] sm:$0xff]
        %v391 = vld [vmem:[%s260 + $0xb0] sm:$0xff]
        %v392 = vld [vmem:[%s260 + $0xb8] sm:$0xff]
        %v393 = vld [vmem:[%s260 + $0xc0] sm:$0xff]
        %v394 = vld [vmem:[%s260 + $0xc8] sm:$0xff]
        %v395 = vld [vmem:[%s260 + $0xd0] sm:$0xff]
        %v396 = vld [vmem:[%s260 + $0xd8] sm:$0xff]
        %v397 = vld [vmem:[%s260 + $0xe0] sm:$0xff]
        %v398 = vld [vmem:[%s260 + $0xe8] sm:$0xff]
        %v399 = vld [vmem:[%s260 + $0xf0] sm:$0xff]
        %v400 = vld [vmem:[%s260 + $0xf8] sm:$0xff]
        %v401 = vld [vmem:[%s260 + $0x100] sm:$0xff]
        %v402 = vld [vmem:[%s260 + $0x108] sm:$0xff]
        %v403 = vld [vmem:[%s260 + $0x110] sm:$0xff]
        %v404 = vld [vmem:[%s260 + $0x118] sm:$0xff]
        %v405 = vld [vmem:[%s260 + $0x120] sm:$0xff]
        %v406 = vld [vmem:[%s260 + $0x128] sm:$0xff]
        %v407 = vld [vmem:[%s260 + $0x130] sm:$0xff]
        %v408 = vld [vmem:[%s260 + $0x138] sm:$0xff]
        %v409 = vld [vmem:[%s260 + $0x140] sm:$0xff]
        %v410 = vld [vmem:[%s260 + $0x148] sm:$0xff]
        %v411 = vld [vmem:[%s260 + $0x150] sm:$0xff]
        %v412 = vld [vmem:[%s260 + $0x158] sm:$0xff]
        %v413 = vld [vmem:[%s260 + $0x160] sm:$0xff]
        %v414 = vld [vmem:[%s260 + $0x168] sm:$0xff]
        %v415 = vld [vmem:[%s260 + $0x170] sm:$0xff]
        %v416 = vld [vmem:[%s260 + $0x178] sm:$0xff]
        %v417 = vld [vmem:[%s260 + $0x180] sm:$0xff]
        %v418 = vld [vmem:[%s260 + $0x188] sm:$0xff]
        %v419 = vld [vmem:[%s260 + $0x190] sm:$0xff]
        %v420 = vld [vmem:[%s260 + $0x198] sm:$0xff]
        %v421 = vld [vmem:[%s260 + $0x1a0] sm:$0xff]
        %v422 = vld [vmem:[%s260 + $0x1a8] sm:$0xff]
        %v423 = vld [vmem:[%s260 + $0x1b0] sm:$0xff]
        %v424 = vld [vmem:[%s260 + $0x1b8] sm:$0xff]
        %v425 = vld [vmem:[%s260 + $0x1c0] sm:$0xff]
        %v426 = vld [vmem:[%s260 + $0x1c8] sm:$0xff]
        %v427 = vld [vmem:[%s260 + $0x1d0] sm:$0xff]
        %v428 = vld [vmem:[%s260 + $0x1d8] sm:$0xff]
        %v429 = vld [vmem:[%s260 + $0x1e0] sm:$0xff]
        %v430 = vld [vmem:[%s260 + $0x1e8] sm:$0xff]
        %v431 = vld [vmem:[%s260 + $0x1f0] sm:$0xff]
        %v432 = vld [vmem:[%s260 + $0x1f8] sm:$0xff]
        %433 = vmatprep.subr.mxu0 0.0
        %434 = vmatpush1.msra.mxu0 %v305
        %435 = vmatprep.subr.mxu0 0.0
        %436 = vmatpush1.msra.mxu0 %v306
        %437 = vmatprep.subr.mxu0 0.0
        %438 = vmatpush1.msra.mxu0 %v307
        %439 = vmatprep.subr.mxu0 0.0
        %440 = vmatpush1.msra.mxu0 %v308
        %441 = vmatprep.subr.mxu0 0.0
        %442 = vmatpush1.msra.mxu0 %v309
        %443 = vmatprep.subr.mxu0 0.0
        %444 = vmatpush1.msra.mxu0 %v310
        %445 = vmatprep.subr.mxu0 0.0
        %446 = vmatpush1.msra.mxu0 %v311
        %447 = vmatprep.subr.mxu0 0.0
        %448 = vmatpush1.msra.mxu0 %v312
        %449 = vmatprep.subr.mxu0 0.0
        %450 = vmatpush1.msra.mxu0 %v313
        %451 = vmatprep.subr.mxu0 0.0
        %452 = vmatpush1.msra.mxu0 %v314
        %453 = vmatprep.subr.mxu0 0.0
        %454 = vmatpush1.msra.mxu0 %v315
        %455 = vmatprep.subr.mxu0 0.0
        %456 = vmatpush1.msra.mxu0 %v316
        %457 = vmatprep.subr.mxu0 0.0
        %458 = vmatpush1.msra.mxu0 %v317
        %459 = vmatprep.subr.mxu0 0.0
        %460 = vmatpush1.msra.mxu0 %v318
        %461 = vmatprep.subr.mxu0 0.0
        %462 = vmatpush1.msra.mxu0 %v319
        %463 = vmatprep.subr.mxu0 0.0
        %464 = vmatpush1.msra.mxu0 %v320
        %465 = vmatprep.subr.mxu0 0.0
        %466 = vmatpush1.msra.mxu0 %v321
        %467 = vmatprep.subr.mxu0 0.0
        %468 = vmatpush1.msra.mxu0 %v322
        %469 = vmatprep.subr.mxu0 0.0
        %470 = vmatpush1.msra.mxu0 %v323
        %471 = vmatprep.subr.mxu0 0.0
        %472 = vmatpush1.msra.mxu0 %v324
        %473 = vmatprep.subr.mxu0 0.0
        %474 = vmatpush1.msra.mxu0 %v325
        %475 = vmatprep.subr.mxu0 0.0
        %476 = vmatpush1.msra.mxu0 %v326
        %477 = vmatprep.subr.mxu0 0.0
        %478 = vmatpush1.msra.mxu0 %v327
        %479 = vmatprep.subr.mxu0 0.0
        %480 = vmatpush1.msra.mxu0 %v328
        %481 = vmatprep.subr.mxu0 0.0
        %482 = vmatpush1.msra.mxu0 %v329
        %483 = vmatprep.subr.mxu0 0.0
        %484 = vmatpush1.msra.mxu0 %v330
        %485 = vmatprep.subr.mxu0 0.0
        %486 = vmatpush1.msra.mxu0 %v331
        %487 = vmatprep.subr.mxu0 0.0
        %488 = vmatpush1.msra.mxu0 %v332
        %489 = vmatprep.subr.mxu0 0.0
        %490 = vmatpush1.msra.mxu0 %v333
        %491 = vmatprep.subr.mxu0 0.0
        %492 = vmatpush1.msra.mxu0 %v334
        %493 = vmatprep.subr.mxu0 0.0
        %494 = vmatpush1.msra.mxu0 %v335
        %495 = vmatprep.subr.mxu0 0.0
        %496 = vmatpush1.msra.mxu0 %v336
        %497 = vmatprep.mubr.f32.mxu0 %v370
        %498 = vmatmul.mubr.f32.gmra.mrb[0].mxu0 %v369
        %v499 = vpop.f32.mrb[0].mxu0
        %v500 = vadd.f32 0.0, %v499
        %v501 = vpop.f32.mrb[0].mxu0
        %502 = vmatprep.mubr.f32.mxu0 %v372
        %503 = vmatmul.mubr.f32.gmra.mrb[0].mxu0 %v371
        %v504 = vpop.f32.mrb[0].mxu0
        %v505 = vadd.f32 0.0, %v504
        %v506 = vpop.f32.mrb[0].mxu0
        %507 = vmatprep.mubr.f32.mxu0 %v374
        %508 = vmatmul.mubr.f32.gmra.mrb[0].mxu0 %v373
        %v509 = vpop.f32.mrb[0].mxu0
        %v510 = vadd.f32 0.0, %v509
        %v511 = vpop.f32.mrb[0].mxu0
        %512 = vmatprep.mubr.f32.mxu0 %v376
        %513 = vmatmul.mubr.f32.gmra.mrb[0].mxu0 %v375
        %v514 = vpop.f32.mrb[0].mxu0
        %v515 = vadd.f32 0.0, %v514
        %v516 = vpop.f32.mrb[0].mxu0
        %517 = vmatprep.mubr.f32.mxu0 %v378
        %518 = vmatmul.mubr.f32.gmra.mrb[0].mxu0 %v377
        %v519 = vpop.f32.mrb[0].mxu0
        %v520 = vadd.f32 0.0, %v519
        %v521 = vpop.f32.mrb[0].mxu0
        %522 = vmatprep.mubr.f32.mxu0 %v380
        %523 = vmatmul.mubr.f32.gmra.mrb[0].mxu0 %v379
        %v524 = vpop.f32.mrb[0].mxu0
        %v525 = vadd.f32 0.0, %v524
        %v526 = vpop.f32.mrb[0].mxu0
        %527 = vmatprep.mubr.f32.mxu0 %v382
        %528 = vmatmul.mubr.f32.gmra.mrb[0].mxu0 %v381
        %v529 = vpop.f32.mrb[0].mxu0
        %v530 = vadd.f32 0.0, %v529
        %v531 = vpop.f32.mrb[0].mxu0
        %532 = vmatprep.mubr.f32.mxu0 %v384
        %533 = vmatmul.mubr.f32.gmra.mrb[0].mxu0 %v383
        %v534 = vpop.f32.mrb[0].mxu0
        %v535 = vadd.f32 0.0, %v534
        %v536 = vpop.f32.mrb[0].mxu0
        %537 = vmatprep.mubr.f32.mxu0 %v386
        %538 = vmatmul.mubr.f32.gmra.mrb[0].mxu0 %v385
        %v539 = vpop.f32.mrb[0].mxu0
        %v540 = vadd.f32 0.0, %v539
        %v541 = vpop.f32.mrb[0].mxu0
        %542 = vmatprep.mubr.f32.mxu0 %v388
        %543 = vmatmul.mubr.f32.gmra.mrb[0].mxu0 %v387
        %v544 = vpop.f32.mrb[0].mxu0
        %v545 = vadd.f32 0.0, %v544
        %v546 = vpop.f32.mrb[0].mxu0
        %547 = vmatprep.mubr.f32.mxu0 %v390
        %548 = vmatmul.mubr.f32.gmra.mrb[0].mxu0 %v389
        %v549 = vpop.f32.mrb[0].mxu0
        %v550 = vadd.f32 0.0, %v549
        %v551 = vpop.f32.mrb[0].mxu0
        %552 = vmatprep.mubr.f32.mxu0 %v392
        %553 = vmatmul.mubr.f32.gmra.mrb[0].mxu0 %v391
        %v554 = vpop.f32.mrb[0].mxu0
        %v555 = vadd.f32 0.0, %v554
        %v556 = vpop.f32.mrb[0].mxu0
        %557 = vmatprep.mubr.f32.mxu0 %v394
        %558 = vmatmul.mubr.f32.gmra.mrb[0].mxu0 %v393
        %v559 = vpop.f32.mrb[0].mxu0
        %v560 = vadd.f32 0.0, %v559
        %v561 = vpop.f32.mrb[0].mxu0
        %562 = vmatprep.mubr.f32.mxu0 %v396
        %563 = vmatmul.mubr.f32.gmra.mrb[0].mxu0 %v395
        %v564 = vpop.f32.mrb[0].mxu0
        %v565 = vadd.f32 0.0, %v564
        %v566 = vpop.f32.mrb[0].mxu0
        %567 = vmatprep.mubr.f32.mxu0 %v398
        %568 = vmatmul.mubr.f32.gmra.mrb[0].mxu0 %v397
        %v569 = vpop.f32.mrb[0].mxu0
        %v570 = vadd.f32 0.0, %v569
        %v571 = vpop.f32.mrb[0].mxu0
        %572 = vmatprep.mubr.f32.mxu0 %v400
        %573 = vmatmul.mubr.f32.gmra.mrb[0].mxu0 %v399
        %v574 = vpop.f32.mrb[0].mxu0
        %v575 = vadd.f32 0.0, %v574
        %v576 = vpop.f32.mrb[0].mxu0
        %577 = vmatprep.mubr.f32.mxu0 %v402
        %578 = vmatmul.mubr.f32.gmra.mrb[0].mxu0 %v401
        %v579 = vpop.f32.mrb[0].mxu0
        %v580 = vadd.f32 0.0, %v579
        %v581 = vpop.f32.mrb[0].mxu0
        %582 = vmatprep.mubr.f32.mxu0 %v404
        %583 = vmatmul.mubr.f32.gmra.mrb[0].mxu0 %v403
        %v584 = vpop.f32.mrb[0].mxu0
        %v585 = vadd.f32 0.0, %v584
        %v586 = vpop.f32.mrb[0].mxu0
        %587 = vmatprep.mubr.f32.mxu0 %v406
        %588 = vmatmul.mubr.f32.gmra.mrb[0].mxu0 %v405
        %v589 = vpop.f32.mrb[0].mxu0
        %v590 = vadd.f32 0.0, %v589
        %v591 = vpop.f32.mrb[0].mxu0
        %592 = vmatprep.mubr.f32.mxu0 %v408
        %593 = vmatmul.mubr.f32.gmra.mrb[0].mxu0 %v407
        %v594 = vpop.f32.mrb[0].mxu0
        %v595 = vadd.f32 0.0, %v594
        %v596 = vpop.f32.mrb[0].mxu0
        %597 = vmatprep.mubr.f32.mxu0 %v410
        %598 = vmatmul.mubr.f32.gmra.mrb[0].mxu0 %v409
        %v599 = vpop.f32.mrb[0].mxu0
        %v600 = vadd.f32 0.0, %v599
        %v601 = vpop.f32.mrb[0].mxu0
        %602 = vmatprep.mubr.f32.mxu0 %v412
        %603 = vmatmul.mubr.f32.gmra.mrb[0].mxu0 %v411
        %v604 = vpop.f32.mrb[0].mxu0
        %v605 = vadd.f32 0.0, %v604
        %v606 = vpop.f32.mrb[0].mxu0
        %607 = vmatprep.mubr.f32.mxu0 %v414
        %608 = vmatmul.mubr.f32.gmra.mrb[0].mxu0 %v413
        %v609 = vpop.f32.mrb[0].mxu0
        %v610 = vadd.f32 0.0, %v609
        %v611 = vpop.f32.mrb[0].mxu0
        %612 = vmatprep.mubr.f32.mxu0 %v416
        %613 = vmatmul.mubr.f32.gmra.mrb[0].mxu0 %v415
        %v614 = vpop.f32.mrb[0].mxu0
        %v615 = vadd.f32 0.0, %v614
        %v616 = vpop.f32.mrb[0].mxu0
        %617 = vmatprep.mubr.f32.mxu0 %v418
        %618 = vmatmul.mubr.f32.gmra.mrb[0].mxu0 %v417
        %v619 = vpop.f32.mrb[0].mxu0
        %v620 = vadd.f32 0.0, %v619
        %v621 = vpop.f32.mrb[0].mxu0
        %622 = vmatprep.mubr.f32.mxu0 %v420
        %623 = vmatmul.mubr.f32.gmra.mrb[0].mxu0 %v419
        %v624 = vpop.f32.mrb[0].mxu0
        %v625 = vadd.f32 0.0, %v624
        %v626 = vpop.f32.mrb[0].mxu0
        %627 = vmatprep.mubr.f32.mxu0 %v422
        %628 = vmatmul.mubr.f32.gmra.mrb[0].mxu0 %v421
        %v629 = vpop.f32.mrb[0].mxu0
        %v630 = vadd.f32 0.0, %v629
        %v631 = vpop.f32.mrb[0].mxu0
        %632 = vmatprep.mubr.f32.mxu0 %v424
        %633 = vmatmul.mubr.f32.gmra.mrb[0].mxu0 %v423
        %v634 = vpop.f32.mrb[0].mxu0
        %v635 = vadd.f32 0.0, %v634
        %v636 = vpop.f32.mrb[0].mxu0
        %637 = vmatprep.mubr.f32.mxu0 %v426
        %638 = vmatmul.mubr.f32.gmra.mrb[0].mxu0 %v425
        %v639 = vpop.f32.mrb[0].mxu0
        %v640 = vadd.f32 0.0, %v639
        %v641 = vpop.f32.mrb[0].mxu0
        %642 = vmatprep.mubr.f32.mxu0 %v428
        %643 = vmatmul.mubr.f32.gmra.mrb[0].mxu0 %v427
        %v644 = vpop.f32.mrb[0].mxu0
        %v645 = vadd.f32 0.0, %v644
        %v646 = vpop.f32.mrb[0].mxu0
        %647 = vmatprep.mubr.f32.mxu0 %v430
        %648 = vmatmul.mubr.f32.gmra.mrb[0].mxu0 %v429
        %v649 = vpop.f32.mrb[0].mxu0
        %v650 = vadd.f32 0.0, %v649
        %v651 = vpop.f32.mrb[0].mxu0
        %652 = vmatprep.mubr.f32.mxu0 %v432
        %653 = vmatmul.mubr.f32.gmra.mrb[0].mxu0 %v431
        %v654 = vpop.f32.mrb[0].mxu0
        %v655 = vadd.f32 0.0, %v654
        %v656 = vpop.f32.mrb[0].mxu0
        %657 = vdwg.mxu0
        %v658 = vld [vmem:[#allocation2] sm:$0xff]
        %v659 = vld [vmem:[#allocation2 + $0x8] sm:$0xff]
        %v660 = vld [vmem:[#allocation2 + $0x10] sm:$0xff]
        %v661 = vld [vmem:[#allocation2 + $0x18] sm:$0xff]
        %v662 = vld [vmem:[#allocation2 + $0x20] sm:$0xff]
        %v663 = vld [vmem:[#allocation2 + $0x28] sm:$0xff]
        %v664 = vld [vmem:[#allocation2 + $0x30] sm:$0xff]
        %v665 = vld [vmem:[#allocation2 + $0x38] sm:$0xff]
        %v666 = vld [vmem:[#allocation2 + $0x40] sm:$0xff]
        %v667 = vld [vmem:[#allocation2 + $0x48] sm:$0xff]
        %v668 = vld [vmem:[#allocation2 + $0x50] sm:$0xff]
        %v669 = vld [vmem:[#allocation2 + $0x58] sm:$0xff]
        %v670 = vld [vmem:[#allocation2 + $0x60] sm:$0xff]
        %v671 = vld [vmem:[#allocation2 + $0x68] sm:$0xff]
        %v672 = vld [vmem:[#allocation2 + $0x70] sm:$0xff]
        %v673 = vld [vmem:[#allocation2 + $0x78] sm:$0xff]
        %v674 = vld [vmem:[#allocation2 + $0x80] sm:$0xff]
        %v675 = vld [vmem:[#allocation2 + $0x88] sm:$0xff]
        %v676 = vld [vmem:[#allocation2 + $0x90] sm:$0xff]
        %v677 = vld [vmem:[#allocation2 + $0x98] sm:$0xff]
        %v678 = vld [vmem:[#allocation2 + $0xa0] sm:$0xff]
        %v679 = vld [vmem:[#allocation2 + $0xa8] sm:$0xff]
        %v680 = vld [vmem:[#allocation2 + $0xb0] sm:$0xff]
        %v681 = vld [vmem:[#allocation2 + $0xb8] sm:$0xff]
        %v682 = vld [vmem:[#allocation2 + $0xc0] sm:$0xff]
        %v683 = vld [vmem:[#allocation2 + $0xc8] sm:$0xff]
        %v684 = vld [vmem:[#allocation2 + $0xd0] sm:$0xff]
        %v685 = vld [vmem:[#allocation2 + $0xd8] sm:$0xff]
        %v686 = vld [vmem:[#allocation2 + $0xe0] sm:$0xff]
        %v687 = vld [vmem:[#allocation2 + $0xe8] sm:$0xff]
        %v688 = vld [vmem:[#allocation2 + $0xf0] sm:$0xff]
        %v689 = vld [vmem:[#allocation2 + $0xf8] sm:$0xff]
        %v690 = vld [vmem:[#allocation6] sm:$0xf]
        %vm691 = vcmask 31744
        %v693 = vsel %vm691, %v500, 0
        %v696 = vsel %vm691, %v505, 0
        %v699 = vsel %vm691, %v510, 0
        %v702 = vsel %vm691, %v515, 0
        %v705 = vsel %vm691, %v520, 0
        %v708 = vsel %vm691, %v525, 0
        %v711 = vsel %vm691, %v530, 0
        %v714 = vsel %vm691, %v535, 0
        %v717 = vsel %vm691, %v540, 0
        %v720 = vsel %vm691, %v545, 0
        %v723 = vsel %vm691, %v550, 0
        %v726 = vsel %vm691, %v555, 0
        %v729 = vsel %vm691, %v560, 0
        %v732 = vsel %vm691, %v565, 0
        %v735 = vsel %vm691, %v570, 0
        %v738 = vsel %vm691, %v575, 0
        %v741 = vsel %vm691, %v580, 0
        %v744 = vsel %vm691, %v585, 0
        %v747 = vsel %vm691, %v590, 0
        %v750 = vsel %vm691, %v595, 0
        %v753 = vsel %vm691, %v600, 0
        %v756 = vsel %vm691, %v605, 0
        %v759 = vsel %vm691, %v610, 0
        %v762 = vsel %vm691, %v615, 0
        %v765 = vsel %vm691, %v620, 0
        %v768 = vsel %vm691, %v625, 0
        %v771 = vsel %vm691, %v630, 0
        %v774 = vsel %vm691, %v635, 0
        %v777 = vsel %vm691, %v640, 0
        %v780 = vsel %vm691, %v645, 0
        %v783 = vsel %vm691, %v650, 0
        %v786 = vsel %vm691, %v655, 0
        %vm788 = vcmask 1043456
        %v790 = vsel %vm788, %v690, 0
        %792 = vmatprep.subr.mxu0 0.0
        %793 = vmatpush1.msra.mxu0 %v790
        %794 = vmatprep.subr.mxu0 0.0
        %795 = vmatpush1.msra.mxu0 0.0
        %796 = vmatprep.subr.mxu0 0.0
        %797 = vmatpush1.msra.mxu0 0.0
        %798 = vmatprep.subr.mxu0 0.0
        %799 = vmatpush1.msra.mxu0 0.0
        %800 = vmatprep.subr.mxu0 0.0
        %801 = vmatpush1.msra.mxu0 0.0
        %802 = vmatprep.subr.mxu0 0.0
        %803 = vmatpush1.msra.mxu0 0.0
        %804 = vmatprep.subr.mxu0 0.0
        %805 = vmatpush1.msra.mxu0 0.0
        %806 = vmatprep.subr.mxu0 0.0
        %807 = vmatpush1.msra.mxu0 0.0
        %808 = vmatprep.subr.mxu0 0.0
        %809 = vmatpush1.msra.mxu0 0.0
        %810 = vmatprep.subr.mxu0 0.0
        %811 = vmatpush1.msra.mxu0 0.0
        %812 = vmatprep.subr.mxu0 0.0
        %813 = vmatpush1.msra.mxu0 0.0
        %814 = vmatprep.subr.mxu0 0.0
        %815 = vmatpush1.msra.mxu0 0.0
        %816 = vmatprep.subr.mxu0 0.0
        %817 = vmatpush1.msra.mxu0 0.0
        %818 = vmatprep.subr.mxu0 0.0
        %819 = vmatpush1.msra.mxu0 0.0
        %820 = vmatprep.subr.mxu0 0.0
        %821 = vmatpush1.msra.mxu0 0.0
        %822 = vmatprep.subr.mxu0 0.0
        %823 = vmatpush1.msra.mxu0 0.0
        %824 = vmatprep.subr.mxu0 0.0
        %825 = vmatpush1.msra.mxu0 0.0
        %826 = vmatprep.subr.mxu0 0.0
        %827 = vmatpush1.msra.mxu0 0.0
        %828 = vmatprep.subr.mxu0 0.0
        %829 = vmatpush1.msra.mxu0 0.0
        %830 = vmatprep.subr.mxu0 0.0
        %831 = vmatpush1.msra.mxu0 0.0
        %832 = vmatprep.subr.mxu0 0.0
        %833 = vmatpush1.msra.mxu0 0.0
        %834 = vmatprep.subr.mxu0 0.0
        %835 = vmatpush1.msra.mxu0 0.0
        %836 = vmatprep.subr.mxu0 0.0
        %837 = vmatpush1.msra.mxu0 0.0
        %838 = vmatprep.subr.mxu0 0.0
        %839 = vmatpush1.msra.mxu0 0.0
        %840 = vmatprep.subr.mxu0 0.0
        %841 = vmatpush1.msra.mxu0 0.0
        %842 = vmatprep.subr.mxu0 0.0
        %843 = vmatpush1.msra.mxu0 0.0
        %844 = vmatprep.subr.mxu0 0.0
        %845 = vmatpush1.msra.mxu0 0.0
        %846 = vmatprep.subr.mxu0 0.0
        %847 = vmatpush1.msra.mxu0 0.0
        %848 = vmatprep.subr.mxu0 0.0
        %849 = vmatpush1.msra.mxu0 0.0
        %850 = vmatprep.subr.mxu0 0.0
        %851 = vmatpush1.msra.mxu0 0.0
        %852 = vmatprep.subr.mxu0 0.0
        %853 = vmatpush1.msra.mxu0 0.0
        %854 = vmatprep.subr.mxu0 0.0
        %855 = vmatpush1.msra.mxu0 0.0
        %856 = vmatprep.mubr.f32.mxu0 0.0
        %857 = vmatmul.mubr.f32.gmra.mrb[0].mxu0 %v693
        %v858 = vpop.f32.mrb[0].mxu0
        %v859 = vadd.f32 0.0, %v858
        %v860 = vpop.f32.mrb[0].mxu0
        %861 = vmatprep.mubr.f32.mxu0 0.0
        %862 = vmatmul.mubr.f32.gmra.mrb[0].mxu0 %v696
        %v863 = vpop.f32.mrb[0].mxu0
        %v864 = vadd.f32 0.0, %v863
        %v865 = vpop.f32.mrb[0].mxu0
        %866 = vmatprep.mubr.f32.mxu0 0.0
        %867 = vmatmul.mubr.f32.gmra.mrb[0].mxu0 %v699
        %v868 = vpop.f32.mrb[0].mxu0
        %v869 = vadd.f32 0.0, %v868
        %v870 = vpop.f32.mrb[0].mxu0
        %871 = vmatprep.mubr.f32.mxu0 0.0
        %872 = vmatmul.mubr.f32.gmra.mrb[0].mxu0 %v702
        %v873 = vpop.f32.mrb[0].mxu0
        %v874 = vadd.f32 0.0, %v873
        %v875 = vpop.f32.mrb[0].mxu0
        %876 = vmatprep.mubr.f32.mxu0 0.0
        %877 = vmatmul.mubr.f32.gmra.mrb[0].mxu0 %v705
        %v878 = vpop.f32.mrb[0].mxu0
        %v879 = vadd.f32 0.0, %v878
        %v880 = vpop.f32.mrb[0].mxu0
        %881 = vmatprep.mubr.f32.mxu0 0.0
        %882 = vmatmul.mubr.f32.gmra.mrb[0].mxu0 %v708
        %v883 = vpop.f32.mrb[0].mxu0
        %v884 = vadd.f32 0.0, %v883
        %v885 = vpop.f32.mrb[0].mxu0
        %886 = vmatprep.mubr.f32.mxu0 0.0
        %887 = vmatmul.mubr.f32.gmra.mrb[0].mxu0 %v711
        %v888 = vpop.f32.mrb[0].mxu0
        %v889 = vadd.f32 0.0, %v888
        %v890 = vpop.f32.mrb[0].mxu0
        %891 = vmatprep.mubr.f32.mxu0 0.0
        %892 = vmatmul.mubr.f32.gmra.mrb[0].mxu0 %v714
        %v893 = vpop.f32.mrb[0].mxu0
        %v894 = vadd.f32 0.0, %v893
        %v895 = vpop.f32.mrb[0].mxu0
        %896 = vmatprep.mubr.f32.mxu0 0.0
        %897 = vmatmul.mubr.f32.gmra.mrb[0].mxu0 %v717
        %v898 = vpop.f32.mrb[0].mxu0
        %v899 = vadd.f32 0.0, %v898
        %v900 = vpop.f32.mrb[0].mxu0
        %901 = vmatprep.mubr.f32.mxu0 0.0
        %902 = vmatmul.mubr.f32.gmra.mrb[0].mxu0 %v720
        %v903 = vpop.f32.mrb[0].mxu0
        %v904 = vadd.f32 0.0, %v903
        %v905 = vpop.f32.mrb[0].mxu0
        %906 = vmatprep.mubr.f32.mxu0 0.0
        %907 = vmatmul.mubr.f32.gmra.mrb[0].mxu0 %v723
        %v908 = vpop.f32.mrb[0].mxu0
        %v909 = vadd.f32 0.0, %v908
        %v910 = vpop.f32.mrb[0].mxu0
        %911 = vmatprep.mubr.f32.mxu0 0.0
        %912 = vmatmul.mubr.f32.gmra.mrb[0].mxu0 %v726
        %v913 = vpop.f32.mrb[0].mxu0
        %v914 = vadd.f32 0.0, %v913
        %v915 = vpop.f32.mrb[0].mxu0
        %916 = vmatprep.mubr.f32.mxu0 0.0
        %917 = vmatmul.mubr.f32.gmra.mrb[0].mxu0 %v729
        %v918 = vpop.f32.mrb[0].mxu0
        %v919 = vadd.f32 0.0, %v918
        %v920 = vpop.f32.mrb[0].mxu0
        %921 = vmatprep.mubr.f32.mxu0 0.0
        %922 = vmatmul.mubr.f32.gmra.mrb[0].mxu0 %v732
        %v923 = vpop.f32.mrb[0].mxu0
        %v924 = vadd.f32 0.0, %v923
        %v925 = vpop.f32.mrb[0].mxu0
        %926 = vmatprep.mubr.f32.mxu0 0.0
        %927 = vmatmul.mubr.f32.gmra.mrb[0].mxu0 %v735
        %v928 = vpop.f32.mrb[0].mxu0
        %v929 = vadd.f32 0.0, %v928
        %v930 = vpop.f32.mrb[0].mxu0
        %931 = vmatprep.mubr.f32.mxu0 0.0
        %932 = vmatmul.mubr.f32.gmra.mrb[0].mxu0 %v738
        %v933 = vpop.f32.mrb[0].mxu0
        %v934 = vadd.f32 0.0, %v933
        %v935 = vpop.f32.mrb[0].mxu0
        %936 = vmatprep.mubr.f32.mxu0 0.0
        %937 = vmatmul.mubr.f32.gmra.mrb[0].mxu0 %v741
        %v938 = vpop.f32.mrb[0].mxu0
        %v939 = vadd.f32 0.0, %v938
        %v940 = vpop.f32.mrb[0].mxu0
        %941 = vmatprep.mubr.f32.mxu0 0.0
        %942 = vmatmul.mubr.f32.gmra.mrb[0].mxu0 %v744
        %v943 = vpop.f32.mrb[0].mxu0
        %v944 = vadd.f32 0.0, %v943
        %v945 = vpop.f32.mrb[0].mxu0
        %946 = vmatprep.mubr.f32.mxu0 0.0
        %947 = vmatmul.mubr.f32.gmra.mrb[0].mxu0 %v747
        %v948 = vpop.f32.mrb[0].mxu0
        %v949 = vadd.f32 0.0, %v948
        %v950 = vpop.f32.mrb[0].mxu0
        %951 = vmatprep.mubr.f32.mxu0 0.0
        %952 = vmatmul.mubr.f32.gmra.mrb[0].mxu0 %v750
        %v953 = vpop.f32.mrb[0].mxu0
        %v954 = vadd.f32 0.0, %v953
        %v955 = vpop.f32.mrb[0].mxu0
        %956 = vmatprep.mubr.f32.mxu0 0.0
        %957 = vmatmul.mubr.f32.gmra.mrb[0].mxu0 %v753
        %v958 = vpop.f32.mrb[0].mxu0
        %v959 = vadd.f32 0.0, %v958
        %v960 = vpop.f32.mrb[0].mxu0
        %961 = vmatprep.mubr.f32.mxu0 0.0
        %962 = vmatmul.mubr.f32.gmra.mrb[0].mxu0 %v756
        %v963 = vpop.f32.mrb[0].mxu0
        %v964 = vadd.f32 0.0, %v963
        %v965 = vpop.f32.mrb[0].mxu0
        %966 = vmatprep.mubr.f32.mxu0 0.0
        %967 = vmatmul.mubr.f32.gmra.mrb[0].mxu0 %v759
        %v968 = vpop.f32.mrb[0].mxu0
        %v969 = vadd.f32 0.0, %v968
        %v970 = vpop.f32.mrb[0].mxu0
        %971 = vmatprep.mubr.f32.mxu0 0.0
        %972 = vmatmul.mubr.f32.gmra.mrb[0].mxu0 %v762
        %v973 = vpop.f32.mrb[0].mxu0
        %v974 = vadd.f32 0.0, %v973
        %v975 = vpop.f32.mrb[0].mxu0
        %976 = vmatprep.mubr.f32.mxu0 0.0
        %977 = vmatmul.mubr.f32.gmra.mrb[0].mxu0 %v765
        %v978 = vpop.f32.mrb[0].mxu0
        %v979 = vadd.f32 0.0, %v978
        %v980 = vpop.f32.mrb[0].mxu0
        %981 = vmatprep.mubr.f32.mxu0 0.0
        %982 = vmatmul.mubr.f32.gmra.mrb[0].mxu0 %v768
        %v983 = vpop.f32.mrb[0].mxu0
        %v984 = vadd.f32 0.0, %v983
        %v985 = vpop.f32.mrb[0].mxu0
        %986 = vmatprep.mubr.f32.mxu0 0.0
        %987 = vmatmul.mubr.f32.gmra.mrb[0].mxu0 %v771
        %v988 = vpop.f32.mrb[0].mxu0
        %v989 = vadd.f32 0.0, %v988
        %v990 = vpop.f32.mrb[0].mxu0
        %991 = vmatprep.mubr.f32.mxu0 0.0
        %992 = vmatmul.mubr.f32.gmra.mrb[0].mxu0 %v774
        %v993 = vpop.f32.mrb[0].mxu0
        %v994 = vadd.f32 0.0, %v993
        %v995 = vpop.f32.mrb[0].mxu0
        %996 = vmatprep.mubr.f32.mxu0 0.0
        %997 = vmatmul.mubr.f32.gmra.mrb[0].mxu0 %v777
        %v998 = vpop.f32.mrb[0].mxu0
        %v999 = vadd.f32 0.0, %v998
        %v1000 = vpop.f32.mrb[0].mxu0
        %1001 = vmatprep.mubr.f32.mxu0 0.0
        %1002 = vmatmul.mubr.f32.gmra.mrb[0].mxu0 %v780
        %v1003 = vpop.f32.mrb[0].mxu0
        %v1004 = vadd.f32 0.0, %v1003
        %v1005 = vpop.f32.mrb[0].mxu0
        %1006 = vmatprep.mubr.f32.mxu0 0.0
        %1007 = vmatmul.mubr.f32.gmra.mrb[0].mxu0 %v783
        %v1008 = vpop.f32.mrb[0].mxu0
        %v1009 = vadd.f32 0.0, %v1008
        %v1010 = vpop.f32.mrb[0].mxu0
        %1011 = vmatprep.mubr.f32.mxu0 0.0
        %1012 = vmatmul.mubr.f32.gmra.mrb[0].mxu0 %v786
        %v1013 = vpop.f32.mrb[0].mxu0
        %v1014 = vadd.f32 0.0, %v1013
        %v1015 = vpop.f32.mrb[0].mxu0
        %1016 = vdwg.mxu0
        %v1017 = vadd.f32 %v658, %v859
        %v1018 = vadd.f32 %v659, %v864
        %v1019 = vadd.f32 %v660, %v869
        %v1020 = vadd.f32 %v661, %v874
        %v1021 = vadd.f32 %v662, %v879
        %v1022 = vadd.f32 %v663, %v884
        %v1023 = vadd.f32 %v664, %v889
        %v1024 = vadd.f32 %v665, %v894
        %v1025 = vadd.f32 %v666, %v899
        %v1026 = vadd.f32 %v667, %v904
        %v1027 = vadd.f32 %v668, %v909
        %v1028 = vadd.f32 %v669, %v914
        %v1029 = vadd.f32 %v670, %v919
        %v1030 = vadd.f32 %v671, %v924
        %v1031 = vadd.f32 %v672, %v929
        %v1032 = vadd.f32 %v673, %v934
        %v1033 = vadd.f32 %v674, %v939
        %v1034 = vadd.f32 %v675, %v944
        %v1035 = vadd.f32 %v676, %v949
        %v1036 = vadd.f32 %v677, %v954
        %v1037 = vadd.f32 %v678, %v959
        %v1038 = vadd.f32 %v679, %v964
        %v1039 = vadd.f32 %v680, %v969
        %v1040 = vadd.f32 %v681, %v974
        %v1041 = vadd.f32 %v682, %v979
        %v1042 = vadd.f32 %v683, %v984
        %v1043 = vadd.f32 %v684, %v989
        %v1044 = vadd.f32 %v685, %v994
        %v1045 = vadd.f32 %v686, %v999
        %v1046 = vadd.f32 %v687, %v1004
        %v1047 = vadd.f32 %v688, %v1009
        %v1048 = vadd.f32 %v689, %v1014
        %1049 = vst [vmem:[#allocation2] sm:$0xff] %v1017
        %1050 = vst [vmem:[#allocation2 + $0x8] sm:$0xff] %v1018
        %1051 = vst [vmem:[#allocation2 + $0x10] sm:$0xff] %v1019
        %1052 = vst [vmem:[#allocation2 + $0x18] sm:$0xff] %v1020
        %1053 = vst [vmem:[#allocation2 + $0x20] sm:$0xff] %v1021
        %1054 = vst [vmem:[#allocation2 + $0x28] sm:$0xff] %v1022
        %1055 = vst [vmem:[#allocation2 + $0x30] sm:$0xff] %v1023
        %1056 = vst [vmem:[#allocation2 + $0x38] sm:$0xff] %v1024
        %1057 = vst [vmem:[#allocation2 + $0x40] sm:$0xff] %v1025
        %1058 = vst [vmem:[#allocation2 + $0x48] sm:$0xff] %v1026
        %1059 = vst [vmem:[#allocation2 + $0x50] sm:$0xff] %v1027
        %1060 = vst [vmem:[#allocation2 + $0x58] sm:$0xff] %v1028
        %1061 = vst [vmem:[#allocation2 + $0x60] sm:$0xff] %v1029
        %1062 = vst [vmem:[#allocation2 + $0x68] sm:$0xff] %v1030
        %1063 = vst [vmem:[#allocation2 + $0x70] sm:$0xff] %v1031
        %1064 = vst [vmem:[#allocation2 + $0x78] sm:$0xff] %v1032
        %1065 = vst [vmem:[#allocation2 + $0x80] sm:$0xff] %v1033
        %1066 = vst [vmem:[#allocation2 + $0x88] sm:$0xff] %v1034
        %1067 = vst [vmem:[#allocation2 + $0x90] sm:$0xff] %v1035
        %1068 = vst [vmem:[#allocation2 + $0x98] sm:$0xff] %v1036
        %1069 = vst [vmem:[#allocation2 + $0xa0] sm:$0xff] %v1037
        %1070 = vst [vmem:[#allocation2 + $0xa8] sm:$0xff] %v1038
        %1071 = vst [vmem:[#allocation2 + $0xb0] sm:$0xff] %v1039
        %1072 = vst [vmem:[#allocation2 + $0xb8] sm:$0xff] %v1040
        %1073 = vst [vmem:[#allocation2 + $0xc0] sm:$0xff] %v1041
        %1074 = vst [vmem:[#allocation2 + $0xc8] sm:$0xff] %v1042
        %1075 = vst [vmem:[#allocation2 + $0xd0] sm:$0xff] %v1043
        %1076 = vst [vmem:[#allocation2 + $0xd8] sm:$0xff] %v1044
        %1077 = vst [vmem:[#allocation2 + $0xe0] sm:$0xff] %v1045
        %1078 = vst [vmem:[#allocation2 + $0xe8] sm:$0xff] %v1046
        %1079 = vst [vmem:[#allocation2 + $0xf0] sm:$0xff] %v1047
        %1080 = vst [vmem:[#allocation2 + $0xf8] sm:$0xff] %v1048
        %s1081 = scalar_lea.vmem %s260, 512 [#allocation3]
        %v1082 = vld [vmem:[%s1081] sm:$0xff]
        %v1083 = vld [vmem:[%s1081 + $0x8] sm:$0xff]
        %v1084 = vld [vmem:[%s1081 + $0x10] sm:$0xff]
        %v1085 = vld [vmem:[%s1081 + $0x18] sm:$0xff]
        %v1086 = vld [vmem:[%s1081 + $0x20] sm:$0xff]
        %v1087 = vld [vmem:[%s1081 + $0x28] sm:$0xff]
        %v1088 = vld [vmem:[%s1081 + $0x30] sm:$0xff]
        %v1089 = vld [vmem:[%s1081 + $0x38] sm:$0xff]
        %v1090 = vld [vmem:[%s1081 + $0x40] sm:$0xff]
        %v1091 = vld [vmem:[%s1081 + $0x48] sm:$0xff]
        %v1092 = vld [vmem:[%s1081 + $0x50] sm:$0xff]
        %v1093 = vld [vmem:[%s1081 + $0x58] sm:$0xff]
        %v1094 = vld [vmem:[%s1081 + $0x60] sm:$0xff]
        %v1095 = vld [vmem:[%s1081 + $0x68] sm:$0xff]
        %v1096 = vld [vmem:[%s1081 + $0x70] sm:$0xff]
        %v1097 = vld [vmem:[%s1081 + $0x78] sm:$0xff]
        %v1098 = vld [vmem:[%s1081 + $0x80] sm:$0xff]
        %v1099 = vld [vmem:[%s1081 + $0x88] sm:$0xff]
        %v1100 = vld [vmem:[%s1081 + $0x90] sm:$0xff]
        %v1101 = vld [vmem:[%s1081 + $0x98] sm:$0xff]
        %v1102 = vld [vmem:[%s1081 + $0xa0] sm:$0xff]
        %v1103 = vld [vmem:[%s1081 + $0xa8] sm:$0xff]
        %v1104 = vld [vmem:[%s1081 + $0xb0] sm:$0xff]
        %v1105 = vld [vmem:[%s1081 + $0xb8] sm:$0xff]
        %v1106 = vld [vmem:[%s1081 + $0xc0] sm:$0xff]
        %v1107 = vld [vmem:[%s1081 + $0xc8] sm:$0xff]
        %v1108 = vld [vmem:[%s1081 + $0xd0] sm:$0xff]
        %v1109 = vld [vmem:[%s1081 + $0xd8] sm:$0xff]
        %v1110 = vld [vmem:[%s1081 + $0xe0] sm:$0xff]
        %v1111 = vld [vmem:[%s1081 + $0xe8] sm:$0xff]
        %v1112 = vld [vmem:[%s1081 + $0xf0] sm:$0xff]
        %v1113 = vld [vmem:[%s1081 + $0xf8] sm:$0xff]
        %v1114 = vld [vmem:[%s1081 + $0x100] sm:$0xff]
        %v1115 = vld [vmem:[%s1081 + $0x108] sm:$0xff]
        %v1116 = vld [vmem:[%s1081 + $0x110] sm:$0xff]
        %v1117 = vld [vmem:[%s1081 + $0x118] sm:$0xff]
        %v1118 = vld [vmem:[%s1081 + $0x120] sm:$0xff]
        %v1119 = vld [vmem:[%s1081 + $0x128] sm:$0xff]
        %v1120 = vld [vmem:[%s1081 + $0x130] sm:$0xff]
        %v1121 = vld [vmem:[%s1081 + $0x138] sm:$0xff]
        %v1122 = vld [vmem:[%s1081 + $0x140] sm:$0xff]
        %v1123 = vld [vmem:[%s1081 + $0x148] sm:$0xff]
        %v1124 = vld [vmem:[%s1081 + $0x150] sm:$0xff]
        %v1125 = vld [vmem:[%s1081 + $0x158] sm:$0xff]
        %v1126 = vld [vmem:[%s1081 + $0x160] sm:$0xff]
        %v1127 = vld [vmem:[%s1081 + $0x168] sm:$0xff]
        %v1128 = vld [vmem:[%s1081 + $0x170] sm:$0xff]
        %v1129 = vld [vmem:[%s1081 + $0x178] sm:$0xff]
        %v1130 = vld [vmem:[%s1081 + $0x180] sm:$0xff]
        %v1131 = vld [vmem:[%s1081 + $0x188] sm:$0xff]
        %v1132 = vld [vmem:[%s1081 + $0x190] sm:$0xff]
        %v1133 = vld [vmem:[%s1081 + $0x198] sm:$0xff]
        %v1134 = vld [vmem:[%s1081 + $0x1a0] sm:$0xff]
        %v1135 = vld [vmem:[%s1081 + $0x1a8] sm:$0xff]
        %v1136 = vld [vmem:[%s1081 + $0x1b0] sm:$0xff]
        %v1137 = vld [vmem:[%s1081 + $0x1b8] sm:$0xff]
        %v1138 = vld [vmem:[%s1081 + $0x1c0] sm:$0xff]
        %v1139 = vld [vmem:[%s1081 + $0x1c8] sm:$0xff]
        %v1140 = vld [vmem:[%s1081 + $0x1d0] sm:$0xff]
        %v1141 = vld [vmem:[%s1081 + $0x1d8] sm:$0xff]
        %v1142 = vld [vmem:[%s1081 + $0x1e0] sm:$0xff]
        %v1143 = vld [vmem:[%s1081 + $0x1e8] sm:$0xff]
        %v1144 = vld [vmem:[%s1081 + $0x1f0] sm:$0xff]
        %v1145 = vld [vmem:[%s1081 + $0x1f8] sm:$0xff]
        %1146 = vmatprep.subr.mxu0 0.0
        %1147 = vmatpush1.msra.mxu0 %v305
        %1148 = vmatprep.subr.mxu0 0.0
        %1149 = vmatpush1.msra.mxu0 %v306
        %1150 = vmatprep.subr.mxu0 0.0
        %1151 = vmatpush1.msra.mxu0 %v307
        %1152 = vmatprep.subr.mxu0 0.0
        %1153 = vmatpush1.msra.mxu0 %v308
        %1154 = vmatprep.subr.mxu0 0.0
        %1155 = vmatpush1.msra.mxu0 %v309
        %1156 = vmatprep.subr.mxu0 0.0
        %1157 = vmatpush1.msra.mxu0 %v310
        %1158 = vmatprep.subr.mxu0 0.0
        %1159 = vmatpush1.msra.mxu0 %v311
        %1160 = vmatprep.subr.mxu0 0.0
        %1161 = vmatpush1.msra.mxu0 %v312
        %1162 = vmatprep.subr.mxu0 0.0
        %1163 = vmatpush1.msra.mxu0 %v313
        %1164 = vmatprep.subr.mxu0 0.0
        %1165 = vmatpush1.msra.mxu0 %v314
        %1166 = vmatprep.subr.mxu0 0.0
        %1167 = vmatpush1.msra.mxu0 %v315
        %1168 = vmatprep.subr.mxu0 0.0
        %1169 = vmatpush1.msra.mxu0 %v316
        %1170 = vmatprep.subr.mxu0 0.0
        %1171 = vmatpush1.msra.mxu0 %v317
        %1172 = vmatprep.subr.mxu0 0.0
        %1173 = vmatpush1.msra.mxu0 %v318
        %1174 = vmatprep.subr.mxu0 0.0
        %1175 = vmatpush1.msra.mxu0 %v319
        %1176 = vmatprep.subr.mxu0 0.0
        %1177 = vmatpush1.msra.mxu0 %v320
        %1178 = vmatprep.subr.mxu0 0.0
        %1179 = vmatpush1.msra.mxu0 %v321
        %1180 = vmatprep.subr.mxu0 0.0
        %1181 = vmatpush1.msra.mxu0 %v322
        %1182 = vmatprep.subr.mxu0 0.0
        %1183 = vmatpush1.msra.mxu0 %v323
        %1184 = vmatprep.subr.mxu0 0.0
        %1185 = vmatpush1.msra.mxu0 %v324
        %1186 = vmatprep.subr.mxu0 0.0
        %1187 = vmatpush1.msra.mxu0 %v325
        %1188 = vmatprep.subr.mxu0 0.0
        %1189 = vmatpush1.msra.mxu0 %v326
        %1190 = vmatprep.subr.mxu0 0.0
        %1191 = vmatpush1.msra.mxu0 %v327
        %1192 = vmatprep.subr.mxu0 0.0
        %1193 = vmatpush1.msra.mxu0 %v328
        %1194 = vmatprep.subr.mxu0 0.0
        %1195 = vmatpush1.msra.mxu0 %v329
        %1196 = vmatprep.subr.mxu0 0.0
        %1197 = vmatpush1.msra.mxu0 %v330
        %1198 = vmatprep.subr.mxu0 0.0
        %1199 = vmatpush1.msra.mxu0 %v331
        %1200 = vmatprep.subr.mxu0 0.0
        %1201 = vmatpush1.msra.mxu0 %v332
        %1202 = vmatprep.subr.mxu0 0.0
        %1203 = vmatpush1.msra.mxu0 %v333
        %1204 = vmatprep.subr.mxu0 0.0
        %1205 = vmatpush1.msra.mxu0 %v334
        %1206 = vmatprep.subr.mxu0 0.0
        %1207 = vmatpush1.msra.mxu0 %v335
        %1208 = vmatprep.subr.mxu0 0.0
        %1209 = vmatpush1.msra.mxu0 %v336
        %1210 = vmatprep.mubr.f32.mxu0 %v1083
        %1211 = vmatmul.mubr.f32.gmra.mrb[0].mxu0 %v1082
        %v1212 = vpop.f32.mrb[0].mxu0
        %v1213 = vadd.f32 0.0, %v1212
        %v1214 = vpop.f32.mrb[0].mxu0
        %1215 = vmatprep.mubr.f32.mxu0 %v1085
        %1216 = vmatmul.mubr.f32.gmra.mrb[0].mxu0 %v1084
        %v1217 = vpop.f32.mrb[0].mxu0
        %v1218 = vadd.f32 0.0, %v1217
        %v1219 = vpop.f32.mrb[0].mxu0
        %1220 = vmatprep.mubr.f32.mxu0 %v1087
        %1221 = vmatmul.mubr.f32.gmra.mrb[0].mxu0 %v1086
        %v1222 = vpop.f32.mrb[0].mxu0
        %v1223 = vadd.f32 0.0, %v1222
        %v1224 = vpop.f32.mrb[0].mxu0
        %1225 = vmatprep.mubr.f32.mxu0 %v1089
        %1226 = vmatmul.mubr.f32.gmra.mrb[0].mxu0 %v1088
        %v1227 = vpop.f32.mrb[0].mxu0
        %v1228 = vadd.f32 0.0, %v1227
        %v1229 = vpop.f32.mrb[0].mxu0
        %1230 = vmatprep.mubr.f32.mxu0 %v1091
        %1231 = vmatmul.mubr.f32.gmra.mrb[0].mxu0 %v1090
        %v1232 = vpop.f32.mrb[0].mxu0
        %v1233 = vadd.f32 0.0, %v1232
        %v1234 = vpop.f32.mrb[0].mxu0
        %1235 = vmatprep.mubr.f32.mxu0 %v1093
        %1236 = vmatmul.mubr.f32.gmra.mrb[0].mxu0 %v1092
        %v1237 = vpop.f32.mrb[0].mxu0
        %v1238 = vadd.f32 0.0, %v1237
        %v1239 = vpop.f32.mrb[0].mxu0
        %1240 = vmatprep.mubr.f32.mxu0 %v1095
        %1241 = vmatmul.mubr.f32.gmra.mrb[0].mxu0 %v1094
        %v1242 = vpop.f32.mrb[0].mxu0
        %v1243 = vadd.f32 0.0, %v1242
        %v1244 = vpop.f32.mrb[0].mxu0
        %1245 = vmatprep.mubr.f32.mxu0 %v1097
        %1246 = vmatmul.mubr.f32.gmra.mrb[0].mxu0 %v1096
        %v1247 = vpop.f32.mrb[0].mxu0
        %v1248 = vadd.f32 0.0, %v1247
        %v1249 = vpop.f32.mrb[0].mxu0
        %1250 = vmatprep.mubr.f32.mxu0 %v1099
        %1251 = vmatmul.mubr.f32.gmra.mrb[0].mxu0 %v1098
        %v1252 = vpop.f32.mrb[0].mxu0
        %v1253 = vadd.f32 0.0, %v1252
        %v1254 = vpop.f32.mrb[0].mxu0
        %1255 = vmatprep.mubr.f32.mxu0 %v1101
        %1256 = vmatmul.mubr.f32.gmra.mrb[0].mxu0 %v1100
        %v1257 = vpop.f32.mrb[0].mxu0
        %v1258 = vadd.f32 0.0, %v1257
        %v1259 = vpop.f32.mrb[0].mxu0
        %1260 = vmatprep.mubr.f32.mxu0 %v1103
        %1261 = vmatmul.mubr.f32.gmra.mrb[0].mxu0 %v1102
        %v1262 = vpop.f32.mrb[0].mxu0
        %v1263 = vadd.f32 0.0, %v1262
        %v1264 = vpop.f32.mrb[0].mxu0
        %1265 = vmatprep.mubr.f32.mxu0 %v1105
        %1266 = vmatmul.mubr.f32.gmra.mrb[0].mxu0 %v1104
        %v1267 = vpop.f32.mrb[0].mxu0
        %v1268 = vadd.f32 0.0, %v1267
        %v1269 = vpop.f32.mrb[0].mxu0
        %1270 = vmatprep.mubr.f32.mxu0 %v1107
        %1271 = vmatmul.mubr.f32.gmra.mrb[0].mxu0 %v1106
        %v1272 = vpop.f32.mrb[0].mxu0
        %v1273 = vadd.f32 0.0, %v1272
        %v1274 = vpop.f32.mrb[0].mxu0
        %1275 = vmatprep.mubr.f32.mxu0 %v1109
        %1276 = vmatmul.mubr.f32.gmra.mrb[0].mxu0 %v1108
        %v1277 = vpop.f32.mrb[0].mxu0
        %v1278 = vadd.f32 0.0, %v1277
        %v1279 = vpop.f32.mrb[0].mxu0
        %1280 = vmatprep.mubr.f32.mxu0 %v1111
        %1281 = vmatmul.mubr.f32.gmra.mrb[0].mxu0 %v1110
        %v1282 = vpop.f32.mrb[0].mxu0
        %v1283 = vadd.f32 0.0, %v1282
        %v1284 = vpop.f32.mrb[0].mxu0
        %1285 = vmatprep.mubr.f32.mxu0 %v1113
        %1286 = vmatmul.mubr.f32.gmra.mrb[0].mxu0 %v1112
        %v1287 = vpop.f32.mrb[0].mxu0
        %v1288 = vadd.f32 0.0, %v1287
        %v1289 = vpop.f32.mrb[0].mxu0
        %1290 = vmatprep.mubr.f32.mxu0 %v1115
        %1291 = vmatmul.mubr.f32.gmra.mrb[0].mxu0 %v1114
        %v1292 = vpop.f32.mrb[0].mxu0
        %v1293 = vadd.f32 0.0, %v1292
        %v1294 = vpop.f32.mrb[0].mxu0
        %1295 = vmatprep.mubr.f32.mxu0 %v1117
        %1296 = vmatmul.mubr.f32.gmra.mrb[0].mxu0 %v1116
        %v1297 = vpop.f32.mrb[0].mxu0
        %v1298 = vadd.f32 0.0, %v1297
        %v1299 = vpop.f32.mrb[0].mxu0
        %1300 = vmatprep.mubr.f32.mxu0 %v1119
        %1301 = vmatmul.mubr.f32.gmra.mrb[0].mxu0 %v1118
        %v1302 = vpop.f32.mrb[0].mxu0
        %v1303 = vadd.f32 0.0, %v1302
        %v1304 = vpop.f32.mrb[0].mxu0
        %1305 = vmatprep.mubr.f32.mxu0 %v1121
        %1306 = vmatmul.mubr.f32.gmra.mrb[0].mxu0 %v1120
        %v1307 = vpop.f32.mrb[0].mxu0
        %v1308 = vadd.f32 0.0, %v1307
        %v1309 = vpop.f32.mrb[0].mxu0
        %1310 = vmatprep.mubr.f32.mxu0 %v1123
        %1311 = vmatmul.mubr.f32.gmra.mrb[0].mxu0 %v1122
        %v1312 = vpop.f32.mrb[0].mxu0
        %v1313 = vadd.f32 0.0, %v1312
        %v1314 = vpop.f32.mrb[0].mxu0
        %1315 = vmatprep.mubr.f32.mxu0 %v1125
        %1316 = vmatmul.mubr.f32.gmra.mrb[0].mxu0 %v1124
        %v1317 = vpop.f32.mrb[0].mxu0
        %v1318 = vadd.f32 0.0, %v1317
        %v1319 = vpop.f32.mrb[0].mxu0
        %1320 = vmatprep.mubr.f32.mxu0 %v1127
        %1321 = vmatmul.mubr.f32.gmra.mrb[0].mxu0 %v1126
        %v1322 = vpop.f32.mrb[0].mxu0
        %v1323 = vadd.f32 0.0, %v1322
        %v1324 = vpop.f32.mrb[0].mxu0
        %1325 = vmatprep.mubr.f32.mxu0 %v1129
        %1326 = vmatmul.mubr.f32.gmra.mrb[0].mxu0 %v1128
        %v1327 = vpop.f32.mrb[0].mxu0
        %v1328 = vadd.f32 0.0, %v1327
        %v1329 = vpop.f32.mrb[0].mxu0
        %1330 = vmatprep.mubr.f32.mxu0 %v1131
        %1331 = vmatmul.mubr.f32.gmra.mrb[0].mxu0 %v1130
        %v1332 = vpop.f32.mrb[0].mxu0
        %v1333 = vadd.f32 0.0, %v1332
        %v1334 = vpop.f32.mrb[0].mxu0
        %1335 = vmatprep.mubr.f32.mxu0 %v1133
        %1336 = vmatmul.mubr.f32.gmra.mrb[0].mxu0 %v1132
        %v1337 = vpop.f32.mrb[0].mxu0
        %v1338 = vadd.f32 0.0, %v1337
        %v1339 = vpop.f32.mrb[0].mxu0
        %1340 = vmatprep.mubr.f32.mxu0 %v1135
        %1341 = vmatmul.mubr.f32.gmra.mrb[0].mxu0 %v1134
        %v1342 = vpop.f32.mrb[0].mxu0
        %v1343 = vadd.f32 0.0, %v1342
        %v1344 = vpop.f32.mrb[0].mxu0
        %1345 = vmatprep.mubr.f32.mxu0 %v1137
        %1346 = vmatmul.mubr.f32.gmra.mrb[0].mxu0 %v1136
        %v1347 = vpop.f32.mrb[0].mxu0
        %v1348 = vadd.f32 0.0, %v1347
        %v1349 = vpop.f32.mrb[0].mxu0
        %1350 = vmatprep.mubr.f32.mxu0 %v1139
        %1351 = vmatmul.mubr.f32.gmra.mrb[0].mxu0 %v1138
        %v1352 = vpop.f32.mrb[0].mxu0
        %v1353 = vadd.f32 0.0, %v1352
        %v1354 = vpop.f32.mrb[0].mxu0
        %1355 = vmatprep.mubr.f32.mxu0 %v1141
        %1356 = vmatmul.mubr.f32.gmra.mrb[0].mxu0 %v1140
        %v1357 = vpop.f32.mrb[0].mxu0
        %v1358 = vadd.f32 0.0, %v1357
        %v1359 = vpop.f32.mrb[0].mxu0
        %1360 = vmatprep.mubr.f32.mxu0 %v1143
        %1361 = vmatmul.mubr.f32.gmra.mrb[0].mxu0 %v1142
        %v1362 = vpop.f32.mrb[0].mxu0
        %v1363 = vadd.f32 0.0, %v1362
        %v1364 = vpop.f32.mrb[0].mxu0
        %1365 = vmatprep.mubr.f32.mxu0 %v1145
        %1366 = vmatmul.mubr.f32.gmra.mrb[0].mxu0 %v1144
        %v1367 = vpop.f32.mrb[0].mxu0
        %v1368 = vadd.f32 0.0, %v1367
        %v1369 = vpop.f32.mrb[0].mxu0
        %1370 = vdwg.mxu0
        %v1371 = vld [vmem:[#allocation2] sm:$0xff]
        %v1372 = vld [vmem:[#allocation2 + $0x8] sm:$0xff]
        %v1373 = vld [vmem:[#allocation2 + $0x10] sm:$0xff]
        %v1374 = vld [vmem:[#allocation2 + $0x18] sm:$0xff]
        %v1375 = vld [vmem:[#allocation2 + $0x20] sm:$0xff]
        %v1376 = vld [vmem:[#allocation2 + $0x28] sm:$0xff]
        %v1377 = vld [vmem:[#allocation2 + $0x30] sm:$0xff]
        %v1378 = vld [vmem:[#allocation2 + $0x38] sm:$0xff]
        %v1379 = vld [vmem:[#allocation2 + $0x40] sm:$0xff]
        %v1380 = vld [vmem:[#allocation2 + $0x48] sm:$0xff]
        %v1381 = vld [vmem:[#allocation2 + $0x50] sm:$0xff]
        %v1382 = vld [vmem:[#allocation2 + $0x58] sm:$0xff]
        %v1383 = vld [vmem:[#allocation2 + $0x60] sm:$0xff]
        %v1384 = vld [vmem:[#allocation2 + $0x68] sm:$0xff]
        %v1385 = vld [vmem:[#allocation2 + $0x70] sm:$0xff]
        %v1386 = vld [vmem:[#allocation2 + $0x78] sm:$0xff]
        %v1387 = vld [vmem:[#allocation2 + $0x80] sm:$0xff]
        %v1388 = vld [vmem:[#allocation2 + $0x88] sm:$0xff]
        %v1389 = vld [vmem:[#allocation2 + $0x90] sm:$0xff]
        %v1390 = vld [vmem:[#allocation2 + $0x98] sm:$0xff]
        %v1391 = vld [vmem:[#allocation2 + $0xa0] sm:$0xff]
        %v1392 = vld [vmem:[#allocation2 + $0xa8] sm:$0xff]
        %v1393 = vld [vmem:[#allocation2 + $0xb0] sm:$0xff]
        %v1394 = vld [vmem:[#allocation2 + $0xb8] sm:$0xff]
        %v1395 = vld [vmem:[#allocation2 + $0xc0] sm:$0xff]
        %v1396 = vld [vmem:[#allocation2 + $0xc8] sm:$0xff]
        %v1397 = vld [vmem:[#allocation2 + $0xd0] sm:$0xff]
        %v1398 = vld [vmem:[#allocation2 + $0xd8] sm:$0xff]
        %v1399 = vld [vmem:[#allocation2 + $0xe0] sm:$0xff]
        %v1400 = vld [vmem:[#allocation2 + $0xe8] sm:$0xff]
        %v1401 = vld [vmem:[#allocation2 + $0xf0] sm:$0xff]
        %v1402 = vld [vmem:[#allocation2 + $0xf8] sm:$0xff]
        %s1403 = scalar_lea.vmem [#allocation6], 4
        %v1404 = vld [vmem:[%s1403] sm:$0xf]
        %v1406 = vsel %vm691, %v1213, 0
        %v1409 = vsel %vm691, %v1218, 0
        %v1412 = vsel %vm691, %v1223, 0
        %v1415 = vsel %vm691, %v1228, 0
        %v1418 = vsel %vm691, %v1233, 0
        %v1421 = vsel %vm691, %v1238, 0
        %v1424 = vsel %vm691, %v1243, 0
        %v1427 = vsel %vm691, %v1248, 0
        %v1430 = vsel %vm691, %v1253, 0
        %v1433 = vsel %vm691, %v1258, 0
        %v1436 = vsel %vm691, %v1263, 0
        %v1439 = vsel %vm691, %v1268, 0
        %v1442 = vsel %vm691, %v1273, 0
        %v1445 = vsel %vm691, %v1278, 0
        %v1448 = vsel %vm691, %v1283, 0
        %v1451 = vsel %vm691, %v1288, 0
        %v1454 = vsel %vm691, %v1293, 0
        %v1457 = vsel %vm691, %v1298, 0
        %v1460 = vsel %vm691, %v1303, 0
        %v1463 = vsel %vm691, %v1308, 0
        %v1466 = vsel %vm691, %v1313, 0
        %v1469 = vsel %vm691, %v1318, 0
        %v1472 = vsel %vm691, %v1323, 0
        %v1475 = vsel %vm691, %v1328, 0
        %v1478 = vsel %vm691, %v1333, 0
        %v1481 = vsel %vm691, %v1338, 0
        %v1484 = vsel %vm691, %v1343, 0
        %v1487 = vsel %vm691, %v1348, 0
        %v1490 = vsel %vm691, %v1353, 0
        %v1493 = vsel %vm691, %v1358, 0
        %v1496 = vsel %vm691, %v1363, 0
        %v1499 = vsel %vm691, %v1368, 0
        %v1502 = vsel %vm788, %v1404, 0
        %1504 = vmatprep.subr.mxu0 0.0
        %1505 = vmatpush1.msra.mxu0 %v1502
        %1506 = vmatprep.subr.mxu0 0.0
        %1507 = vmatpush1.msra.mxu0 0.0
        %1508 = vmatprep.subr.mxu0 0.0
        %1509 = vmatpush1.msra.mxu0 0.0
        %1510 = vmatprep.subr.mxu0 0.0
        %1511 = vmatpush1.msra.mxu0 0.0
        %1512 = vmatprep.subr.mxu0 0.0
        %1513 = vmatpush1.msra.mxu0 0.0
        %1514 = vmatprep.subr.mxu0 0.0
        %1515 = vmatpush1.msra.mxu0 0.0
        %1516 = vmatprep.subr.mxu0 0.0
        %1517 = vmatpush1.msra.mxu0 0.0
        %1518 = vmatprep.subr.mxu0 0.0
        %1519 = vmatpush1.msra.mxu0 0.0
        %1520 = vmatprep.subr.mxu0 0.0
        %1521 = vmatpush1.msra.mxu0 0.0
        %1522 = vmatprep.subr.mxu0 0.0
        %1523 = vmatpush1.msra.mxu0 0.0
        %1524 = vmatprep.subr.mxu0 0.0
        %1525 = vmatpush1.msra.mxu0 0.0
        %1526 = vmatprep.subr.mxu0 0.0
        %1527 = vmatpush1.msra.mxu0 0.0
        %1528 = vmatprep.subr.mxu0 0.0
        %1529 = vmatpush1.msra.mxu0 0.0
        %1530 = vmatprep.subr.mxu0 0.0
        %1531 = vmatpush1.msra.mxu0 0.0
        %1532 = vmatprep.subr.mxu0 0.0
        %1533 = vmatpush1.msra.mxu0 0.0
        %1534 = vmatprep.subr.mxu0 0.0
        %1535 = vmatpush1.msra.mxu0 0.0
        %1536 = vmatprep.subr.mxu0 0.0
        %1537 = vmatpush1.msra.mxu0 0.0
        %1538 = vmatprep.subr.mxu0 0.0
        %1539 = vmatpush1.msra.mxu0 0.0
        %1540 = vmatprep.subr.mxu0 0.0
        %1541 = vmatpush1.msra.mxu0 0.0
        %1542 = vmatprep.subr.mxu0 0.0
        %1543 = vmatpush1.msra.mxu0 0.0
        %1544 = vmatprep.subr.mxu0 0.0
        %1545 = vmatpush1.msra.mxu0 0.0
        %1546 = vmatprep.subr.mxu0 0.0
        %1547 = vmatpush1.msra.mxu0 0.0
        %1548 = vmatprep.subr.mxu0 0.0
        %1549 = vmatpush1.msra.mxu0 0.0
        %1550 = vmatprep.subr.mxu0 0.0
        %1551 = vmatpush1.msra.mxu0 0.0
        %1552 = vmatprep.subr.mxu0 0.0
        %1553 = vmatpush1.msra.mxu0 0.0
        %1554 = vmatprep.subr.mxu0 0.0
        %1555 = vmatpush1.msra.mxu0 0.0
        %1556 = vmatprep.subr.mxu0 0.0
        %1557 = vmatpush1.msra.mxu0 0.0
        %1558 = vmatprep.subr.mxu0 0.0
        %1559 = vmatpush1.msra.mxu0 0.0
        %1560 = vmatprep.subr.mxu0 0.0
        %1561 = vmatpush1.msra.mxu0 0.0
        %1562 = vmatprep.subr.mxu0 0.0
        %1563 = vmatpush1.msra.mxu0 0.0
        %1564 = vmatprep.subr.mxu0 0.0
        %1565 = vmatpush1.msra.mxu0 0.0
        %1566 = vmatprep.subr.mxu0 0.0
        %1567 = vmatpush1.msra.mxu0 0.0
        %1568 = vmatprep.mubr.f32.mxu0 0.0
        %1569 = vmatmul.mubr.f32.gmra.mrb[0].mxu0 %v1406
        %v1570 = vpop.f32.mrb[0].mxu0
        %v1571 = vadd.f32 0.0, %v1570
        %v1572 = vpop.f32.mrb[0].mxu0
        %1573 = vmatprep.mubr.f32.mxu0 0.0
        %1574 = vmatmul.mubr.f32.gmra.mrb[0].mxu0 %v1409
        %v1575 = vpop.f32.mrb[0].mxu0
        %v1576 = vadd.f32 0.0, %v1575
        %v1577 = vpop.f32.mrb[0].mxu0
        %1578 = vmatprep.mubr.f32.mxu0 0.0
        %1579 = vmatmul.mubr.f32.gmra.mrb[0].mxu0 %v1412
        %v1580 = vpop.f32.mrb[0].mxu0
        %v1581 = vadd.f32 0.0, %v1580
        %v1582 = vpop.f32.mrb[0].mxu0
        %1583 = vmatprep.mubr.f32.mxu0 0.0
        %1584 = vmatmul.mubr.f32.gmra.mrb[0].mxu0 %v1415
        %v1585 = vpop.f32.mrb[0].mxu0
        %v1586 = vadd.f32 0.0, %v1585
        %v1587 = vpop.f32.mrb[0].mxu0
        %1588 = vmatprep.mubr.f32.mxu0 0.0
        %1589 = vmatmul.mubr.f32.gmra.mrb[0].mxu0 %v1418
        %v1590 = vpop.f32.mrb[0].mxu0
        %v1591 = vadd.f32 0.0, %v1590
        %v1592 = vpop.f32.mrb[0].mxu0
        %1593 = vmatprep.mubr.f32.mxu0 0.0
        %1594 = vmatmul.mubr.f32.gmra.mrb[0].mxu0 %v1421
        %v1595 = vpop.f32.mrb[0].mxu0
        %v1596 = vadd.f32 0.0, %v1595
        %v1597 = vpop.f32.mrb[0].mxu0
        %1598 = vmatprep.mubr.f32.mxu0 0.0
        %1599 = vmatmul.mubr.f32.gmra.mrb[0].mxu0 %v1424
        %v1600 = vpop.f32.mrb[0].mxu0
        %v1601 = vadd.f32 0.0, %v1600
        %v1602 = vpop.f32.mrb[0].mxu0
        %1603 = vmatprep.mubr.f32.mxu0 0.0
        %1604 = vmatmul.mubr.f32.gmra.mrb[0].mxu0 %v1427
        %v1605 = vpop.f32.mrb[0].mxu0
        %v1606 = vadd.f32 0.0, %v1605
        %v1607 = vpop.f32.mrb[0].mxu0
        %1608 = vmatprep.mubr.f32.mxu0 0.0
        %1609 = vmatmul.mubr.f32.gmra.mrb[0].mxu0 %v1430
        %v1610 = vpop.f32.mrb[0].mxu0
        %v1611 = vadd.f32 0.0, %v1610
        %v1612 = vpop.f32.mrb[0].mxu0
        %1613 = vmatprep.mubr.f32.mxu0 0.0
        %1614 = vmatmul.mubr.f32.gmra.mrb[0].mxu0 %v1433
        %v1615 = vpop.f32.mrb[0].mxu0
        %v1616 = vadd.f32 0.0, %v1615
        %v1617 = vpop.f32.mrb[0].mxu0
        %1618 = vmatprep.mubr.f32.mxu0 0.0
        %1619 = vmatmul.mubr.f32.gmra.mrb[0].mxu0 %v1436
        %v1620 = vpop.f32.mrb[0].mxu0
        %v1621 = vadd.f32 0.0, %v1620
        %v1622 = vpop.f32.mrb[0].mxu0
        %1623 = vmatprep.mubr.f32.mxu0 0.0
        %1624 = vmatmul.mubr.f32.gmra.mrb[0].mxu0 %v1439
        %v1625 = vpop.f32.mrb[0].mxu0
        %v1626 = vadd.f32 0.0, %v1625
        %v1627 = vpop.f32.mrb[0].mxu0
        %1628 = vmatprep.mubr.f32.mxu0 0.0
        %1629 = vmatmul.mubr.f32.gmra.mrb[0].mxu0 %v1442
        %v1630 = vpop.f32.mrb[0].mxu0
        %v1631 = vadd.f32 0.0, %v1630
        %v1632 = vpop.f32.mrb[0].mxu0
        %1633 = vmatprep.mubr.f32.mxu0 0.0
        %1634 = vmatmul.mubr.f32.gmra.mrb[0].mxu0 %v1445
        %v1635 = vpop.f32.mrb[0].mxu0
        %v1636 = vadd.f32 0.0, %v1635
        %v1637 = vpop.f32.mrb[0].mxu0
        %1638 = vmatprep.mubr.f32.mxu0 0.0
        %1639 = vmatmul.mubr.f32.gmra.mrb[0].mxu0 %v1448
        %v1640 = vpop.f32.mrb[0].mxu0
        %v1641 = vadd.f32 0.0, %v1640
        %v1642 = vpop.f32.mrb[0].mxu0
        %1643 = vmatprep.mubr.f32.mxu0 0.0
        %1644 = vmatmul.mubr.f32.gmra.mrb[0].mxu0 %v1451
        %v1645 = vpop.f32.mrb[0].mxu0
        %v1646 = vadd.f32 0.0, %v1645
        %v1647 = vpop.f32.mrb[0].mxu0
        %1648 = vmatprep.mubr.f32.mxu0 0.0
        %1649 = vmatmul.mubr.f32.gmra.mrb[0].mxu0 %v1454
        %v1650 = vpop.f32.mrb[0].mxu0
        %v1651 = vadd.f32 0.0, %v1650
        %v1652 = vpop.f32.mrb[0].mxu0
        %1653 = vmatprep.mubr.f32.mxu0 0.0
        %1654 = vmatmul.mubr.f32.gmra.mrb[0].mxu0 %v1457
        %v1655 = vpop.f32.mrb[0].mxu0
        %v1656 = vadd.f32 0.0, %v1655
        %v1657 = vpop.f32.mrb[0].mxu0
        %1658 = vmatprep.mubr.f32.mxu0 0.0
        %1659 = vmatmul.mubr.f32.gmra.mrb[0].mxu0 %v1460
        %v1660 = vpop.f32.mrb[0].mxu0
        %v1661 = vadd.f32 0.0, %v1660
        %v1662 = vpop.f32.mrb[0].mxu0
        %1663 = vmatprep.mubr.f32.mxu0 0.0
        %1664 = vmatmul.mubr.f32.gmra.mrb[0].mxu0 %v1463
        %v1665 = vpop.f32.mrb[0].mxu0
        %v1666 = vadd.f32 0.0, %v1665
        %v1667 = vpop.f32.mrb[0].mxu0
        %1668 = vmatprep.mubr.f32.mxu0 0.0
        %1669 = vmatmul.mubr.f32.gmra.mrb[0].mxu0 %v1466
        %v1670 = vpop.f32.mrb[0].mxu0
        %v1671 = vadd.f32 0.0, %v1670
        %v1672 = vpop.f32.mrb[0].mxu0
        %1673 = vmatprep.mubr.f32.mxu0 0.0
        %1674 = vmatmul.mubr.f32.gmra.mrb[0].mxu0 %v1469
        %v1675 = vpop.f32.mrb[0].mxu0
        %v1676 = vadd.f32 0.0, %v1675
        %v1677 = vpop.f32.mrb[0].mxu0
        %1678 = vmatprep.mubr.f32.mxu0 0.0
        %1679 = vmatmul.mubr.f32.gmra.mrb[0].mxu0 %v1472
        %v1680 = vpop.f32.mrb[0].mxu0
        %v1681 = vadd.f32 0.0, %v1680
        %v1682 = vpop.f32.mrb[0].mxu0
        %1683 = vmatprep.mubr.f32.mxu0 0.0
        %1684 = vmatmul.mubr.f32.gmra.mrb[0].mxu0 %v1475
        %v1685 = vpop.f32.mrb[0].mxu0
        %v1686 = vadd.f32 0.0, %v1685
        %v1687 = vpop.f32.mrb[0].mxu0
        %1688 = vmatprep.mubr.f32.mxu0 0.0
        %1689 = vmatmul.mubr.f32.gmra.mrb[0].mxu0 %v1478
        %v1690 = vpop.f32.mrb[0].mxu0
        %v1691 = vadd.f32 0.0, %v1690
        %v1692 = vpop.f32.mrb[0].mxu0
        %1693 = vmatprep.mubr.f32.mxu0 0.0
        %1694 = vmatmul.mubr.f32.gmra.mrb[0].mxu0 %v1481
        %v1695 = vpop.f32.mrb[0].mxu0
        %v1696 = vadd.f32 0.0, %v1695
        %v1697 = vpop.f32.mrb[0].mxu0
        %1698 = vmatprep.mubr.f32.mxu0 0.0
        %1699 = vmatmul.mubr.f32.gmra.mrb[0].mxu0 %v1484
        %v1700 = vpop.f32.mrb[0].mxu0
        %v1701 = vadd.f32 0.0, %v1700
        %v1702 = vpop.f32.mrb[0].mxu0
        %1703 = vmatprep.mubr.f32.mxu0 0.0
        %1704 = vmatmul.mubr.f32.gmra.mrb[0].mxu0 %v1487
        %v1705 = vpop.f32.mrb[0].mxu0
        %v1706 = vadd.f32 0.0, %v1705
        %v1707 = vpop.f32.mrb[0].mxu0
        %1708 = vmatprep.mubr.f32.mxu0 0.0
        %1709 = vmatmul.mubr.f32.gmra.mrb[0].mxu0 %v1490
        %v1710 = vpop.f32.mrb[0].mxu0
        %v1711 = vadd.f32 0.0, %v1710
        %v1712 = vpop.f32.mrb[0].mxu0
        %1713 = vmatprep.mubr.f32.mxu0 0.0
        %1714 = vmatmul.mubr.f32.gmra.mrb[0].mxu0 %v1493
        %v1715 = vpop.f32.mrb[0].mxu0
        %v1716 = vadd.f32 0.0, %v1715
        %v1717 = vpop.f32.mrb[0].mxu0
        %1718 = vmatprep.mubr.f32.mxu0 0.0
        %1719 = vmatmul.mubr.f32.gmra.mrb[0].mxu0 %v1496
        %v1720 = vpop.f32.mrb[0].mxu0
        %v1721 = vadd.f32 0.0, %v1720
        %v1722 = vpop.f32.mrb[0].mxu0
        %1723 = vmatprep.mubr.f32.mxu0 0.0
        %1724 = vmatmul.mubr.f32.gmra.mrb[0].mxu0 %v1499
        %v1725 = vpop.f32.mrb[0].mxu0
        %v1726 = vadd.f32 0.0, %v1725
        %v1727 = vpop.f32.mrb[0].mxu0
        %1728 = vdwg.mxu0
        %v1729 = vadd.f32 %v1371, %v1571
        %v1730 = vadd.f32 %v1372, %v1576
        %v1731 = vadd.f32 %v1373, %v1581
        %v1732 = vadd.f32 %v1374, %v1586
        %v1733 = vadd.f32 %v1375, %v1591
        %v1734 = vadd.f32 %v1376, %v1596
        %v1735 = vadd.f32 %v1377, %v1601
        %v1736 = vadd.f32 %v1378, %v1606
        %v1737 = vadd.f32 %v1379, %v1611
        %v1738 = vadd.f32 %v1380, %v1616
        %v1739 = vadd.f32 %v1381, %v1621
        %v1740 = vadd.f32 %v1382, %v1626
        %v1741 = vadd.f32 %v1383, %v1631
        %v1742 = vadd.f32 %v1384, %v1636
        %v1743 = vadd.f32 %v1385, %v1641
        %v1744 = vadd.f32 %v1386, %v1646
        %v1745 = vadd.f32 %v1387, %v1651
        %v1746 = vadd.f32 %v1388, %v1656
        %v1747 = vadd.f32 %v1389, %v1661
        %v1748 = vadd.f32 %v1390, %v1666
        %v1749 = vadd.f32 %v1391, %v1671
        %v1750 = vadd.f32 %v1392, %v1676
        %v1751 = vadd.f32 %v1393, %v1681
        %v1752 = vadd.f32 %v1394, %v1686
        %v1753 = vadd.f32 %v1395, %v1691
        %v1754 = vadd.f32 %v1396, %v1696
        %v1755 = vadd.f32 %v1397, %v1701
        %v1756 = vadd.f32 %v1398, %v1706
        %v1757 = vadd.f32 %v1399, %v1711
        %v1758 = vadd.f32 %v1400, %v1716
        %v1759 = vadd.f32 %v1401, %v1721
        %v1760 = vadd.f32 %v1402, %v1726
        %1761 = vst [vmem:[#allocation2] sm:$0xff] %v1729
        %1762 = vst [vmem:[#allocation2 + $0x8] sm:$0xff] %v1730
        %1763 = vst [vmem:[#allocation2 + $0x10] sm:$0xff] %v1731
        %1764 = vst [vmem:[#allocation2 + $0x18] sm:$0xff] %v1732
        %1765 = vst [vmem:[#allocation2 + $0x20] sm:$0xff] %v1733
        %1766 = vst [vmem:[#allocation2 + $0x28] sm:$0xff] %v1734
        %1767 = vst [vmem:[#allocation2 + $0x30] sm:$0xff] %v1735
        %1768 = vst [vmem:[#allocation2 + $0x38] sm:$0xff] %v1736
        %1769 = vst [vmem:[#allocation2 + $0x40] sm:$0xff] %v1737
        %1770 = vst [vmem:[#allocation2 + $0x48] sm:$0xff] %v1738
        %1771 = vst [vmem:[#allocation2 + $0x50] sm:$0xff] %v1739
        %1772 = vst [vmem:[#allocation2 + $0x58] sm:$0xff] %v1740
        %1773 = vst [vmem:[#allocation2 + $0x60] sm:$0xff] %v1741
        %1774 = vst [vmem:[#allocation2 + $0x68] sm:$0xff] %v1742
        %1775 = vst [vmem:[#allocation2 + $0x70] sm:$0xff] %v1743
        %1776 = vst [vmem:[#allocation2 + $0x78] sm:$0xff] %v1744
        %1777 = vst [vmem:[#allocation2 + $0x80] sm:$0xff] %v1745
        %1778 = vst [vmem:[#allocation2 + $0x88] sm:$0xff] %v1746
        %1779 = vst [vmem:[#allocation2 + $0x90] sm:$0xff] %v1747
        %1780 = vst [vmem:[#allocation2 + $0x98] sm:$0xff] %v1748
        %1781 = vst [vmem:[#allocation2 + $0xa0] sm:$0xff] %v1749
        %1782 = vst [vmem:[#allocation2 + $0xa8] sm:$0xff] %v1750
        %1783 = vst [vmem:[#allocation2 + $0xb0] sm:$0xff] %v1751
        %1784 = vst [vmem:[#allocation2 + $0xb8] sm:$0xff] %v1752
        %1785 = vst [vmem:[#allocation2 + $0xc0] sm:$0xff] %v1753
        %1786 = vst [vmem:[#allocation2 + $0xc8] sm:$0xff] %v1754
        %1787 = vst [vmem:[#allocation2 + $0xd0] sm:$0xff] %v1755
        %1788 = vst [vmem:[#allocation2 + $0xd8] sm:$0xff] %v1756
        %1789 = vst [vmem:[#allocation2 + $0xe0] sm:$0xff] %v1757
        %1790 = vst [vmem:[#allocation2 + $0xe8] sm:$0xff] %v1758
        %1791 = vst [vmem:[#allocation2 + $0xf0] sm:$0xff] %v1759
        %1792 = vst [vmem:[#allocation2 + $0xf8] sm:$0xff] %v1760
        %s1793 = scalar_lea.vmem %s260, 1024 [#allocation3]
        %v1794 = vld [vmem:[%s1793] sm:$0xff]
        %v1795 = vld [vmem:[%s1793 + $0x8] sm:$0xff]
        %v1796 = vld [vmem:[%s1793 + $0x10] sm:$0xff]
        %v1797 = vld [vmem:[%s1793 + $0x18] sm:$0xff]
        %v1798 = vld [vmem:[%s1793 + $0x20] sm:$0xff]
        %v1799 = vld [vmem:[%s1793 + $0x28] sm:$0xff]
        %v1800 = vld [vmem:[%s1793 + $0x30] sm:$0xff]
        %v1801 = vld [vmem:[%s1793 + $0x38] sm:$0xff]
        %v1802 = vld [vmem:[%s1793 + $0x40] sm:$0xff]
        %v1803 = vld [vmem:[%s1793 + $0x48] sm:$0xff]
        %v1804 = vld [vmem:[%s1793 + $0x50] sm:$0xff]
        %v1805 = vld [vmem:[%s1793 + $0x58] sm:$0xff]
        %v1806 = vld [vmem:[%s1793 + $0x60] sm:$0xff]
        %v1807 = vld [vmem:[%s1793 + $0x68] sm:$0xff]
        %v1808 = vld [vmem:[%s1793 + $0x70] sm:$0xff]
        %v1809 = vld [vmem:[%s1793 + $0x78] sm:$0xff]
        %v1810 = vld [vmem:[%s1793 + $0x80] sm:$0xff]
        %v1811 = vld [vmem:[%s1793 + $0x88] sm:$0xff]
        %v1812 = vld [vmem:[%s1793 + $0x90] sm:$0xff]
        %v1813 = vld [vmem:[%s1793 + $0x98] sm:$0xff]
        %v1814 = vld [vmem:[%s1793 + $0xa0] sm:$0xff]
        %v1815 = vld [vmem:[%s1793 + $0xa8] sm:$0xff]
        %v1816 = vld [vmem:[%s1793 + $0xb0] sm:$0xff]
        %v1817 = vld [vmem:[%s1793 + $0xb8] sm:$0xff]
        %v1818 = vld [vmem:[%s1793 + $0xc0] sm:$0xff]
        %v1819 = vld [vmem:[%s1793 + $0xc8] sm:$0xff]
        %v1820 = vld [vmem:[%s1793 + $0xd0] sm:$0xff]
        %v1821 = vld [vmem:[%s1793 + $0xd8] sm:$0xff]
        %v1822 = vld [vmem:[%s1793 + $0xe0] sm:$0xff]
        %v1823 = vld [vmem:[%s1793 + $0xe8] sm:$0xff]
        %v1824 = vld [vmem:[%s1793 + $0xf0] sm:$0xff]
        %v1825 = vld [vmem:[%s1793 + $0xf8] sm:$0xff]
        %v1826 = vld [vmem:[%s1793 + $0x100] sm:$0xff]
        %v1827 = vld [vmem:[%s1793 + $0x108] sm:$0xff]
        %v1828 = vld [vmem:[%s1793 + $0x110] sm:$0xff]
        %v1829 = vld [vmem:[%s1793 + $0x118] sm:$0xff]
        %v1830 = vld [vmem:[%s1793 + $0x120] sm:$0xff]
        %v1831 = vld [vmem:[%s1793 + $0x128] sm:$0xff]
        %v1832 = vld [vmem:[%s1793 + $0x130] sm:$0xff]
        %v1833 = vld [vmem:[%s1793 + $0x138] sm:$0xff]
        %v1834 = vld [vmem:[%s1793 + $0x140] sm:$0xff]
        %v1835 = vld [vmem:[%s1793 + $0x148] sm:$0xff]
        %v1836 = vld [vmem:[%s1793 + $0x150] sm:$0xff]
        %v1837 = vld [vmem:[%s1793 + $0x158] sm:$0xff]
        %v1838 = vld [vmem:[%s1793 + $0x160] sm:$0xff]
        %v1839 = vld [vmem:[%s1793 + $0x168] sm:$0xff]
        %v1840 = vld [vmem:[%s1793 + $0x170] sm:$0xff]
        %v1841 = vld [vmem:[%s1793 + $0x178] sm:$0xff]
        %v1842 = vld [vmem:[%s1793 + $0x180] sm:$0xff]
        %v1843 = vld [vmem:[%s1793 + $0x188] sm:$0xff]
        %v1844 = vld [vmem:[%s1793 + $0x190] sm:$0xff]
        %v1845 = vld [vmem:[%s1793 + $0x198] sm:$0xff]
        %v1846 = vld [vmem:[%s1793 + $0x1a0] sm:$0xff]
        %v1847 = vld [vmem:[%s1793 + $0x1a8] sm:$0xff]
        %v1848 = vld [vmem:[%s1793 + $0x1b0] sm:$0xff]
        %v1849 = vld [vmem:[%s1793 + $0x1b8] sm:$0xff]
        %v1850 = vld [vmem:[%s1793 + $0x1c0] sm:$0xff]
        %v1851 = vld [vmem:[%s1793 + $0x1c8] sm:$0xff]
        %v1852 = vld [vmem:[%s1793 + $0x1d0] sm:$0xff]
        %v1853 = vld [vmem:[%s1793 + $0x1d8] sm:$0xff]
        %v1854 = vld [vmem:[%s1793 + $0x1e0] sm:$0xff]
        %v1855 = vld [vmem:[%s1793 + $0x1e8] sm:$0xff]
        %v1856 = vld [vmem:[%s1793 + $0x1f0] sm:$0xff]
        %v1857 = vld [vmem:[%s1793 + $0x1f8] sm:$0xff]
        %1858 = vmatprep.subr.mxu0 0.0
        %1859 = vmatpush1.msra.mxu0 %v305
        %1860 = vmatprep.subr.mxu0 0.0
        %1861 = vmatpush1.msra.mxu0 %v306
        %1862 = vmatprep.subr.mxu0 0.0
        %1863 = vmatpush1.msra.mxu0 %v307
        %1864 = vmatprep.subr.mxu0 0.0
        %1865 = vmatpush1.msra.mxu0 %v308
        %1866 = vmatprep.subr.mxu0 0.0
        %1867 = vmatpush1.msra.mxu0 %v309
        %1868 = vmatprep.subr.mxu0 0.0
        %1869 = vmatpush1.msra.mxu0 %v310
        %1870 = vmatprep.subr.mxu0 0.0
        %1871 = vmatpush1.msra.mxu0 %v311
        %1872 = vmatprep.subr.mxu0 0.0
        %1873 = vmatpush1.msra.mxu0 %v312
        %1874 = vmatprep.subr.mxu0 0.0
        %1875 = vmatpush1.msra.mxu0 %v313
        %1876 = vmatprep.subr.mxu0 0.0
        %1877 = vmatpush1.msra.mxu0 %v314
        %1878 = vmatprep.subr.mxu0 0.0
        %1879 = vmatpush1.msra.mxu0 %v315
        %1880 = vmatprep.subr.mxu0 0.0
        %1881 = vmatpush1.msra.mxu0 %v316
        %1882 = vmatprep.subr.mxu0 0.0
        %1883 = vmatpush1.msra.mxu0 %v317
        %1884 = vmatprep.subr.mxu0 0.0
        %1885 = vmatpush1.msra.mxu0 %v318
        %1886 = vmatprep.subr.mxu0 0.0
        %1887 = vmatpush1.msra.mxu0 %v319
        %1888 = vmatprep.subr.mxu0 0.0
        %1889 = vmatpush1.msra.mxu0 %v320
        %1890 = vmatprep.subr.mxu0 0.0
        %1891 = vmatpush1.msra.mxu0 %v321
        %1892 = vmatprep.subr.mxu0 0.0
        %1893 = vmatpush1.msra.mxu0 %v322
        %1894 = vmatprep.subr.mxu0 0.0
        %1895 = vmatpush1.msra.mxu0 %v323
        %1896 = vmatprep.subr.mxu0 0.0
        %1897 = vmatpush1.msra.mxu0 %v324
        %1898 = vmatprep.subr.mxu0 0.0
        %1899 = vmatpush1.msra.mxu0 %v325
        %1900 = vmatprep.subr.mxu0 0.0
        %1901 = vmatpush1.msra.mxu0 %v326
        %1902 = vmatprep.subr.mxu0 0.0
        %1903 = vmatpush1.msra.mxu0 %v327
        %1904 = vmatprep.subr.mxu0 0.0
        %1905 = vmatpush1.msra.mxu0 %v328
        %1906 = vmatprep.subr.mxu0 0.0
        %1907 = vmatpush1.msra.mxu0 %v329
        %1908 = vmatprep.subr.mxu0 0.0
        %1909 = vmatpush1.msra.mxu0 %v330
        %1910 = vmatprep.subr.mxu0 0.0
        %1911 = vmatpush1.msra.mxu0 %v331
        %1912 = vmatprep.subr.mxu0 0.0
        %1913 = vmatpush1.msra.mxu0 %v332
        %1914 = vmatprep.subr.mxu0 0.0
        %1915 = vmatpush1.msra.mxu0 %v333
        %1916 = vmatprep.subr.mxu0 0.0
        %1917 = vmatpush1.msra.mxu0 %v334
        %1918 = vmatprep.subr.mxu0 0.0
        %1919 = vmatpush1.msra.mxu0 %v335
        %1920 = vmatprep.subr.mxu0 0.0
        %1921 = vmatpush1.msra.mxu0 %v336
        %1922 = vmatprep.mubr.f32.mxu0 %v1795
        %1923 = vmatmul.mubr.f32.gmra.mrb[0].mxu0 %v1794
        %v1924 = vpop.f32.mrb[0].mxu0
        %v1925 = vadd.f32 0.0, %v1924
        %v1926 = vpop.f32.mrb[0].mxu0
        %1927 = vmatprep.mubr.f32.mxu0 %v1797
        %1928 = vmatmul.mubr.f32.gmra.mrb[0].mxu0 %v1796
        %v1929 = vpop.f32.mrb[0].mxu0
        %v1930 = vadd.f32 0.0, %v1929
        %v1931 = vpop.f32.mrb[0].mxu0
        %1932 = vmatprep.mubr.f32.mxu0 %v1799
        %1933 = vmatmul.mubr.f32.gmra.mrb[0].mxu0 %v1798
        %v1934 = vpop.f32.mrb[0].mxu0
        %v1935 = vadd.f32 0.0, %v1934
        %v1936 = vpop.f32.mrb[0].mxu0
        %1937 = vmatprep.mubr.f32.mxu0 %v1801
        %1938 = vmatmul.mubr.f32.gmra.mrb[0].mxu0 %v1800
        %v1939 = vpop.f32.mrb[0].mxu0
        %v1940 = vadd.f32 0.0, %v1939
        %v1941 = vpop.f32.mrb[0].mxu0
        %1942 = vmatprep.mubr.f32.mxu0 %v1803
        %1943 = vmatmul.mubr.f32.gmra.mrb[0].mxu0 %v1802
        %v1944 = vpop.f32.mrb[0].mxu0
        %v1945 = vadd.f32 0.0, %v1944
        %v1946 = vpop.f32.mrb[0].mxu0
        %1947 = vmatprep.mubr.f32.mxu0 %v1805
        %1948 = vmatmul.mubr.f32.gmra.mrb[0].mxu0 %v1804
        %v1949 = vpop.f32.mrb[0].mxu0
        %v1950 = vadd.f32 0.0, %v1949
        %v1951 = vpop.f32.mrb[0].mxu0
        %1952 = vmatprep.mubr.f32.mxu0 %v1807
        %1953 = vmatmul.mubr.f32.gmra.mrb[0].mxu0 %v1806
        %v1954 = vpop.f32.mrb[0].mxu0
        %v1955 = vadd.f32 0.0, %v1954
        %v1956 = vpop.f32.mrb[0].mxu0
        %1957 = vmatprep.mubr.f32.mxu0 %v1809
        %1958 = vmatmul.mubr.f32.gmra.mrb[0].mxu0 %v1808
        %v1959 = vpop.f32.mrb[0].mxu0
        %v1960 = vadd.f32 0.0, %v1959
        %v1961 = vpop.f32.mrb[0].mxu0
        %1962 = vmatprep.mubr.f32.mxu0 %v1811
        %1963 = vmatmul.mubr.f32.gmra.mrb[0].mxu0 %v1810
        %v1964 = vpop.f32.mrb[0].mxu0
        %v1965 = vadd.f32 0.0, %v1964
        %v1966 = vpop.f32.mrb[0].mxu0
        %1967 = vmatprep.mubr.f32.mxu0 %v1813
        %1968 = vmatmul.mubr.f32.gmra.mrb[0].mxu0 %v1812
        %v1969 = vpop.f32.mrb[0].mxu0
        %v1970 = vadd.f32 0.0, %v1969
        %v1971 = vpop.f32.mrb[0].mxu0
        %1972 = vmatprep.mubr.f32.mxu0 %v1815
        %1973 = vmatmul.mubr.f32.gmra.mrb[0].mxu0 %v1814
        %v1974 = vpop.f32.mrb[0].mxu0
        %v1975 = vadd.f32 0.0, %v1974
        %v1976 = vpop.f32.mrb[0].mxu0
        %1977 = vmatprep.mubr.f32.mxu0 %v1817
        %1978 = vmatmul.mubr.f32.gmra.mrb[0].mxu0 %v1816
        %v1979 = vpop.f32.mrb[0].mxu0
        %v1980 = vadd.f32 0.0, %v1979
        %v1981 = vpop.f32.mrb[0].mxu0
        %1982 = vmatprep.mubr.f32.mxu0 %v1819
        %1983 = vmatmul.mubr.f32.gmra.mrb[0].mxu0 %v1818
        %v1984 = vpop.f32.mrb[0].mxu0
        %v1985 = vadd.f32 0.0, %v1984
        %v1986 = vpop.f32.mrb[0].mxu0
        %1987 = vmatprep.mubr.f32.mxu0 %v1821
        %1988 = vmatmul.mubr.f32.gmra.mrb[0].mxu0 %v1820
        %v1989 = vpop.f32.mrb[0].mxu0
        %v1990 = vadd.f32 0.0, %v1989
        %v1991 = vpop.f32.mrb[0].mxu0
        %1992 = vmatprep.mubr.f32.mxu0 %v1823
        %1993 = vmatmul.mubr.f32.gmra.mrb[0].mxu0 %v1822
        %v1994 = vpop.f32.mrb[0].mxu0
        %v1995 = vadd.f32 0.0, %v1994
        %v1996 = vpop.f32.mrb[0].mxu0
        %1997 = vmatprep.mubr.f32.mxu0 %v1825
        %1998 = vmatmul.mubr.f32.gmra.mrb[0].mxu0 %v1824
        %v1999 = vpop.f32.mrb[0].mxu0
        %v2000 = vadd.f32 0.0, %v1999
        %v2001 = vpop.f32.mrb[0].mxu0
        %2002 = vmatprep.mubr.f32.mxu0 %v1827
        %2003 = vmatmul.mubr.f32.gmra.mrb[0].mxu0 %v1826
        %v2004 = vpop.f32.mrb[0].mxu0
        %v2005 = vadd.f32 0.0, %v2004
        %v2006 = vpop.f32.mrb[0].mxu0
        %2007 = vmatprep.mubr.f32.mxu0 %v1829
        %2008 = vmatmul.mubr.f32.gmra.mrb[0].mxu0 %v1828
        %v2009 = vpop.f32.mrb[0].mxu0
        %v2010 = vadd.f32 0.0, %v2009
        %v2011 = vpop.f32.mrb[0].mxu0
        %2012 = vmatprep.mubr.f32.mxu0 %v1831
        %2013 = vmatmul.mubr.f32.gmra.mrb[0].mxu0 %v1830
        %v2014 = vpop.f32.mrb[0].mxu0
        %v2015 = vadd.f32 0.0, %v2014
        %v2016 = vpop.f32.mrb[0].mxu0
        %2017 = vmatprep.mubr.f32.mxu0 %v1833
        %2018 = vmatmul.mubr.f32.gmra.mrb[0].mxu0 %v1832
        %v2019 = vpop.f32.mrb[0].mxu0
        %v2020 = vadd.f32 0.0, %v2019
        %v2021 = vpop.f32.mrb[0].mxu0
        %2022 = vmatprep.mubr.f32.mxu0 %v1835
        %2023 = vmatmul.mubr.f32.gmra.mrb[0].mxu0 %v1834
        %v2024 = vpop.f32.mrb[0].mxu0
        %v2025 = vadd.f32 0.0, %v2024
        %v2026 = vpop.f32.mrb[0].mxu0
        %2027 = vmatprep.mubr.f32.mxu0 %v1837
        %2028 = vmatmul.mubr.f32.gmra.mrb[0].mxu0 %v1836
        %v2029 = vpop.f32.mrb[0].mxu0
        %v2030 = vadd.f32 0.0, %v2029
        %v2031 = vpop.f32.mrb[0].mxu0
        %2032 = vmatprep.mubr.f32.mxu0 %v1839
        %2033 = vmatmul.mubr.f32.gmra.mrb[0].mxu0 %v1838
        %v2034 = vpop.f32.mrb[0].mxu0
        %v2035 = vadd.f32 0.0, %v2034
        %v2036 = vpop.f32.mrb[0].mxu0
        %2037 = vmatprep.mubr.f32.mxu0 %v1841
        %2038 = vmatmul.mubr.f32.gmra.mrb[0].mxu0 %v1840
        %v2039 = vpop.f32.mrb[0].mxu0
        %v2040 = vadd.f32 0.0, %v2039
        %v2041 = vpop.f32.mrb[0].mxu0
        %2042 = vmatprep.mubr.f32.mxu0 %v1843
        %2043 = vmatmul.mubr.f32.gmra.mrb[0].mxu0 %v1842
        %v2044 = vpop.f32.mrb[0].mxu0
        %v2045 = vadd.f32 0.0, %v2044
        %v2046 = vpop.f32.mrb[0].mxu0
        %2047 = vmatprep.mubr.f32.mxu0 %v1845
        %2048 = vmatmul.mubr.f32.gmra.mrb[0].mxu0 %v1844
        %v2049 = vpop.f32.mrb[0].mxu0
        %v2050 = vadd.f32 0.0, %v2049
        %v2051 = vpop.f32.mrb[0].mxu0
        %2052 = vmatprep.mubr.f32.mxu0 %v1847
        %2053 = vmatmul.mubr.f32.gmra.mrb[0].mxu0 %v1846
        %v2054 = vpop.f32.mrb[0].mxu0
        %v2055 = vadd.f32 0.0, %v2054
        %v2056 = vpop.f32.mrb[0].mxu0
        %2057 = vmatprep.mubr.f32.mxu0 %v1849
        %2058 = vmatmul.mubr.f32.gmra.mrb[0].mxu0 %v1848
        %v2059 = vpop.f32.mrb[0].mxu0
        %v2060 = vadd.f32 0.0, %v2059
        %v2061 = vpop.f32.mrb[0].mxu0
        %2062 = vmatprep.mubr.f32.mxu0 %v1851
        %2063 = vmatmul.mubr.f32.gmra.mrb[0].mxu0 %v1850
        %v2064 = vpop.f32.mrb[0].mxu0
        %v2065 = vadd.f32 0.0, %v2064
        %v2066 = vpop.f32.mrb[0].mxu0
        %2067 = vmatprep.mubr.f32.mxu0 %v1853
        %2068 = vmatmul.mubr.f32.gmra.mrb[0].mxu0 %v1852
        %v2069 = vpop.f32.mrb[0].mxu0
        %v2070 = vadd.f32 0.0, %v2069
        %v2071 = vpop.f32.mrb[0].mxu0
        %2072 = vmatprep.mubr.f32.mxu0 %v1855
        %2073 = vmatmul.mubr.f32.gmra.mrb[0].mxu0 %v1854
        %v2074 = vpop.f32.mrb[0].mxu0
        %v2075 = vadd.f32 0.0, %v2074
        %v2076 = vpop.f32.mrb[0].mxu0
        %2077 = vmatprep.mubr.f32.mxu0 %v1857
        %2078 = vmatmul.mubr.f32.gmra.mrb[0].mxu0 %v1856
        %v2079 = vpop.f32.mrb[0].mxu0
        %v2080 = vadd.f32 0.0, %v2079
        %v2081 = vpop.f32.mrb[0].mxu0
        %2082 = vdwg.mxu0
        %v2083 = vld [vmem:[#allocation2] sm:$0xff]
        %v2084 = vld [vmem:[#allocation2 + $0x8] sm:$0xff]
        %v2085 = vld [vmem:[#allocation2 + $0x10] sm:$0xff]
        %v2086 = vld [vmem:[#allocation2 + $0x18] sm:$0xff]
        %v2087 = vld [vmem:[#allocation2 + $0x20] sm:$0xff]
        %v2088 = vld [vmem:[#allocation2 + $0x28] sm:$0xff]
        %v2089 = vld [vmem:[#allocation2 + $0x30] sm:$0xff]
        %v2090 = vld [vmem:[#allocation2 + $0x38] sm:$0xff]
        %v2091 = vld [vmem:[#allocation2 + $0x40] sm:$0xff]
        %v2092 = vld [vmem:[#allocation2 + $0x48] sm:$0xff]
        %v2093 = vld [vmem:[#allocation2 + $0x50] sm:$0xff]
        %v2094 = vld [vmem:[#allocation2 + $0x58] sm:$0xff]
        %v2095 = vld [vmem:[#allocation2 + $0x60] sm:$0xff]
        %v2096 = vld [vmem:[#allocation2 + $0x68] sm:$0xff]
        %v2097 = vld [vmem:[#allocation2 + $0x70] sm:$0xff]
        %v2098 = vld [vmem:[#allocation2 + $0x78] sm:$0xff]
        %v2099 = vld [vmem:[#allocation2 + $0x80] sm:$0xff]
        %v2100 = vld [vmem:[#allocation2 + $0x88] sm:$0xff]
        %v2101 = vld [vmem:[#allocation2 + $0x90] sm:$0xff]
        %v2102 = vld [vmem:[#allocation2 + $0x98] sm:$0xff]
        %v2103 = vld [vmem:[#allocation2 + $0xa0] sm:$0xff]
        %v2104 = vld [vmem:[#allocation2 + $0xa8] sm:$0xff]
        %v2105 = vld [vmem:[#allocation2 + $0xb0] sm:$0xff]
        %v2106 = vld [vmem:[#allocation2 + $0xb8] sm:$0xff]
        %v2107 = vld [vmem:[#allocation2 + $0xc0] sm:$0xff]
        %v2108 = vld [vmem:[#allocation2 + $0xc8] sm:$0xff]
        %v2109 = vld [vmem:[#allocation2 + $0xd0] sm:$0xff]
        %v2110 = vld [vmem:[#allocation2 + $0xd8] sm:$0xff]
        %v2111 = vld [vmem:[#allocation2 + $0xe0] sm:$0xff]
        %v2112 = vld [vmem:[#allocation2 + $0xe8] sm:$0xff]
        %v2113 = vld [vmem:[#allocation2 + $0xf0] sm:$0xff]
        %v2114 = vld [vmem:[#allocation2 + $0xf8] sm:$0xff]
        %s2115 = scalar_lea.vmem [#allocation6], 8
        %v2116 = vld [vmem:[%s2115] sm:$0xf]
        %v2118 = vsel %vm691, %v1925, 0
        %v2121 = vsel %vm691, %v1930, 0
        %v2124 = vsel %vm691, %v1935, 0
        %v2127 = vsel %vm691, %v1940, 0
        %v2130 = vsel %vm691, %v1945, 0
        %v2133 = vsel %vm691, %v1950, 0
        %v2136 = vsel %vm691, %v1955, 0
        %v2139 = vsel %vm691, %v1960, 0
        %v2142 = vsel %vm691, %v1965, 0
        %v2145 = vsel %vm691, %v1970, 0
        %v2148 = vsel %vm691, %v1975, 0
        %v2151 = vsel %vm691, %v1980, 0
        %v2154 = vsel %vm691, %v1985, 0
        %v2157 = vsel %vm691, %v1990, 0
        %v2160 = vsel %vm691, %v1995, 0
        %v2163 = vsel %vm691, %v2000, 0
        %v2166 = vsel %vm691, %v2005, 0
        %v2169 = vsel %vm691, %v2010, 0
        %v2172 = vsel %vm691, %v2015, 0
        %v2175 = vsel %vm691, %v2020, 0
        %v2178 = vsel %vm691, %v2025, 0
        %v2181 = vsel %vm691, %v2030, 0
        %v2184 = vsel %vm691, %v2035, 0
        %v2187 = vsel %vm691, %v2040, 0
        %v2190 = vsel %vm691, %v2045, 0
        %v2193 = vsel %vm691, %v2050, 0
        %v2196 = vsel %vm691, %v2055, 0
        %v2199 = vsel %vm691, %v2060, 0
        %v2202 = vsel %vm691, %v2065, 0
        %v2205 = vsel %vm691, %v2070, 0
        %v2208 = vsel %vm691, %v2075, 0
        %v2211 = vsel %vm691, %v2080, 0
        %v2214 = vsel %vm788, %v2116, 0
        %2216 = vmatprep.subr.mxu0 0.0
        %2217 = vmatpush1.msra.mxu0 %v2214
        %2218 = vmatprep.subr.mxu0 0.0
        %2219 = vmatpush1.msra.mxu0 0.0
        %2220 = vmatprep.subr.mxu0 0.0
        %2221 = vmatpush1.msra.mxu0 0.0
        %2222 = vmatprep.subr.mxu0 0.0
        %2223 = vmatpush1.msra.mxu0 0.0
        %2224 = vmatprep.subr.mxu0 0.0
        %2225 = vmatpush1.msra.mxu0 0.0
        %2226 = vmatprep.subr.mxu0 0.0
        %2227 = vmatpush1.msra.mxu0 0.0
        %2228 = vmatprep.subr.mxu0 0.0
        %2229 = vmatpush1.msra.mxu0 0.0
        %2230 = vmatprep.subr.mxu0 0.0
        %2231 = vmatpush1.msra.mxu0 0.0
        %2232 = vmatprep.subr.mxu0 0.0
        %2233 = vmatpush1.msra.mxu0 0.0
        %2234 = vmatprep.subr.mxu0 0.0
        %2235 = vmatpush1.msra.mxu0 0.0
        %2236 = vmatprep.subr.mxu0 0.0
        %2237 = vmatpush1.msra.mxu0 0.0
        %2238 = vmatprep.subr.mxu0 0.0
        %2239 = vmatpush1.msra.mxu0 0.0
        %2240 = vmatprep.subr.mxu0 0.0
        %2241 = vmatpush1.msra.mxu0 0.0
        %2242 = vmatprep.subr.mxu0 0.0
        %2243 = vmatpush1.msra.mxu0 0.0
        %2244 = vmatprep.subr.mxu0 0.0
        %2245 = vmatpush1.msra.mxu0 0.0
        %2246 = vmatprep.subr.mxu0 0.0
        %2247 = vmatpush1.msra.mxu0 0.0
        %2248 = vmatprep.subr.mxu0 0.0
        %2249 = vmatpush1.msra.mxu0 0.0
        %2250 = vmatprep.subr.mxu0 0.0
        %2251 = vmatpush1.msra.mxu0 0.0
        %2252 = vmatprep.subr.mxu0 0.0
        %2253 = vmatpush1.msra.mxu0 0.0
        %2254 = vmatprep.subr.mxu0 0.0
        %2255 = vmatpush1.msra.mxu0 0.0
        %2256 = vmatprep.subr.mxu0 0.0
        %2257 = vmatpush1.msra.mxu0 0.0
        %2258 = vmatprep.subr.mxu0 0.0
        %2259 = vmatpush1.msra.mxu0 0.0
        %2260 = vmatprep.subr.mxu0 0.0
        %2261 = vmatpush1.msra.mxu0 0.0
        %2262 = vmatprep.subr.mxu0 0.0
        %2263 = vmatpush1.msra.mxu0 0.0
        %2264 = vmatprep.subr.mxu0 0.0
        %2265 = vmatpush1.msra.mxu0 0.0
        %2266 = vmatprep.subr.mxu0 0.0
        %2267 = vmatpush1.msra.mxu0 0.0
        %2268 = vmatprep.subr.mxu0 0.0
        %2269 = vmatpush1.msra.mxu0 0.0
        %2270 = vmatprep.subr.mxu0 0.0
        %2271 = vmatpush1.msra.mxu0 0.0
        %2272 = vmatprep.subr.mxu0 0.0
        %2273 = vmatpush1.msra.mxu0 0.0
        %2274 = vmatprep.subr.mxu0 0.0
        %2275 = vmatpush1.msra.mxu0 0.0
        %2276 = vmatprep.subr.mxu0 0.0
        %2277 = vmatpush1.msra.mxu0 0.0
        %2278 = vmatprep.subr.mxu0 0.0
        %2279 = vmatpush1.msra.mxu0 0.0
        %2280 = vmatprep.mubr.f32.mxu0 0.0
        %2281 = vmatmul.mubr.f32.gmra.mrb[0].mxu0 %v2118
        %v2282 = vpop.f32.mrb[0].mxu0
        %v2283 = vadd.f32 0.0, %v2282
        %v2284 = vpop.f32.mrb[0].mxu0
        %2285 = vmatprep.mubr.f32.mxu0 0.0
        %2286 = vmatmul.mubr.f32.gmra.mrb[0].mxu0 %v2121
        %v2287 = vpop.f32.mrb[0].mxu0
        %v2288 = vadd.f32 0.0, %v2287
        %v2289 = vpop.f32.mrb[0].mxu0
        %2290 = vmatprep.mubr.f32.mxu0 0.0
        %2291 = vmatmul.mubr.f32.gmra.mrb[0].mxu0 %v2124
        %v2292 = vpop.f32.mrb[0].mxu0
        %v2293 = vadd.f32 0.0, %v2292
        %v2294 = vpop.f32.mrb[0].mxu0
        %2295 = vmatprep.mubr.f32.mxu0 0.0
        %2296 = vmatmul.mubr.f32.gmra.mrb[0].mxu0 %v2127
        %v2297 = vpop.f32.mrb[0].mxu0
        %v2298 = vadd.f32 0.0, %v2297
        %v2299 = vpop.f32.mrb[0].mxu0
        %2300 = vmatprep.mubr.f32.mxu0 0.0
        %2301 = vmatmul.mubr.f32.gmra.mrb[0].mxu0 %v2130
        %v2302 = vpop.f32.mrb[0].mxu0
        %v2303 = vadd.f32 0.0, %v2302
        %v2304 = vpop.f32.mrb[0].mxu0
        %2305 = vmatprep.mubr.f32.mxu0 0.0
        %2306 = vmatmul.mubr.f32.gmra.mrb[0].mxu0 %v2133
        %v2307 = vpop.f32.mrb[0].mxu0
        %v2308 = vadd.f32 0.0, %v2307
        %v2309 = vpop.f32.mrb[0].mxu0
        %2310 = vmatprep.mubr.f32.mxu0 0.0
        %2311 = vmatmul.mubr.f32.gmra.mrb[0].mxu0 %v2136
        %v2312 = vpop.f32.mrb[0].mxu0
        %v2313 = vadd.f32 0.0, %v2312
        %v2314 = vpop.f32.mrb[0].mxu0
        %2315 = vmatprep.mubr.f32.mxu0 0.0
        %2316 = vmatmul.mubr.f32.gmra.mrb[0].mxu0 %v2139
        %v2317 = vpop.f32.mrb[0].mxu0
        %v2318 = vadd.f32 0.0, %v2317
        %v2319 = vpop.f32.mrb[0].mxu0
        %2320 = vmatprep.mubr.f32.mxu0 0.0
        %2321 = vmatmul.mubr.f32.gmra.mrb[0].mxu0 %v2142
        %v2322 = vpop.f32.mrb[0].mxu0
        %v2323 = vadd.f32 0.0, %v2322
        %v2324 = vpop.f32.mrb[0].mxu0
        %2325 = vmatprep.mubr.f32.mxu0 0.0
        %2326 = vmatmul.mubr.f32.gmra.mrb[0].mxu0 %v2145
        %v2327 = vpop.f32.mrb[0].mxu0
        %v2328 = vadd.f32 0.0, %v2327
        %v2329 = vpop.f32.mrb[0].mxu0
        %2330 = vmatprep.mubr.f32.mxu0 0.0
        %2331 = vmatmul.mubr.f32.gmra.mrb[0].mxu0 %v2148
        %v2332 = vpop.f32.mrb[0].mxu0
        %v2333 = vadd.f32 0.0, %v2332
        %v2334 = vpop.f32.mrb[0].mxu0
        %2335 = vmatprep.mubr.f32.mxu0 0.0
        %2336 = vmatmul.mubr.f32.gmra.mrb[0].mxu0 %v2151
        %v2337 = vpop.f32.mrb[0].mxu0
        %v2338 = vadd.f32 0.0, %v2337
        %v2339 = vpop.f32.mrb[0].mxu0
        %2340 = vmatprep.mubr.f32.mxu0 0.0
        %2341 = vmatmul.mubr.f32.gmra.mrb[0].mxu0 %v2154
        %v2342 = vpop.f32.mrb[0].mxu0
        %v2343 = vadd.f32 0.0, %v2342
        %v2344 = vpop.f32.mrb[0].mxu0
        %2345 = vmatprep.mubr.f32.mxu0 0.0
        %2346 = vmatmul.mubr.f32.gmra.mrb[0].mxu0 %v2157
        %v2347 = vpop.f32.mrb[0].mxu0
        %v2348 = vadd.f32 0.0, %v2347
        %v2349 = vpop.f32.mrb[0].mxu0
        %2350 = vmatprep.mubr.f32.mxu0 0.0
        %2351 = vmatmul.mubr.f32.gmra.mrb[0].mxu0 %v2160
        %v2352 = vpop.f32.mrb[0].mxu0
        %v2353 = vadd.f32 0.0, %v2352
        %v2354 = vpop.f32.mrb[0].mxu0
        %2355 = vmatprep.mubr.f32.mxu0 0.0
        %2356 = vmatmul.mubr.f32.gmra.mrb[0].mxu0 %v2163
        %v2357 = vpop.f32.mrb[0].mxu0
        %v2358 = vadd.f32 0.0, %v2357
        %v2359 = vpop.f32.mrb[0].mxu0
        %2360 = vmatprep.mubr.f32.mxu0 0.0
        %2361 = vmatmul.mubr.f32.gmra.mrb[0].mxu0 %v2166
        %v2362 = vpop.f32.mrb[0].mxu0
        %v2363 = vadd.f32 0.0, %v2362
        %v2364 = vpop.f32.mrb[0].mxu0
        %2365 = vmatprep.mubr.f32.mxu0 0.0
        %2366 = vmatmul.mubr.f32.gmra.mrb[0].mxu0 %v2169
        %v2367 = vpop.f32.mrb[0].mxu0
        %v2368 = vadd.f32 0.0, %v2367
        %v2369 = vpop.f32.mrb[0].mxu0
        %2370 = vmatprep.mubr.f32.mxu0 0.0
        %2371 = vmatmul.mubr.f32.gmra.mrb[0].mxu0 %v2172
        %v2372 = vpop.f32.mrb[0].mxu0
        %v2373 = vadd.f32 0.0, %v2372
        %v2374 = vpop.f32.mrb[0].mxu0
        %2375 = vmatprep.mubr.f32.mxu0 0.0
        %2376 = vmatmul.mubr.f32.gmra.mrb[0].mxu0 %v2175
        %v2377 = vpop.f32.mrb[0].mxu0
        %v2378 = vadd.f32 0.0, %v2377
        %v2379 = vpop.f32.mrb[0].mxu0
        %2380 = vmatprep.mubr.f32.mxu0 0.0
        %2381 = vmatmul.mubr.f32.gmra.mrb[0].mxu0 %v2178
        %v2382 = vpop.f32.mrb[0].mxu0
        %v2383 = vadd.f32 0.0, %v2382
        %v2384 = vpop.f32.mrb[0].mxu0
        %2385 = vmatprep.mubr.f32.mxu0 0.0
        %2386 = vmatmul.mubr.f32.gmra.mrb[0].mxu0 %v2181
        %v2387 = vpop.f32.mrb[0].mxu0
        %v2388 = vadd.f32 0.0, %v2387
        %v2389 = vpop.f32.mrb[0].mxu0
        %2390 = vmatprep.mubr.f32.mxu0 0.0
        %2391 = vmatmul.mubr.f32.gmra.mrb[0].mxu0 %v2184
        %v2392 = vpop.f32.mrb[0].mxu0
        %v2393 = vadd.f32 0.0, %v2392
        %v2394 = vpop.f32.mrb[0].mxu0
        %2395 = vmatprep.mubr.f32.mxu0 0.0
        %2396 = vmatmul.mubr.f32.gmra.mrb[0].mxu0 %v2187
        %v2397 = vpop.f32.mrb[0].mxu0
        %v2398 = vadd.f32 0.0, %v2397
        %v2399 = vpop.f32.mrb[0].mxu0
        %2400 = vmatprep.mubr.f32.mxu0 0.0
        %2401 = vmatmul.mubr.f32.gmra.mrb[0].mxu0 %v2190
        %v2402 = vpop.f32.mrb[0].mxu0
        %v2403 = vadd.f32 0.0, %v2402
        %v2404 = vpop.f32.mrb[0].mxu0
        %2405 = vmatprep.mubr.f32.mxu0 0.0
        %2406 = vmatmul.mubr.f32.gmra.mrb[0].mxu0 %v2193
        %v2407 = vpop.f32.mrb[0].mxu0
        %v2408 = vadd.f32 0.0, %v2407
        %v2409 = vpop.f32.mrb[0].mxu0
        %2410 = vmatprep.mubr.f32.mxu0 0.0
        %2411 = vmatmul.mubr.f32.gmra.mrb[0].mxu0 %v2196
        %v2412 = vpop.f32.mrb[0].mxu0
        %v2413 = vadd.f32 0.0, %v2412
        %v2414 = vpop.f32.mrb[0].mxu0
        %2415 = vmatprep.mubr.f32.mxu0 0.0
        %2416 = vmatmul.mubr.f32.gmra.mrb[0].mxu0 %v2199
        %v2417 = vpop.f32.mrb[0].mxu0
        %v2418 = vadd.f32 0.0, %v2417
        %v2419 = vpop.f32.mrb[0].mxu0
        %2420 = vmatprep.mubr.f32.mxu0 0.0
        %2421 = vmatmul.mubr.f32.gmra.mrb[0].mxu0 %v2202
        %v2422 = vpop.f32.mrb[0].mxu0
        %v2423 = vadd.f32 0.0, %v2422
        %v2424 = vpop.f32.mrb[0].mxu0
        %2425 = vmatprep.mubr.f32.mxu0 0.0
        %2426 = vmatmul.mubr.f32.gmra.mrb[0].mxu0 %v2205
        %v2427 = vpop.f32.mrb[0].mxu0
        %v2428 = vadd.f32 0.0, %v2427
        %v2429 = vpop.f32.mrb[0].mxu0
        %2430 = vmatprep.mubr.f32.mxu0 0.0
        %2431 = vmatmul.mubr.f32.gmra.mrb[0].mxu0 %v2208
        %v2432 = vpop.f32.mrb[0].mxu0
        %v2433 = vadd.f32 0.0, %v2432
        %v2434 = vpop.f32.mrb[0].mxu0
        %2435 = vmatprep.mubr.f32.mxu0 0.0
        %2436 = vmatmul.mubr.f32.gmra.mrb[0].mxu0 %v2211
        %v2437 = vpop.f32.mrb[0].mxu0
        %v2438 = vadd.f32 0.0, %v2437
        %v2439 = vpop.f32.mrb[0].mxu0
        %2440 = vdwg.mxu0
        %v2441 = vadd.f32 %v2083, %v2283
        %v2442 = vadd.f32 %v2084, %v2288
        %v2443 = vadd.f32 %v2085, %v2293
        %v2444 = vadd.f32 %v2086, %v2298
        %v2445 = vadd.f32 %v2087, %v2303
        %v2446 = vadd.f32 %v2088, %v2308
        %v2447 = vadd.f32 %v2089, %v2313
        %v2448 = vadd.f32 %v2090, %v2318
        %v2449 = vadd.f32 %v2091, %v2323
        %v2450 = vadd.f32 %v2092, %v2328
        %v2451 = vadd.f32 %v2093, %v2333
        %v2452 = vadd.f32 %v2094, %v2338
        %v2453 = vadd.f32 %v2095, %v2343
        %v2454 = vadd.f32 %v2096, %v2348
        %v2455 = vadd.f32 %v2097, %v2353
        %v2456 = vadd.f32 %v2098, %v2358
        %v2457 = vadd.f32 %v2099, %v2363
        %v2458 = vadd.f32 %v2100, %v2368
        %v2459 = vadd.f32 %v2101, %v2373
        %v2460 = vadd.f32 %v2102, %v2378
        %v2461 = vadd.f32 %v2103, %v2383
        %v2462 = vadd.f32 %v2104, %v2388
        %v2463 = vadd.f32 %v2105, %v2393
        %v2464 = vadd.f32 %v2106, %v2398
        %v2465 = vadd.f32 %v2107, %v2403
        %v2466 = vadd.f32 %v2108, %v2408
        %v2467 = vadd.f32 %v2109, %v2413
        %v2468 = vadd.f32 %v2110, %v2418
        %v2469 = vadd.f32 %v2111, %v2423
        %v2470 = vadd.f32 %v2112, %v2428
        %v2471 = vadd.f32 %v2113, %v2433
        %v2472 = vadd.f32 %v2114, %v2438
        %2473 = vst [vmem:[#allocation2] sm:$0xff] %v2441
        %2474 = vst [vmem:[#allocation2 + $0x8] sm:$0xff] %v2442
        %2475 = vst [vmem:[#allocation2 + $0x10] sm:$0xff] %v2443
        %2476 = vst [vmem:[#allocation2 + $0x18] sm:$0xff] %v2444
        %2477 = vst [vmem:[#allocation2 + $0x20] sm:$0xff] %v2445
        %2478 = vst [vmem:[#allocation2 + $0x28] sm:$0xff] %v2446
        %2479 = vst [vmem:[#allocation2 + $0x30] sm:$0xff] %v2447
        %2480 = vst [vmem:[#allocation2 + $0x38] sm:$0xff] %v2448
        %2481 = vst [vmem:[#allocation2 + $0x40] sm:$0xff] %v2449
        %2482 = vst [vmem:[#allocation2 + $0x48] sm:$0xff] %v2450
        %2483 = vst [vmem:[#allocation2 + $0x50] sm:$0xff] %v2451
        %2484 = vst [vmem:[#allocation2 + $0x58] sm:$0xff] %v2452
        %2485 = vst [vmem:[#allocation2 + $0x60] sm:$0xff] %v2453
        %2486 = vst [vmem:[#allocation2 + $0x68] sm:$0xff] %v2454
        %2487 = vst [vmem:[#allocation2 + $0x70] sm:$0xff] %v2455
        %2488 = vst [vmem:[#allocation2 + $0x78] sm:$0xff] %v2456
        %2489 = vst [vmem:[#allocation2 + $0x80] sm:$0xff] %v2457
        %2490 = vst [vmem:[#allocation2 + $0x88] sm:$0xff] %v2458
        %2491 = vst [vmem:[#allocation2 + $0x90] sm:$0xff] %v2459
        %2492 = vst [vmem:[#allocation2 + $0x98] sm:$0xff] %v2460
        %2493 = vst [vmem:[#allocation2 + $0xa0] sm:$0xff] %v2461
        %2494 = vst [vmem:[#allocation2 + $0xa8] sm:$0xff] %v2462
        %2495 = vst [vmem:[#allocation2 + $0xb0] sm:$0xff] %v2463
        %2496 = vst [vmem:[#allocation2 + $0xb8] sm:$0xff] %v2464
        %2497 = vst [vmem:[#allocation2 + $0xc0] sm:$0xff] %v2465
        %2498 = vst [vmem:[#allocation2 + $0xc8] sm:$0xff] %v2466
        %2499 = vst [vmem:[#allocation2 + $0xd0] sm:$0xff] %v2467
        %2500 = vst [vmem:[#allocation2 + $0xd8] sm:$0xff] %v2468
        %2501 = vst [vmem:[#allocation2 + $0xe0] sm:$0xff] %v2469
        %2502 = vst [vmem:[#allocation2 + $0xe8] sm:$0xff] %v2470
        %2503 = vst [vmem:[#allocation2 + $0xf0] sm:$0xff] %v2471
        %2504 = vst [vmem:[#allocation2 + $0xf8] sm:$0xff] %v2472
        %s2505 = scalar_lea.vmem %s260, 1536 [#allocation3]
        %v2506 = vld [vmem:[%s2505] sm:$0xff]
        %v2507 = vld [vmem:[%s2505 + $0x8] sm:$0xff]
        %v2508 = vld [vmem:[%s2505 + $0x10] sm:$0xff]
        %v2509 = vld [vmem:[%s2505 + $0x18] sm:$0xff]
        %v2510 = vld [vmem:[%s2505 + $0x20] sm:$0xff]
        %v2511 = vld [vmem:[%s2505 + $0x28] sm:$0xff]
        %v2512 = vld [vmem:[%s2505 + $0x30] sm:$0xff]
        %v2513 = vld [vmem:[%s2505 + $0x38] sm:$0xff]
        %v2514 = vld [vmem:[%s2505 + $0x40] sm:$0xff]
        %v2515 = vld [vmem:[%s2505 + $0x48] sm:$0xff]
        %v2516 = vld [vmem:[%s2505 + $0x50] sm:$0xff]
        %v2517 = vld [vmem:[%s2505 + $0x58] sm:$0xff]
        %v2518 = vld [vmem:[%s2505 + $0x60] sm:$0xff]
        %v2519 = vld [vmem:[%s2505 + $0x68] sm:$0xff]
        %v2520 = vld [vmem:[%s2505 + $0x70] sm:$0xff]
        %v2521 = vld [vmem:[%s2505 + $0x78] sm:$0xff]
        %v2522 = vld [vmem:[%s2505 + $0x80] sm:$0xff]
        %v2523 = vld [vmem:[%s2505 + $0x88] sm:$0xff]
        %v2524 = vld [vmem:[%s2505 + $0x90] sm:$0xff]
        %v2525 = vld [vmem:[%s2505 + $0x98] sm:$0xff]
        %v2526 = vld [vmem:[%s2505 + $0xa0] sm:$0xff]
        %v2527 = vld [vmem:[%s2505 + $0xa8] sm:$0xff]
        %v2528 = vld [vmem:[%s2505 + $0xb0] sm:$0xff]
        %v2529 = vld [vmem:[%s2505 + $0xb8] sm:$0xff]
        %v2530 = vld [vmem:[%s2505 + $0xc0] sm:$0xff]
        %v2531 = vld [vmem:[%s2505 + $0xc8] sm:$0xff]
        %v2532 = vld [vmem:[%s2505 + $0xd0] sm:$0xff]
        %v2533 = vld [vmem:[%s2505 + $0xd8] sm:$0xff]
        %v2534 = vld [vmem:[%s2505 + $0xe0] sm:$0xff]
        %v2535 = vld [vmem:[%s2505 + $0xe8] sm:$0xff]
        %v2536 = vld [vmem:[%s2505 + $0xf0] sm:$0xff]
        %v2537 = vld [vmem:[%s2505 + $0xf8] sm:$0xff]
        %v2538 = vld [vmem:[%s2505 + $0x100] sm:$0xff]
        %v2539 = vld [vmem:[%s2505 + $0x108] sm:$0xff]
        %v2540 = vld [vmem:[%s2505 + $0x110] sm:$0xff]
        %v2541 = vld [vmem:[%s2505 + $0x118] sm:$0xff]
        %v2542 = vld [vmem:[%s2505 + $0x120] sm:$0xff]
        %v2543 = vld [vmem:[%s2505 + $0x128] sm:$0xff]
        %v2544 = vld [vmem:[%s2505 + $0x130] sm:$0xff]
        %v2545 = vld [vmem:[%s2505 + $0x138] sm:$0xff]
        %v2546 = vld [vmem:[%s2505 + $0x140] sm:$0xff]
        %v2547 = vld [vmem:[%s2505 + $0x148] sm:$0xff]
        %v2548 = vld [vmem:[%s2505 + $0x150] sm:$0xff]
        %v2549 = vld [vmem:[%s2505 + $0x158] sm:$0xff]
        %v2550 = vld [vmem:[%s2505 + $0x160] sm:$0xff]
        %v2551 = vld [vmem:[%s2505 + $0x168] sm:$0xff]
        %v2552 = vld [vmem:[%s2505 + $0x170] sm:$0xff]
        %v2553 = vld [vmem:[%s2505 + $0x178] sm:$0xff]
        %v2554 = vld [vmem:[%s2505 + $0x180] sm:$0xff]
        %v2555 = vld [vmem:[%s2505 + $0x188] sm:$0xff]
        %v2556 = vld [vmem:[%s2505 + $0x190] sm:$0xff]
        %v2557 = vld [vmem:[%s2505 + $0x198] sm:$0xff]
        %v2558 = vld [vmem:[%s2505 + $0x1a0] sm:$0xff]
        %v2559 = vld [vmem:[%s2505 + $0x1a8] sm:$0xff]
        %v2560 = vld [vmem:[%s2505 + $0x1b0] sm:$0xff]
        %v2561 = vld [vmem:[%s2505 + $0x1b8] sm:$0xff]
        %v2562 = vld [vmem:[%s2505 + $0x1c0] sm:$0xff]
        %v2563 = vld [vmem:[%s2505 + $0x1c8] sm:$0xff]
        %v2564 = vld [vmem:[%s2505 + $0x1d0] sm:$0xff]
        %v2565 = vld [vmem:[%s2505 + $0x1d8] sm:$0xff]
        %v2566 = vld [vmem:[%s2505 + $0x1e0] sm:$0xff]
        %v2567 = vld [vmem:[%s2505 + $0x1e8] sm:$0xff]
        %v2568 = vld [vmem:[%s2505 + $0x1f0] sm:$0xff]
        %v2569 = vld [vmem:[%s2505 + $0x1f8] sm:$0xff]
        %2570 = vmatprep.subr.mxu0 0.0
        %2571 = vmatpush1.msra.mxu0 %v305
        %2572 = vmatprep.subr.mxu0 0.0
        %2573 = vmatpush1.msra.mxu0 %v306
        %2574 = vmatprep.subr.mxu0 0.0
        %2575 = vmatpush1.msra.mxu0 %v307
        %2576 = vmatprep.subr.mxu0 0.0
        %2577 = vmatpush1.msra.mxu0 %v308
        %2578 = vmatprep.subr.mxu0 0.0
        %2579 = vmatpush1.msra.mxu0 %v309
        %2580 = vmatprep.subr.mxu0 0.0
        %2581 = vmatpush1.msra.mxu0 %v310
        %2582 = vmatprep.subr.mxu0 0.0
        %2583 = vmatpush1.msra.mxu0 %v311
        %2584 = vmatprep.subr.mxu0 0.0
        %2585 = vmatpush1.msra.mxu0 %v312
        %2586 = vmatprep.subr.mxu0 0.0
        %2587 = vmatpush1.msra.mxu0 %v313
        %2588 = vmatprep.subr.mxu0 0.0
        %2589 = vmatpush1.msra.mxu0 %v314
        %2590 = vmatprep.subr.mxu0 0.0
        %2591 = vmatpush1.msra.mxu0 %v315
        %2592 = vmatprep.subr.mxu0 0.0
        %2593 = vmatpush1.msra.mxu0 %v316
        %2594 = vmatprep.subr.mxu0 0.0
        %2595 = vmatpush1.msra.mxu0 %v317
        %2596 = vmatprep.subr.mxu0 0.0
        %2597 = vmatpush1.msra.mxu0 %v318
        %2598 = vmatprep.subr.mxu0 0.0
        %2599 = vmatpush1.msra.mxu0 %v319
        %2600 = vmatprep.subr.mxu0 0.0
        %2601 = vmatpush1.msra.mxu0 %v320
        %2602 = vmatprep.subr.mxu0 0.0
        %2603 = vmatpush1.msra.mxu0 %v321
        %2604 = vmatprep.subr.mxu0 0.0
        %2605 = vmatpush1.msra.mxu0 %v322
        %2606 = vmatprep.subr.mxu0 0.0
        %2607 = vmatpush1.msra.mxu0 %v323
        %2608 = vmatprep.subr.mxu0 0.0
        %2609 = vmatpush1.msra.mxu0 %v324
        %2610 = vmatprep.subr.mxu0 0.0
        %2611 = vmatpush1.msra.mxu0 %v325
        %2612 = vmatprep.subr.mxu0 0.0
        %2613 = vmatpush1.msra.mxu0 %v326
        %2614 = vmatprep.subr.mxu0 0.0
        %2615 = vmatpush1.msra.mxu0 %v327
        %2616 = vmatprep.subr.mxu0 0.0
        %2617 = vmatpush1.msra.mxu0 %v328
        %2618 = vmatprep.subr.mxu0 0.0
        %2619 = vmatpush1.msra.mxu0 %v329
        %2620 = vmatprep.subr.mxu0 0.0
        %2621 = vmatpush1.msra.mxu0 %v330
        %2622 = vmatprep.subr.mxu0 0.0
        %2623 = vmatpush1.msra.mxu0 %v331
        %2624 = vmatprep.subr.mxu0 0.0
        %2625 = vmatpush1.msra.mxu0 %v332
        %2626 = vmatprep.subr.mxu0 0.0
        %2627 = vmatpush1.msra.mxu0 %v333
        %2628 = vmatprep.subr.mxu0 0.0
        %2629 = vmatpush1.msra.mxu0 %v334
        %2630 = vmatprep.subr.mxu0 0.0
        %2631 = vmatpush1.msra.mxu0 %v335
        %2632 = vmatprep.subr.mxu0 0.0
        %2633 = vmatpush1.msra.mxu0 %v336
        %2634 = vmatprep.mubr.f32.mxu0 %v2507
        %2635 = vmatmul.mubr.f32.gmra.mrb[0].mxu0 %v2506
        %v2636 = vpop.f32.mrb[0].mxu0
        %v2637 = vadd.f32 0.0, %v2636
        %v2638 = vpop.f32.mrb[0].mxu0
        %2639 = vmatprep.mubr.f32.mxu0 %v2509
        %2640 = vmatmul.mubr.f32.gmra.mrb[0].mxu0 %v2508
        %v2641 = vpop.f32.mrb[0].mxu0
        %v2642 = vadd.f32 0.0, %v2641
        %v2643 = vpop.f32.mrb[0].mxu0
        %2644 = vmatprep.mubr.f32.mxu0 %v2511
        %2645 = vmatmul.mubr.f32.gmra.mrb[0].mxu0 %v2510
        %v2646 = vpop.f32.mrb[0].mxu0
        %v2647 = vadd.f32 0.0, %v2646
        %v2648 = vpop.f32.mrb[0].mxu0
        %2649 = vmatprep.mubr.f32.mxu0 %v2513
        %2650 = vmatmul.mubr.f32.gmra.mrb[0].mxu0 %v2512
        %v2651 = vpop.f32.mrb[0].mxu0
        %v2652 = vadd.f32 0.0, %v2651
        %v2653 = vpop.f32.mrb[0].mxu0
        %2654 = vmatprep.mubr.f32.mxu0 %v2515
        %2655 = vmatmul.mubr.f32.gmra.mrb[0].mxu0 %v2514
        %v2656 = vpop.f32.mrb[0].mxu0
        %v2657 = vadd.f32 0.0, %v2656
        %v2658 = vpop.f32.mrb[0].mxu0
        %2659 = vmatprep.mubr.f32.mxu0 %v2517
        %2660 = vmatmul.mubr.f32.gmra.mrb[0].mxu0 %v2516
        %v2661 = vpop.f32.mrb[0].mxu0
        %v2662 = vadd.f32 0.0, %v2661
        %v2663 = vpop.f32.mrb[0].mxu0
        %2664 = vmatprep.mubr.f32.mxu0 %v2519
        %2665 = vmatmul.mubr.f32.gmra.mrb[0].mxu0 %v2518
        %v2666 = vpop.f32.mrb[0].mxu0
        %v2667 = vadd.f32 0.0, %v2666
        %v2668 = vpop.f32.mrb[0].mxu0
        %2669 = vmatprep.mubr.f32.mxu0 %v2521
        %2670 = vmatmul.mubr.f32.gmra.mrb[0].mxu0 %v2520
        %v2671 = vpop.f32.mrb[0].mxu0
        %v2672 = vadd.f32 0.0, %v2671
        %v2673 = vpop.f32.mrb[0].mxu0
        %2674 = vmatprep.mubr.f32.mxu0 %v2523
        %2675 = vmatmul.mubr.f32.gmra.mrb[0].mxu0 %v2522
        %v2676 = vpop.f32.mrb[0].mxu0
        %v2677 = vadd.f32 0.0, %v2676
        %v2678 = vpop.f32.mrb[0].mxu0
        %2679 = vmatprep.mubr.f32.mxu0 %v2525
        %2680 = vmatmul.mubr.f32.gmra.mrb[0].mxu0 %v2524
        %v2681 = vpop.f32.mrb[0].mxu0
        %v2682 = vadd.f32 0.0, %v2681
        %v2683 = vpop.f32.mrb[0].mxu0
        %2684 = vmatprep.mubr.f32.mxu0 %v2527
        %2685 = vmatmul.mubr.f32.gmra.mrb[0].mxu0 %v2526
        %v2686 = vpop.f32.mrb[0].mxu0
        %v2687 = vadd.f32 0.0, %v2686
        %v2688 = vpop.f32.mrb[0].mxu0
        %2689 = vmatprep.mubr.f32.mxu0 %v2529
        %2690 = vmatmul.mubr.f32.gmra.mrb[0].mxu0 %v2528
        %v2691 = vpop.f32.mrb[0].mxu0
        %v2692 = vadd.f32 0.0, %v2691
        %v2693 = vpop.f32.mrb[0].mxu0
        %2694 = vmatprep.mubr.f32.mxu0 %v2531
        %2695 = vmatmul.mubr.f32.gmra.mrb[0].mxu0 %v2530
        %v2696 = vpop.f32.mrb[0].mxu0
        %v2697 = vadd.f32 0.0, %v2696
        %v2698 = vpop.f32.mrb[0].mxu0
        %2699 = vmatprep.mubr.f32.mxu0 %v2533
        %2700 = vmatmul.mubr.f32.gmra.mrb[0].mxu0 %v2532
        %v2701 = vpop.f32.mrb[0].mxu0
        %v2702 = vadd.f32 0.0, %v2701
        %v2703 = vpop.f32.mrb[0].mxu0
        %2704 = vmatprep.mubr.f32.mxu0 %v2535
        %2705 = vmatmul.mubr.f32.gmra.mrb[0].mxu0 %v2534
        %v2706 = vpop.f32.mrb[0].mxu0
        %v2707 = vadd.f32 0.0, %v2706
        %v2708 = vpop.f32.mrb[0].mxu0
        %2709 = vmatprep.mubr.f32.mxu0 %v2537
        %2710 = vmatmul.mubr.f32.gmra.mrb[0].mxu0 %v2536
        %v2711 = vpop.f32.mrb[0].mxu0
        %v2712 = vadd.f32 0.0, %v2711
        %v2713 = vpop.f32.mrb[0].mxu0
        %2714 = vmatprep.mubr.f32.mxu0 %v2539
        %2715 = vmatmul.mubr.f32.gmra.mrb[0].mxu0 %v2538
        %v2716 = vpop.f32.mrb[0].mxu0
        %v2717 = vadd.f32 0.0, %v2716
        %v2718 = vpop.f32.mrb[0].mxu0
        %2719 = vmatprep.mubr.f32.mxu0 %v2541
        %2720 = vmatmul.mubr.f32.gmra.mrb[0].mxu0 %v2540
        %v2721 = vpop.f32.mrb[0].mxu0
        %v2722 = vadd.f32 0.0, %v2721
        %v2723 = vpop.f32.mrb[0].mxu0
        %2724 = vmatprep.mubr.f32.mxu0 %v2543
        %2725 = vmatmul.mubr.f32.gmra.mrb[0].mxu0 %v2542
        %v2726 = vpop.f32.mrb[0].mxu0
        %v2727 = vadd.f32 0.0, %v2726
        %v2728 = vpop.f32.mrb[0].mxu0
        %2729 = vmatprep.mubr.f32.mxu0 %v2545
        %2730 = vmatmul.mubr.f32.gmra.mrb[0].mxu0 %v2544
        %v2731 = vpop.f32.mrb[0].mxu0
        %v2732 = vadd.f32 0.0, %v2731
        %v2733 = vpop.f32.mrb[0].mxu0
        %2734 = vmatprep.mubr.f32.mxu0 %v2547
        %2735 = vmatmul.mubr.f32.gmra.mrb[0].mxu0 %v2546
        %v2736 = vpop.f32.mrb[0].mxu0
        %v2737 = vadd.f32 0.0, %v2736
        %v2738 = vpop.f32.mrb[0].mxu0
        %2739 = vmatprep.mubr.f32.mxu0 %v2549
        %2740 = vmatmul.mubr.f32.gmra.mrb[0].mxu0 %v2548
        %v2741 = vpop.f32.mrb[0].mxu0
        %v2742 = vadd.f32 0.0, %v2741
        %v2743 = vpop.f32.mrb[0].mxu0
        %2744 = vmatprep.mubr.f32.mxu0 %v2551
        %2745 = vmatmul.mubr.f32.gmra.mrb[0].mxu0 %v2550
        %v2746 = vpop.f32.mrb[0].mxu0
        %v2747 = vadd.f32 0.0, %v2746
        %v2748 = vpop.f32.mrb[0].mxu0
        %2749 = vmatprep.mubr.f32.mxu0 %v2553
        %2750 = vmatmul.mubr.f32.gmra.mrb[0].mxu0 %v2552
        %v2751 = vpop.f32.mrb[0].mxu0
        %v2752 = vadd.f32 0.0, %v2751
        %v2753 = vpop.f32.mrb[0].mxu0
        %2754 = vmatprep.mubr.f32.mxu0 %v2555
        %2755 = vmatmul.mubr.f32.gmra.mrb[0].mxu0 %v2554
        %v2756 = vpop.f32.mrb[0].mxu0
        %v2757 = vadd.f32 0.0, %v2756
        %v2758 = vpop.f32.mrb[0].mxu0
        %2759 = vmatprep.mubr.f32.mxu0 %v2557
        %2760 = vmatmul.mubr.f32.gmra.mrb[0].mxu0 %v2556
        %v2761 = vpop.f32.mrb[0].mxu0
        %v2762 = vadd.f32 0.0, %v2761
        %v2763 = vpop.f32.mrb[0].mxu0
        %2764 = vmatprep.mubr.f32.mxu0 %v2559
        %2765 = vmatmul.mubr.f32.gmra.mrb[0].mxu0 %v2558
        %v2766 = vpop.f32.mrb[0].mxu0
        %v2767 = vadd.f32 0.0, %v2766
        %v2768 = vpop.f32.mrb[0].mxu0
        %2769 = vmatprep.mubr.f32.mxu0 %v2561
        %2770 = vmatmul.mubr.f32.gmra.mrb[0].mxu0 %v2560
        %v2771 = vpop.f32.mrb[0].mxu0
        %v2772 = vadd.f32 0.0, %v2771
        %v2773 = vpop.f32.mrb[0].mxu0
        %2774 = vmatprep.mubr.f32.mxu0 %v2563
        %2775 = vmatmul.mubr.f32.gmra.mrb[0].mxu0 %v2562
        %v2776 = vpop.f32.mrb[0].mxu0
        %v2777 = vadd.f32 0.0, %v2776
        %v2778 = vpop.f32.mrb[0].mxu0
        %2779 = vmatprep.mubr.f32.mxu0 %v2565
        %2780 = vmatmul.mubr.f32.gmra.mrb[0].mxu0 %v2564
        %v2781 = vpop.f32.mrb[0].mxu0
        %v2782 = vadd.f32 0.0, %v2781
        %v2783 = vpop.f32.mrb[0].mxu0
        %2784 = vmatprep.mubr.f32.mxu0 %v2567
        %2785 = vmatmul.mubr.f32.gmra.mrb[0].mxu0 %v2566
        %v2786 = vpop.f32.mrb[0].mxu0
        %v2787 = vadd.f32 0.0, %v2786
        %v2788 = vpop.f32.mrb[0].mxu0
        %2789 = vmatprep.mubr.f32.mxu0 %v2569
        %2790 = vmatmul.mubr.f32.gmra.mrb[0].mxu0 %v2568
        %v2791 = vpop.f32.mrb[0].mxu0
        %v2792 = vadd.f32 0.0, %v2791
        %v2793 = vpop.f32.mrb[0].mxu0
        %2794 = vdwg.mxu0
        %v2795 = vld [vmem:[#allocation2] sm:$0xff]
        %v2796 = vld [vmem:[#allocation2 + $0x8] sm:$0xff]
        %v2797 = vld [vmem:[#allocation2 + $0x10] sm:$0xff]
        %v2798 = vld [vmem:[#allocation2 + $0x18] sm:$0xff]
        %v2799 = vld [vmem:[#allocation2 + $0x20] sm:$0xff]
        %v2800 = vld [vmem:[#allocation2 + $0x28] sm:$0xff]
        %v2801 = vld [vmem:[#allocation2 + $0x30] sm:$0xff]
        %v2802 = vld [vmem:[#allocation2 + $0x38] sm:$0xff]
        %v2803 = vld [vmem:[#allocation2 + $0x40] sm:$0xff]
        %v2804 = vld [vmem:[#allocation2 + $0x48] sm:$0xff]
        %v2805 = vld [vmem:[#allocation2 + $0x50] sm:$0xff]
        %v2806 = vld [vmem:[#allocation2 + $0x58] sm:$0xff]
        %v2807 = vld [vmem:[#allocation2 + $0x60] sm:$0xff]
        %v2808 = vld [vmem:[#allocation2 + $0x68] sm:$0xff]
        %v2809 = vld [vmem:[#allocation2 + $0x70] sm:$0xff]
        %v2810 = vld [vmem:[#allocation2 + $0x78] sm:$0xff]
        %v2811 = vld [vmem:[#allocation2 + $0x80] sm:$0xff]
        %v2812 = vld [vmem:[#allocation2 + $0x88] sm:$0xff]
        %v2813 = vld [vmem:[#allocation2 + $0x90] sm:$0xff]
        %v2814 = vld [vmem:[#allocation2 + $0x98] sm:$0xff]
        %v2815 = vld [vmem:[#allocation2 + $0xa0] sm:$0xff]
        %v2816 = vld [vmem:[#allocation2 + $0xa8] sm:$0xff]
        %v2817 = vld [vmem:[#allocation2 + $0xb0] sm:$0xff]
        %v2818 = vld [vmem:[#allocation2 + $0xb8] sm:$0xff]
        %v2819 = vld [vmem:[#allocation2 + $0xc0] sm:$0xff]
        %v2820 = vld [vmem:[#allocation2 + $0xc8] sm:$0xff]
        %v2821 = vld [vmem:[#allocation2 + $0xd0] sm:$0xff]
        %v2822 = vld [vmem:[#allocation2 + $0xd8] sm:$0xff]
        %v2823 = vld [vmem:[#allocation2 + $0xe0] sm:$0xff]
        %v2824 = vld [vmem:[#allocation2 + $0xe8] sm:$0xff]
        %v2825 = vld [vmem:[#allocation2 + $0xf0] sm:$0xff]
        %v2826 = vld [vmem:[#allocation2 + $0xf8] sm:$0xff]
        %s2827 = scalar_lea.vmem [#allocation6], 12
        %v2828 = vld [vmem:[%s2827] sm:$0xf]
        %v2830 = vsel %vm691, %v2637, 0
        %v2833 = vsel %vm691, %v2642, 0
        %v2836 = vsel %vm691, %v2647, 0
        %v2839 = vsel %vm691, %v2652, 0
        %v2842 = vsel %vm691, %v2657, 0
        %v2845 = vsel %vm691, %v2662, 0
        %v2848 = vsel %vm691, %v2667, 0
        %v2851 = vsel %vm691, %v2672, 0
        %v2854 = vsel %vm691, %v2677, 0
        %v2857 = vsel %vm691, %v2682, 0
        %v2860 = vsel %vm691, %v2687, 0
        %v2863 = vsel %vm691, %v2692, 0
        %v2866 = vsel %vm691, %v2697, 0
        %v2869 = vsel %vm691, %v2702, 0
        %v2872 = vsel %vm691, %v2707, 0
        %v2875 = vsel %vm691, %v2712, 0
        %v2878 = vsel %vm691, %v2717, 0
        %v2881 = vsel %vm691, %v2722, 0
        %v2884 = vsel %vm691, %v2727, 0
        %v2887 = vsel %vm691, %v2732, 0
        %v2890 = vsel %vm691, %v2737, 0
        %v2893 = vsel %vm691, %v2742, 0
        %v2896 = vsel %vm691, %v2747, 0
        %v2899 = vsel %vm691, %v2752, 0
        %v2902 = vsel %vm691, %v2757, 0
        %v2905 = vsel %vm691, %v2762, 0
        %v2908 = vsel %vm691, %v2767, 0
        %v2911 = vsel %vm691, %v2772, 0
        %v2914 = vsel %vm691, %v2777, 0
        %v2917 = vsel %vm691, %v2782, 0
        %v2920 = vsel %vm691, %v2787, 0
        %v2923 = vsel %vm691, %v2792, 0
        %v2926 = vsel %vm788, %v2828, 0
        %2928 = vmatprep.subr.mxu0 0.0
        %2929 = vmatpush1.msra.mxu0 %v2926
        %2930 = vmatprep.subr.mxu0 0.0
        %2931 = vmatpush1.msra.mxu0 0.0
        %2932 = vmatprep.subr.mxu0 0.0
        %2933 = vmatpush1.msra.mxu0 0.0
        %2934 = vmatprep.subr.mxu0 0.0
        %2935 = vmatpush1.msra.mxu0 0.0
        %2936 = vmatprep.subr.mxu0 0.0
        %2937 = vmatpush1.msra.mxu0 0.0
        %2938 = vmatprep.subr.mxu0 0.0
        %2939 = vmatpush1.msra.mxu0 0.0
        %2940 = vmatprep.subr.mxu0 0.0
        %2941 = vmatpush1.msra.mxu0 0.0
        %2942 = vmatprep.subr.mxu0 0.0
        %2943 = vmatpush1.msra.mxu0 0.0
        %2944 = vmatprep.subr.mxu0 0.0
        %2945 = vmatpush1.msra.mxu0 0.0
        %2946 = vmatprep.subr.mxu0 0.0
        %2947 = vmatpush1.msra.mxu0 0.0
        %2948 = vmatprep.subr.mxu0 0.0
        %2949 = vmatpush1.msra.mxu0 0.0
        %2950 = vmatprep.subr.mxu0 0.0
        %2951 = vmatpush1.msra.mxu0 0.0
        %2952 = vmatprep.subr.mxu0 0.0
        %2953 = vmatpush1.msra.mxu0 0.0
        %2954 = vmatprep.subr.mxu0 0.0
        %2955 = vmatpush1.msra.mxu0 0.0
        %2956 = vmatprep.subr.mxu0 0.0
        %2957 = vmatpush1.msra.mxu0 0.0
        %2958 = vmatprep.subr.mxu0 0.0
        %2959 = vmatpush1.msra.mxu0 0.0
        %2960 = vmatprep.subr.mxu0 0.0
        %2961 = vmatpush1.msra.mxu0 0.0
        %2962 = vmatprep.subr.mxu0 0.0
        %2963 = vmatpush1.msra.mxu0 0.0
        %2964 = vmatprep.subr.mxu0 0.0
        %2965 = vmatpush1.msra.mxu0 0.0
        %2966 = vmatprep.subr.mxu0 0.0
        %2967 = vmatpush1.msra.mxu0 0.0
        %2968 = vmatprep.subr.mxu0 0.0
        %2969 = vmatpush1.msra.mxu0 0.0
        %2970 = vmatprep.subr.mxu0 0.0
        %2971 = vmatpush1.msra.mxu0 0.0
        %2972 = vmatprep.subr.mxu0 0.0
        %2973 = vmatpush1.msra.mxu0 0.0
        %2974 = vmatprep.subr.mxu0 0.0
        %2975 = vmatpush1.msra.mxu0 0.0
        %2976 = vmatprep.subr.mxu0 0.0
        %2977 = vmatpush1.msra.mxu0 0.0
        %2978 = vmatprep.subr.mxu0 0.0
        %2979 = vmatpush1.msra.mxu0 0.0
        %2980 = vmatprep.subr.mxu0 0.0
        %2981 = vmatpush1.msra.mxu0 0.0
        %2982 = vmatprep.subr.mxu0 0.0
        %2983 = vmatpush1.msra.mxu0 0.0
        %2984 = vmatprep.subr.mxu0 0.0
        %2985 = vmatpush1.msra.mxu0 0.0
        %2986 = vmatprep.subr.mxu0 0.0
        %2987 = vmatpush1.msra.mxu0 0.0
        %2988 = vmatprep.subr.mxu0 0.0
        %2989 = vmatpush1.msra.mxu0 0.0
        %2990 = vmatprep.subr.mxu0 0.0
        %2991 = vmatpush1.msra.mxu0 0.0
        %2992 = vmatprep.mubr.f32.mxu0 0.0
        %2993 = vmatmul.mubr.f32.gmra.mrb[0].mxu0 %v2830
        %v2994 = vpop.f32.mrb[0].mxu0
        %v2995 = vadd.f32 0.0, %v2994
        %v2996 = vpop.f32.mrb[0].mxu0
        %2997 = vmatprep.mubr.f32.mxu0 0.0
        %2998 = vmatmul.mubr.f32.gmra.mrb[0].mxu0 %v2833
        %v2999 = vpop.f32.mrb[0].mxu0
        %v3000 = vadd.f32 0.0, %v2999
        %v3001 = vpop.f32.mrb[0].mxu0
        %3002 = vmatprep.mubr.f32.mxu0 0.0
        %3003 = vmatmul.mubr.f32.gmra.mrb[0].mxu0 %v2836
        %v3004 = vpop.f32.mrb[0].mxu0
        %v3005 = vadd.f32 0.0, %v3004
        %v3006 = vpop.f32.mrb[0].mxu0
        %3007 = vmatprep.mubr.f32.mxu0 0.0
        %3008 = vmatmul.mubr.f32.gmra.mrb[0].mxu0 %v2839
        %v3009 = vpop.f32.mrb[0].mxu0
        %v3010 = vadd.f32 0.0, %v3009
        %v3011 = vpop.f32.mrb[0].mxu0
        %3012 = vmatprep.mubr.f32.mxu0 0.0
        %3013 = vmatmul.mubr.f32.gmra.mrb[0].mxu0 %v2842
        %v3014 = vpop.f32.mrb[0].mxu0
        %v3015 = vadd.f32 0.0, %v3014
        %v3016 = vpop.f32.mrb[0].mxu0
        %3017 = vmatprep.mubr.f32.mxu0 0.0
        %3018 = vmatmul.mubr.f32.gmra.mrb[0].mxu0 %v2845
        %v3019 = vpop.f32.mrb[0].mxu0
        %v3020 = vadd.f32 0.0, %v3019
        %v3021 = vpop.f32.mrb[0].mxu0
        %3022 = vmatprep.mubr.f32.mxu0 0.0
        %3023 = vmatmul.mubr.f32.gmra.mrb[0].mxu0 %v2848
        %v3024 = vpop.f32.mrb[0].mxu0
        %v3025 = vadd.f32 0.0, %v3024
        %v3026 = vpop.f32.mrb[0].mxu0
        %3027 = vmatprep.mubr.f32.mxu0 0.0
        %3028 = vmatmul.mubr.f32.gmra.mrb[0].mxu0 %v2851
        %v3029 = vpop.f32.mrb[0].mxu0
        %v3030 = vadd.f32 0.0, %v3029
        %v3031 = vpop.f32.mrb[0].mxu0
        %3032 = vmatprep.mubr.f32.mxu0 0.0
        %3033 = vmatmul.mubr.f32.gmra.mrb[0].mxu0 %v2854
        %v3034 = vpop.f32.mrb[0].mxu0
        %v3035 = vadd.f32 0.0, %v3034
        %v3036 = vpop.f32.mrb[0].mxu0
        %3037 = vmatprep.mubr.f32.mxu0 0.0
        %3038 = vmatmul.mubr.f32.gmra.mrb[0].mxu0 %v2857
        %v3039 = vpop.f32.mrb[0].mxu0
        %v3040 = vadd.f32 0.0, %v3039
        %v3041 = vpop.f32.mrb[0].mxu0
        %3042 = vmatprep.mubr.f32.mxu0 0.0
        %3043 = vmatmul.mubr.f32.gmra.mrb[0].mxu0 %v2860
        %v3044 = vpop.f32.mrb[0].mxu0
        %v3045 = vadd.f32 0.0, %v3044
        %v3046 = vpop.f32.mrb[0].mxu0
        %3047 = vmatprep.mubr.f32.mxu0 0.0
        %3048 = vmatmul.mubr.f32.gmra.mrb[0].mxu0 %v2863
        %v3049 = vpop.f32.mrb[0].mxu0
        %v3050 = vadd.f32 0.0, %v3049
        %v3051 = vpop.f32.mrb[0].mxu0
        %3052 = vmatprep.mubr.f32.mxu0 0.0
        %3053 = vmatmul.mubr.f32.gmra.mrb[0].mxu0 %v2866
        %v3054 = vpop.f32.mrb[0].mxu0
        %v3055 = vadd.f32 0.0, %v3054
        %v3056 = vpop.f32.mrb[0].mxu0
        %3057 = vmatprep.mubr.f32.mxu0 0.0
        %3058 = vmatmul.mubr.f32.gmra.mrb[0].mxu0 %v2869
        %v3059 = vpop.f32.mrb[0].mxu0
        %v3060 = vadd.f32 0.0, %v3059
        %v3061 = vpop.f32.mrb[0].mxu0
        %3062 = vmatprep.mubr.f32.mxu0 0.0
        %3063 = vmatmul.mubr.f32.gmra.mrb[0].mxu0 %v2872
        %v3064 = vpop.f32.mrb[0].mxu0
        %v3065 = vadd.f32 0.0, %v3064
        %v3066 = vpop.f32.mrb[0].mxu0
        %3067 = vmatprep.mubr.f32.mxu0 0.0
        %3068 = vmatmul.mubr.f32.gmra.mrb[0].mxu0 %v2875
        %v3069 = vpop.f32.mrb[0].mxu0
        %v3070 = vadd.f32 0.0, %v3069
        %v3071 = vpop.f32.mrb[0].mxu0
        %3072 = vmatprep.mubr.f32.mxu0 0.0
        %3073 = vmatmul.mubr.f32.gmra.mrb[0].mxu0 %v2878
        %v3074 = vpop.f32.mrb[0].mxu0
        %v3075 = vadd.f32 0.0, %v3074
        %v3076 = vpop.f32.mrb[0].mxu0
        %3077 = vmatprep.mubr.f32.mxu0 0.0
        %3078 = vmatmul.mubr.f32.gmra.mrb[0].mxu0 %v2881
        %v3079 = vpop.f32.mrb[0].mxu0
        %v3080 = vadd.f32 0.0, %v3079
        %v3081 = vpop.f32.mrb[0].mxu0
        %3082 = vmatprep.mubr.f32.mxu0 0.0
        %3083 = vmatmul.mubr.f32.gmra.mrb[0].mxu0 %v2884
        %v3084 = vpop.f32.mrb[0].mxu0
        %v3085 = vadd.f32 0.0, %v3084
        %v3086 = vpop.f32.mrb[0].mxu0
        %3087 = vmatprep.mubr.f32.mxu0 0.0
        %3088 = vmatmul.mubr.f32.gmra.mrb[0].mxu0 %v2887
        %v3089 = vpop.f32.mrb[0].mxu0
        %v3090 = vadd.f32 0.0, %v3089
        %v3091 = vpop.f32.mrb[0].mxu0
        %3092 = vmatprep.mubr.f32.mxu0 0.0
        %3093 = vmatmul.mubr.f32.gmra.mrb[0].mxu0 %v2890
        %v3094 = vpop.f32.mrb[0].mxu0
        %v3095 = vadd.f32 0.0, %v3094
        %v3096 = vpop.f32.mrb[0].mxu0
        %3097 = vmatprep.mubr.f32.mxu0 0.0
        %3098 = vmatmul.mubr.f32.gmra.mrb[0].mxu0 %v2893
        %v3099 = vpop.f32.mrb[0].mxu0
        %v3100 = vadd.f32 0.0, %v3099
        %v3101 = vpop.f32.mrb[0].mxu0
        %3102 = vmatprep.mubr.f32.mxu0 0.0
        %3103 = vmatmul.mubr.f32.gmra.mrb[0].mxu0 %v2896
        %v3104 = vpop.f32.mrb[0].mxu0
        %v3105 = vadd.f32 0.0, %v3104
        %v3106 = vpop.f32.mrb[0].mxu0
        %3107 = vmatprep.mubr.f32.mxu0 0.0
        %3108 = vmatmul.mubr.f32.gmra.mrb[0].mxu0 %v2899
        %v3109 = vpop.f32.mrb[0].mxu0
        %v3110 = vadd.f32 0.0, %v3109
        %v3111 = vpop.f32.mrb[0].mxu0
        %3112 = vmatprep.mubr.f32.mxu0 0.0
        %3113 = vmatmul.mubr.f32.gmra.mrb[0].mxu0 %v2902
        %v3114 = vpop.f32.mrb[0].mxu0
        %v3115 = vadd.f32 0.0, %v3114
        %v3116 = vpop.f32.mrb[0].mxu0
        %3117 = vmatprep.mubr.f32.mxu0 0.0
        %3118 = vmatmul.mubr.f32.gmra.mrb[0].mxu0 %v2905
        %v3119 = vpop.f32.mrb[0].mxu0
        %v3120 = vadd.f32 0.0, %v3119
        %v3121 = vpop.f32.mrb[0].mxu0
        %3122 = vmatprep.mubr.f32.mxu0 0.0
        %3123 = vmatmul.mubr.f32.gmra.mrb[0].mxu0 %v2908
        %v3124 = vpop.f32.mrb[0].mxu0
        %v3125 = vadd.f32 0.0, %v3124
        %v3126 = vpop.f32.mrb[0].mxu0
        %3127 = vmatprep.mubr.f32.mxu0 0.0
        %3128 = vmatmul.mubr.f32.gmra.mrb[0].mxu0 %v2911
        %v3129 = vpop.f32.mrb[0].mxu0
        %v3130 = vadd.f32 0.0, %v3129
        %v3131 = vpop.f32.mrb[0].mxu0
        %3132 = vmatprep.mubr.f32.mxu0 0.0
        %3133 = vmatmul.mubr.f32.gmra.mrb[0].mxu0 %v2914
        %v3134 = vpop.f32.mrb[0].mxu0
        %v3135 = vadd.f32 0.0, %v3134
        %v3136 = vpop.f32.mrb[0].mxu0
        %3137 = vmatprep.mubr.f32.mxu0 0.0
        %3138 = vmatmul.mubr.f32.gmra.mrb[0].mxu0 %v2917
        %v3139 = vpop.f32.mrb[0].mxu0
        %v3140 = vadd.f32 0.0, %v3139
        %v3141 = vpop.f32.mrb[0].mxu0
        %3142 = vmatprep.mubr.f32.mxu0 0.0
        %3143 = vmatmul.mubr.f32.gmra.mrb[0].mxu0 %v2920
        %v3144 = vpop.f32.mrb[0].mxu0
        %v3145 = vadd.f32 0.0, %v3144
        %v3146 = vpop.f32.mrb[0].mxu0
        %3147 = vmatprep.mubr.f32.mxu0 0.0
        %3148 = vmatmul.mubr.f32.gmra.mrb[0].mxu0 %v2923
        %v3149 = vpop.f32.mrb[0].mxu0
        %v3150 = vadd.f32 0.0, %v3149
        %v3151 = vpop.f32.mrb[0].mxu0
        %3152 = vdwg.mxu0
        %v3153 = vadd.f32 %v2795, %v2995
        %v3154 = vadd.f32 %v2796, %v3000
        %v3155 = vadd.f32 %v2797, %v3005
        %v3156 = vadd.f32 %v2798, %v3010
        %v3157 = vadd.f32 %v2799, %v3015
        %v3158 = vadd.f32 %v2800, %v3020
        %v3159 = vadd.f32 %v2801, %v3025
        %v3160 = vadd.f32 %v2802, %v3030
        %v3161 = vadd.f32 %v2803, %v3035
        %v3162 = vadd.f32 %v2804, %v3040
        %v3163 = vadd.f32 %v2805, %v3045
        %v3164 = vadd.f32 %v2806, %v3050
        %v3165 = vadd.f32 %v2807, %v3055
        %v3166 = vadd.f32 %v2808, %v3060
        %v3167 = vadd.f32 %v2809, %v3065
        %v3168 = vadd.f32 %v2810, %v3070
        %v3169 = vadd.f32 %v2811, %v3075
        %v3170 = vadd.f32 %v2812, %v3080
        %v3171 = vadd.f32 %v2813, %v3085
        %v3172 = vadd.f32 %v2814, %v3090
        %v3173 = vadd.f32 %v2815, %v3095
        %v3174 = vadd.f32 %v2816, %v3100
        %v3175 = vadd.f32 %v2817, %v3105
        %v3176 = vadd.f32 %v2818, %v3110
        %v3177 = vadd.f32 %v2819, %v3115
        %v3178 = vadd.f32 %v2820, %v3120
        %v3179 = vadd.f32 %v2821, %v3125
        %v3180 = vadd.f32 %v2822, %v3130
        %v3181 = vadd.f32 %v2823, %v3135
        %v3182 = vadd.f32 %v2824, %v3140
        %v3183 = vadd.f32 %v2825, %v3145
        %v3184 = vadd.f32 %v2826, %v3150
        %3185 = vst [vmem:[#allocation2] sm:$0xff] %v3153
        %3186 = vst [vmem:[#allocation2 + $0x8] sm:$0xff] %v3154
        %3187 = vst [vmem:[#allocation2 + $0x10] sm:$0xff] %v3155
        %3188 = vst [vmem:[#allocation2 + $0x18] sm:$0xff] %v3156
        %3189 = vst [vmem:[#allocation2 + $0x20] sm:$0xff] %v3157
        %3190 = vst [vmem:[#allocation2 + $0x28] sm:$0xff] %v3158
        %3191 = vst [vmem:[#allocation2 + $0x30] sm:$0xff] %v3159
        %3192 = vst [vmem:[#allocation2 + $0x38] sm:$0xff] %v3160
        %3193 = vst [vmem:[#allocation2 + $0x40] sm:$0xff] %v3161
        %3194 = vst [vmem:[#allocation2 + $0x48] sm:$0xff] %v3162
        %3195 = vst [vmem:[#allocation2 + $0x50] sm:$0xff] %v3163
        %3196 = vst [vmem:[#allocation2 + $0x58] sm:$0xff] %v3164
        %3197 = vst [vmem:[#allocation2 + $0x60] sm:$0xff] %v3165
        %3198 = vst [vmem:[#allocation2 + $0x68] sm:$0xff] %v3166
        %3199 = vst [vmem:[#allocation2 + $0x70] sm:$0xff] %v3167
        %3200 = vst [vmem:[#allocation2 + $0x78] sm:$0xff] %v3168
        %3201 = vst [vmem:[#allocation2 + $0x80] sm:$0xff] %v3169
        %3202 = vst [vmem:[#allocation2 + $0x88] sm:$0xff] %v3170
        %3203 = vst [vmem:[#allocation2 + $0x90] sm:$0xff] %v3171
        %3204 = vst [vmem:[#allocation2 + $0x98] sm:$0xff] %v3172
        %3205 = vst [vmem:[#allocation2 + $0xa0] sm:$0xff] %v3173
        %3206 = vst [vmem:[#allocation2 + $0xa8] sm:$0xff] %v3174
        %3207 = vst [vmem:[#allocation2 + $0xb0] sm:$0xff] %v3175
        %3208 = vst [vmem:[#allocation2 + $0xb8] sm:$0xff] %v3176
        %3209 = vst [vmem:[#allocation2 + $0xc0] sm:$0xff] %v3177
        %3210 = vst [vmem:[#allocation2 + $0xc8] sm:$0xff] %v3178
        %3211 = vst [vmem:[#allocation2 + $0xd0] sm:$0xff] %v3179
        %3212 = vst [vmem:[#allocation2 + $0xd8] sm:$0xff] %v3180
        %3213 = vst [vmem:[#allocation2 + $0xe0] sm:$0xff] %v3181
        %3214 = vst [vmem:[#allocation2 + $0xe8] sm:$0xff] %v3182
        %3215 = vst [vmem:[#allocation2 + $0xf0] sm:$0xff] %v3183
        %3216 = vst [vmem:[#allocation2 + $0xf8] sm:$0xff] %v3184
        %s3217 = scalar_lea.vmem %s260, 2048 [#allocation3]
        %v3218 = vld [vmem:[%s3217] sm:$0xff]
        %v3219 = vld [vmem:[%s3217 + $0x8] sm:$0xff]
        %v3220 = vld [vmem:[%s3217 + $0x10] sm:$0xff]
        %v3221 = vld [vmem:[%s3217 + $0x18] sm:$0xff]
        %v3222 = vld [vmem:[%s3217 + $0x20] sm:$0xff]
        %v3223 = vld [vmem:[%s3217 + $0x28] sm:$0xff]
        %v3224 = vld [vmem:[%s3217 + $0x30] sm:$0xff]
        %v3225 = vld [vmem:[%s3217 + $0x38] sm:$0xff]
        %v3226 = vld [vmem:[%s3217 + $0x40] sm:$0xff]
        %v3227 = vld [vmem:[%s3217 + $0x48] sm:$0xff]
        %v3228 = vld [vmem:[%s3217 + $0x50] sm:$0xff]
        %v3229 = vld [vmem:[%s3217 + $0x58] sm:$0xff]
        %v3230 = vld [vmem:[%s3217 + $0x60] sm:$0xff]
        %v3231 = vld [vmem:[%s3217 + $0x68] sm:$0xff]
        %v3232 = vld [vmem:[%s3217 + $0x70] sm:$0xff]
        %v3233 = vld [vmem:[%s3217 + $0x78] sm:$0xff]
        %v3234 = vld [vmem:[%s3217 + $0x80] sm:$0xff]
        %v3235 = vld [vmem:[%s3217 + $0x88] sm:$0xff]
        %v3236 = vld [vmem:[%s3217 + $0x90] sm:$0xff]
        %v3237 = vld [vmem:[%s3217 + $0x98] sm:$0xff]
        %v3238 = vld [vmem:[%s3217 + $0xa0] sm:$0xff]
        %v3239 = vld [vmem:[%s3217 + $0xa8] sm:$0xff]
        %v3240 = vld [vmem:[%s3217 + $0xb0] sm:$0xff]
        %v3241 = vld [vmem:[%s3217 + $0xb8] sm:$0xff]
        %v3242 = vld [vmem:[%s3217 + $0xc0] sm:$0xff]
        %v3243 = vld [vmem:[%s3217 + $0xc8] sm:$0xff]
        %v3244 = vld [vmem:[%s3217 + $0xd0] sm:$0xff]
        %v3245 = vld [vmem:[%s3217 + $0xd8] sm:$0xff]
        %v3246 = vld [vmem:[%s3217 + $0xe0] sm:$0xff]
        %v3247 = vld [vmem:[%s3217 + $0xe8] sm:$0xff]
        %v3248 = vld [vmem:[%s3217 + $0xf0] sm:$0xff]
        %v3249 = vld [vmem:[%s3217 + $0xf8] sm:$0xff]
        %v3250 = vld [vmem:[%s3217 + $0x100] sm:$0xff]
        %v3251 = vld [vmem:[%s3217 + $0x108] sm:$0xff]
        %v3252 = vld [vmem:[%s3217 + $0x110] sm:$0xff]
        %v3253 = vld [vmem:[%s3217 + $0x118] sm:$0xff]
        %v3254 = vld [vmem:[%s3217 + $0x120] sm:$0xff]
        %v3255 = vld [vmem:[%s3217 + $0x128] sm:$0xff]
        %v3256 = vld [vmem:[%s3217 + $0x130] sm:$0xff]
        %v3257 = vld [vmem:[%s3217 + $0x138] sm:$0xff]
        %v3258 = vld [vmem:[%s3217 + $0x140] sm:$0xff]
        %v3259 = vld [vmem:[%s3217 + $0x148] sm:$0xff]
        %v3260 = vld [vmem:[%s3217 + $0x150] sm:$0xff]
        %v3261 = vld [vmem:[%s3217 + $0x158] sm:$0xff]
        %v3262 = vld [vmem:[%s3217 + $0x160] sm:$0xff]
        %v3263 = vld [vmem:[%s3217 + $0x168] sm:$0xff]
        %v3264 = vld [vmem:[%s3217 + $0x170] sm:$0xff]
        %v3265 = vld [vmem:[%s3217 + $0x178] sm:$0xff]
        %v3266 = vld [vmem:[%s3217 + $0x180] sm:$0xff]
        %v3267 = vld [vmem:[%s3217 + $0x188] sm:$0xff]
        %v3268 = vld [vmem:[%s3217 + $0x190] sm:$0xff]
        %v3269 = vld [vmem:[%s3217 + $0x198] sm:$0xff]
        %v3270 = vld [vmem:[%s3217 + $0x1a0] sm:$0xff]
        %v3271 = vld [vmem:[%s3217 + $0x1a8] sm:$0xff]
        %v3272 = vld [vmem:[%s3217 + $0x1b0] sm:$0xff]
        %v3273 = vld [vmem:[%s3217 + $0x1b8] sm:$0xff]
        %v3274 = vld [vmem:[%s3217 + $0x1c0] sm:$0xff]
        %v3275 = vld [vmem:[%s3217 + $0x1c8] sm:$0xff]
        %v3276 = vld [vmem:[%s3217 + $0x1d0] sm:$0xff]
        %v3277 = vld [vmem:[%s3217 + $0x1d8] sm:$0xff]
        %v3278 = vld [vmem:[%s3217 + $0x1e0] sm:$0xff]
        %v3279 = vld [vmem:[%s3217 + $0x1e8] sm:$0xff]
        %v3280 = vld [vmem:[%s3217 + $0x1f0] sm:$0xff]
        %v3281 = vld [vmem:[%s3217 + $0x1f8] sm:$0xff]
        %3282 = vmatprep.subr.mxu0 0.0
        %3283 = vmatpush1.msra.mxu0 %v305
        %3284 = vmatprep.subr.mxu0 0.0
        %3285 = vmatpush1.msra.mxu0 %v306
        %3286 = vmatprep.subr.mxu0 0.0
        %3287 = vmatpush1.msra.mxu0 %v307
        %3288 = vmatprep.subr.mxu0 0.0
        %3289 = vmatpush1.msra.mxu0 %v308
        %3290 = vmatprep.subr.mxu0 0.0
        %3291 = vmatpush1.msra.mxu0 %v309
        %3292 = vmatprep.subr.mxu0 0.0
        %3293 = vmatpush1.msra.mxu0 %v310
        %3294 = vmatprep.subr.mxu0 0.0
        %3295 = vmatpush1.msra.mxu0 %v311
        %3296 = vmatprep.subr.mxu0 0.0
        %3297 = vmatpush1.msra.mxu0 %v312
        %3298 = vmatprep.subr.mxu0 0.0
        %3299 = vmatpush1.msra.mxu0 %v313
        %3300 = vmatprep.subr.mxu0 0.0
        %3301 = vmatpush1.msra.mxu0 %v314
        %3302 = vmatprep.subr.mxu0 0.0
        %3303 = vmatpush1.msra.mxu0 %v315
        %3304 = vmatprep.subr.mxu0 0.0
        %3305 = vmatpush1.msra.mxu0 %v316
        %3306 = vmatprep.subr.mxu0 0.0
        %3307 = vmatpush1.msra.mxu0 %v317
        %3308 = vmatprep.subr.mxu0 0.0
        %3309 = vmatpush1.msra.mxu0 %v318
        %3310 = vmatprep.subr.mxu0 0.0
        %3311 = vmatpush1.msra.mxu0 %v319
        %3312 = vmatprep.subr.mxu0 0.0
        %3313 = vmatpush1.msra.mxu0 %v320
        %3314 = vmatprep.subr.mxu0 0.0
        %3315 = vmatpush1.msra.mxu0 %v321
        %3316 = vmatprep.subr.mxu0 0.0
        %3317 = vmatpush1.msra.mxu0 %v322
        %3318 = vmatprep.subr.mxu0 0.0
        %3319 = vmatpush1.msra.mxu0 %v323
        %3320 = vmatprep.subr.mxu0 0.0
        %3321 = vmatpush1.msra.mxu0 %v324
        %3322 = vmatprep.subr.mxu0 0.0
        %3323 = vmatpush1.msra.mxu0 %v325
        %3324 = vmatprep.subr.mxu0 0.0
        %3325 = vmatpush1.msra.mxu0 %v326
        %3326 = vmatprep.subr.mxu0 0.0
        %3327 = vmatpush1.msra.mxu0 %v327
        %3328 = vmatprep.subr.mxu0 0.0
        %3329 = vmatpush1.msra.mxu0 %v328
        %3330 = vmatprep.subr.mxu0 0.0
        %3331 = vmatpush1.msra.mxu0 %v329
        %3332 = vmatprep.subr.mxu0 0.0
        %3333 = vmatpush1.msra.mxu0 %v330
        %3334 = vmatprep.subr.mxu0 0.0
        %3335 = vmatpush1.msra.mxu0 %v331
        %3336 = vmatprep.subr.mxu0 0.0
        %3337 = vmatpush1.msra.mxu0 %v332
        %3338 = vmatprep.subr.mxu0 0.0
        %3339 = vmatpush1.msra.mxu0 %v333
        %3340 = vmatprep.subr.mxu0 0.0
        %3341 = vmatpush1.msra.mxu0 %v334
        %3342 = vmatprep.subr.mxu0 0.0
        %3343 = vmatpush1.msra.mxu0 %v335
        %3344 = vmatprep.subr.mxu0 0.0
        %3345 = vmatpush1.msra.mxu0 %v336
        %3346 = vmatprep.mubr.f32.mxu0 %v3219
        %3347 = vmatmul.mubr.f32.gmra.mrb[0].mxu0 %v3218
        %v3348 = vpop.f32.mrb[0].mxu0
        %v3349 = vadd.f32 0.0, %v3348
        %v3350 = vpop.f32.mrb[0].mxu0
        %3351 = vmatprep.mubr.f32.mxu0 %v3221
        %3352 = vmatmul.mubr.f32.gmra.mrb[0].mxu0 %v3220
        %v3353 = vpop.f32.mrb[0].mxu0
        %v3354 = vadd.f32 0.0, %v3353
        %v3355 = vpop.f32.mrb[0].mxu0
        %3356 = vmatprep.mubr.f32.mxu0 %v3223
        %3357 = vmatmul.mubr.f32.gmra.mrb[0].mxu0 %v3222
        %v3358 = vpop.f32.mrb[0].mxu0
        %v3359 = vadd.f32 0.0, %v3358
        %v3360 = vpop.f32.mrb[0].mxu0
        %3361 = vmatprep.mubr.f32.mxu0 %v3225
        %3362 = vmatmul.mubr.f32.gmra.mrb[0].mxu0 %v3224
        %v3363 = vpop.f32.mrb[0].mxu0
        %v3364 = vadd.f32 0.0, %v3363
        %v3365 = vpop.f32.mrb[0].mxu0
        %3366 = vmatprep.mubr.f32.mxu0 %v3227
        %3367 = vmatmul.mubr.f32.gmra.mrb[0].mxu0 %v3226
        %v3368 = vpop.f32.mrb[0].mxu0
        %v3369 = vadd.f32 0.0, %v3368
        %v3370 = vpop.f32.mrb[0].mxu0
        %3371 = vmatprep.mubr.f32.mxu0 %v3229
        %3372 = vmatmul.mubr.f32.gmra.mrb[0].mxu0 %v3228
        %v3373 = vpop.f32.mrb[0].mxu0
        %v3374 = vadd.f32 0.0, %v3373
        %v3375 = vpop.f32.mrb[0].mxu0
        %3376 = vmatprep.mubr.f32.mxu0 %v3231
        %3377 = vmatmul.mubr.f32.gmra.mrb[0].mxu0 %v3230
        %v3378 = vpop.f32.mrb[0].mxu0
        %v3379 = vadd.f32 0.0, %v3378
        %v3380 = vpop.f32.mrb[0].mxu0
        %3381 = vmatprep.mubr.f32.mxu0 %v3233
        %3382 = vmatmul.mubr.f32.gmra.mrb[0].mxu0 %v3232
        %v3383 = vpop.f32.mrb[0].mxu0
        %v3384 = vadd.f32 0.0, %v3383
        %v3385 = vpop.f32.mrb[0].mxu0
        %3386 = vmatprep.mubr.f32.mxu0 %v3235
        %3387 = vmatmul.mubr.f32.gmra.mrb[0].mxu0 %v3234
        %v3388 = vpop.f32.mrb[0].mxu0
        %v3389 = vadd.f32 0.0, %v3388
        %v3390 = vpop.f32.mrb[0].mxu0
        %3391 = vmatprep.mubr.f32.mxu0 %v3237
        %3392 = vmatmul.mubr.f32.gmra.mrb[0].mxu0 %v3236
        %v3393 = vpop.f32.mrb[0].mxu0
        %v3394 = vadd.f32 0.0, %v3393
        %v3395 = vpop.f32.mrb[0].mxu0
        %3396 = vmatprep.mubr.f32.mxu0 %v3239
        %3397 = vmatmul.mubr.f32.gmra.mrb[0].mxu0 %v3238
        %v3398 = vpop.f32.mrb[0].mxu0
        %v3399 = vadd.f32 0.0, %v3398
        %v3400 = vpop.f32.mrb[0].mxu0
        %3401 = vmatprep.mubr.f32.mxu0 %v3241
        %3402 = vmatmul.mubr.f32.gmra.mrb[0].mxu0 %v3240
        %v3403 = vpop.f32.mrb[0].mxu0
        %v3404 = vadd.f32 0.0, %v3403
        %v3405 = vpop.f32.mrb[0].mxu0
        %3406 = vmatprep.mubr.f32.mxu0 %v3243
        %3407 = vmatmul.mubr.f32.gmra.mrb[0].mxu0 %v3242
        %v3408 = vpop.f32.mrb[0].mxu0
        %v3409 = vadd.f32 0.0, %v3408
        %v3410 = vpop.f32.mrb[0].mxu0
        %3411 = vmatprep.mubr.f32.mxu0 %v3245
        %3412 = vmatmul.mubr.f32.gmra.mrb[0].mxu0 %v3244
        %v3413 = vpop.f32.mrb[0].mxu0
        %v3414 = vadd.f32 0.0, %v3413
        %v3415 = vpop.f32.mrb[0].mxu0
        %3416 = vmatprep.mubr.f32.mxu0 %v3247
        %3417 = vmatmul.mubr.f32.gmra.mrb[0].mxu0 %v3246
        %v3418 = vpop.f32.mrb[0].mxu0
        %v3419 = vadd.f32 0.0, %v3418
        %v3420 = vpop.f32.mrb[0].mxu0
        %3421 = vmatprep.mubr.f32.mxu0 %v3249
        %3422 = vmatmul.mubr.f32.gmra.mrb[0].mxu0 %v3248
        %v3423 = vpop.f32.mrb[0].mxu0
        %v3424 = vadd.f32 0.0, %v3423
        %v3425 = vpop.f32.mrb[0].mxu0
        %3426 = vmatprep.mubr.f32.mxu0 %v3251
        %3427 = vmatmul.mubr.f32.gmra.mrb[0].mxu0 %v3250
        %v3428 = vpop.f32.mrb[0].mxu0
        %v3429 = vadd.f32 0.0, %v3428
        %v3430 = vpop.f32.mrb[0].mxu0
        %3431 = vmatprep.mubr.f32.mxu0 %v3253
        %3432 = vmatmul.mubr.f32.gmra.mrb[0].mxu0 %v3252
        %v3433 = vpop.f32.mrb[0].mxu0
        %v3434 = vadd.f32 0.0, %v3433
        %v3435 = vpop.f32.mrb[0].mxu0
        %3436 = vmatprep.mubr.f32.mxu0 %v3255
        %3437 = vmatmul.mubr.f32.gmra.mrb[0].mxu0 %v3254
        %v3438 = vpop.f32.mrb[0].mxu0
        %v3439 = vadd.f32 0.0, %v3438
        %v3440 = vpop.f32.mrb[0].mxu0
        %3441 = vmatprep.mubr.f32.mxu0 %v3257
        %3442 = vmatmul.mubr.f32.gmra.mrb[0].mxu0 %v3256
        %v3443 = vpop.f32.mrb[0].mxu0
        %v3444 = vadd.f32 0.0, %v3443
        %v3445 = vpop.f32.mrb[0].mxu0
        %3446 = vmatprep.mubr.f32.mxu0 %v3259
        %3447 = vmatmul.mubr.f32.gmra.mrb[0].mxu0 %v3258
        %v3448 = vpop.f32.mrb[0].mxu0
        %v3449 = vadd.f32 0.0, %v3448
        %v3450 = vpop.f32.mrb[0].mxu0
        %3451 = vmatprep.mubr.f32.mxu0 %v3261
        %3452 = vmatmul.mubr.f32.gmra.mrb[0].mxu0 %v3260
        %v3453 = vpop.f32.mrb[0].mxu0
        %v3454 = vadd.f32 0.0, %v3453
        %v3455 = vpop.f32.mrb[0].mxu0
        %3456 = vmatprep.mubr.f32.mxu0 %v3263
        %3457 = vmatmul.mubr.f32.gmra.mrb[0].mxu0 %v3262
        %v3458 = vpop.f32.mrb[0].mxu0
        %v3459 = vadd.f32 0.0, %v3458
        %v3460 = vpop.f32.mrb[0].mxu0
        %3461 = vmatprep.mubr.f32.mxu0 %v3265
        %3462 = vmatmul.mubr.f32.gmra.mrb[0].mxu0 %v3264
        %v3463 = vpop.f32.mrb[0].mxu0
        %v3464 = vadd.f32 0.0, %v3463
        %v3465 = vpop.f32.mrb[0].mxu0
        %3466 = vmatprep.mubr.f32.mxu0 %v3267
        %3467 = vmatmul.mubr.f32.gmra.mrb[0].mxu0 %v3266
        %v3468 = vpop.f32.mrb[0].mxu0
        %v3469 = vadd.f32 0.0, %v3468
        %v3470 = vpop.f32.mrb[0].mxu0
        %3471 = vmatprep.mubr.f32.mxu0 %v3269
        %3472 = vmatmul.mubr.f32.gmra.mrb[0].mxu0 %v3268
        %v3473 = vpop.f32.mrb[0].mxu0
        %v3474 = vadd.f32 0.0, %v3473
        %v3475 = vpop.f32.mrb[0].mxu0
        %3476 = vmatprep.mubr.f32.mxu0 %v3271
        %3477 = vmatmul.mubr.f32.gmra.mrb[0].mxu0 %v3270
        %v3478 = vpop.f32.mrb[0].mxu0
        %v3479 = vadd.f32 0.0, %v3478
        %v3480 = vpop.f32.mrb[0].mxu0
        %3481 = vmatprep.mubr.f32.mxu0 %v3273
        %3482 = vmatmul.mubr.f32.gmra.mrb[0].mxu0 %v3272
        %v3483 = vpop.f32.mrb[0].mxu0
        %v3484 = vadd.f32 0.0, %v3483
        %v3485 = vpop.f32.mrb[0].mxu0
        %3486 = vmatprep.mubr.f32.mxu0 %v3275
        %3487 = vmatmul.mubr.f32.gmra.mrb[0].mxu0 %v3274
        %v3488 = vpop.f32.mrb[0].mxu0
        %v3489 = vadd.f32 0.0, %v3488
        %v3490 = vpop.f32.mrb[0].mxu0
        %3491 = vmatprep.mubr.f32.mxu0 %v3277
        %3492 = vmatmul.mubr.f32.gmra.mrb[0].mxu0 %v3276
        %v3493 = vpop.f32.mrb[0].mxu0
        %v3494 = vadd.f32 0.0, %v3493
        %v3495 = vpop.f32.mrb[0].mxu0
        %3496 = vmatprep.mubr.f32.mxu0 %v3279
        %3497 = vmatmul.mubr.f32.gmra.mrb[0].mxu0 %v3278
        %v3498 = vpop.f32.mrb[0].mxu0
        %v3499 = vadd.f32 0.0, %v3498
        %v3500 = vpop.f32.mrb[0].mxu0
        %3501 = vmatprep.mubr.f32.mxu0 %v3281
        %3502 = vmatmul.mubr.f32.gmra.mrb[0].mxu0 %v3280
        %v3503 = vpop.f32.mrb[0].mxu0
        %v3504 = vadd.f32 0.0, %v3503
        %v3505 = vpop.f32.mrb[0].mxu0
        %3506 = vdwg.mxu0
        %v3507 = vld [vmem:[#allocation2] sm:$0xff]
        %v3508 = vld [vmem:[#allocation2 + $0x8] sm:$0xff]
        %v3509 = vld [vmem:[#allocation2 + $0x10] sm:$0xff]
        %v3510 = vld [vmem:[#allocation2 + $0x18] sm:$0xff]
        %v3511 = vld [vmem:[#allocation2 + $0x20] sm:$0xff]
        %v3512 = vld [vmem:[#allocation2 + $0x28] sm:$0xff]
        %v3513 = vld [vmem:[#allocation2 + $0x30] sm:$0xff]
        %v3514 = vld [vmem:[#allocation2 + $0x38] sm:$0xff]
        %v3515 = vld [vmem:[#allocation2 + $0x40] sm:$0xff]
        %v3516 = vld [vmem:[#allocation2 + $0x48] sm:$0xff]
        %v3517 = vld [vmem:[#allocation2 + $0x50] sm:$0xff]
        %v3518 = vld [vmem:[#allocation2 + $0x58] sm:$0xff]
        %v3519 = vld [vmem:[#allocation2 + $0x60] sm:$0xff]
        %v3520 = vld [vmem:[#allocation2 + $0x68] sm:$0xff]
        %v3521 = vld [vmem:[#allocation2 + $0x70] sm:$0xff]
        %v3522 = vld [vmem:[#allocation2 + $0x78] sm:$0xff]
        %v3523 = vld [vmem:[#allocation2 + $0x80] sm:$0xff]
        %v3524 = vld [vmem:[#allocation2 + $0x88] sm:$0xff]
        %v3525 = vld [vmem:[#allocation2 + $0x90] sm:$0xff]
        %v3526 = vld [vmem:[#allocation2 + $0x98] sm:$0xff]
        %v3527 = vld [vmem:[#allocation2 + $0xa0] sm:$0xff]
        %v3528 = vld [vmem:[#allocation2 + $0xa8] sm:$0xff]
        %v3529 = vld [vmem:[#allocation2 + $0xb0] sm:$0xff]
        %v3530 = vld [vmem:[#allocation2 + $0xb8] sm:$0xff]
        %v3531 = vld [vmem:[#allocation2 + $0xc0] sm:$0xff]
        %v3532 = vld [vmem:[#allocation2 + $0xc8] sm:$0xff]
        %v3533 = vld [vmem:[#allocation2 + $0xd0] sm:$0xff]
        %v3534 = vld [vmem:[#allocation2 + $0xd8] sm:$0xff]
        %v3535 = vld [vmem:[#allocation2 + $0xe0] sm:$0xff]
        %v3536 = vld [vmem:[#allocation2 + $0xe8] sm:$0xff]
        %v3537 = vld [vmem:[#allocation2 + $0xf0] sm:$0xff]
        %v3538 = vld [vmem:[#allocation2 + $0xf8] sm:$0xff]
        %s3539 = scalar_lea.vmem [#allocation6], 16
        %v3540 = vld [vmem:[%s3539] sm:$0xf]
        %v3542 = vsel %vm691, %v3349, 0
        %v3545 = vsel %vm691, %v3354, 0
        %v3548 = vsel %vm691, %v3359, 0
        %v3551 = vsel %vm691, %v3364, 0
        %v3554 = vsel %vm691, %v3369, 0
        %v3557 = vsel %vm691, %v3374, 0
        %v3560 = vsel %vm691, %v3379, 0
        %v3563 = vsel %vm691, %v3384, 0
        %v3566 = vsel %vm691, %v3389, 0
        %v3569 = vsel %vm691, %v3394, 0
        %v3572 = vsel %vm691, %v3399, 0
        %v3575 = vsel %vm691, %v3404, 0
        %v3578 = vsel %vm691, %v3409, 0
        %v3581 = vsel %vm691, %v3414, 0
        %v3584 = vsel %vm691, %v3419, 0
        %v3587 = vsel %vm691, %v3424, 0
        %v3590 = vsel %vm691, %v3429, 0
        %v3593 = vsel %vm691, %v3434, 0
        %v3596 = vsel %vm691, %v3439, 0
        %v3599 = vsel %vm691, %v3444, 0
        %v3602 = vsel %vm691, %v3449, 0
        %v3605 = vsel %vm691, %v3454, 0
        %v3608 = vsel %vm691, %v3459, 0
        %v3611 = vsel %vm691, %v3464, 0
        %v3614 = vsel %vm691, %v3469, 0
        %v3617 = vsel %vm691, %v3474, 0
        %v3620 = vsel %vm691, %v3479, 0
        %v3623 = vsel %vm691, %v3484, 0
        %v3626 = vsel %vm691, %v3489, 0
        %v3629 = vsel %vm691, %v3494, 0
        %v3632 = vsel %vm691, %v3499, 0
        %v3635 = vsel %vm691, %v3504, 0
        %v3638 = vsel %vm788, %v3540, 0
        %3640 = vmatprep.subr.mxu0 0.0
        %3641 = vmatpush1.msra.mxu0 %v3638
        %3642 = vmatprep.subr.mxu0 0.0
        %3643 = vmatpush1.msra.mxu0 0.0
        %3644 = vmatprep.subr.mxu0 0.0
        %3645 = vmatpush1.msra.mxu0 0.0
        %3646 = vmatprep.subr.mxu0 0.0
        %3647 = vmatpush1.msra.mxu0 0.0
        %3648 = vmatprep.subr.mxu0 0.0
        %3649 = vmatpush1.msra.mxu0 0.0
        %3650 = vmatprep.subr.mxu0 0.0
        %3651 = vmatpush1.msra.mxu0 0.0
        %3652 = vmatprep.subr.mxu0 0.0
        %3653 = vmatpush1.msra.mxu0 0.0
        %3654 = vmatprep.subr.mxu0 0.0
        %3655 = vmatpush1.msra.mxu0 0.0
        %3656 = vmatprep.subr.mxu0 0.0
        %3657 = vmatpush1.msra.mxu0 0.0
        %3658 = vmatprep.subr.mxu0 0.0
        %3659 = vmatpush1.msra.mxu0 0.0
        %3660 = vmatprep.subr.mxu0 0.0
        %3661 = vmatpush1.msra.mxu0 0.0
        %3662 = vmatprep.subr.mxu0 0.0
        %3663 = vmatpush1.msra.mxu0 0.0
        %3664 = vmatprep.subr.mxu0 0.0
        %3665 = vmatpush1.msra.mxu0 0.0
        %3666 = vmatprep.subr.mxu0 0.0
        %3667 = vmatpush1.msra.mxu0 0.0
        %3668 = vmatprep.subr.mxu0 0.0
        %3669 = vmatpush1.msra.mxu0 0.0
        %3670 = vmatprep.subr.mxu0 0.0
        %3671 = vmatpush1.msra.mxu0 0.0
        %3672 = vmatprep.subr.mxu0 0.0
        %3673 = vmatpush1.msra.mxu0 0.0
        %3674 = vmatprep.subr.mxu0 0.0
        %3675 = vmatpush1.msra.mxu0 0.0
        %3676 = vmatprep.subr.mxu0 0.0
        %3677 = vmatpush1.msra.mxu0 0.0
        %3678 = vmatprep.subr.mxu0 0.0
        %3679 = vmatpush1.msra.mxu0 0.0
        %3680 = vmatprep.subr.mxu0 0.0
        %3681 = vmatpush1.msra.mxu0 0.0
        %3682 = vmatprep.subr.mxu0 0.0
        %3683 = vmatpush1.msra.mxu0 0.0
        %3684 = vmatprep.subr.mxu0 0.0
        %3685 = vmatpush1.msra.mxu0 0.0
        %3686 = vmatprep.subr.mxu0 0.0
        %3687 = vmatpush1.msra.mxu0 0.0
        %3688 = vmatprep.subr.mxu0 0.0
        %3689 = vmatpush1.msra.mxu0 0.0
        %3690 = vmatprep.subr.mxu0 0.0
        %3691 = vmatpush1.msra.mxu0 0.0
        %3692 = vmatprep.subr.mxu0 0.0
        %3693 = vmatpush1.msra.mxu0 0.0
        %3694 = vmatprep.subr.mxu0 0.0
        %3695 = vmatpush1.msra.mxu0 0.0
        %3696 = vmatprep.subr.mxu0 0.0
        %3697 = vmatpush1.msra.mxu0 0.0
        %3698 = vmatprep.subr.mxu0 0.0
        %3699 = vmatpush1.msra.mxu0 0.0
        %3700 = vmatprep.subr.mxu0 0.0
        %3701 = vmatpush1.msra.mxu0 0.0
        %3702 = vmatprep.subr.mxu0 0.0
        %3703 = vmatpush1.msra.mxu0 0.0
        %3704 = vmatprep.mubr.f32.mxu0 0.0
        %3705 = vmatmul.mubr.f32.gmra.mrb[0].mxu0 %v3542
        %v3706 = vpop.f32.mrb[0].mxu0
        %v3707 = vadd.f32 0.0, %v3706
        %v3708 = vpop.f32.mrb[0].mxu0
        %3709 = vmatprep.mubr.f32.mxu0 0.0
        %3710 = vmatmul.mubr.f32.gmra.mrb[0].mxu0 %v3545
        %v3711 = vpop.f32.mrb[0].mxu0
        %v3712 = vadd.f32 0.0, %v3711
        %v3713 = vpop.f32.mrb[0].mxu0
        %3714 = vmatprep.mubr.f32.mxu0 0.0
        %3715 = vmatmul.mubr.f32.gmra.mrb[0].mxu0 %v3548
        %v3716 = vpop.f32.mrb[0].mxu0
        %v3717 = vadd.f32 0.0, %v3716
        %v3718 = vpop.f32.mrb[0].mxu0
        %3719 = vmatprep.mubr.f32.mxu0 0.0
        %3720 = vmatmul.mubr.f32.gmra.mrb[0].mxu0 %v3551
        %v3721 = vpop.f32.mrb[0].mxu0
        %v3722 = vadd.f32 0.0, %v3721
        %v3723 = vpop.f32.mrb[0].mxu0
        %3724 = vmatprep.mubr.f32.mxu0 0.0
        %3725 = vmatmul.mubr.f32.gmra.mrb[0].mxu0 %v3554
        %v3726 = vpop.f32.mrb[0].mxu0
        %v3727 = vadd.f32 0.0, %v3726
        %v3728 = vpop.f32.mrb[0].mxu0
        %3729 = vmatprep.mubr.f32.mxu0 0.0
        %3730 = vmatmul.mubr.f32.gmra.mrb[0].mxu0 %v3557
        %v3731 = vpop.f32.mrb[0].mxu0
        %v3732 = vadd.f32 0.0, %v3731
        %v3733 = vpop.f32.mrb[0].mxu0
        %3734 = vmatprep.mubr.f32.mxu0 0.0
        %3735 = vmatmul.mubr.f32.gmra.mrb[0].mxu0 %v3560
        %v3736 = vpop.f32.mrb[0].mxu0
        %v3737 = vadd.f32 0.0, %v3736
        %v3738 = vpop.f32.mrb[0].mxu0
        %3739 = vmatprep.mubr.f32.mxu0 0.0
        %3740 = vmatmul.mubr.f32.gmra.mrb[0].mxu0 %v3563
        %v3741 = vpop.f32.mrb[0].mxu0
        %v3742 = vadd.f32 0.0, %v3741
        %v3743 = vpop.f32.mrb[0].mxu0
        %3744 = vmatprep.mubr.f32.mxu0 0.0
        %3745 = vmatmul.mubr.f32.gmra.mrb[0].mxu0 %v3566
        %v3746 = vpop.f32.mrb[0].mxu0
        %v3747 = vadd.f32 0.0, %v3746
        %v3748 = vpop.f32.mrb[0].mxu0
        %3749 = vmatprep.mubr.f32.mxu0 0.0
        %3750 = vmatmul.mubr.f32.gmra.mrb[0].mxu0 %v3569
        %v3751 = vpop.f32.mrb[0].mxu0
        %v3752 = vadd.f32 0.0, %v3751
        %v3753 = vpop.f32.mrb[0].mxu0
        %3754 = vmatprep.mubr.f32.mxu0 0.0
        %3755 = vmatmul.mubr.f32.gmra.mrb[0].mxu0 %v3572
        %v3756 = vpop.f32.mrb[0].mxu0
        %v3757 = vadd.f32 0.0, %v3756
        %v3758 = vpop.f32.mrb[0].mxu0
        %3759 = vmatprep.mubr.f32.mxu0 0.0
        %3760 = vmatmul.mubr.f32.gmra.mrb[0].mxu0 %v3575
        %v3761 = vpop.f32.mrb[0].mxu0
        %v3762 = vadd.f32 0.0, %v3761
        %v3763 = vpop.f32.mrb[0].mxu0
        %3764 = vmatprep.mubr.f32.mxu0 0.0
        %3765 = vmatmul.mubr.f32.gmra.mrb[0].mxu0 %v3578
        %v3766 = vpop.f32.mrb[0].mxu0
        %v3767 = vadd.f32 0.0, %v3766
        %v3768 = vpop.f32.mrb[0].mxu0
        %3769 = vmatprep.mubr.f32.mxu0 0.0
        %3770 = vmatmul.mubr.f32.gmra.mrb[0].mxu0 %v3581
        %v3771 = vpop.f32.mrb[0].mxu0
        %v3772 = vadd.f32 0.0, %v3771
        %v3773 = vpop.f32.mrb[0].mxu0
        %3774 = vmatprep.mubr.f32.mxu0 0.0
        %3775 = vmatmul.mubr.f32.gmra.mrb[0].mxu0 %v3584
        %v3776 = vpop.f32.mrb[0].mxu0
        %v3777 = vadd.f32 0.0, %v3776
        %v3778 = vpop.f32.mrb[0].mxu0
        %3779 = vmatprep.mubr.f32.mxu0 0.0
        %3780 = vmatmul.mubr.f32.gmra.mrb[0].mxu0 %v3587
        %v3781 = vpop.f32.mrb[0].mxu0
        %v3782 = vadd.f32 0.0, %v3781
        %v3783 = vpop.f32.mrb[0].mxu0
        %3784 = vmatprep.mubr.f32.mxu0 0.0
        %3785 = vmatmul.mubr.f32.gmra.mrb[0].mxu0 %v3590
        %v3786 = vpop.f32.mrb[0].mxu0
        %v3787 = vadd.f32 0.0, %v3786
        %v3788 = vpop.f32.mrb[0].mxu0
        %3789 = vmatprep.mubr.f32.mxu0 0.0
        %3790 = vmatmul.mubr.f32.gmra.mrb[0].mxu0 %v3593
        %v3791 = vpop.f32.mrb[0].mxu0
        %v3792 = vadd.f32 0.0, %v3791
        %v3793 = vpop.f32.mrb[0].mxu0
        %3794 = vmatprep.mubr.f32.mxu0 0.0
        %3795 = vmatmul.mubr.f32.gmra.mrb[0].mxu0 %v3596
        %v3796 = vpop.f32.mrb[0].mxu0
        %v3797 = vadd.f32 0.0, %v3796
        %v3798 = vpop.f32.mrb[0].mxu0
        %3799 = vmatprep.mubr.f32.mxu0 0.0
        %3800 = vmatmul.mubr.f32.gmra.mrb[0].mxu0 %v3599
        %v3801 = vpop.f32.mrb[0].mxu0
        %v3802 = vadd.f32 0.0, %v3801
        %v3803 = vpop.f32.mrb[0].mxu0
        %3804 = vmatprep.mubr.f32.mxu0 0.0
        %3805 = vmatmul.mubr.f32.gmra.mrb[0].mxu0 %v3602
        %v3806 = vpop.f32.mrb[0].mxu0
        %v3807 = vadd.f32 0.0, %v3806
        %v3808 = vpop.f32.mrb[0].mxu0
        %3809 = vmatprep.mubr.f32.mxu0 0.0
        %3810 = vmatmul.mubr.f32.gmra.mrb[0].mxu0 %v3605
        %v3811 = vpop.f32.mrb[0].mxu0
        %v3812 = vadd.f32 0.0, %v3811
        %v3813 = vpop.f32.mrb[0].mxu0
        %3814 = vmatprep.mubr.f32.mxu0 0.0
        %3815 = vmatmul.mubr.f32.gmra.mrb[0].mxu0 %v3608
        %v3816 = vpop.f32.mrb[0].mxu0
        %v3817 = vadd.f32 0.0, %v3816
        %v3818 = vpop.f32.mrb[0].mxu0
        %3819 = vmatprep.mubr.f32.mxu0 0.0
        %3820 = vmatmul.mubr.f32.gmra.mrb[0].mxu0 %v3611
        %v3821 = vpop.f32.mrb[0].mxu0
        %v3822 = vadd.f32 0.0, %v3821
        %v3823 = vpop.f32.mrb[0].mxu0
        %3824 = vmatprep.mubr.f32.mxu0 0.0
        %3825 = vmatmul.mubr.f32.gmra.mrb[0].mxu0 %v3614
        %v3826 = vpop.f32.mrb[0].mxu0
        %v3827 = vadd.f32 0.0, %v3826
        %v3828 = vpop.f32.mrb[0].mxu0
        %3829 = vmatprep.mubr.f32.mxu0 0.0
        %3830 = vmatmul.mubr.f32.gmra.mrb[0].mxu0 %v3617
        %v3831 = vpop.f32.mrb[0].mxu0
        %v3832 = vadd.f32 0.0, %v3831
        %v3833 = vpop.f32.mrb[0].mxu0
        %3834 = vmatprep.mubr.f32.mxu0 0.0
        %3835 = vmatmul.mubr.f32.gmra.mrb[0].mxu0 %v3620
        %v3836 = vpop.f32.mrb[0].mxu0
        %v3837 = vadd.f32 0.0, %v3836
        %v3838 = vpop.f32.mrb[0].mxu0
        %3839 = vmatprep.mubr.f32.mxu0 0.0
        %3840 = vmatmul.mubr.f32.gmra.mrb[0].mxu0 %v3623
        %v3841 = vpop.f32.mrb[0].mxu0
        %v3842 = vadd.f32 0.0, %v3841
        %v3843 = vpop.f32.mrb[0].mxu0
        %3844 = vmatprep.mubr.f32.mxu0 0.0
        %3845 = vmatmul.mubr.f32.gmra.mrb[0].mxu0 %v3626
        %v3846 = vpop.f32.mrb[0].mxu0
        %v3847 = vadd.f32 0.0, %v3846
        %v3848 = vpop.f32.mrb[0].mxu0
        %3849 = vmatprep.mubr.f32.mxu0 0.0
        %3850 = vmatmul.mubr.f32.gmra.mrb[0].mxu0 %v3629
        %v3851 = vpop.f32.mrb[0].mxu0
        %v3852 = vadd.f32 0.0, %v3851
        %v3853 = vpop.f32.mrb[0].mxu0
        %3854 = vmatprep.mubr.f32.mxu0 0.0
        %3855 = vmatmul.mubr.f32.gmra.mrb[0].mxu0 %v3632
        %v3856 = vpop.f32.mrb[0].mxu0
        %v3857 = vadd.f32 0.0, %v3856
        %v3858 = vpop.f32.mrb[0].mxu0
        %3859 = vmatprep.mubr.f32.mxu0 0.0
        %3860 = vmatmul.mubr.f32.gmra.mrb[0].mxu0 %v3635
        %v3861 = vpop.f32.mrb[0].mxu0
        %v3862 = vadd.f32 0.0, %v3861
        %v3863 = vpop.f32.mrb[0].mxu0
        %3864 = vdwg.mxu0
        %v3865 = vadd.f32 %v3507, %v3707
        %v3866 = vadd.f32 %v3508, %v3712
        %v3867 = vadd.f32 %v3509, %v3717
        %v3868 = vadd.f32 %v3510, %v3722
        %v3869 = vadd.f32 %v3511, %v3727
        %v3870 = vadd.f32 %v3512, %v3732
        %v3871 = vadd.f32 %v3513, %v3737
        %v3872 = vadd.f32 %v3514, %v3742
        %v3873 = vadd.f32 %v3515, %v3747
        %v3874 = vadd.f32 %v3516, %v3752
        %v3875 = vadd.f32 %v3517, %v3757
        %v3876 = vadd.f32 %v3518, %v3762
        %v3877 = vadd.f32 %v3519, %v3767
        %v3878 = vadd.f32 %v3520, %v3772
        %v3879 = vadd.f32 %v3521, %v3777
        %v3880 = vadd.f32 %v3522, %v3782
        %v3881 = vadd.f32 %v3523, %v3787
        %v3882 = vadd.f32 %v3524, %v3792
        %v3883 = vadd.f32 %v3525, %v3797
        %v3884 = vadd.f32 %v3526, %v3802
        %v3885 = vadd.f32 %v3527, %v3807
        %v3886 = vadd.f32 %v3528, %v3812
        %v3887 = vadd.f32 %v3529, %v3817
        %v3888 = vadd.f32 %v3530, %v3822
        %v3889 = vadd.f32 %v3531, %v3827
        %v3890 = vadd.f32 %v3532, %v3832
        %v3891 = vadd.f32 %v3533, %v3837
        %v3892 = vadd.f32 %v3534, %v3842
        %v3893 = vadd.f32 %v3535, %v3847
        %v3894 = vadd.f32 %v3536, %v3852
        %v3895 = vadd.f32 %v3537, %v3857
        %v3896 = vadd.f32 %v3538, %v3862
        %3897 = vst [vmem:[#allocation2] sm:$0xff] %v3865
        %3898 = vst [vmem:[#allocation2 + $0x8] sm:$0xff] %v3866
        %3899 = vst [vmem:[#allocation2 + $0x10] sm:$0xff] %v3867
        %3900 = vst [vmem:[#allocation2 + $0x18] sm:$0xff] %v3868
        %3901 = vst [vmem:[#allocation2 + $0x20] sm:$0xff] %v3869
        %3902 = vst [vmem:[#allocation2 + $0x28] sm:$0xff] %v3870
        %3903 = vst [vmem:[#allocation2 + $0x30] sm:$0xff] %v3871
        %3904 = vst [vmem:[#allocation2 + $0x38] sm:$0xff] %v3872
        %3905 = vst [vmem:[#allocation2 + $0x40] sm:$0xff] %v3873
        %3906 = vst [vmem:[#allocation2 + $0x48] sm:$0xff] %v3874
        %3907 = vst [vmem:[#allocation2 + $0x50] sm:$0xff] %v3875
        %3908 = vst [vmem:[#allocation2 + $0x58] sm:$0xff] %v3876
        %3909 = vst [vmem:[#allocation2 + $0x60] sm:$0xff] %v3877
        %3910 = vst [vmem:[#allocation2 + $0x68] sm:$0xff] %v3878
        %3911 = vst [vmem:[#allocation2 + $0x70] sm:$0xff] %v3879
        %3912 = vst [vmem:[#allocation2 + $0x78] sm:$0xff] %v3880
        %3913 = vst [vmem:[#allocation2 + $0x80] sm:$0xff] %v3881
        %3914 = vst [vmem:[#allocation2 + $0x88] sm:$0xff] %v3882
        %3915 = vst [vmem:[#allocation2 + $0x90] sm:$0xff] %v3883
        %3916 = vst [vmem:[#allocation2 + $0x98] sm:$0xff] %v3884
        %3917 = vst [vmem:[#allocation2 + $0xa0] sm:$0xff] %v3885
        %3918 = vst [vmem:[#allocation2 + $0xa8] sm:$0xff] %v3886
        %3919 = vst [vmem:[#allocation2 + $0xb0] sm:$0xff] %v3887
        %3920 = vst [vmem:[#allocation2 + $0xb8] sm:$0xff] %v3888
        %3921 = vst [vmem:[#allocation2 + $0xc0] sm:$0xff] %v3889
        %3922 = vst [vmem:[#allocation2 + $0xc8] sm:$0xff] %v3890
        %3923 = vst [vmem:[#allocation2 + $0xd0] sm:$0xff] %v3891
        %3924 = vst [vmem:[#allocation2 + $0xd8] sm:$0xff] %v3892
        %3925 = vst [vmem:[#allocation2 + $0xe0] sm:$0xff] %v3893
        %3926 = vst [vmem:[#allocation2 + $0xe8] sm:$0xff] %v3894
        %3927 = vst [vmem:[#allocation2 + $0xf0] sm:$0xff] %v3895
        %3928 = vst [vmem:[#allocation2 + $0xf8] sm:$0xff] %v3896
        %s3929 = scalar_lea.vmem %s260, 2560 [#allocation3]
        %v3930 = vld [vmem:[%s3929] sm:$0xff]
        %v3931 = vld [vmem:[%s3929 + $0x8] sm:$0xff]
        %v3932 = vld [vmem:[%s3929 + $0x10] sm:$0xff]
        %v3933 = vld [vmem:[%s3929 + $0x18] sm:$0xff]
        %v3934 = vld [vmem:[%s3929 + $0x20] sm:$0xff]
        %v3935 = vld [vmem:[%s3929 + $0x28] sm:$0xff]
        %v3936 = vld [vmem:[%s3929 + $0x30] sm:$0xff]
        %v3937 = vld [vmem:[%s3929 + $0x38] sm:$0xff]
        %v3938 = vld [vmem:[%s3929 + $0x40] sm:$0xff]
        %v3939 = vld [vmem:[%s3929 + $0x48] sm:$0xff]
        %v3940 = vld [vmem:[%s3929 + $0x50] sm:$0xff]
        %v3941 = vld [vmem:[%s3929 + $0x58] sm:$0xff]
        %v3942 = vld [vmem:[%s3929 + $0x60] sm:$0xff]
        %v3943 = vld [vmem:[%s3929 + $0x68] sm:$0xff]
        %v3944 = vld [vmem:[%s3929 + $0x70] sm:$0xff]
        %v3945 = vld [vmem:[%s3929 + $0x78] sm:$0xff]
        %v3946 = vld [vmem:[%s3929 + $0x80] sm:$0xff]
        %v3947 = vld [vmem:[%s3929 + $0x88] sm:$0xff]
        %v3948 = vld [vmem:[%s3929 + $0x90] sm:$0xff]
        %v3949 = vld [vmem:[%s3929 + $0x98] sm:$0xff]
        %v3950 = vld [vmem:[%s3929 + $0xa0] sm:$0xff]
        %v3951 = vld [vmem:[%s3929 + $0xa8] sm:$0xff]
        %v3952 = vld [vmem:[%s3929 + $0xb0] sm:$0xff]
        %v3953 = vld [vmem:[%s3929 + $0xb8] sm:$0xff]
        %v3954 = vld [vmem:[%s3929 + $0xc0] sm:$0xff]
        %v3955 = vld [vmem:[%s3929 + $0xc8] sm:$0xff]
        %v3956 = vld [vmem:[%s3929 + $0xd0] sm:$0xff]
        %v3957 = vld [vmem:[%s3929 + $0xd8] sm:$0xff]
        %v3958 = vld [vmem:[%s3929 + $0xe0] sm:$0xff]
        %v3959 = vld [vmem:[%s3929 + $0xe8] sm:$0xff]
        %v3960 = vld [vmem:[%s3929 + $0xf0] sm:$0xff]
        %v3961 = vld [vmem:[%s3929 + $0xf8] sm:$0xff]
        %v3962 = vld [vmem:[%s3929 + $0x100] sm:$0xff]
        %v3963 = vld [vmem:[%s3929 + $0x108] sm:$0xff]
        %v3964 = vld [vmem:[%s3929 + $0x110] sm:$0xff]
        %v3965 = vld [vmem:[%s3929 + $0x118] sm:$0xff]
        %v3966 = vld [vmem:[%s3929 + $0x120] sm:$0xff]
        %v3967 = vld [vmem:[%s3929 + $0x128] sm:$0xff]
        %v3968 = vld [vmem:[%s3929 + $0x130] sm:$0xff]
        %v3969 = vld [vmem:[%s3929 + $0x138] sm:$0xff]
        %v3970 = vld [vmem:[%s3929 + $0x140] sm:$0xff]
        %v3971 = vld [vmem:[%s3929 + $0x148] sm:$0xff]
        %v3972 = vld [vmem:[%s3929 + $0x150] sm:$0xff]
        %v3973 = vld [vmem:[%s3929 + $0x158] sm:$0xff]
        %v3974 = vld [vmem:[%s3929 + $0x160] sm:$0xff]
        %v3975 = vld [vmem:[%s3929 + $0x168] sm:$0xff]
        %v3976 = vld [vmem:[%s3929 + $0x170] sm:$0xff]
        %v3977 = vld [vmem:[%s3929 + $0x178] sm:$0xff]
        %v3978 = vld [vmem:[%s3929 + $0x180] sm:$0xff]
        %v3979 = vld [vmem:[%s3929 + $0x188] sm:$0xff]
        %v3980 = vld [vmem:[%s3929 + $0x190] sm:$0xff]
        %v3981 = vld [vmem:[%s3929 + $0x198] sm:$0xff]
        %v3982 = vld [vmem:[%s3929 + $0x1a0] sm:$0xff]
        %v3983 = vld [vmem:[%s3929 + $0x1a8] sm:$0xff]
        %v3984 = vld [vmem:[%s3929 + $0x1b0] sm:$0xff]
        %v3985 = vld [vmem:[%s3929 + $0x1b8] sm:$0xff]
        %v3986 = vld [vmem:[%s3929 + $0x1c0] sm:$0xff]
        %v3987 = vld [vmem:[%s3929 + $0x1c8] sm:$0xff]
        %v3988 = vld [vmem:[%s3929 + $0x1d0] sm:$0xff]
        %v3989 = vld [vmem:[%s3929 + $0x1d8] sm:$0xff]
        %v3990 = vld [vmem:[%s3929 + $0x1e0] sm:$0xff]
        %v3991 = vld [vmem:[%s3929 + $0x1e8] sm:$0xff]
        %v3992 = vld [vmem:[%s3929 + $0x1f0] sm:$0xff]
        %v3993 = vld [vmem:[%s3929 + $0x1f8] sm:$0xff]
        %3994 = vmatprep.subr.mxu0 0.0
        %3995 = vmatpush1.msra.mxu0 %v305
        %3996 = vmatprep.subr.mxu0 0.0
        %3997 = vmatpush1.msra.mxu0 %v306
        %3998 = vmatprep.subr.mxu0 0.0
        %3999 = vmatpush1.msra.mxu0 %v307
        %4000 = vmatprep.subr.mxu0 0.0
        %4001 = vmatpush1.msra.mxu0 %v308
        %4002 = vmatprep.subr.mxu0 0.0
        %4003 = vmatpush1.msra.mxu0 %v309
        %4004 = vmatprep.subr.mxu0 0.0
        %4005 = vmatpush1.msra.mxu0 %v310
        %4006 = vmatprep.subr.mxu0 0.0
        %4007 = vmatpush1.msra.mxu0 %v311
        %4008 = vmatprep.subr.mxu0 0.0
        %4009 = vmatpush1.msra.mxu0 %v312
        %4010 = vmatprep.subr.mxu0 0.0
        %4011 = vmatpush1.msra.mxu0 %v313
        %4012 = vmatprep.subr.mxu0 0.0
        %4013 = vmatpush1.msra.mxu0 %v314
        %4014 = vmatprep.subr.mxu0 0.0
        %4015 = vmatpush1.msra.mxu0 %v315
        %4016 = vmatprep.subr.mxu0 0.0
        %4017 = vmatpush1.msra.mxu0 %v316
        %4018 = vmatprep.subr.mxu0 0.0
        %4019 = vmatpush1.msra.mxu0 %v317
        %4020 = vmatprep.subr.mxu0 0.0
        %4021 = vmatpush1.msra.mxu0 %v318
        %4022 = vmatprep.subr.mxu0 0.0
        %4023 = vmatpush1.msra.mxu0 %v319
        %4024 = vmatprep.subr.mxu0 0.0
        %4025 = vmatpush1.msra.mxu0 %v320
        %4026 = vmatprep.subr.mxu0 0.0
        %4027 = vmatpush1.msra.mxu0 %v321
        %4028 = vmatprep.subr.mxu0 0.0
        %4029 = vmatpush1.msra.mxu0 %v322
        %4030 = vmatprep.subr.mxu0 0.0
        %4031 = vmatpush1.msra.mxu0 %v323
        %4032 = vmatprep.subr.mxu0 0.0
        %4033 = vmatpush1.msra.mxu0 %v324
        %4034 = vmatprep.subr.mxu0 0.0
        %4035 = vmatpush1.msra.mxu0 %v325
        %4036 = vmatprep.subr.mxu0 0.0
        %4037 = vmatpush1.msra.mxu0 %v326
        %4038 = vmatprep.subr.mxu0 0.0
        %4039 = vmatpush1.msra.mxu0 %v327
        %4040 = vmatprep.subr.mxu0 0.0
        %4041 = vmatpush1.msra.mxu0 %v328
        %4042 = vmatprep.subr.mxu0 0.0
        %4043 = vmatpush1.msra.mxu0 %v329
        %4044 = vmatprep.subr.mxu0 0.0
        %4045 = vmatpush1.msra.mxu0 %v330
        %4046 = vmatprep.subr.mxu0 0.0
        %4047 = vmatpush1.msra.mxu0 %v331
        %4048 = vmatprep.subr.mxu0 0.0
        %4049 = vmatpush1.msra.mxu0 %v332
        %4050 = vmatprep.subr.mxu0 0.0
        %4051 = vmatpush1.msra.mxu0 %v333
        %4052 = vmatprep.subr.mxu0 0.0
        %4053 = vmatpush1.msra.mxu0 %v334
        %4054 = vmatprep.subr.mxu0 0.0
        %4055 = vmatpush1.msra.mxu0 %v335
        %4056 = vmatprep.subr.mxu0 0.0
        %4057 = vmatpush1.msra.mxu0 %v336
        %4058 = vmatprep.mubr.f32.mxu0 %v3931
        %4059 = vmatmul.mubr.f32.gmra.mrb[0].mxu0 %v3930
        %v4060 = vpop.f32.mrb[0].mxu0
        %v4061 = vadd.f32 0.0, %v4060
        %v4062 = vpop.f32.mrb[0].mxu0
        %4063 = vmatprep.mubr.f32.mxu0 %v3933
        %4064 = vmatmul.mubr.f32.gmra.mrb[0].mxu0 %v3932
        %v4065 = vpop.f32.mrb[0].mxu0
        %v4066 = vadd.f32 0.0, %v4065
        %v4067 = vpop.f32.mrb[0].mxu0
        %4068 = vmatprep.mubr.f32.mxu0 %v3935
        %4069 = vmatmul.mubr.f32.gmra.mrb[0].mxu0 %v3934
        %v4070 = vpop.f32.mrb[0].mxu0
        %v4071 = vadd.f32 0.0, %v4070
        %v4072 = vpop.f32.mrb[0].mxu0
        %4073 = vmatprep.mubr.f32.mxu0 %v3937
        %4074 = vmatmul.mubr.f32.gmra.mrb[0].mxu0 %v3936
        %v4075 = vpop.f32.mrb[0].mxu0
        %v4076 = vadd.f32 0.0, %v4075
        %v4077 = vpop.f32.mrb[0].mxu0
        %4078 = vmatprep.mubr.f32.mxu0 %v3939
        %4079 = vmatmul.mubr.f32.gmra.mrb[0].mxu0 %v3938
        %v4080 = vpop.f32.mrb[0].mxu0
        %v4081 = vadd.f32 0.0, %v4080
        %v4082 = vpop.f32.mrb[0].mxu0
        %4083 = vmatprep.mubr.f32.mxu0 %v3941
        %4084 = vmatmul.mubr.f32.gmra.mrb[0].mxu0 %v3940
        %v4085 = vpop.f32.mrb[0].mxu0
        %v4086 = vadd.f32 0.0, %v4085
        %v4087 = vpop.f32.mrb[0].mxu0
        %4088 = vmatprep.mubr.f32.mxu0 %v3943
        %4089 = vmatmul.mubr.f32.gmra.mrb[0].mxu0 %v3942
        %v4090 = vpop.f32.mrb[0].mxu0
        %v4091 = vadd.f32 0.0, %v4090
        %v4092 = vpop.f32.mrb[0].mxu0
        %4093 = vmatprep.mubr.f32.mxu0 %v3945
        %4094 = vmatmul.mubr.f32.gmra.mrb[0].mxu0 %v3944
        %v4095 = vpop.f32.mrb[0].mxu0
        %v4096 = vadd.f32 0.0, %v4095
        %v4097 = vpop.f32.mrb[0].mxu0
        %4098 = vmatprep.mubr.f32.mxu0 %v3947
        %4099 = vmatmul.mubr.f32.gmra.mrb[0].mxu0 %v3946
        %v4100 = vpop.f32.mrb[0].mxu0
        %v4101 = vadd.f32 0.0, %v4100
        %v4102 = vpop.f32.mrb[0].mxu0
        %4103 = vmatprep.mubr.f32.mxu0 %v3949
        %4104 = vmatmul.mubr.f32.gmra.mrb[0].mxu0 %v3948
        %v4105 = vpop.f32.mrb[0].mxu0
        %v4106 = vadd.f32 0.0, %v4105
        %v4107 = vpop.f32.mrb[0].mxu0
        %4108 = vmatprep.mubr.f32.mxu0 %v3951
        %4109 = vmatmul.mubr.f32.gmra.mrb[0].mxu0 %v3950
        %v4110 = vpop.f32.mrb[0].mxu0
        %v4111 = vadd.f32 0.0, %v4110
        %v4112 = vpop.f32.mrb[0].mxu0
        %4113 = vmatprep.mubr.f32.mxu0 %v3953
        %4114 = vmatmul.mubr.f32.gmra.mrb[0].mxu0 %v3952
        %v4115 = vpop.f32.mrb[0].mxu0
        %v4116 = vadd.f32 0.0, %v4115
        %v4117 = vpop.f32.mrb[0].mxu0
        %4118 = vmatprep.mubr.f32.mxu0 %v3955
        %4119 = vmatmul.mubr.f32.gmra.mrb[0].mxu0 %v3954
        %v4120 = vpop.f32.mrb[0].mxu0
        %v4121 = vadd.f32 0.0, %v4120
        %v4122 = vpop.f32.mrb[0].mxu0
        %4123 = vmatprep.mubr.f32.mxu0 %v3957
        %4124 = vmatmul.mubr.f32.gmra.mrb[0].mxu0 %v3956
        %v4125 = vpop.f32.mrb[0].mxu0
        %v4126 = vadd.f32 0.0, %v4125
        %v4127 = vpop.f32.mrb[0].mxu0
        %4128 = vmatprep.mubr.f32.mxu0 %v3959
        %4129 = vmatmul.mubr.f32.gmra.mrb[0].mxu0 %v3958
        %v4130 = vpop.f32.mrb[0].mxu0
        %v4131 = vadd.f32 0.0, %v4130
        %v4132 = vpop.f32.mrb[0].mxu0
        %4133 = vmatprep.mubr.f32.mxu0 %v3961
        %4134 = vmatmul.mubr.f32.gmra.mrb[0].mxu0 %v3960
        %v4135 = vpop.f32.mrb[0].mxu0
        %v4136 = vadd.f32 0.0, %v4135
        %v4137 = vpop.f32.mrb[0].mxu0
        %4138 = vmatprep.mubr.f32.mxu0 %v3963
        %4139 = vmatmul.mubr.f32.gmra.mrb[0].mxu0 %v3962
        %v4140 = vpop.f32.mrb[0].mxu0
        %v4141 = vadd.f32 0.0, %v4140
        %v4142 = vpop.f32.mrb[0].mxu0
        %4143 = vmatprep.mubr.f32.mxu0 %v3965
        %4144 = vmatmul.mubr.f32.gmra.mrb[0].mxu0 %v3964
        %v4145 = vpop.f32.mrb[0].mxu0
        %v4146 = vadd.f32 0.0, %v4145
        %v4147 = vpop.f32.mrb[0].mxu0
        %4148 = vmatprep.mubr.f32.mxu0 %v3967
        %4149 = vmatmul.mubr.f32.gmra.mrb[0].mxu0 %v3966
        %v4150 = vpop.f32.mrb[0].mxu0
        %v4151 = vadd.f32 0.0, %v4150
        %v4152 = vpop.f32.mrb[0].mxu0
        %4153 = vmatprep.mubr.f32.mxu0 %v3969
        %4154 = vmatmul.mubr.f32.gmra.mrb[0].mxu0 %v3968
        %v4155 = vpop.f32.mrb[0].mxu0
        %v4156 = vadd.f32 0.0, %v4155
        %v4157 = vpop.f32.mrb[0].mxu0
        %4158 = vmatprep.mubr.f32.mxu0 %v3971
        %4159 = vmatmul.mubr.f32.gmra.mrb[0].mxu0 %v3970
        %v4160 = vpop.f32.mrb[0].mxu0
        %v4161 = vadd.f32 0.0, %v4160
        %v4162 = vpop.f32.mrb[0].mxu0
        %4163 = vmatprep.mubr.f32.mxu0 %v3973
        %4164 = vmatmul.mubr.f32.gmra.mrb[0].mxu0 %v3972
        %v4165 = vpop.f32.mrb[0].mxu0
        %v4166 = vadd.f32 0.0, %v4165
        %v4167 = vpop.f32.mrb[0].mxu0
        %4168 = vmatprep.mubr.f32.mxu0 %v3975
        %4169 = vmatmul.mubr.f32.gmra.mrb[0].mxu0 %v3974
        %v4170 = vpop.f32.mrb[0].mxu0
        %v4171 = vadd.f32 0.0, %v4170
        %v4172 = vpop.f32.mrb[0].mxu0
        %4173 = vmatprep.mubr.f32.mxu0 %v3977
        %4174 = vmatmul.mubr.f32.gmra.mrb[0].mxu0 %v3976
        %v4175 = vpop.f32.mrb[0].mxu0
        %v4176 = vadd.f32 0.0, %v4175
        %v4177 = vpop.f32.mrb[0].mxu0
        %4178 = vmatprep.mubr.f32.mxu0 %v3979
        %4179 = vmatmul.mubr.f32.gmra.mrb[0].mxu0 %v3978
        %v4180 = vpop.f32.mrb[0].mxu0
        %v4181 = vadd.f32 0.0, %v4180
        %v4182 = vpop.f32.mrb[0].mxu0
        %4183 = vmatprep.mubr.f32.mxu0 %v3981
        %4184 = vmatmul.mubr.f32.gmra.mrb[0].mxu0 %v3980
        %v4185 = vpop.f32.mrb[0].mxu0
        %v4186 = vadd.f32 0.0, %v4185
        %v4187 = vpop.f32.mrb[0].mxu0
        %4188 = vmatprep.mubr.f32.mxu0 %v3983
        %4189 = vmatmul.mubr.f32.gmra.mrb[0].mxu0 %v3982
        %v4190 = vpop.f32.mrb[0].mxu0
        %v4191 = vadd.f32 0.0, %v4190
        %v4192 = vpop.f32.mrb[0].mxu0
        %4193 = vmatprep.mubr.f32.mxu0 %v3985
        %4194 = vmatmul.mubr.f32.gmra.mrb[0].mxu0 %v3984
        %v4195 = vpop.f32.mrb[0].mxu0
        %v4196 = vadd.f32 0.0, %v4195
        %v4197 = vpop.f32.mrb[0].mxu0
        %4198 = vmatprep.mubr.f32.mxu0 %v3987
        %4199 = vmatmul.mubr.f32.gmra.mrb[0].mxu0 %v3986
        %v4200 = vpop.f32.mrb[0].mxu0
        %v4201 = vadd.f32 0.0, %v4200
        %v4202 = vpop.f32.mrb[0].mxu0
        %4203 = vmatprep.mubr.f32.mxu0 %v3989
        %4204 = vmatmul.mubr.f32.gmra.mrb[0].mxu0 %v3988
        %v4205 = vpop.f32.mrb[0].mxu0
        %v4206 = vadd.f32 0.0, %v4205
        %v4207 = vpop.f32.mrb[0].mxu0
        %4208 = vmatprep.mubr.f32.mxu0 %v3991
        %4209 = vmatmul.mubr.f32.gmra.mrb[0].mxu0 %v3990
        %v4210 = vpop.f32.mrb[0].mxu0
        %v4211 = vadd.f32 0.0, %v4210
        %v4212 = vpop.f32.mrb[0].mxu0
        %4213 = vmatprep.mubr.f32.mxu0 %v3993
        %4214 = vmatmul.mubr.f32.gmra.mrb[0].mxu0 %v3992
        %v4215 = vpop.f32.mrb[0].mxu0
        %v4216 = vadd.f32 0.0, %v4215
        %v4217 = vpop.f32.mrb[0].mxu0
        %4218 = vdwg.mxu0
        %v4219 = vld [vmem:[#allocation2] sm:$0xff]
        %v4220 = vld [vmem:[#allocation2 + $0x8] sm:$0xff]
        %v4221 = vld [vmem:[#allocation2 + $0x10] sm:$0xff]
        %v4222 = vld [vmem:[#allocation2 + $0x18] sm:$0xff]
        %v4223 = vld [vmem:[#allocation2 + $0x20] sm:$0xff]
        %v4224 = vld [vmem:[#allocation2 + $0x28] sm:$0xff]
        %v4225 = vld [vmem:[#allocation2 + $0x30] sm:$0xff]
        %v4226 = vld [vmem:[#allocation2 + $0x38] sm:$0xff]
        %v4227 = vld [vmem:[#allocation2 + $0x40] sm:$0xff]
        %v4228 = vld [vmem:[#allocation2 + $0x48] sm:$0xff]
        %v4229 = vld [vmem:[#allocation2 + $0x50] sm:$0xff]
        %v4230 = vld [vmem:[#allocation2 + $0x58] sm:$0xff]
        %v4231 = vld [vmem:[#allocation2 + $0x60] sm:$0xff]
        %v4232 = vld [vmem:[#allocation2 + $0x68] sm:$0xff]
        %v4233 = vld [vmem:[#allocation2 + $0x70] sm:$0xff]
        %v4234 = vld [vmem:[#allocation2 + $0x78] sm:$0xff]
        %v4235 = vld [vmem:[#allocation2 + $0x80] sm:$0xff]
        %v4236 = vld [vmem:[#allocation2 + $0x88] sm:$0xff]
        %v4237 = vld [vmem:[#allocation2 + $0x90] sm:$0xff]
        %v4238 = vld [vmem:[#allocation2 + $0x98] sm:$0xff]
        %v4239 = vld [vmem:[#allocation2 + $0xa0] sm:$0xff]
        %v4240 = vld [vmem:[#allocation2 + $0xa8] sm:$0xff]
        %v4241 = vld [vmem:[#allocation2 + $0xb0] sm:$0xff]
        %v4242 = vld [vmem:[#allocation2 + $0xb8] sm:$0xff]
        %v4243 = vld [vmem:[#allocation2 + $0xc0] sm:$0xff]
        %v4244 = vld [vmem:[#allocation2 + $0xc8] sm:$0xff]
        %v4245 = vld [vmem:[#allocation2 + $0xd0] sm:$0xff]
        %v4246 = vld [vmem:[#allocation2 + $0xd8] sm:$0xff]
        %v4247 = vld [vmem:[#allocation2 + $0xe0] sm:$0xff]
        %v4248 = vld [vmem:[#allocation2 + $0xe8] sm:$0xff]
        %v4249 = vld [vmem:[#allocation2 + $0xf0] sm:$0xff]
        %v4250 = vld [vmem:[#allocation2 + $0xf8] sm:$0xff]
        %s4251 = scalar_lea.vmem [#allocation6], 20
        %v4252 = vld [vmem:[%s4251] sm:$0xf]
        %v4254 = vsel %vm691, %v4061, 0
        %v4257 = vsel %vm691, %v4066, 0
        %v4260 = vsel %vm691, %v4071, 0
        %v4263 = vsel %vm691, %v4076, 0
        %v4266 = vsel %vm691, %v4081, 0
        %v4269 = vsel %vm691, %v4086, 0
        %v4272 = vsel %vm691, %v4091, 0
        %v4275 = vsel %vm691, %v4096, 0
        %v4278 = vsel %vm691, %v4101, 0
        %v4281 = vsel %vm691, %v4106, 0
        %v4284 = vsel %vm691, %v4111, 0
        %v4287 = vsel %vm691, %v4116, 0
        %v4290 = vsel %vm691, %v4121, 0
        %v4293 = vsel %vm691, %v4126, 0
        %v4296 = vsel %vm691, %v4131, 0
        %v4299 = vsel %vm691, %v4136, 0
        %v4302 = vsel %vm691, %v4141, 0
        %v4305 = vsel %vm691, %v4146, 0
        %v4308 = vsel %vm691, %v4151, 0
        %v4311 = vsel %vm691, %v4156, 0
        %v4314 = vsel %vm691, %v4161, 0
        %v4317 = vsel %vm691, %v4166, 0
        %v4320 = vsel %vm691, %v4171, 0
        %v4323 = vsel %vm691, %v4176, 0
        %v4326 = vsel %vm691, %v4181, 0
        %v4329 = vsel %vm691, %v4186, 0
        %v4332 = vsel %vm691, %v4191, 0
        %v4335 = vsel %vm691, %v4196, 0
        %v4338 = vsel %vm691, %v4201, 0
        %v4341 = vsel %vm691, %v4206, 0
        %v4344 = vsel %vm691, %v4211, 0
        %v4347 = vsel %vm691, %v4216, 0
        %v4350 = vsel %vm788, %v4252, 0
        %4352 = vmatprep.subr.mxu0 0.0
        %4353 = vmatpush1.msra.mxu0 %v4350
        %4354 = vmatprep.subr.mxu0 0.0
        %4355 = vmatpush1.msra.mxu0 0.0
        %4356 = vmatprep.subr.mxu0 0.0
        %4357 = vmatpush1.msra.mxu0 0.0
        %4358 = vmatprep.subr.mxu0 0.0
        %4359 = vmatpush1.msra.mxu0 0.0
        %4360 = vmatprep.subr.mxu0 0.0
        %4361 = vmatpush1.msra.mxu0 0.0
        %4362 = vmatprep.subr.mxu0 0.0
        %4363 = vmatpush1.msra.mxu0 0.0
        %4364 = vmatprep.subr.mxu0 0.0
        %4365 = vmatpush1.msra.mxu0 0.0
        %4366 = vmatprep.subr.mxu0 0.0
        %4367 = vmatpush1.msra.mxu0 0.0
        %4368 = vmatprep.subr.mxu0 0.0
        %4369 = vmatpush1.msra.mxu0 0.0
        %4370 = vmatprep.subr.mxu0 0.0
        %4371 = vmatpush1.msra.mxu0 0.0
        %4372 = vmatprep.subr.mxu0 0.0
        %4373 = vmatpush1.msra.mxu0 0.0
        %4374 = vmatprep.subr.mxu0 0.0
        %4375 = vmatpush1.msra.mxu0 0.0
        %4376 = vmatprep.subr.mxu0 0.0
        %4377 = vmatpush1.msra.mxu0 0.0
        %4378 = vmatprep.subr.mxu0 0.0
        %4379 = vmatpush1.msra.mxu0 0.0
        %4380 = vmatprep.subr.mxu0 0.0
        %4381 = vmatpush1.msra.mxu0 0.0
        %4382 = vmatprep.subr.mxu0 0.0
        %4383 = vmatpush1.msra.mxu0 0.0
        %4384 = vmatprep.subr.mxu0 0.0
        %4385 = vmatpush1.msra.mxu0 0.0
        %4386 = vmatprep.subr.mxu0 0.0
        %4387 = vmatpush1.msra.mxu0 0.0
        %4388 = vmatprep.subr.mxu0 0.0
        %4389 = vmatpush1.msra.mxu0 0.0
        %4390 = vmatprep.subr.mxu0 0.0
        %4391 = vmatpush1.msra.mxu0 0.0
        %4392 = vmatprep.subr.mxu0 0.0
        %4393 = vmatpush1.msra.mxu0 0.0
        %4394 = vmatprep.subr.mxu0 0.0
        %4395 = vmatpush1.msra.mxu0 0.0
        %4396 = vmatprep.subr.mxu0 0.0
        %4397 = vmatpush1.msra.mxu0 0.0
        %4398 = vmatprep.subr.mxu0 0.0
        %4399 = vmatpush1.msra.mxu0 0.0
        %4400 = vmatprep.subr.mxu0 0.0
        %4401 = vmatpush1.msra.mxu0 0.0
        %4402 = vmatprep.subr.mxu0 0.0
        %4403 = vmatpush1.msra.mxu0 0.0
        %4404 = vmatprep.subr.mxu0 0.0
        %4405 = vmatpush1.msra.mxu0 0.0
        %4406 = vmatprep.subr.mxu0 0.0
        %4407 = vmatpush1.msra.mxu0 0.0
        %4408 = vmatprep.subr.mxu0 0.0
        %4409 = vmatpush1.msra.mxu0 0.0
        %4410 = vmatprep.subr.mxu0 0.0
        %4411 = vmatpush1.msra.mxu0 0.0
        %4412 = vmatprep.subr.mxu0 0.0
        %4413 = vmatpush1.msra.mxu0 0.0
        %4414 = vmatprep.subr.mxu0 0.0
        %4415 = vmatpush1.msra.mxu0 0.0
        %4416 = vmatprep.mubr.f32.mxu0 0.0
        %4417 = vmatmul.mubr.f32.gmra.mrb[0].mxu0 %v4254
        %v4418 = vpop.f32.mrb[0].mxu0
        %v4419 = vadd.f32 0.0, %v4418
        %v4420 = vpop.f32.mrb[0].mxu0
        %4421 = vmatprep.mubr.f32.mxu0 0.0
        %4422 = vmatmul.mubr.f32.gmra.mrb[0].mxu0 %v4257
        %v4423 = vpop.f32.mrb[0].mxu0
        %v4424 = vadd.f32 0.0, %v4423
        %v4425 = vpop.f32.mrb[0].mxu0
        %4426 = vmatprep.mubr.f32.mxu0 0.0
        %4427 = vmatmul.mubr.f32.gmra.mrb[0].mxu0 %v4260
        %v4428 = vpop.f32.mrb[0].mxu0
        %v4429 = vadd.f32 0.0, %v4428
        %v4430 = vpop.f32.mrb[0].mxu0
        %4431 = vmatprep.mubr.f32.mxu0 0.0
        %4432 = vmatmul.mubr.f32.gmra.mrb[0].mxu0 %v4263
        %v4433 = vpop.f32.mrb[0].mxu0
        %v4434 = vadd.f32 0.0, %v4433
        %v4435 = vpop.f32.mrb[0].mxu0
        %4436 = vmatprep.mubr.f32.mxu0 0.0
        %4437 = vmatmul.mubr.f32.gmra.mrb[0].mxu0 %v4266
        %v4438 = vpop.f32.mrb[0].mxu0
        %v4439 = vadd.f32 0.0, %v4438
        %v4440 = vpop.f32.mrb[0].mxu0
        %4441 = vmatprep.mubr.f32.mxu0 0.0
        %4442 = vmatmul.mubr.f32.gmra.mrb[0].mxu0 %v4269
        %v4443 = vpop.f32.mrb[0].mxu0
        %v4444 = vadd.f32 0.0, %v4443
        %v4445 = vpop.f32.mrb[0].mxu0
        %4446 = vmatprep.mubr.f32.mxu0 0.0
        %4447 = vmatmul.mubr.f32.gmra.mrb[0].mxu0 %v4272
        %v4448 = vpop.f32.mrb[0].mxu0
        %v4449 = vadd.f32 0.0, %v4448
        %v4450 = vpop.f32.mrb[0].mxu0
        %4451 = vmatprep.mubr.f32.mxu0 0.0
        %4452 = vmatmul.mubr.f32.gmra.mrb[0].mxu0 %v4275
        %v4453 = vpop.f32.mrb[0].mxu0
        %v4454 = vadd.f32 0.0, %v4453
        %v4455 = vpop.f32.mrb[0].mxu0
        %4456 = vmatprep.mubr.f32.mxu0 0.0
        %4457 = vmatmul.mubr.f32.gmra.mrb[0].mxu0 %v4278
        %v4458 = vpop.f32.mrb[0].mxu0
        %v4459 = vadd.f32 0.0, %v4458
        %v4460 = vpop.f32.mrb[0].mxu0
        %4461 = vmatprep.mubr.f32.mxu0 0.0
        %4462 = vmatmul.mubr.f32.gmra.mrb[0].mxu0 %v4281
        %v4463 = vpop.f32.mrb[0].mxu0
        %v4464 = vadd.f32 0.0, %v4463
        %v4465 = vpop.f32.mrb[0].mxu0
        %4466 = vmatprep.mubr.f32.mxu0 0.0
        %4467 = vmatmul.mubr.f32.gmra.mrb[0].mxu0 %v4284
        %v4468 = vpop.f32.mrb[0].mxu0
        %v4469 = vadd.f32 0.0, %v4468
        %v4470 = vpop.f32.mrb[0].mxu0
        %4471 = vmatprep.mubr.f32.mxu0 0.0
        %4472 = vmatmul.mubr.f32.gmra.mrb[0].mxu0 %v4287
        %v4473 = vpop.f32.mrb[0].mxu0
        %v4474 = vadd.f32 0.0, %v4473
        %v4475 = vpop.f32.mrb[0].mxu0
        %4476 = vmatprep.mubr.f32.mxu0 0.0
        %4477 = vmatmul.mubr.f32.gmra.mrb[0].mxu0 %v4290
        %v4478 = vpop.f32.mrb[0].mxu0
        %v4479 = vadd.f32 0.0, %v4478
        %v4480 = vpop.f32.mrb[0].mxu0
        %4481 = vmatprep.mubr.f32.mxu0 0.0
        %4482 = vmatmul.mubr.f32.gmra.mrb[0].mxu0 %v4293
        %v4483 = vpop.f32.mrb[0].mxu0
        %v4484 = vadd.f32 0.0, %v4483
        %v4485 = vpop.f32.mrb[0].mxu0
        %4486 = vmatprep.mubr.f32.mxu0 0.0
        %4487 = vmatmul.mubr.f32.gmra.mrb[0].mxu0 %v4296
        %v4488 = vpop.f32.mrb[0].mxu0
        %v4489 = vadd.f32 0.0, %v4488
        %v4490 = vpop.f32.mrb[0].mxu0
        %4491 = vmatprep.mubr.f32.mxu0 0.0
        %4492 = vmatmul.mubr.f32.gmra.mrb[0].mxu0 %v4299
        %v4493 = vpop.f32.mrb[0].mxu0
        %v4494 = vadd.f32 0.0, %v4493
        %v4495 = vpop.f32.mrb[0].mxu0
        %4496 = vmatprep.mubr.f32.mxu0 0.0
        %4497 = vmatmul.mubr.f32.gmra.mrb[0].mxu0 %v4302
        %v4498 = vpop.f32.mrb[0].mxu0
        %v4499 = vadd.f32 0.0, %v4498
        %v4500 = vpop.f32.mrb[0].mxu0
        %4501 = vmatprep.mubr.f32.mxu0 0.0
        %4502 = vmatmul.mubr.f32.gmra.mrb[0].mxu0 %v4305
        %v4503 = vpop.f32.mrb[0].mxu0
        %v4504 = vadd.f32 0.0, %v4503
        %v4505 = vpop.f32.mrb[0].mxu0
        %4506 = vmatprep.mubr.f32.mxu0 0.0
        %4507 = vmatmul.mubr.f32.gmra.mrb[0].mxu0 %v4308
        %v4508 = vpop.f32.mrb[0].mxu0
        %v4509 = vadd.f32 0.0, %v4508
        %v4510 = vpop.f32.mrb[0].mxu0
        %4511 = vmatprep.mubr.f32.mxu0 0.0
        %4512 = vmatmul.mubr.f32.gmra.mrb[0].mxu0 %v4311
        %v4513 = vpop.f32.mrb[0].mxu0
        %v4514 = vadd.f32 0.0, %v4513
        %v4515 = vpop.f32.mrb[0].mxu0
        %4516 = vmatprep.mubr.f32.mxu0 0.0
        %4517 = vmatmul.mubr.f32.gmra.mrb[0].mxu0 %v4314
        %v4518 = vpop.f32.mrb[0].mxu0
        %v4519 = vadd.f32 0.0, %v4518
        %v4520 = vpop.f32.mrb[0].mxu0
        %4521 = vmatprep.mubr.f32.mxu0 0.0
        %4522 = vmatmul.mubr.f32.gmra.mrb[0].mxu0 %v4317
        %v4523 = vpop.f32.mrb[0].mxu0
        %v4524 = vadd.f32 0.0, %v4523
        %v4525 = vpop.f32.mrb[0].mxu0
        %4526 = vmatprep.mubr.f32.mxu0 0.0
        %4527 = vmatmul.mubr.f32.gmra.mrb[0].mxu0 %v4320
        %v4528 = vpop.f32.mrb[0].mxu0
        %v4529 = vadd.f32 0.0, %v4528
        %v4530 = vpop.f32.mrb[0].mxu0
        %4531 = vmatprep.mubr.f32.mxu0 0.0
        %4532 = vmatmul.mubr.f32.gmra.mrb[0].mxu0 %v4323
        %v4533 = vpop.f32.mrb[0].mxu0
        %v4534 = vadd.f32 0.0, %v4533
        %v4535 = vpop.f32.mrb[0].mxu0
        %4536 = vmatprep.mubr.f32.mxu0 0.0
        %4537 = vmatmul.mubr.f32.gmra.mrb[0].mxu0 %v4326
        %v4538 = vpop.f32.mrb[0].mxu0
        %v4539 = vadd.f32 0.0, %v4538
        %v4540 = vpop.f32.mrb[0].mxu0
        %4541 = vmatprep.mubr.f32.mxu0 0.0
        %4542 = vmatmul.mubr.f32.gmra.mrb[0].mxu0 %v4329
        %v4543 = vpop.f32.mrb[0].mxu0
        %v4544 = vadd.f32 0.0, %v4543
        %v4545 = vpop.f32.mrb[0].mxu0
        %4546 = vmatprep.mubr.f32.mxu0 0.0
        %4547 = vmatmul.mubr.f32.gmra.mrb[0].mxu0 %v4332
        %v4548 = vpop.f32.mrb[0].mxu0
        %v4549 = vadd.f32 0.0, %v4548
        %v4550 = vpop.f32.mrb[0].mxu0
        %4551 = vmatprep.mubr.f32.mxu0 0.0
        %4552 = vmatmul.mubr.f32.gmra.mrb[0].mxu0 %v4335
        %v4553 = vpop.f32.mrb[0].mxu0
        %v4554 = vadd.f32 0.0, %v4553
        %v4555 = vpop.f32.mrb[0].mxu0
        %4556 = vmatprep.mubr.f32.mxu0 0.0
        %4557 = vmatmul.mubr.f32.gmra.mrb[0].mxu0 %v4338
        %v4558 = vpop.f32.mrb[0].mxu0
        %v4559 = vadd.f32 0.0, %v4558
        %v4560 = vpop.f32.mrb[0].mxu0
        %4561 = vmatprep.mubr.f32.mxu0 0.0
        %4562 = vmatmul.mubr.f32.gmra.mrb[0].mxu0 %v4341
        %v4563 = vpop.f32.mrb[0].mxu0
        %v4564 = vadd.f32 0.0, %v4563
        %v4565 = vpop.f32.mrb[0].mxu0
        %4566 = vmatprep.mubr.f32.mxu0 0.0
        %4567 = vmatmul.mubr.f32.gmra.mrb[0].mxu0 %v4344
        %v4568 = vpop.f32.mrb[0].mxu0
        %v4569 = vadd.f32 0.0, %v4568
        %v4570 = vpop.f32.mrb[0].mxu0
        %4571 = vmatprep.mubr.f32.mxu0 0.0
        %4572 = vmatmul.mubr.f32.gmra.mrb[0].mxu0 %v4347
        %v4573 = vpop.f32.mrb[0].mxu0
        %v4574 = vadd.f32 0.0, %v4573
        %v4575 = vpop.f32.mrb[0].mxu0
        %4576 = vdwg.mxu0
        %v4577 = vadd.f32 %v4219, %v4419
        %v4578 = vadd.f32 %v4220, %v4424
        %v4579 = vadd.f32 %v4221, %v4429
        %v4580 = vadd.f32 %v4222, %v4434
        %v4581 = vadd.f32 %v4223, %v4439
        %v4582 = vadd.f32 %v4224, %v4444
        %v4583 = vadd.f32 %v4225, %v4449
        %v4584 = vadd.f32 %v4226, %v4454
        %v4585 = vadd.f32 %v4227, %v4459
        %v4586 = vadd.f32 %v4228, %v4464
        %v4587 = vadd.f32 %v4229, %v4469
        %v4588 = vadd.f32 %v4230, %v4474
        %v4589 = vadd.f32 %v4231, %v4479
        %v4590 = vadd.f32 %v4232, %v4484
        %v4591 = vadd.f32 %v4233, %v4489
        %v4592 = vadd.f32 %v4234, %v4494
        %v4593 = vadd.f32 %v4235, %v4499
        %v4594 = vadd.f32 %v4236, %v4504
        %v4595 = vadd.f32 %v4237, %v4509
        %v4596 = vadd.f32 %v4238, %v4514
        %v4597 = vadd.f32 %v4239, %v4519
        %v4598 = vadd.f32 %v4240, %v4524
        %v4599 = vadd.f32 %v4241, %v4529
        %v4600 = vadd.f32 %v4242, %v4534
        %v4601 = vadd.f32 %v4243, %v4539
        %v4602 = vadd.f32 %v4244, %v4544
        %v4603 = vadd.f32 %v4245, %v4549
        %v4604 = vadd.f32 %v4246, %v4554
        %v4605 = vadd.f32 %v4247, %v4559
        %v4606 = vadd.f32 %v4248, %v4564
        %v4607 = vadd.f32 %v4249, %v4569
        %v4608 = vadd.f32 %v4250, %v4574
        %4609 = vst [vmem:[#allocation2] sm:$0xff] %v4577
        %4610 = vst [vmem:[#allocation2 + $0x8] sm:$0xff] %v4578
        %4611 = vst [vmem:[#allocation2 + $0x10] sm:$0xff] %v4579
        %4612 = vst [vmem:[#allocation2 + $0x18] sm:$0xff] %v4580
        %4613 = vst [vmem:[#allocation2 + $0x20] sm:$0xff] %v4581
        %4614 = vst [vmem:[#allocation2 + $0x28] sm:$0xff] %v4582
        %4615 = vst [vmem:[#allocation2 + $0x30] sm:$0xff] %v4583
        %4616 = vst [vmem:[#allocation2 + $0x38] sm:$0xff] %v4584
        %4617 = vst [vmem:[#allocation2 + $0x40] sm:$0xff] %v4585
        %4618 = vst [vmem:[#allocation2 + $0x48] sm:$0xff] %v4586
        %4619 = vst [vmem:[#allocation2 + $0x50] sm:$0xff] %v4587
        %4620 = vst [vmem:[#allocation2 + $0x58] sm:$0xff] %v4588
        %4621 = vst [vmem:[#allocation2 + $0x60] sm:$0xff] %v4589
        %4622 = vst [vmem:[#allocation2 + $0x68] sm:$0xff] %v4590
        %4623 = vst [vmem:[#allocation2 + $0x70] sm:$0xff] %v4591
        %4624 = vst [vmem:[#allocation2 + $0x78] sm:$0xff] %v4592
        %4625 = vst [vmem:[#allocation2 + $0x80] sm:$0xff] %v4593
        %4626 = vst [vmem:[#allocation2 + $0x88] sm:$0xff] %v4594
        %4627 = vst [vmem:[#allocation2 + $0x90] sm:$0xff] %v4595
        %4628 = vst [vmem:[#allocation2 + $0x98] sm:$0xff] %v4596
        %4629 = vst [vmem:[#allocation2 + $0xa0] sm:$0xff] %v4597
        %4630 = vst [vmem:[#allocation2 + $0xa8] sm:$0xff] %v4598
        %4631 = vst [vmem:[#allocation2 + $0xb0] sm:$0xff] %v4599
        %4632 = vst [vmem:[#allocation2 + $0xb8] sm:$0xff] %v4600
        %4633 = vst [vmem:[#allocation2 + $0xc0] sm:$0xff] %v4601
        %4634 = vst [vmem:[#allocation2 + $0xc8] sm:$0xff] %v4602
        %4635 = vst [vmem:[#allocation2 + $0xd0] sm:$0xff] %v4603
        %4636 = vst [vmem:[#allocation2 + $0xd8] sm:$0xff] %v4604
        %4637 = vst [vmem:[#allocation2 + $0xe0] sm:$0xff] %v4605
        %4638 = vst [vmem:[#allocation2 + $0xe8] sm:$0xff] %v4606
        %4639 = vst [vmem:[#allocation2 + $0xf0] sm:$0xff] %v4607
        %4640 = vst [vmem:[#allocation2 + $0xf8] sm:$0xff] %v4608
        %s4641 = scalar_lea.vmem %s260, 3072 [#allocation3]
        %v4642 = vld [vmem:[%s4641] sm:$0xff]
        %v4643 = vld [vmem:[%s4641 + $0x8] sm:$0xff]
        %v4644 = vld [vmem:[%s4641 + $0x10] sm:$0xff]
        %v4645 = vld [vmem:[%s4641 + $0x18] sm:$0xff]
        %v4646 = vld [vmem:[%s4641 + $0x20] sm:$0xff]
        %v4647 = vld [vmem:[%s4641 + $0x28] sm:$0xff]
        %v4648 = vld [vmem:[%s4641 + $0x30] sm:$0xff]
        %v4649 = vld [vmem:[%s4641 + $0x38] sm:$0xff]
        %v4650 = vld [vmem:[%s4641 + $0x40] sm:$0xff]
        %v4651 = vld [vmem:[%s4641 + $0x48] sm:$0xff]
        %v4652 = vld [vmem:[%s4641 + $0x50] sm:$0xff]
        %v4653 = vld [vmem:[%s4641 + $0x58] sm:$0xff]
        %v4654 = vld [vmem:[%s4641 + $0x60] sm:$0xff]
        %v4655 = vld [vmem:[%s4641 + $0x68] sm:$0xff]
        %v4656 = vld [vmem:[%s4641 + $0x70] sm:$0xff]
        %v4657 = vld [vmem:[%s4641 + $0x78] sm:$0xff]
        %v4658 = vld [vmem:[%s4641 + $0x80] sm:$0xff]
        %v4659 = vld [vmem:[%s4641 + $0x88] sm:$0xff]
        %v4660 = vld [vmem:[%s4641 + $0x90] sm:$0xff]
        %v4661 = vld [vmem:[%s4641 + $0x98] sm:$0xff]
        %v4662 = vld [vmem:[%s4641 + $0xa0] sm:$0xff]
        %v4663 = vld [vmem:[%s4641 + $0xa8] sm:$0xff]
        %v4664 = vld [vmem:[%s4641 + $0xb0] sm:$0xff]
        %v4665 = vld [vmem:[%s4641 + $0xb8] sm:$0xff]
        %v4666 = vld [vmem:[%s4641 + $0xc0] sm:$0xff]
        %v4667 = vld [vmem:[%s4641 + $0xc8] sm:$0xff]
        %v4668 = vld [vmem:[%s4641 + $0xd0] sm:$0xff]
        %v4669 = vld [vmem:[%s4641 + $0xd8] sm:$0xff]
        %v4670 = vld [vmem:[%s4641 + $0xe0] sm:$0xff]
        %v4671 = vld [vmem:[%s4641 + $0xe8] sm:$0xff]
        %v4672 = vld [vmem:[%s4641 + $0xf0] sm:$0xff]
        %v4673 = vld [vmem:[%s4641 + $0xf8] sm:$0xff]
        %v4674 = vld [vmem:[%s4641 + $0x100] sm:$0xff]
        %v4675 = vld [vmem:[%s4641 + $0x108] sm:$0xff]
        %v4676 = vld [vmem:[%s4641 + $0x110] sm:$0xff]
        %v4677 = vld [vmem:[%s4641 + $0x118] sm:$0xff]
        %v4678 = vld [vmem:[%s4641 + $0x120] sm:$0xff]
        %v4679 = vld [vmem:[%s4641 + $0x128] sm:$0xff]
        %v4680 = vld [vmem:[%s4641 + $0x130] sm:$0xff]
        %v4681 = vld [vmem:[%s4641 + $0x138] sm:$0xff]
        %v4682 = vld [vmem:[%s4641 + $0x140] sm:$0xff]
        %v4683 = vld [vmem:[%s4641 + $0x148] sm:$0xff]
        %v4684 = vld [vmem:[%s4641 + $0x150] sm:$0xff]
        %v4685 = vld [vmem:[%s4641 + $0x158] sm:$0xff]
        %v4686 = vld [vmem:[%s4641 + $0x160] sm:$0xff]
        %v4687 = vld [vmem:[%s4641 + $0x168] sm:$0xff]
        %v4688 = vld [vmem:[%s4641 + $0x170] sm:$0xff]
        %v4689 = vld [vmem:[%s4641 + $0x178] sm:$0xff]
        %v4690 = vld [vmem:[%s4641 + $0x180] sm:$0xff]
        %v4691 = vld [vmem:[%s4641 + $0x188] sm:$0xff]
        %v4692 = vld [vmem:[%s4641 + $0x190] sm:$0xff]
        %v4693 = vld [vmem:[%s4641 + $0x198] sm:$0xff]
        %v4694 = vld [vmem:[%s4641 + $0x1a0] sm:$0xff]
        %v4695 = vld [vmem:[%s4641 + $0x1a8] sm:$0xff]
        %v4696 = vld [vmem:[%s4641 + $0x1b0] sm:$0xff]
        %v4697 = vld [vmem:[%s4641 + $0x1b8] sm:$0xff]
        %v4698 = vld [vmem:[%s4641 + $0x1c0] sm:$0xff]
        %v4699 = vld [vmem:[%s4641 + $0x1c8] sm:$0xff]
        %v4700 = vld [vmem:[%s4641 + $0x1d0] sm:$0xff]
        %v4701 = vld [vmem:[%s4641 + $0x1d8] sm:$0xff]
        %v4702 = vld [vmem:[%s4641 + $0x1e0] sm:$0xff]
        %v4703 = vld [vmem:[%s4641 + $0x1e8] sm:$0xff]
        %v4704 = vld [vmem:[%s4641 + $0x1f0] sm:$0xff]
        %v4705 = vld [vmem:[%s4641 + $0x1f8] sm:$0xff]
        %4706 = vmatprep.subr.mxu0 0.0
        %4707 = vmatpush1.msra.mxu0 %v305
        %4708 = vmatprep.subr.mxu0 0.0
        %4709 = vmatpush1.msra.mxu0 %v306
        %4710 = vmatprep.subr.mxu0 0.0
        %4711 = vmatpush1.msra.mxu0 %v307
        %4712 = vmatprep.subr.mxu0 0.0
        %4713 = vmatpush1.msra.mxu0 %v308
        %4714 = vmatprep.subr.mxu0 0.0
        %4715 = vmatpush1.msra.mxu0 %v309
        %4716 = vmatprep.subr.mxu0 0.0
        %4717 = vmatpush1.msra.mxu0 %v310
        %4718 = vmatprep.subr.mxu0 0.0
        %4719 = vmatpush1.msra.mxu0 %v311
        %4720 = vmatprep.subr.mxu0 0.0
        %4721 = vmatpush1.msra.mxu0 %v312
        %4722 = vmatprep.subr.mxu0 0.0
        %4723 = vmatpush1.msra.mxu0 %v313
        %4724 = vmatprep.subr.mxu0 0.0
        %4725 = vmatpush1.msra.mxu0 %v314
        %4726 = vmatprep.subr.mxu0 0.0
        %4727 = vmatpush1.msra.mxu0 %v315
        %4728 = vmatprep.subr.mxu0 0.0
        %4729 = vmatpush1.msra.mxu0 %v316
        %4730 = vmatprep.subr.mxu0 0.0
        %4731 = vmatpush1.msra.mxu0 %v317
        %4732 = vmatprep.subr.mxu0 0.0
        %4733 = vmatpush1.msra.mxu0 %v318
        %4734 = vmatprep.subr.mxu0 0.0
        %4735 = vmatpush1.msra.mxu0 %v319
        %4736 = vmatprep.subr.mxu0 0.0
        %4737 = vmatpush1.msra.mxu0 %v320
        %4738 = vmatprep.subr.mxu0 0.0
        %4739 = vmatpush1.msra.mxu0 %v321
        %4740 = vmatprep.subr.mxu0 0.0
        %4741 = vmatpush1.msra.mxu0 %v322
        %4742 = vmatprep.subr.mxu0 0.0
        %4743 = vmatpush1.msra.mxu0 %v323
        %4744 = vmatprep.subr.mxu0 0.0
        %4745 = vmatpush1.msra.mxu0 %v324
        %4746 = vmatprep.subr.mxu0 0.0
        %4747 = vmatpush1.msra.mxu0 %v325
        %4748 = vmatprep.subr.mxu0 0.0
        %4749 = vmatpush1.msra.mxu0 %v326
        %4750 = vmatprep.subr.mxu0 0.0
        %4751 = vmatpush1.msra.mxu0 %v327
        %4752 = vmatprep.subr.mxu0 0.0
        %4753 = vmatpush1.msra.mxu0 %v328
        %4754 = vmatprep.subr.mxu0 0.0
        %4755 = vmatpush1.msra.mxu0 %v329
        %4756 = vmatprep.subr.mxu0 0.0
        %4757 = vmatpush1.msra.mxu0 %v330
        %4758 = vmatprep.subr.mxu0 0.0
        %4759 = vmatpush1.msra.mxu0 %v331
        %4760 = vmatprep.subr.mxu0 0.0
        %4761 = vmatpush1.msra.mxu0 %v332
        %4762 = vmatprep.subr.mxu0 0.0
        %4763 = vmatpush1.msra.mxu0 %v333
        %4764 = vmatprep.subr.mxu0 0.0
        %4765 = vmatpush1.msra.mxu0 %v334
        %4766 = vmatprep.subr.mxu0 0.0
        %4767 = vmatpush1.msra.mxu0 %v335
        %4768 = vmatprep.subr.mxu0 0.0
        %4769 = vmatpush1.msra.mxu0 %v336
        %4770 = vmatprep.mubr.f32.mxu0 %v4643
        %4771 = vmatmul.mubr.f32.gmra.mrb[0].mxu0 %v4642
        %v4772 = vpop.f32.mrb[0].mxu0
        %v4773 = vadd.f32 0.0, %v4772
        %v4774 = vpop.f32.mrb[0].mxu0
        %4775 = vmatprep.mubr.f32.mxu0 %v4645
        %4776 = vmatmul.mubr.f32.gmra.mrb[0].mxu0 %v4644
        %v4777 = vpop.f32.mrb[0].mxu0
        %v4778 = vadd.f32 0.0, %v4777
        %v4779 = vpop.f32.mrb[0].mxu0
        %4780 = vmatprep.mubr.f32.mxu0 %v4647
        %4781 = vmatmul.mubr.f32.gmra.mrb[0].mxu0 %v4646
        %v4782 = vpop.f32.mrb[0].mxu0
        %v4783 = vadd.f32 0.0, %v4782
        %v4784 = vpop.f32.mrb[0].mxu0
        %4785 = vmatprep.mubr.f32.mxu0 %v4649
        %4786 = vmatmul.mubr.f32.gmra.mrb[0].mxu0 %v4648
        %v4787 = vpop.f32.mrb[0].mxu0
        %v4788 = vadd.f32 0.0, %v4787
        %v4789 = vpop.f32.mrb[0].mxu0
        %4790 = vmatprep.mubr.f32.mxu0 %v4651
        %4791 = vmatmul.mubr.f32.gmra.mrb[0].mxu0 %v4650
        %v4792 = vpop.f32.mrb[0].mxu0
        %v4793 = vadd.f32 0.0, %v4792
        %v4794 = vpop.f32.mrb[0].mxu0
        %4795 = vmatprep.mubr.f32.mxu0 %v4653
        %4796 = vmatmul.mubr.f32.gmra.mrb[0].mxu0 %v4652
        %v4797 = vpop.f32.mrb[0].mxu0
        %v4798 = vadd.f32 0.0, %v4797
        %v4799 = vpop.f32.mrb[0].mxu0
        %4800 = vmatprep.mubr.f32.mxu0 %v4655
        %4801 = vmatmul.mubr.f32.gmra.mrb[0].mxu0 %v4654
        %v4802 = vpop.f32.mrb[0].mxu0
        %v4803 = vadd.f32 0.0, %v4802
        %v4804 = vpop.f32.mrb[0].mxu0
        %4805 = vmatprep.mubr.f32.mxu0 %v4657
        %4806 = vmatmul.mubr.f32.gmra.mrb[0].mxu0 %v4656
        %v4807 = vpop.f32.mrb[0].mxu0
        %v4808 = vadd.f32 0.0, %v4807
        %v4809 = vpop.f32.mrb[0].mxu0
        %4810 = vmatprep.mubr.f32.mxu0 %v4659
        %4811 = vmatmul.mubr.f32.gmra.mrb[0].mxu0 %v4658
        %v4812 = vpop.f32.mrb[0].mxu0
        %v4813 = vadd.f32 0.0, %v4812
        %v4814 = vpop.f32.mrb[0].mxu0
        %4815 = vmatprep.mubr.f32.mxu0 %v4661
        %4816 = vmatmul.mubr.f32.gmra.mrb[0].mxu0 %v4660
        %v4817 = vpop.f32.mrb[0].mxu0
        %v4818 = vadd.f32 0.0, %v4817
        %v4819 = vpop.f32.mrb[0].mxu0
        %4820 = vmatprep.mubr.f32.mxu0 %v4663
        %4821 = vmatmul.mubr.f32.gmra.mrb[0].mxu0 %v4662
        %v4822 = vpop.f32.mrb[0].mxu0
        %v4823 = vadd.f32 0.0, %v4822
        %v4824 = vpop.f32.mrb[0].mxu0
        %4825 = vmatprep.mubr.f32.mxu0 %v4665
        %4826 = vmatmul.mubr.f32.gmra.mrb[0].mxu0 %v4664
        %v4827 = vpop.f32.mrb[0].mxu0
        %v4828 = vadd.f32 0.0, %v4827
        %v4829 = vpop.f32.mrb[0].mxu0
        %4830 = vmatprep.mubr.f32.mxu0 %v4667
        %4831 = vmatmul.mubr.f32.gmra.mrb[0].mxu0 %v4666
        %v4832 = vpop.f32.mrb[0].mxu0
        %v4833 = vadd.f32 0.0, %v4832
        %v4834 = vpop.f32.mrb[0].mxu0
        %4835 = vmatprep.mubr.f32.mxu0 %v4669
        %4836 = vmatmul.mubr.f32.gmra.mrb[0].mxu0 %v4668
        %v4837 = vpop.f32.mrb[0].mxu0
        %v4838 = vadd.f32 0.0, %v4837
        %v4839 = vpop.f32.mrb[0].mxu0
        %4840 = vmatprep.mubr.f32.mxu0 %v4671
        %4841 = vmatmul.mubr.f32.gmra.mrb[0].mxu0 %v4670
        %v4842 = vpop.f32.mrb[0].mxu0
        %v4843 = vadd.f32 0.0, %v4842
        %v4844 = vpop.f32.mrb[0].mxu0
        %4845 = vmatprep.mubr.f32.mxu0 %v4673
        %4846 = vmatmul.mubr.f32.gmra.mrb[0].mxu0 %v4672
        %v4847 = vpop.f32.mrb[0].mxu0
        %v4848 = vadd.f32 0.0, %v4847
        %v4849 = vpop.f32.mrb[0].mxu0
        %4850 = vmatprep.mubr.f32.mxu0 %v4675
        %4851 = vmatmul.mubr.f32.gmra.mrb[0].mxu0 %v4674
        %v4852 = vpop.f32.mrb[0].mxu0
        %v4853 = vadd.f32 0.0, %v4852
        %v4854 = vpop.f32.mrb[0].mxu0
        %4855 = vmatprep.mubr.f32.mxu0 %v4677
        %4856 = vmatmul.mubr.f32.gmra.mrb[0].mxu0 %v4676
        %v4857 = vpop.f32.mrb[0].mxu0
        %v4858 = vadd.f32 0.0, %v4857
        %v4859 = vpop.f32.mrb[0].mxu0
        %4860 = vmatprep.mubr.f32.mxu0 %v4679
        %4861 = vmatmul.mubr.f32.gmra.mrb[0].mxu0 %v4678
        %v4862 = vpop.f32.mrb[0].mxu0
        %v4863 = vadd.f32 0.0, %v4862
        %v4864 = vpop.f32.mrb[0].mxu0
        %4865 = vmatprep.mubr.f32.mxu0 %v4681
        %4866 = vmatmul.mubr.f32.gmra.mrb[0].mxu0 %v4680
        %v4867 = vpop.f32.mrb[0].mxu0
        %v4868 = vadd.f32 0.0, %v4867
        %v4869 = vpop.f32.mrb[0].mxu0
        %4870 = vmatprep.mubr.f32.mxu0 %v4683
        %4871 = vmatmul.mubr.f32.gmra.mrb[0].mxu0 %v4682
        %v4872 = vpop.f32.mrb[0].mxu0
        %v4873 = vadd.f32 0.0, %v4872
        %v4874 = vpop.f32.mrb[0].mxu0
        %4875 = vmatprep.mubr.f32.mxu0 %v4685
        %4876 = vmatmul.mubr.f32.gmra.mrb[0].mxu0 %v4684
        %v4877 = vpop.f32.mrb[0].mxu0
        %v4878 = vadd.f32 0.0, %v4877
        %v4879 = vpop.f32.mrb[0].mxu0
        %4880 = vmatprep.mubr.f32.mxu0 %v4687
        %4881 = vmatmul.mubr.f32.gmra.mrb[0].mxu0 %v4686
        %v4882 = vpop.f32.mrb[0].mxu0
        %v4883 = vadd.f32 0.0, %v4882
        %v4884 = vpop.f32.mrb[0].mxu0
        %4885 = vmatprep.mubr.f32.mxu0 %v4689
        %4886 = vmatmul.mubr.f32.gmra.mrb[0].mxu0 %v4688
        %v4887 = vpop.f32.mrb[0].mxu0
        %v4888 = vadd.f32 0.0, %v4887
        %v4889 = vpop.f32.mrb[0].mxu0
        %4890 = vmatprep.mubr.f32.mxu0 %v4691
        %4891 = vmatmul.mubr.f32.gmra.mrb[0].mxu0 %v4690
        %v4892 = vpop.f32.mrb[0].mxu0
        %v4893 = vadd.f32 0.0, %v4892
        %v4894 = vpop.f32.mrb[0].mxu0
        %4895 = vmatprep.mubr.f32.mxu0 %v4693
        %4896 = vmatmul.mubr.f32.gmra.mrb[0].mxu0 %v4692
        %v4897 = vpop.f32.mrb[0].mxu0
        %v4898 = vadd.f32 0.0, %v4897
        %v4899 = vpop.f32.mrb[0].mxu0
        %4900 = vmatprep.mubr.f32.mxu0 %v4695
        %4901 = vmatmul.mubr.f32.gmra.mrb[0].mxu0 %v4694
        %v4902 = vpop.f32.mrb[0].mxu0
        %v4903 = vadd.f32 0.0, %v4902
        %v4904 = vpop.f32.mrb[0].mxu0
        %4905 = vmatprep.mubr.f32.mxu0 %v4697
        %4906 = vmatmul.mubr.f32.gmra.mrb[0].mxu0 %v4696
        %v4907 = vpop.f32.mrb[0].mxu0
        %v4908 = vadd.f32 0.0, %v4907
        %v4909 = vpop.f32.mrb[0].mxu0
        %4910 = vmatprep.mubr.f32.mxu0 %v4699
        %4911 = vmatmul.mubr.f32.gmra.mrb[0].mxu0 %v4698
        %v4912 = vpop.f32.mrb[0].mxu0
        %v4913 = vadd.f32 0.0, %v4912
        %v4914 = vpop.f32.mrb[0].mxu0
        %4915 = vmatprep.mubr.f32.mxu0 %v4701
        %4916 = vmatmul.mubr.f32.gmra.mrb[0].mxu0 %v4700
        %v4917 = vpop.f32.mrb[0].mxu0
        %v4918 = vadd.f32 0.0, %v4917
        %v4919 = vpop.f32.mrb[0].mxu0
        %4920 = vmatprep.mubr.f32.mxu0 %v4703
        %4921 = vmatmul.mubr.f32.gmra.mrb[0].mxu0 %v4702
        %v4922 = vpop.f32.mrb[0].mxu0
        %v4923 = vadd.f32 0.0, %v4922
        %v4924 = vpop.f32.mrb[0].mxu0
        %4925 = vmatprep.mubr.f32.mxu0 %v4705
        %4926 = vmatmul.mubr.f32.gmra.mrb[0].mxu0 %v4704
        %v4927 = vpop.f32.mrb[0].mxu0
        %v4928 = vadd.f32 0.0, %v4927
        %v4929 = vpop.f32.mrb[0].mxu0
        %4930 = vdwg.mxu0
        %v4931 = vld [vmem:[#allocation2] sm:$0xff]
        %v4932 = vld [vmem:[#allocation2 + $0x8] sm:$0xff]
        %v4933 = vld [vmem:[#allocation2 + $0x10] sm:$0xff]
        %v4934 = vld [vmem:[#allocation2 + $0x18] sm:$0xff]
        %v4935 = vld [vmem:[#allocation2 + $0x20] sm:$0xff]
        %v4936 = vld [vmem:[#allocation2 + $0x28] sm:$0xff]
        %v4937 = vld [vmem:[#allocation2 + $0x30] sm:$0xff]
        %v4938 = vld [vmem:[#allocation2 + $0x38] sm:$0xff]
        %v4939 = vld [vmem:[#allocation2 + $0x40] sm:$0xff]
        %v4940 = vld [vmem:[#allocation2 + $0x48] sm:$0xff]
        %v4941 = vld [vmem:[#allocation2 + $0x50] sm:$0xff]
        %v4942 = vld [vmem:[#allocation2 + $0x58] sm:$0xff]
        %v4943 = vld [vmem:[#allocation2 + $0x60] sm:$0xff]
        %v4944 = vld [vmem:[#allocation2 + $0x68] sm:$0xff]
        %v4945 = vld [vmem:[#allocation2 + $0x70] sm:$0xff]
        %v4946 = vld [vmem:[#allocation2 + $0x78] sm:$0xff]
        %v4947 = vld [vmem:[#allocation2 + $0x80] sm:$0xff]
        %v4948 = vld [vmem:[#allocation2 + $0x88] sm:$0xff]
        %v4949 = vld [vmem:[#allocation2 + $0x90] sm:$0xff]
        %v4950 = vld [vmem:[#allocation2 + $0x98] sm:$0xff]
        %v4951 = vld [vmem:[#allocation2 + $0xa0] sm:$0xff]
        %v4952 = vld [vmem:[#allocation2 + $0xa8] sm:$0xff]
        %v4953 = vld [vmem:[#allocation2 + $0xb0] sm:$0xff]
        %v4954 = vld [vmem:[#allocation2 + $0xb8] sm:$0xff]
        %v4955 = vld [vmem:[#allocation2 + $0xc0] sm:$0xff]
        %v4956 = vld [vmem:[#allocation2 + $0xc8] sm:$0xff]
        %v4957 = vld [vmem:[#allocation2 + $0xd0] sm:$0xff]
        %v4958 = vld [vmem:[#allocation2 + $0xd8] sm:$0xff]
        %v4959 = vld [vmem:[#allocation2 + $0xe0] sm:$0xff]
        %v4960 = vld [vmem:[#allocation2 + $0xe8] sm:$0xff]
        %v4961 = vld [vmem:[#allocation2 + $0xf0] sm:$0xff]
        %v4962 = vld [vmem:[#allocation2 + $0xf8] sm:$0xff]
        %s4963 = scalar_lea.vmem [#allocation6], 24
        %v4964 = vld [vmem:[%s4963] sm:$0xf]
        %v4966 = vsel %vm691, %v4773, 0
        %v4969 = vsel %vm691, %v4778, 0
        %v4972 = vsel %vm691, %v4783, 0
        %v4975 = vsel %vm691, %v4788, 0
        %v4978 = vsel %vm691, %v4793, 0
        %v4981 = vsel %vm691, %v4798, 0
        %v4984 = vsel %vm691, %v4803, 0
        %v4987 = vsel %vm691, %v4808, 0
        %v4990 = vsel %vm691, %v4813, 0
        %v4993 = vsel %vm691, %v4818, 0
        %v4996 = vsel %vm691, %v4823, 0
        %v4999 = vsel %vm691, %v4828, 0
        %v5002 = vsel %vm691, %v4833, 0
        %v5005 = vsel %vm691, %v4838, 0
        %v5008 = vsel %vm691, %v4843, 0
        %v5011 = vsel %vm691, %v4848, 0
        %v5014 = vsel %vm691, %v4853, 0
        %v5017 = vsel %vm691, %v4858, 0
        %v5020 = vsel %vm691, %v4863, 0
        %v5023 = vsel %vm691, %v4868, 0
        %v5026 = vsel %vm691, %v4873, 0
        %v5029 = vsel %vm691, %v4878, 0
        %v5032 = vsel %vm691, %v4883, 0
        %v5035 = vsel %vm691, %v4888, 0
        %v5038 = vsel %vm691, %v4893, 0
        %v5041 = vsel %vm691, %v4898, 0
        %v5044 = vsel %vm691, %v4903, 0
        %v5047 = vsel %vm691, %v4908, 0
        %v5050 = vsel %vm691, %v4913, 0
        %v5053 = vsel %vm691, %v4918, 0
        %v5056 = vsel %vm691, %v4923, 0
        %v5059 = vsel %vm691, %v4928, 0
        %v5062 = vsel %vm788, %v4964, 0
        %5064 = vmatprep.subr.mxu0 0.0
        %5065 = vmatpush1.msra.mxu0 %v5062
        %5066 = vmatprep.subr.mxu0 0.0
        %5067 = vmatpush1.msra.mxu0 0.0
        %5068 = vmatprep.subr.mxu0 0.0
        %5069 = vmatpush1.msra.mxu0 0.0
        %5070 = vmatprep.subr.mxu0 0.0
        %5071 = vmatpush1.msra.mxu0 0.0
        %5072 = vmatprep.subr.mxu0 0.0
        %5073 = vmatpush1.msra.mxu0 0.0
        %5074 = vmatprep.subr.mxu0 0.0
        %5075 = vmatpush1.msra.mxu0 0.0
        %5076 = vmatprep.subr.mxu0 0.0
        %5077 = vmatpush1.msra.mxu0 0.0
        %5078 = vmatprep.subr.mxu0 0.0
        %5079 = vmatpush1.msra.mxu0 0.0
        %5080 = vmatprep.subr.mxu0 0.0
        %5081 = vmatpush1.msra.mxu0 0.0
        %5082 = vmatprep.subr.mxu0 0.0
        %5083 = vmatpush1.msra.mxu0 0.0
        %5084 = vmatprep.subr.mxu0 0.0
        %5085 = vmatpush1.msra.mxu0 0.0
        %5086 = vmatprep.subr.mxu0 0.0
        %5087 = vmatpush1.msra.mxu0 0.0
        %5088 = vmatprep.subr.mxu0 0.0
        %5089 = vmatpush1.msra.mxu0 0.0
        %5090 = vmatprep.subr.mxu0 0.0
        %5091 = vmatpush1.msra.mxu0 0.0
        %5092 = vmatprep.subr.mxu0 0.0
        %5093 = vmatpush1.msra.mxu0 0.0
        %5094 = vmatprep.subr.mxu0 0.0
        %5095 = vmatpush1.msra.mxu0 0.0
        %5096 = vmatprep.subr.mxu0 0.0
        %5097 = vmatpush1.msra.mxu0 0.0
        %5098 = vmatprep.subr.mxu0 0.0
        %5099 = vmatpush1.msra.mxu0 0.0
        %5100 = vmatprep.subr.mxu0 0.0
        %5101 = vmatpush1.msra.mxu0 0.0
        %5102 = vmatprep.subr.mxu0 0.0
        %5103 = vmatpush1.msra.mxu0 0.0
        %5104 = vmatprep.subr.mxu0 0.0
        %5105 = vmatpush1.msra.mxu0 0.0
        %5106 = vmatprep.subr.mxu0 0.0
        %5107 = vmatpush1.msra.mxu0 0.0
        %5108 = vmatprep.subr.mxu0 0.0
        %5109 = vmatpush1.msra.mxu0 0.0
        %5110 = vmatprep.subr.mxu0 0.0
        %5111 = vmatpush1.msra.mxu0 0.0
        %5112 = vmatprep.subr.mxu0 0.0
        %5113 = vmatpush1.msra.mxu0 0.0
        %5114 = vmatprep.subr.mxu0 0.0
        %5115 = vmatpush1.msra.mxu0 0.0
        %5116 = vmatprep.subr.mxu0 0.0
        %5117 = vmatpush1.msra.mxu0 0.0
        %5118 = vmatprep.subr.mxu0 0.0
        %5119 = vmatpush1.msra.mxu0 0.0
        %5120 = vmatprep.subr.mxu0 0.0
        %5121 = vmatpush1.msra.mxu0 0.0
        %5122 = vmatprep.subr.mxu0 0.0
        %5123 = vmatpush1.msra.mxu0 0.0
        %5124 = vmatprep.subr.mxu0 0.0
        %5125 = vmatpush1.msra.mxu0 0.0
        %5126 = vmatprep.subr.mxu0 0.0
        %5127 = vmatpush1.msra.mxu0 0.0
        %5128 = vmatprep.mubr.f32.mxu0 0.0
        %5129 = vmatmul.mubr.f32.gmra.mrb[0].mxu0 %v4966
        %v5130 = vpop.f32.mrb[0].mxu0
        %v5131 = vadd.f32 0.0, %v5130
        %v5132 = vpop.f32.mrb[0].mxu0
        %5133 = vmatprep.mubr.f32.mxu0 0.0
        %5134 = vmatmul.mubr.f32.gmra.mrb[0].mxu0 %v4969
        %v5135 = vpop.f32.mrb[0].mxu0
        %v5136 = vadd.f32 0.0, %v5135
        %v5137 = vpop.f32.mrb[0].mxu0
        %5138 = vmatprep.mubr.f32.mxu0 0.0
        %5139 = vmatmul.mubr.f32.gmra.mrb[0].mxu0 %v4972
        %v5140 = vpop.f32.mrb[0].mxu0
        %v5141 = vadd.f32 0.0, %v5140
        %v5142 = vpop.f32.mrb[0].mxu0
        %5143 = vmatprep.mubr.f32.mxu0 0.0
        %5144 = vmatmul.mubr.f32.gmra.mrb[0].mxu0 %v4975
        %v5145 = vpop.f32.mrb[0].mxu0
        %v5146 = vadd.f32 0.0, %v5145
        %v5147 = vpop.f32.mrb[0].mxu0
        %5148 = vmatprep.mubr.f32.mxu0 0.0
        %5149 = vmatmul.mubr.f32.gmra.mrb[0].mxu0 %v4978
        %v5150 = vpop.f32.mrb[0].mxu0
        %v5151 = vadd.f32 0.0, %v5150
        %v5152 = vpop.f32.mrb[0].mxu0
        %5153 = vmatprep.mubr.f32.mxu0 0.0
        %5154 = vmatmul.mubr.f32.gmra.mrb[0].mxu0 %v4981
        %v5155 = vpop.f32.mrb[0].mxu0
        %v5156 = vadd.f32 0.0, %v5155
        %v5157 = vpop.f32.mrb[0].mxu0
        %5158 = vmatprep.mubr.f32.mxu0 0.0
        %5159 = vmatmul.mubr.f32.gmra.mrb[0].mxu0 %v4984
        %v5160 = vpop.f32.mrb[0].mxu0
        %v5161 = vadd.f32 0.0, %v5160
        %v5162 = vpop.f32.mrb[0].mxu0
        %5163 = vmatprep.mubr.f32.mxu0 0.0
        %5164 = vmatmul.mubr.f32.gmra.mrb[0].mxu0 %v4987
        %v5165 = vpop.f32.mrb[0].mxu0
        %v5166 = vadd.f32 0.0, %v5165
        %v5167 = vpop.f32.mrb[0].mxu0
        %5168 = vmatprep.mubr.f32.mxu0 0.0
        %5169 = vmatmul.mubr.f32.gmra.mrb[0].mxu0 %v4990
        %v5170 = vpop.f32.mrb[0].mxu0
        %v5171 = vadd.f32 0.0, %v5170
        %v5172 = vpop.f32.mrb[0].mxu0
        %5173 = vmatprep.mubr.f32.mxu0 0.0
        %5174 = vmatmul.mubr.f32.gmra.mrb[0].mxu0 %v4993
        %v5175 = vpop.f32.mrb[0].mxu0
        %v5176 = vadd.f32 0.0, %v5175
        %v5177 = vpop.f32.mrb[0].mxu0
        %5178 = vmatprep.mubr.f32.mxu0 0.0
        %5179 = vmatmul.mubr.f32.gmra.mrb[0].mxu0 %v4996
        %v5180 = vpop.f32.mrb[0].mxu0
        %v5181 = vadd.f32 0.0, %v5180
        %v5182 = vpop.f32.mrb[0].mxu0
        %5183 = vmatprep.mubr.f32.mxu0 0.0
        %5184 = vmatmul.mubr.f32.gmra.mrb[0].mxu0 %v4999
        %v5185 = vpop.f32.mrb[0].mxu0
        %v5186 = vadd.f32 0.0, %v5185
        %v5187 = vpop.f32.mrb[0].mxu0
        %5188 = vmatprep.mubr.f32.mxu0 0.0
        %5189 = vmatmul.mubr.f32.gmra.mrb[0].mxu0 %v5002
        %v5190 = vpop.f32.mrb[0].mxu0
        %v5191 = vadd.f32 0.0, %v5190
        %v5192 = vpop.f32.mrb[0].mxu0
        %5193 = vmatprep.mubr.f32.mxu0 0.0
        %5194 = vmatmul.mubr.f32.gmra.mrb[0].mxu0 %v5005
        %v5195 = vpop.f32.mrb[0].mxu0
        %v5196 = vadd.f32 0.0, %v5195
        %v5197 = vpop.f32.mrb[0].mxu0
        %5198 = vmatprep.mubr.f32.mxu0 0.0
        %5199 = vmatmul.mubr.f32.gmra.mrb[0].mxu0 %v5008
        %v5200 = vpop.f32.mrb[0].mxu0
        %v5201 = vadd.f32 0.0, %v5200
        %v5202 = vpop.f32.mrb[0].mxu0
        %5203 = vmatprep.mubr.f32.mxu0 0.0
        %5204 = vmatmul.mubr.f32.gmra.mrb[0].mxu0 %v5011
        %v5205 = vpop.f32.mrb[0].mxu0
        %v5206 = vadd.f32 0.0, %v5205
        %v5207 = vpop.f32.mrb[0].mxu0
        %5208 = vmatprep.mubr.f32.mxu0 0.0
        %5209 = vmatmul.mubr.f32.gmra.mrb[0].mxu0 %v5014
        %v5210 = vpop.f32.mrb[0].mxu0
        %v5211 = vadd.f32 0.0, %v5210
        %v5212 = vpop.f32.mrb[0].mxu0
        %5213 = vmatprep.mubr.f32.mxu0 0.0
        %5214 = vmatmul.mubr.f32.gmra.mrb[0].mxu0 %v5017
        %v5215 = vpop.f32.mrb[0].mxu0
        %v5216 = vadd.f32 0.0, %v5215
        %v5217 = vpop.f32.mrb[0].mxu0
        %5218 = vmatprep.mubr.f32.mxu0 0.0
        %5219 = vmatmul.mubr.f32.gmra.mrb[0].mxu0 %v5020
        %v5220 = vpop.f32.mrb[0].mxu0
        %v5221 = vadd.f32 0.0, %v5220
        %v5222 = vpop.f32.mrb[0].mxu0
        %5223 = vmatprep.mubr.f32.mxu0 0.0
        %5224 = vmatmul.mubr.f32.gmra.mrb[0].mxu0 %v5023
        %v5225 = vpop.f32.mrb[0].mxu0
        %v5226 = vadd.f32 0.0, %v5225
        %v5227 = vpop.f32.mrb[0].mxu0
        %5228 = vmatprep.mubr.f32.mxu0 0.0
        %5229 = vmatmul.mubr.f32.gmra.mrb[0].mxu0 %v5026
        %v5230 = vpop.f32.mrb[0].mxu0
        %v5231 = vadd.f32 0.0, %v5230
        %v5232 = vpop.f32.mrb[0].mxu0
        %5233 = vmatprep.mubr.f32.mxu0 0.0
        %5234 = vmatmul.mubr.f32.gmra.mrb[0].mxu0 %v5029
        %v5235 = vpop.f32.mrb[0].mxu0
        %v5236 = vadd.f32 0.0, %v5235
        %v5237 = vpop.f32.mrb[0].mxu0
        %5238 = vmatprep.mubr.f32.mxu0 0.0
        %5239 = vmatmul.mubr.f32.gmra.mrb[0].mxu0 %v5032
        %v5240 = vpop.f32.mrb[0].mxu0
        %v5241 = vadd.f32 0.0, %v5240
        %v5242 = vpop.f32.mrb[0].mxu0
        %5243 = vmatprep.mubr.f32.mxu0 0.0
        %5244 = vmatmul.mubr.f32.gmra.mrb[0].mxu0 %v5035
        %v5245 = vpop.f32.mrb[0].mxu0
        %v5246 = vadd.f32 0.0, %v5245
        %v5247 = vpop.f32.mrb[0].mxu0
        %5248 = vmatprep.mubr.f32.mxu0 0.0
        %5249 = vmatmul.mubr.f32.gmra.mrb[0].mxu0 %v5038
        %v5250 = vpop.f32.mrb[0].mxu0
        %v5251 = vadd.f32 0.0, %v5250
        %v5252 = vpop.f32.mrb[0].mxu0
        %5253 = vmatprep.mubr.f32.mxu0 0.0
        %5254 = vmatmul.mubr.f32.gmra.mrb[0].mxu0 %v5041
        %v5255 = vpop.f32.mrb[0].mxu0
        %v5256 = vadd.f32 0.0, %v5255
        %v5257 = vpop.f32.mrb[0].mxu0
        %5258 = vmatprep.mubr.f32.mxu0 0.0
        %5259 = vmatmul.mubr.f32.gmra.mrb[0].mxu0 %v5044
        %v5260 = vpop.f32.mrb[0].mxu0
        %v5261 = vadd.f32 0.0, %v5260
        %v5262 = vpop.f32.mrb[0].mxu0
        %5263 = vmatprep.mubr.f32.mxu0 0.0
        %5264 = vmatmul.mubr.f32.gmra.mrb[0].mxu0 %v5047
        %v5265 = vpop.f32.mrb[0].mxu0
        %v5266 = vadd.f32 0.0, %v5265
        %v5267 = vpop.f32.mrb[0].mxu0
        %5268 = vmatprep.mubr.f32.mxu0 0.0
        %5269 = vmatmul.mubr.f32.gmra.mrb[0].mxu0 %v5050
        %v5270 = vpop.f32.mrb[0].mxu0
        %v5271 = vadd.f32 0.0, %v5270
        %v5272 = vpop.f32.mrb[0].mxu0
        %5273 = vmatprep.mubr.f32.mxu0 0.0
        %5274 = vmatmul.mubr.f32.gmra.mrb[0].mxu0 %v5053
        %v5275 = vpop.f32.mrb[0].mxu0
        %v5276 = vadd.f32 0.0, %v5275
        %v5277 = vpop.f32.mrb[0].mxu0
        %5278 = vmatprep.mubr.f32.mxu0 0.0
        %5279 = vmatmul.mubr.f32.gmra.mrb[0].mxu0 %v5056
        %v5280 = vpop.f32.mrb[0].mxu0
        %v5281 = vadd.f32 0.0, %v5280
        %v5282 = vpop.f32.mrb[0].mxu0
        %5283 = vmatprep.mubr.f32.mxu0 0.0
        %5284 = vmatmul.mubr.f32.gmra.mrb[0].mxu0 %v5059
        %v5285 = vpop.f32.mrb[0].mxu0
        %v5286 = vadd.f32 0.0, %v5285
        %v5287 = vpop.f32.mrb[0].mxu0
        %5288 = vdwg.mxu0
        %v5289 = vadd.f32 %v4931, %v5131
        %v5290 = vadd.f32 %v4932, %v5136
        %v5291 = vadd.f32 %v4933, %v5141
        %v5292 = vadd.f32 %v4934, %v5146
        %v5293 = vadd.f32 %v4935, %v5151
        %v5294 = vadd.f32 %v4936, %v5156
        %v5295 = vadd.f32 %v4937, %v5161
        %v5296 = vadd.f32 %v4938, %v5166
        %v5297 = vadd.f32 %v4939, %v5171
        %v5298 = vadd.f32 %v4940, %v5176
        %v5299 = vadd.f32 %v4941, %v5181
        %v5300 = vadd.f32 %v4942, %v5186
        %v5301 = vadd.f32 %v4943, %v5191
        %v5302 = vadd.f32 %v4944, %v5196
        %v5303 = vadd.f32 %v4945, %v5201
        %v5304 = vadd.f32 %v4946, %v5206
        %v5305 = vadd.f32 %v4947, %v5211
        %v5306 = vadd.f32 %v4948, %v5216
        %v5307 = vadd.f32 %v4949, %v5221
        %v5308 = vadd.f32 %v4950, %v5226
        %v5309 = vadd.f32 %v4951, %v5231
        %v5310 = vadd.f32 %v4952, %v5236
        %v5311 = vadd.f32 %v4953, %v5241
        %v5312 = vadd.f32 %v4954, %v5246
        %v5313 = vadd.f32 %v4955, %v5251
        %v5314 = vadd.f32 %v4956, %v5256
        %v5315 = vadd.f32 %v4957, %v5261
        %v5316 = vadd.f32 %v4958, %v5266
        %v5317 = vadd.f32 %v4959, %v5271
        %v5318 = vadd.f32 %v4960, %v5276
        %v5319 = vadd.f32 %v4961, %v5281
        %v5320 = vadd.f32 %v4962, %v5286
        %5321 = vst [vmem:[#allocation2] sm:$0xff] %v5289
        %5322 = vst [vmem:[#allocation2 + $0x8] sm:$0xff] %v5290
        %5323 = vst [vmem:[#allocation2 + $0x10] sm:$0xff] %v5291
        %5324 = vst [vmem:[#allocation2 + $0x18] sm:$0xff] %v5292
        %5325 = vst [vmem:[#allocation2 + $0x20] sm:$0xff] %v5293
        %5326 = vst [vmem:[#allocation2 + $0x28] sm:$0xff] %v5294
        %5327 = vst [vmem:[#allocation2 + $0x30] sm:$0xff] %v5295
        %5328 = vst [vmem:[#allocation2 + $0x38] sm:$0xff] %v5296
        %5329 = vst [vmem:[#allocation2 + $0x40] sm:$0xff] %v5297
        %5330 = vst [vmem:[#allocation2 + $0x48] sm:$0xff] %v5298
        %5331 = vst [vmem:[#allocation2 + $0x50] sm:$0xff] %v5299
        %5332 = vst [vmem:[#allocation2 + $0x58] sm:$0xff] %v5300
        %5333 = vst [vmem:[#allocation2 + $0x60] sm:$0xff] %v5301
        %5334 = vst [vmem:[#allocation2 + $0x68] sm:$0xff] %v5302
        %5335 = vst [vmem:[#allocation2 + $0x70] sm:$0xff] %v5303
        %5336 = vst [vmem:[#allocation2 + $0x78] sm:$0xff] %v5304
        %5337 = vst [vmem:[#allocation2 + $0x80] sm:$0xff] %v5305
        %5338 = vst [vmem:[#allocation2 + $0x88] sm:$0xff] %v5306
        %5339 = vst [vmem:[#allocation2 + $0x90] sm:$0xff] %v5307
        %5340 = vst [vmem:[#allocation2 + $0x98] sm:$0xff] %v5308
        %5341 = vst [vmem:[#allocation2 + $0xa0] sm:$0xff] %v5309
        %5342 = vst [vmem:[#allocation2 + $0xa8] sm:$0xff] %v5310
        %5343 = vst [vmem:[#allocation2 + $0xb0] sm:$0xff] %v5311
        %5344 = vst [vmem:[#allocation2 + $0xb8] sm:$0xff] %v5312
        %5345 = vst [vmem:[#allocation2 + $0xc0] sm:$0xff] %v5313
        %5346 = vst [vmem:[#allocation2 + $0xc8] sm:$0xff] %v5314
        %5347 = vst [vmem:[#allocation2 + $0xd0] sm:$0xff] %v5315
        %5348 = vst [vmem:[#allocation2 + $0xd8] sm:$0xff] %v5316
        %5349 = vst [vmem:[#allocation2 + $0xe0] sm:$0xff] %v5317
        %5350 = vst [vmem:[#allocation2 + $0xe8] sm:$0xff] %v5318
        %5351 = vst [vmem:[#allocation2 + $0xf0] sm:$0xff] %v5319
        %5352 = vst [vmem:[#allocation2 + $0xf8] sm:$0xff] %v5320
        %s5353 = scalar_lea.vmem %s260, 3584 [#allocation3]
        %v5354 = vld [vmem:[%s5353] sm:$0xff]
        %v5355 = vld [vmem:[%s5353 + $0x8] sm:$0xff]
        %v5356 = vld [vmem:[%s5353 + $0x10] sm:$0xff]
        %v5357 = vld [vmem:[%s5353 + $0x18] sm:$0xff]
        %v5358 = vld [vmem:[%s5353 + $0x20] sm:$0xff]
        %v5359 = vld [vmem:[%s5353 + $0x28] sm:$0xff]
        %v5360 = vld [vmem:[%s5353 + $0x30] sm:$0xff]
        %v5361 = vld [vmem:[%s5353 + $0x38] sm:$0xff]
        %v5362 = vld [vmem:[%s5353 + $0x40] sm:$0xff]
        %v5363 = vld [vmem:[%s5353 + $0x48] sm:$0xff]
        %v5364 = vld [vmem:[%s5353 + $0x50] sm:$0xff]
        %v5365 = vld [vmem:[%s5353 + $0x58] sm:$0xff]
        %v5366 = vld [vmem:[%s5353 + $0x60] sm:$0xff]
        %v5367 = vld [vmem:[%s5353 + $0x68] sm:$0xff]
        %v5368 = vld [vmem:[%s5353 + $0x70] sm:$0xff]
        %v5369 = vld [vmem:[%s5353 + $0x78] sm:$0xff]
        %v5370 = vld [vmem:[%s5353 + $0x80] sm:$0xff]
        %v5371 = vld [vmem:[%s5353 + $0x88] sm:$0xff]
        %v5372 = vld [vmem:[%s5353 + $0x90] sm:$0xff]
        %v5373 = vld [vmem:[%s5353 + $0x98] sm:$0xff]
        %v5374 = vld [vmem:[%s5353 + $0xa0] sm:$0xff]
        %v5375 = vld [vmem:[%s5353 + $0xa8] sm:$0xff]
        %v5376 = vld [vmem:[%s5353 + $0xb0] sm:$0xff]
        %v5377 = vld [vmem:[%s5353 + $0xb8] sm:$0xff]
        %v5378 = vld [vmem:[%s5353 + $0xc0] sm:$0xff]
        %v5379 = vld [vmem:[%s5353 + $0xc8] sm:$0xff]
        %v5380 = vld [vmem:[%s5353 + $0xd0] sm:$0xff]
        %v5381 = vld [vmem:[%s5353 + $0xd8] sm:$0xff]
        %v5382 = vld [vmem:[%s5353 + $0xe0] sm:$0xff]
        %v5383 = vld [vmem:[%s5353 + $0xe8] sm:$0xff]
        %v5384 = vld [vmem:[%s5353 + $0xf0] sm:$0xff]
        %v5385 = vld [vmem:[%s5353 + $0xf8] sm:$0xff]
        %v5386 = vld [vmem:[%s5353 + $0x100] sm:$0xff]
        %v5387 = vld [vmem:[%s5353 + $0x108] sm:$0xff]
        %v5388 = vld [vmem:[%s5353 + $0x110] sm:$0xff]
        %v5389 = vld [vmem:[%s5353 + $0x118] sm:$0xff]
        %v5390 = vld [vmem:[%s5353 + $0x120] sm:$0xff]
        %v5391 = vld [vmem:[%s5353 + $0x128] sm:$0xff]
        %v5392 = vld [vmem:[%s5353 + $0x130] sm:$0xff]
        %v5393 = vld [vmem:[%s5353 + $0x138] sm:$0xff]
        %v5394 = vld [vmem:[%s5353 + $0x140] sm:$0xff]
        %v5395 = vld [vmem:[%s5353 + $0x148] sm:$0xff]
        %v5396 = vld [vmem:[%s5353 + $0x150] sm:$0xff]
        %v5397 = vld [vmem:[%s5353 + $0x158] sm:$0xff]
        %v5398 = vld [vmem:[%s5353 + $0x160] sm:$0xff]
        %v5399 = vld [vmem:[%s5353 + $0x168] sm:$0xff]
        %v5400 = vld [vmem:[%s5353 + $0x170] sm:$0xff]
        %v5401 = vld [vmem:[%s5353 + $0x178] sm:$0xff]
        %v5402 = vld [vmem:[%s5353 + $0x180] sm:$0xff]
        %v5403 = vld [vmem:[%s5353 + $0x188] sm:$0xff]
        %v5404 = vld [vmem:[%s5353 + $0x190] sm:$0xff]
        %v5405 = vld [vmem:[%s5353 + $0x198] sm:$0xff]
        %v5406 = vld [vmem:[%s5353 + $0x1a0] sm:$0xff]
        %v5407 = vld [vmem:[%s5353 + $0x1a8] sm:$0xff]
        %v5408 = vld [vmem:[%s5353 + $0x1b0] sm:$0xff]
        %v5409 = vld [vmem:[%s5353 + $0x1b8] sm:$0xff]
        %v5410 = vld [vmem:[%s5353 + $0x1c0] sm:$0xff]
        %v5411 = vld [vmem:[%s5353 + $0x1c8] sm:$0xff]
        %v5412 = vld [vmem:[%s5353 + $0x1d0] sm:$0xff]
        %v5413 = vld [vmem:[%s5353 + $0x1d8] sm:$0xff]
        %v5414 = vld [vmem:[%s5353 + $0x1e0] sm:$0xff]
        %v5415 = vld [vmem:[%s5353 + $0x1e8] sm:$0xff]
        %v5416 = vld [vmem:[%s5353 + $0x1f0] sm:$0xff]
        %v5417 = vld [vmem:[%s5353 + $0x1f8] sm:$0xff]
        %5418 = vmatprep.subr.mxu0 0.0
        %5419 = vmatpush1.msra.mxu0 %v305
        %5420 = vmatprep.subr.mxu0 0.0
        %5421 = vmatpush1.msra.mxu0 %v306
        %5422 = vmatprep.subr.mxu0 0.0
        %5423 = vmatpush1.msra.mxu0 %v307
        %5424 = vmatprep.subr.mxu0 0.0
        %5425 = vmatpush1.msra.mxu0 %v308
        %5426 = vmatprep.subr.mxu0 0.0
        %5427 = vmatpush1.msra.mxu0 %v309
        %5428 = vmatprep.subr.mxu0 0.0
        %5429 = vmatpush1.msra.mxu0 %v310
        %5430 = vmatprep.subr.mxu0 0.0
        %5431 = vmatpush1.msra.mxu0 %v311
        %5432 = vmatprep.subr.mxu0 0.0
        %5433 = vmatpush1.msra.mxu0 %v312
        %5434 = vmatprep.subr.mxu0 0.0
        %5435 = vmatpush1.msra.mxu0 %v313
        %5436 = vmatprep.subr.mxu0 0.0
        %5437 = vmatpush1.msra.mxu0 %v314
        %5438 = vmatprep.subr.mxu0 0.0
        %5439 = vmatpush1.msra.mxu0 %v315
        %5440 = vmatprep.subr.mxu0 0.0
        %5441 = vmatpush1.msra.mxu0 %v316
        %5442 = vmatprep.subr.mxu0 0.0
        %5443 = vmatpush1.msra.mxu0 %v317
        %5444 = vmatprep.subr.mxu0 0.0
        %5445 = vmatpush1.msra.mxu0 %v318
        %5446 = vmatprep.subr.mxu0 0.0
        %5447 = vmatpush1.msra.mxu0 %v319
        %5448 = vmatprep.subr.mxu0 0.0
        %5449 = vmatpush1.msra.mxu0 %v320
        %5450 = vmatprep.subr.mxu0 0.0
        %5451 = vmatpush1.msra.mxu0 %v321
        %5452 = vmatprep.subr.mxu0 0.0
        %5453 = vmatpush1.msra.mxu0 %v322
        %5454 = vmatprep.subr.mxu0 0.0
        %5455 = vmatpush1.msra.mxu0 %v323
        %5456 = vmatprep.subr.mxu0 0.0
        %5457 = vmatpush1.msra.mxu0 %v324
        %5458 = vmatprep.subr.mxu0 0.0
        %5459 = vmatpush1.msra.mxu0 %v325
        %5460 = vmatprep.subr.mxu0 0.0
        %5461 = vmatpush1.msra.mxu0 %v326
        %5462 = vmatprep.subr.mxu0 0.0
        %5463 = vmatpush1.msra.mxu0 %v327
        %5464 = vmatprep.subr.mxu0 0.0
        %5465 = vmatpush1.msra.mxu0 %v328
        %5466 = vmatprep.subr.mxu0 0.0
        %5467 = vmatpush1.msra.mxu0 %v329
        %5468 = vmatprep.subr.mxu0 0.0
        %5469 = vmatpush1.msra.mxu0 %v330
        %5470 = vmatprep.subr.mxu0 0.0
        %5471 = vmatpush1.msra.mxu0 %v331
        %5472 = vmatprep.subr.mxu0 0.0
        %5473 = vmatpush1.msra.mxu0 %v332
        %5474 = vmatprep.subr.mxu0 0.0
        %5475 = vmatpush1.msra.mxu0 %v333
        %5476 = vmatprep.subr.mxu0 0.0
        %5477 = vmatpush1.msra.mxu0 %v334
        %5478 = vmatprep.subr.mxu0 0.0
        %5479 = vmatpush1.msra.mxu0 %v335
        %5480 = vmatprep.subr.mxu0 0.0
        %5481 = vmatpush1.msra.mxu0 %v336
        %5482 = vmatprep.mubr.f32.mxu0 %v5355
        %5483 = vmatmul.mubr.f32.gmra.mrb[0].mxu0 %v5354
        %v5484 = vpop.f32.mrb[0].mxu0
        %v5485 = vadd.f32 0.0, %v5484
        %v5486 = vpop.f32.mrb[0].mxu0
        %5487 = vmatprep.mubr.f32.mxu0 %v5357
        %5488 = vmatmul.mubr.f32.gmra.mrb[0].mxu0 %v5356
        %v5489 = vpop.f32.mrb[0].mxu0
        %v5490 = vadd.f32 0.0, %v5489
        %v5491 = vpop.f32.mrb[0].mxu0
        %5492 = vmatprep.mubr.f32.mxu0 %v5359
        %5493 = vmatmul.mubr.f32.gmra.mrb[0].mxu0 %v5358
        %v5494 = vpop.f32.mrb[0].mxu0
        %v5495 = vadd.f32 0.0, %v5494
        %v5496 = vpop.f32.mrb[0].mxu0
        %5497 = vmatprep.mubr.f32.mxu0 %v5361
        %5498 = vmatmul.mubr.f32.gmra.mrb[0].mxu0 %v5360
        %v5499 = vpop.f32.mrb[0].mxu0
        %v5500 = vadd.f32 0.0, %v5499
        %v5501 = vpop.f32.mrb[0].mxu0
        %5502 = vmatprep.mubr.f32.mxu0 %v5363
        %5503 = vmatmul.mubr.f32.gmra.mrb[0].mxu0 %v5362
        %v5504 = vpop.f32.mrb[0].mxu0
        %v5505 = vadd.f32 0.0, %v5504
        %v5506 = vpop.f32.mrb[0].mxu0
        %5507 = vmatprep.mubr.f32.mxu0 %v5365
        %5508 = vmatmul.mubr.f32.gmra.mrb[0].mxu0 %v5364
        %v5509 = vpop.f32.mrb[0].mxu0
        %v5510 = vadd.f32 0.0, %v5509
        %v5511 = vpop.f32.mrb[0].mxu0
        %5512 = vmatprep.mubr.f32.mxu0 %v5367
        %5513 = vmatmul.mubr.f32.gmra.mrb[0].mxu0 %v5366
        %v5514 = vpop.f32.mrb[0].mxu0
        %v5515 = vadd.f32 0.0, %v5514
        %v5516 = vpop.f32.mrb[0].mxu0
        %5517 = vmatprep.mubr.f32.mxu0 %v5369
        %5518 = vmatmul.mubr.f32.gmra.mrb[0].mxu0 %v5368
        %v5519 = vpop.f32.mrb[0].mxu0
        %v5520 = vadd.f32 0.0, %v5519
        %v5521 = vpop.f32.mrb[0].mxu0
        %5522 = vmatprep.mubr.f32.mxu0 %v5371
        %5523 = vmatmul.mubr.f32.gmra.mrb[0].mxu0 %v5370
        %v5524 = vpop.f32.mrb[0].mxu0
        %v5525 = vadd.f32 0.0, %v5524
        %v5526 = vpop.f32.mrb[0].mxu0
        %5527 = vmatprep.mubr.f32.mxu0 %v5373
        %5528 = vmatmul.mubr.f32.gmra.mrb[0].mxu0 %v5372
        %v5529 = vpop.f32.mrb[0].mxu0
        %v5530 = vadd.f32 0.0, %v5529
        %v5531 = vpop.f32.mrb[0].mxu0
        %5532 = vmatprep.mubr.f32.mxu0 %v5375
        %5533 = vmatmul.mubr.f32.gmra.mrb[0].mxu0 %v5374
        %v5534 = vpop.f32.mrb[0].mxu0
        %v5535 = vadd.f32 0.0, %v5534
        %v5536 = vpop.f32.mrb[0].mxu0
        %5537 = vmatprep.mubr.f32.mxu0 %v5377
        %5538 = vmatmul.mubr.f32.gmra.mrb[0].mxu0 %v5376
        %v5539 = vpop.f32.mrb[0].mxu0
        %v5540 = vadd.f32 0.0, %v5539
        %v5541 = vpop.f32.mrb[0].mxu0
        %5542 = vmatprep.mubr.f32.mxu0 %v5379
        %5543 = vmatmul.mubr.f32.gmra.mrb[0].mxu0 %v5378
        %v5544 = vpop.f32.mrb[0].mxu0
        %v5545 = vadd.f32 0.0, %v5544
        %v5546 = vpop.f32.mrb[0].mxu0
        %5547 = vmatprep.mubr.f32.mxu0 %v5381
        %5548 = vmatmul.mubr.f32.gmra.mrb[0].mxu0 %v5380
        %v5549 = vpop.f32.mrb[0].mxu0
        %v5550 = vadd.f32 0.0, %v5549
        %v5551 = vpop.f32.mrb[0].mxu0
        %5552 = vmatprep.mubr.f32.mxu0 %v5383
        %5553 = vmatmul.mubr.f32.gmra.mrb[0].mxu0 %v5382
        %v5554 = vpop.f32.mrb[0].mxu0
        %v5555 = vadd.f32 0.0, %v5554
        %v5556 = vpop.f32.mrb[0].mxu0
        %5557 = vmatprep.mubr.f32.mxu0 %v5385
        %5558 = vmatmul.mubr.f32.gmra.mrb[0].mxu0 %v5384
        %v5559 = vpop.f32.mrb[0].mxu0
        %v5560 = vadd.f32 0.0, %v5559
        %v5561 = vpop.f32.mrb[0].mxu0
        %5562 = vmatprep.mubr.f32.mxu0 %v5387
        %5563 = vmatmul.mubr.f32.gmra.mrb[0].mxu0 %v5386
        %v5564 = vpop.f32.mrb[0].mxu0
        %v5565 = vadd.f32 0.0, %v5564
        %v5566 = vpop.f32.mrb[0].mxu0
        %5567 = vmatprep.mubr.f32.mxu0 %v5389
        %5568 = vmatmul.mubr.f32.gmra.mrb[0].mxu0 %v5388
        %v5569 = vpop.f32.mrb[0].mxu0
        %v5570 = vadd.f32 0.0, %v5569
        %v5571 = vpop.f32.mrb[0].mxu0
        %5572 = vmatprep.mubr.f32.mxu0 %v5391
        %5573 = vmatmul.mubr.f32.gmra.mrb[0].mxu0 %v5390
        %v5574 = vpop.f32.mrb[0].mxu0
        %v5575 = vadd.f32 0.0, %v5574
        %v5576 = vpop.f32.mrb[0].mxu0
        %5577 = vmatprep.mubr.f32.mxu0 %v5393
        %5578 = vmatmul.mubr.f32.gmra.mrb[0].mxu0 %v5392
        %v5579 = vpop.f32.mrb[0].mxu0
        %v5580 = vadd.f32 0.0, %v5579
        %v5581 = vpop.f32.mrb[0].mxu0
        %5582 = vmatprep.mubr.f32.mxu0 %v5395
        %5583 = vmatmul.mubr.f32.gmra.mrb[0].mxu0 %v5394
        %v5584 = vpop.f32.mrb[0].mxu0
        %v5585 = vadd.f32 0.0, %v5584
        %v5586 = vpop.f32.mrb[0].mxu0
        %5587 = vmatprep.mubr.f32.mxu0 %v5397
        %5588 = vmatmul.mubr.f32.gmra.mrb[0].mxu0 %v5396
        %v5589 = vpop.f32.mrb[0].mxu0
        %v5590 = vadd.f32 0.0, %v5589
        %v5591 = vpop.f32.mrb[0].mxu0
        %5592 = vmatprep.mubr.f32.mxu0 %v5399
        %5593 = vmatmul.mubr.f32.gmra.mrb[0].mxu0 %v5398
        %v5594 = vpop.f32.mrb[0].mxu0
        %v5595 = vadd.f32 0.0, %v5594
        %v5596 = vpop.f32.mrb[0].mxu0
        %5597 = vmatprep.mubr.f32.mxu0 %v5401
        %5598 = vmatmul.mubr.f32.gmra.mrb[0].mxu0 %v5400
        %v5599 = vpop.f32.mrb[0].mxu0
        %v5600 = vadd.f32 0.0, %v5599
        %v5601 = vpop.f32.mrb[0].mxu0
        %5602 = vmatprep.mubr.f32.mxu0 %v5403
        %5603 = vmatmul.mubr.f32.gmra.mrb[0].mxu0 %v5402
        %v5604 = vpop.f32.mrb[0].mxu0
        %v5605 = vadd.f32 0.0, %v5604
        %v5606 = vpop.f32.mrb[0].mxu0
        %5607 = vmatprep.mubr.f32.mxu0 %v5405
        %5608 = vmatmul.mubr.f32.gmra.mrb[0].mxu0 %v5404
        %v5609 = vpop.f32.mrb[0].mxu0
        %v5610 = vadd.f32 0.0, %v5609
        %v5611 = vpop.f32.mrb[0].mxu0
        %5612 = vmatprep.mubr.f32.mxu0 %v5407
        %5613 = vmatmul.mubr.f32.gmra.mrb[0].mxu0 %v5406
        %v5614 = vpop.f32.mrb[0].mxu0
        %v5615 = vadd.f32 0.0, %v5614
        %v5616 = vpop.f32.mrb[0].mxu0
        %5617 = vmatprep.mubr.f32.mxu0 %v5409
        %5618 = vmatmul.mubr.f32.gmra.mrb[0].mxu0 %v5408
        %v5619 = vpop.f32.mrb[0].mxu0
        %v5620 = vadd.f32 0.0, %v5619
        %v5621 = vpop.f32.mrb[0].mxu0
        %5622 = vmatprep.mubr.f32.mxu0 %v5411
        %5623 = vmatmul.mubr.f32.gmra.mrb[0].mxu0 %v5410
        %v5624 = vpop.f32.mrb[0].mxu0
        %v5625 = vadd.f32 0.0, %v5624
        %v5626 = vpop.f32.mrb[0].mxu0
        %5627 = vmatprep.mubr.f32.mxu0 %v5413
        %5628 = vmatmul.mubr.f32.gmra.mrb[0].mxu0 %v5412
        %v5629 = vpop.f32.mrb[0].mxu0
        %v5630 = vadd.f32 0.0, %v5629
        %v5631 = vpop.f32.mrb[0].mxu0
        %5632 = vmatprep.mubr.f32.mxu0 %v5415
        %5633 = vmatmul.mubr.f32.gmra.mrb[0].mxu0 %v5414
        %v5634 = vpop.f32.mrb[0].mxu0
        %v5635 = vadd.f32 0.0, %v5634
        %v5636 = vpop.f32.mrb[0].mxu0
        %5637 = vmatprep.mubr.f32.mxu0 %v5417
        %5638 = vmatmul.mubr.f32.gmra.mrb[0].mxu0 %v5416
        %v5639 = vpop.f32.mrb[0].mxu0
        %v5640 = vadd.f32 0.0, %v5639
        %v5641 = vpop.f32.mrb[0].mxu0
        %5642 = vdwg.mxu0
        %v5643 = vld [vmem:[#allocation2] sm:$0xff]
        %v5644 = vld [vmem:[#allocation2 + $0x8] sm:$0xff]
        %v5645 = vld [vmem:[#allocation2 + $0x10] sm:$0xff]
        %v5646 = vld [vmem:[#allocation2 + $0x18] sm:$0xff]
        %v5647 = vld [vmem:[#allocation2 + $0x20] sm:$0xff]
        %v5648 = vld [vmem:[#allocation2 + $0x28] sm:$0xff]
        %v5649 = vld [vmem:[#allocation2 + $0x30] sm:$0xff]
        %v5650 = vld [vmem:[#allocation2 + $0x38] sm:$0xff]
        %v5651 = vld [vmem:[#allocation2 + $0x40] sm:$0xff]
        %v5652 = vld [vmem:[#allocation2 + $0x48] sm:$0xff]
        %v5653 = vld [vmem:[#allocation2 + $0x50] sm:$0xff]
        %v5654 = vld [vmem:[#allocation2 + $0x58] sm:$0xff]
        %v5655 = vld [vmem:[#allocation2 + $0x60] sm:$0xff]
        %v5656 = vld [vmem:[#allocation2 + $0x68] sm:$0xff]
        %v5657 = vld [vmem:[#allocation2 + $0x70] sm:$0xff]
        %v5658 = vld [vmem:[#allocation2 + $0x78] sm:$0xff]
        %v5659 = vld [vmem:[#allocation2 + $0x80] sm:$0xff]
        %v5660 = vld [vmem:[#allocation2 + $0x88] sm:$0xff]
        %v5661 = vld [vmem:[#allocation2 + $0x90] sm:$0xff]
        %v5662 = vld [vmem:[#allocation2 + $0x98] sm:$0xff]
        %v5663 = vld [vmem:[#allocation2 + $0xa0] sm:$0xff]
        %v5664 = vld [vmem:[#allocation2 + $0xa8] sm:$0xff]
        %v5665 = vld [vmem:[#allocation2 + $0xb0] sm:$0xff]
        %v5666 = vld [vmem:[#allocation2 + $0xb8] sm:$0xff]
        %v5667 = vld [vmem:[#allocation2 + $0xc0] sm:$0xff]
        %v5668 = vld [vmem:[#allocation2 + $0xc8] sm:$0xff]
        %v5669 = vld [vmem:[#allocation2 + $0xd0] sm:$0xff]
        %v5670 = vld [vmem:[#allocation2 + $0xd8] sm:$0xff]
        %v5671 = vld [vmem:[#allocation2 + $0xe0] sm:$0xff]
        %v5672 = vld [vmem:[#allocation2 + $0xe8] sm:$0xff]
        %v5673 = vld [vmem:[#allocation2 + $0xf0] sm:$0xff]
        %v5674 = vld [vmem:[#allocation2 + $0xf8] sm:$0xff]
        %s5675 = scalar_lea.vmem [#allocation6], 28
        %v5676 = vld [vmem:[%s5675] sm:$0xf]
        %v5678 = vsel %vm691, %v5485, 0
        %v5681 = vsel %vm691, %v5490, 0
        %v5684 = vsel %vm691, %v5495, 0
        %v5687 = vsel %vm691, %v5500, 0
        %v5690 = vsel %vm691, %v5505, 0
        %v5693 = vsel %vm691, %v5510, 0
        %v5696 = vsel %vm691, %v5515, 0
        %v5699 = vsel %vm691, %v5520, 0
        %v5702 = vsel %vm691, %v5525, 0
        %v5705 = vsel %vm691, %v5530, 0
        %v5708 = vsel %vm691, %v5535, 0
        %v5711 = vsel %vm691, %v5540, 0
        %v5714 = vsel %vm691, %v5545, 0
        %v5717 = vsel %vm691, %v5550, 0
        %v5720 = vsel %vm691, %v5555, 0
        %v5723 = vsel %vm691, %v5560, 0
        %v5726 = vsel %vm691, %v5565, 0
        %v5729 = vsel %vm691, %v5570, 0
        %v5732 = vsel %vm691, %v5575, 0
        %v5735 = vsel %vm691, %v5580, 0
        %v5738 = vsel %vm691, %v5585, 0
        %v5741 = vsel %vm691, %v5590, 0
        %v5744 = vsel %vm691, %v5595, 0
        %v5747 = vsel %vm691, %v5600, 0
        %v5750 = vsel %vm691, %v5605, 0
        %v5753 = vsel %vm691, %v5610, 0
        %v5756 = vsel %vm691, %v5615, 0
        %v5759 = vsel %vm691, %v5620, 0
        %v5762 = vsel %vm691, %v5625, 0
        %v5765 = vsel %vm691, %v5630, 0
        %v5768 = vsel %vm691, %v5635, 0
        %v5771 = vsel %vm691, %v5640, 0
        %v5774 = vsel %vm788, %v5676, 0
        %5776 = vmatprep.subr.mxu0 0.0
        %5777 = vmatpush1.msra.mxu0 %v5774
        %5778 = vmatprep.subr.mxu0 0.0
        %5779 = vmatpush1.msra.mxu0 0.0
        %5780 = vmatprep.subr.mxu0 0.0
        %5781 = vmatpush1.msra.mxu0 0.0
        %5782 = vmatprep.subr.mxu0 0.0
        %5783 = vmatpush1.msra.mxu0 0.0
        %5784 = vmatprep.subr.mxu0 0.0
        %5785 = vmatpush1.msra.mxu0 0.0
        %5786 = vmatprep.subr.mxu0 0.0
        %5787 = vmatpush1.msra.mxu0 0.0
        %5788 = vmatprep.subr.mxu0 0.0
        %5789 = vmatpush1.msra.mxu0 0.0
        %5790 = vmatprep.subr.mxu0 0.0
        %5791 = vmatpush1.msra.mxu0 0.0
        %5792 = vmatprep.subr.mxu0 0.0
        %5793 = vmatpush1.msra.mxu0 0.0
        %5794 = vmatprep.subr.mxu0 0.0
        %5795 = vmatpush1.msra.mxu0 0.0
        %5796 = vmatprep.subr.mxu0 0.0
        %5797 = vmatpush1.msra.mxu0 0.0
        %5798 = vmatprep.subr.mxu0 0.0
        %5799 = vmatpush1.msra.mxu0 0.0
        %5800 = vmatprep.subr.mxu0 0.0
        %5801 = vmatpush1.msra.mxu0 0.0
        %5802 = vmatprep.subr.mxu0 0.0
        %5803 = vmatpush1.msra.mxu0 0.0
        %5804 = vmatprep.subr.mxu0 0.0
        %5805 = vmatpush1.msra.mxu0 0.0
        %5806 = vmatprep.subr.mxu0 0.0
        %5807 = vmatpush1.msra.mxu0 0.0
        %5808 = vmatprep.subr.mxu0 0.0
        %5809 = vmatpush1.msra.mxu0 0.0
        %5810 = vmatprep.subr.mxu0 0.0
        %5811 = vmatpush1.msra.mxu0 0.0
        %5812 = vmatprep.subr.mxu0 0.0
        %5813 = vmatpush1.msra.mxu0 0.0
        %5814 = vmatprep.subr.mxu0 0.0
        %5815 = vmatpush1.msra.mxu0 0.0
        %5816 = vmatprep.subr.mxu0 0.0
        %5817 = vmatpush1.msra.mxu0 0.0
        %5818 = vmatprep.subr.mxu0 0.0
        %5819 = vmatpush1.msra.mxu0 0.0
        %5820 = vmatprep.subr.mxu0 0.0
        %5821 = vmatpush1.msra.mxu0 0.0
        %5822 = vmatprep.subr.mxu0 0.0
        %5823 = vmatpush1.msra.mxu0 0.0
        %5824 = vmatprep.subr.mxu0 0.0
        %5825 = vmatpush1.msra.mxu0 0.0
        %5826 = vmatprep.subr.mxu0 0.0
        %5827 = vmatpush1.msra.mxu0 0.0
        %5828 = vmatprep.subr.mxu0 0.0
        %5829 = vmatpush1.msra.mxu0 0.0
        %5830 = vmatprep.subr.mxu0 0.0
        %5831 = vmatpush1.msra.mxu0 0.0
        %5832 = vmatprep.subr.mxu0 0.0
        %5833 = vmatpush1.msra.mxu0 0.0
        %5834 = vmatprep.subr.mxu0 0.0
        %5835 = vmatpush1.msra.mxu0 0.0
        %5836 = vmatprep.subr.mxu0 0.0
        %5837 = vmatpush1.msra.mxu0 0.0
        %5838 = vmatprep.subr.mxu0 0.0
        %5839 = vmatpush1.msra.mxu0 0.0
        %5840 = vmatprep.mubr.f32.mxu0 0.0
        %5841 = vmatmul.mubr.f32.gmra.mrb[0].mxu0 %v5678
        %v5842 = vpop.f32.mrb[0].mxu0
        %v5843 = vadd.f32 0.0, %v5842
        %v5844 = vpop.f32.mrb[0].mxu0
        %5845 = vmatprep.mubr.f32.mxu0 0.0
        %5846 = vmatmul.mubr.f32.gmra.mrb[0].mxu0 %v5681
        %v5847 = vpop.f32.mrb[0].mxu0
        %v5848 = vadd.f32 0.0, %v5847
        %v5849 = vpop.f32.mrb[0].mxu0
        %5850 = vmatprep.mubr.f32.mxu0 0.0
        %5851 = vmatmul.mubr.f32.gmra.mrb[0].mxu0 %v5684
        %v5852 = vpop.f32.mrb[0].mxu0
        %v5853 = vadd.f32 0.0, %v5852
        %v5854 = vpop.f32.mrb[0].mxu0
        %5855 = vmatprep.mubr.f32.mxu0 0.0
        %5856 = vmatmul.mubr.f32.gmra.mrb[0].mxu0 %v5687
        %v5857 = vpop.f32.mrb[0].mxu0
        %v5858 = vadd.f32 0.0, %v5857
        %v5859 = vpop.f32.mrb[0].mxu0
        %5860 = vmatprep.mubr.f32.mxu0 0.0
        %5861 = vmatmul.mubr.f32.gmra.mrb[0].mxu0 %v5690
        %v5862 = vpop.f32.mrb[0].mxu0
        %v5863 = vadd.f32 0.0, %v5862
        %v5864 = vpop.f32.mrb[0].mxu0
        %5865 = vmatprep.mubr.f32.mxu0 0.0
        %5866 = vmatmul.mubr.f32.gmra.mrb[0].mxu0 %v5693
        %v5867 = vpop.f32.mrb[0].mxu0
        %v5868 = vadd.f32 0.0, %v5867
        %v5869 = vpop.f32.mrb[0].mxu0
        %5870 = vmatprep.mubr.f32.mxu0 0.0
        %5871 = vmatmul.mubr.f32.gmra.mrb[0].mxu0 %v5696
        %v5872 = vpop.f32.mrb[0].mxu0
        %v5873 = vadd.f32 0.0, %v5872
        %v5874 = vpop.f32.mrb[0].mxu0
        %5875 = vmatprep.mubr.f32.mxu0 0.0
        %5876 = vmatmul.mubr.f32.gmra.mrb[0].mxu0 %v5699
        %v5877 = vpop.f32.mrb[0].mxu0
        %v5878 = vadd.f32 0.0, %v5877
        %v5879 = vpop.f32.mrb[0].mxu0
        %5880 = vmatprep.mubr.f32.mxu0 0.0
        %5881 = vmatmul.mubr.f32.gmra.mrb[0].mxu0 %v5702
        %v5882 = vpop.f32.mrb[0].mxu0
        %v5883 = vadd.f32 0.0, %v5882
        %v5884 = vpop.f32.mrb[0].mxu0
        %5885 = vmatprep.mubr.f32.mxu0 0.0
        %5886 = vmatmul.mubr.f32.gmra.mrb[0].mxu0 %v5705
        %v5887 = vpop.f32.mrb[0].mxu0
        %v5888 = vadd.f32 0.0, %v5887
        %v5889 = vpop.f32.mrb[0].mxu0
        %5890 = vmatprep.mubr.f32.mxu0 0.0
        %5891 = vmatmul.mubr.f32.gmra.mrb[0].mxu0 %v5708
        %v5892 = vpop.f32.mrb[0].mxu0
        %v5893 = vadd.f32 0.0, %v5892
        %v5894 = vpop.f32.mrb[0].mxu0
        %5895 = vmatprep.mubr.f32.mxu0 0.0
        %5896 = vmatmul.mubr.f32.gmra.mrb[0].mxu0 %v5711
        %v5897 = vpop.f32.mrb[0].mxu0
        %v5898 = vadd.f32 0.0, %v5897
        %v5899 = vpop.f32.mrb[0].mxu0
        %5900 = vmatprep.mubr.f32.mxu0 0.0
        %5901 = vmatmul.mubr.f32.gmra.mrb[0].mxu0 %v5714
        %v5902 = vpop.f32.mrb[0].mxu0
        %v5903 = vadd.f32 0.0, %v5902
        %v5904 = vpop.f32.mrb[0].mxu0
        %5905 = vmatprep.mubr.f32.mxu0 0.0
        %5906 = vmatmul.mubr.f32.gmra.mrb[0].mxu0 %v5717
        %v5907 = vpop.f32.mrb[0].mxu0
        %v5908 = vadd.f32 0.0, %v5907
        %v5909 = vpop.f32.mrb[0].mxu0
        %5910 = vmatprep.mubr.f32.mxu0 0.0
        %5911 = vmatmul.mubr.f32.gmra.mrb[0].mxu0 %v5720
        %v5912 = vpop.f32.mrb[0].mxu0
        %v5913 = vadd.f32 0.0, %v5912
        %v5914 = vpop.f32.mrb[0].mxu0
        %5915 = vmatprep.mubr.f32.mxu0 0.0
        %5916 = vmatmul.mubr.f32.gmra.mrb[0].mxu0 %v5723
        %v5917 = vpop.f32.mrb[0].mxu0
        %v5918 = vadd.f32 0.0, %v5917
        %v5919 = vpop.f32.mrb[0].mxu0
        %5920 = vmatprep.mubr.f32.mxu0 0.0
        %5921 = vmatmul.mubr.f32.gmra.mrb[0].mxu0 %v5726
        %v5922 = vpop.f32.mrb[0].mxu0
        %v5923 = vadd.f32 0.0, %v5922
        %v5924 = vpop.f32.mrb[0].mxu0
        %5925 = vmatprep.mubr.f32.mxu0 0.0
        %5926 = vmatmul.mubr.f32.gmra.mrb[0].mxu0 %v5729
        %v5927 = vpop.f32.mrb[0].mxu0
        %v5928 = vadd.f32 0.0, %v5927
        %v5929 = vpop.f32.mrb[0].mxu0
        %5930 = vmatprep.mubr.f32.mxu0 0.0
        %5931 = vmatmul.mubr.f32.gmra.mrb[0].mxu0 %v5732
        %v5932 = vpop.f32.mrb[0].mxu0
        %v5933 = vadd.f32 0.0, %v5932
        %v5934 = vpop.f32.mrb[0].mxu0
        %5935 = vmatprep.mubr.f32.mxu0 0.0
        %5936 = vmatmul.mubr.f32.gmra.mrb[0].mxu0 %v5735
        %v5937 = vpop.f32.mrb[0].mxu0
        %v5938 = vadd.f32 0.0, %v5937
        %v5939 = vpop.f32.mrb[0].mxu0
        %5940 = vmatprep.mubr.f32.mxu0 0.0
        %5941 = vmatmul.mubr.f32.gmra.mrb[0].mxu0 %v5738
        %v5942 = vpop.f32.mrb[0].mxu0
        %v5943 = vadd.f32 0.0, %v5942
        %v5944 = vpop.f32.mrb[0].mxu0
        %5945 = vmatprep.mubr.f32.mxu0 0.0
        %5946 = vmatmul.mubr.f32.gmra.mrb[0].mxu0 %v5741
        %v5947 = vpop.f32.mrb[0].mxu0
        %v5948 = vadd.f32 0.0, %v5947
        %v5949 = vpop.f32.mrb[0].mxu0
        %5950 = vmatprep.mubr.f32.mxu0 0.0
        %5951 = vmatmul.mubr.f32.gmra.mrb[0].mxu0 %v5744
        %v5952 = vpop.f32.mrb[0].mxu0
        %v5953 = vadd.f32 0.0, %v5952
        %v5954 = vpop.f32.mrb[0].mxu0
        %5955 = vmatprep.mubr.f32.mxu0 0.0
        %5956 = vmatmul.mubr.f32.gmra.mrb[0].mxu0 %v5747
        %v5957 = vpop.f32.mrb[0].mxu0
        %v5958 = vadd.f32 0.0, %v5957
        %v5959 = vpop.f32.mrb[0].mxu0
        %5960 = vmatprep.mubr.f32.mxu0 0.0
        %5961 = vmatmul.mubr.f32.gmra.mrb[0].mxu0 %v5750
        %v5962 = vpop.f32.mrb[0].mxu0
        %v5963 = vadd.f32 0.0, %v5962
        %v5964 = vpop.f32.mrb[0].mxu0
        %5965 = vmatprep.mubr.f32.mxu0 0.0
        %5966 = vmatmul.mubr.f32.gmra.mrb[0].mxu0 %v5753
        %v5967 = vpop.f32.mrb[0].mxu0
        %v5968 = vadd.f32 0.0, %v5967
        %v5969 = vpop.f32.mrb[0].mxu0
        %5970 = vmatprep.mubr.f32.mxu0 0.0
        %5971 = vmatmul.mubr.f32.gmra.mrb[0].mxu0 %v5756
        %v5972 = vpop.f32.mrb[0].mxu0
        %v5973 = vadd.f32 0.0, %v5972
        %v5974 = vpop.f32.mrb[0].mxu0
        %5975 = vmatprep.mubr.f32.mxu0 0.0
        %5976 = vmatmul.mubr.f32.gmra.mrb[0].mxu0 %v5759
        %v5977 = vpop.f32.mrb[0].mxu0
        %v5978 = vadd.f32 0.0, %v5977
        %v5979 = vpop.f32.mrb[0].mxu0
        %5980 = vmatprep.mubr.f32.mxu0 0.0
        %5981 = vmatmul.mubr.f32.gmra.mrb[0].mxu0 %v5762
        %v5982 = vpop.f32.mrb[0].mxu0
        %v5983 = vadd.f32 0.0, %v5982
        %v5984 = vpop.f32.mrb[0].mxu0
        %5985 = vmatprep.mubr.f32.mxu0 0.0
        %5986 = vmatmul.mubr.f32.gmra.mrb[0].mxu0 %v5765
        %v5987 = vpop.f32.mrb[0].mxu0
        %v5988 = vadd.f32 0.0, %v5987
        %v5989 = vpop.f32.mrb[0].mxu0
        %5990 = vmatprep.mubr.f32.mxu0 0.0
        %5991 = vmatmul.mubr.f32.gmra.mrb[0].mxu0 %v5768
        %v5992 = vpop.f32.mrb[0].mxu0
        %v5993 = vadd.f32 0.0, %v5992
        %v5994 = vpop.f32.mrb[0].mxu0
        %5995 = vmatprep.mubr.f32.mxu0 0.0
        %5996 = vmatmul.mubr.f32.gmra.mrb[0].mxu0 %v5771
        %v5997 = vpop.f32.mrb[0].mxu0
        %v5998 = vadd.f32 0.0, %v5997
        %v5999 = vpop.f32.mrb[0].mxu0
        %6000 = vdwg.mxu0
        %v6001 = vadd.f32 %v5643, %v5843
        %v6002 = vadd.f32 %v5644, %v5848
        %v6003 = vadd.f32 %v5645, %v5853
        %v6004 = vadd.f32 %v5646, %v5858
        %v6005 = vadd.f32 %v5647, %v5863
        %v6006 = vadd.f32 %v5648, %v5868
        %v6007 = vadd.f32 %v5649, %v5873
        %v6008 = vadd.f32 %v5650, %v5878
        %v6009 = vadd.f32 %v5651, %v5883
        %v6010 = vadd.f32 %v5652, %v5888
        %v6011 = vadd.f32 %v5653, %v5893
        %v6012 = vadd.f32 %v5654, %v5898
        %v6013 = vadd.f32 %v5655, %v5903
        %v6014 = vadd.f32 %v5656, %v5908
        %v6015 = vadd.f32 %v5657, %v5913
        %v6016 = vadd.f32 %v5658, %v5918
        %v6017 = vadd.f32 %v5659, %v5923
        %v6018 = vadd.f32 %v5660, %v5928
        %v6019 = vadd.f32 %v5661, %v5933
        %v6020 = vadd.f32 %v5662, %v5938
        %v6021 = vadd.f32 %v5663, %v5943
        %v6022 = vadd.f32 %v5664, %v5948
        %v6023 = vadd.f32 %v5665, %v5953
        %v6024 = vadd.f32 %v5666, %v5958
        %v6025 = vadd.f32 %v5667, %v5963
        %v6026 = vadd.f32 %v5668, %v5968
        %v6027 = vadd.f32 %v5669, %v5973
        %v6028 = vadd.f32 %v5670, %v5978
        %v6029 = vadd.f32 %v5671, %v5983
        %v6030 = vadd.f32 %v5672, %v5988
        %v6031 = vadd.f32 %v5673, %v5993
        %v6032 = vadd.f32 %v5674, %v5998
        %6033 = vst [vmem:[#allocation2] sm:$0xff] %v6001
        %6034 = vst [vmem:[#allocation2 + $0x8] sm:$0xff] %v6002
        %6035 = vst [vmem:[#allocation2 + $0x10] sm:$0xff] %v6003
        %6036 = vst [vmem:[#allocation2 + $0x18] sm:$0xff] %v6004
        %6037 = vst [vmem:[#allocation2 + $0x20] sm:$0xff] %v6005
        %6038 = vst [vmem:[#allocation2 + $0x28] sm:$0xff] %v6006
        %6039 = vst [vmem:[#allocation2 + $0x30] sm:$0xff] %v6007
        %6040 = vst [vmem:[#allocation2 + $0x38] sm:$0xff] %v6008
        %6041 = vst [vmem:[#allocation2 + $0x40] sm:$0xff] %v6009
        %6042 = vst [vmem:[#allocation2 + $0x48] sm:$0xff] %v6010
        %6043 = vst [vmem:[#allocation2 + $0x50] sm:$0xff] %v6011
        %6044 = vst [vmem:[#allocation2 + $0x58] sm:$0xff] %v6012
        %6045 = vst [vmem:[#allocation2 + $0x60] sm:$0xff] %v6013
        %6046 = vst [vmem:[#allocation2 + $0x68] sm:$0xff] %v6014
        %6047 = vst [vmem:[#allocation2 + $0x70] sm:$0xff] %v6015
        %6048 = vst [vmem:[#allocation2 + $0x78] sm:$0xff] %v6016
        %6049 = vst [vmem:[#allocation2 + $0x80] sm:$0xff] %v6017
        %6050 = vst [vmem:[#allocation2 + $0x88] sm:$0xff] %v6018
        %6051 = vst [vmem:[#allocation2 + $0x90] sm:$0xff] %v6019
        %6052 = vst [vmem:[#allocation2 + $0x98] sm:$0xff] %v6020
        %6053 = vst [vmem:[#allocation2 + $0xa0] sm:$0xff] %v6021
        %6054 = vst [vmem:[#allocation2 + $0xa8] sm:$0xff] %v6022
        %6055 = vst [vmem:[#allocation2 + $0xb0] sm:$0xff] %v6023
        %6056 = vst [vmem:[#allocation2 + $0xb8] sm:$0xff] %v6024
        %6057 = vst [vmem:[#allocation2 + $0xc0] sm:$0xff] %v6025
        %6058 = vst [vmem:[#allocation2 + $0xc8] sm:$0xff] %v6026
        %6059 = vst [vmem:[#allocation2 + $0xd0] sm:$0xff] %v6027
        %6060 = vst [vmem:[#allocation2 + $0xd8] sm:$0xff] %v6028
        %6061 = vst [vmem:[#allocation2 + $0xe0] sm:$0xff] %v6029
        %6062 = vst [vmem:[#allocation2 + $0xe8] sm:$0xff] %v6030
        %6063 = vst [vmem:[#allocation2 + $0xf0] sm:$0xff] %v6031
        %6064 = vst [vmem:[#allocation2 + $0xf8] sm:$0xff] %v6032
        %s6065 = scalar_lea.vmem %s260, 4096 [#allocation3]
        %v6066 = vld [vmem:[%s6065] sm:$0xff]
        %v6067 = vld [vmem:[%s6065 + $0x8] sm:$0xff]
        %v6068 = vld [vmem:[%s6065 + $0x10] sm:$0xff]
        %v6069 = vld [vmem:[%s6065 + $0x18] sm:$0xff]
        %v6070 = vld [vmem:[%s6065 + $0x20] sm:$0xff]
        %v6071 = vld [vmem:[%s6065 + $0x28] sm:$0xff]
        %v6072 = vld [vmem:[%s6065 + $0x30] sm:$0xff]
        %v6073 = vld [vmem:[%s6065 + $0x38] sm:$0xff]
        %v6074 = vld [vmem:[%s6065 + $0x40] sm:$0xff]
        %v6075 = vld [vmem:[%s6065 + $0x48] sm:$0xff]
        %v6076 = vld [vmem:[%s6065 + $0x50] sm:$0xff]
        %v6077 = vld [vmem:[%s6065 + $0x58] sm:$0xff]
        %v6078 = vld [vmem:[%s6065 + $0x60] sm:$0xff]
        %v6079 = vld [vmem:[%s6065 + $0x68] sm:$0xff]
        %v6080 = vld [vmem:[%s6065 + $0x70] sm:$0xff]
        %v6081 = vld [vmem:[%s6065 + $0x78] sm:$0xff]
        %v6082 = vld [vmem:[%s6065 + $0x80] sm:$0xff]
        %v6083 = vld [vmem:[%s6065 + $0x88] sm:$0xff]
        %v6084 = vld [vmem:[%s6065 + $0x90] sm:$0xff]
        %v6085 = vld [vmem:[%s6065 + $0x98] sm:$0xff]
        %v6086 = vld [vmem:[%s6065 + $0xa0] sm:$0xff]
        %v6087 = vld [vmem:[%s6065 + $0xa8] sm:$0xff]
        %v6088 = vld [vmem:[%s6065 + $0xb0] sm:$0xff]
        %v6089 = vld [vmem:[%s6065 + $0xb8] sm:$0xff]
        %v6090 = vld [vmem:[%s6065 + $0xc0] sm:$0xff]
        %v6091 = vld [vmem:[%s6065 + $0xc8] sm:$0xff]
        %v6092 = vld [vmem:[%s6065 + $0xd0] sm:$0xff]
        %v6093 = vld [vmem:[%s6065 + $0xd8] sm:$0xff]
        %v6094 = vld [vmem:[%s6065 + $0xe0] sm:$0xff]
        %v6095 = vld [vmem:[%s6065 + $0xe8] sm:$0xff]
        %v6096 = vld [vmem:[%s6065 + $0xf0] sm:$0xff]
        %v6097 = vld [vmem:[%s6065 + $0xf8] sm:$0xff]
        %v6098 = vld [vmem:[%s6065 + $0x100] sm:$0xff]
        %v6099 = vld [vmem:[%s6065 + $0x108] sm:$0xff]
        %v6100 = vld [vmem:[%s6065 + $0x110] sm:$0xff]
        %v6101 = vld [vmem:[%s6065 + $0x118] sm:$0xff]
        %v6102 = vld [vmem:[%s6065 + $0x120] sm:$0xff]
        %v6103 = vld [vmem:[%s6065 + $0x128] sm:$0xff]
        %v6104 = vld [vmem:[%s6065 + $0x130] sm:$0xff]
        %v6105 = vld [vmem:[%s6065 + $0x138] sm:$0xff]
        %v6106 = vld [vmem:[%s6065 + $0x140] sm:$0xff]
        %v6107 = vld [vmem:[%s6065 + $0x148] sm:$0xff]
        %v6108 = vld [vmem:[%s6065 + $0x150] sm:$0xff]
        %v6109 = vld [vmem:[%s6065 + $0x158] sm:$0xff]
        %v6110 = vld [vmem:[%s6065 + $0x160] sm:$0xff]
        %v6111 = vld [vmem:[%s6065 + $0x168] sm:$0xff]
        %v6112 = vld [vmem:[%s6065 + $0x170] sm:$0xff]
        %v6113 = vld [vmem:[%s6065 + $0x178] sm:$0xff]
        %v6114 = vld [vmem:[%s6065 + $0x180] sm:$0xff]
        %v6115 = vld [vmem:[%s6065 + $0x188] sm:$0xff]
        %v6116 = vld [vmem:[%s6065 + $0x190] sm:$0xff]
        %v6117 = vld [vmem:[%s6065 + $0x198] sm:$0xff]
        %v6118 = vld [vmem:[%s6065 + $0x1a0] sm:$0xff]
        %v6119 = vld [vmem:[%s6065 + $0x1a8] sm:$0xff]
        %v6120 = vld [vmem:[%s6065 + $0x1b0] sm:$0xff]
        %v6121 = vld [vmem:[%s6065 + $0x1b8] sm:$0xff]
        %v6122 = vld [vmem:[%s6065 + $0x1c0] sm:$0xff]
        %v6123 = vld [vmem:[%s6065 + $0x1c8] sm:$0xff]
        %v6124 = vld [vmem:[%s6065 + $0x1d0] sm:$0xff]
        %v6125 = vld [vmem:[%s6065 + $0x1d8] sm:$0xff]
        %v6126 = vld [vmem:[%s6065 + $0x1e0] sm:$0xff]
        %v6127 = vld [vmem:[%s6065 + $0x1e8] sm:$0xff]
        %v6128 = vld [vmem:[%s6065 + $0x1f0] sm:$0xff]
        %v6129 = vld [vmem:[%s6065 + $0x1f8] sm:$0xff]
        %6130 = vmatprep.subr.mxu0 0.0
        %6131 = vmatpush1.msra.mxu0 %v305
        %6132 = vmatprep.subr.mxu0 0.0
        %6133 = vmatpush1.msra.mxu0 %v306
        %6134 = vmatprep.subr.mxu0 0.0
        %6135 = vmatpush1.msra.mxu0 %v307
        %6136 = vmatprep.subr.mxu0 0.0
        %6137 = vmatpush1.msra.mxu0 %v308
        %6138 = vmatprep.subr.mxu0 0.0
        %6139 = vmatpush1.msra.mxu0 %v309
        %6140 = vmatprep.subr.mxu0 0.0
        %6141 = vmatpush1.msra.mxu0 %v310
        %6142 = vmatprep.subr.mxu0 0.0
        %6143 = vmatpush1.msra.mxu0 %v311
        %6144 = vmatprep.subr.mxu0 0.0
        %6145 = vmatpush1.msra.mxu0 %v312
        %6146 = vmatprep.subr.mxu0 0.0
        %6147 = vmatpush1.msra.mxu0 %v313
        %6148 = vmatprep.subr.mxu0 0.0
        %6149 = vmatpush1.msra.mxu0 %v314
        %6150 = vmatprep.subr.mxu0 0.0
        %6151 = vmatpush1.msra.mxu0 %v315
        %6152 = vmatprep.subr.mxu0 0.0
        %6153 = vmatpush1.msra.mxu0 %v316
        %6154 = vmatprep.subr.mxu0 0.0
        %6155 = vmatpush1.msra.mxu0 %v317
        %6156 = vmatprep.subr.mxu0 0.0
        %6157 = vmatpush1.msra.mxu0 %v318
        %6158 = vmatprep.subr.mxu0 0.0
        %6159 = vmatpush1.msra.mxu0 %v319
        %6160 = vmatprep.subr.mxu0 0.0
        %6161 = vmatpush1.msra.mxu0 %v320
        %6162 = vmatprep.subr.mxu0 0.0
        %6163 = vmatpush1.msra.mxu0 %v321
        %6164 = vmatprep.subr.mxu0 0.0
        %6165 = vmatpush1.msra.mxu0 %v322
        %6166 = vmatprep.subr.mxu0 0.0
        %6167 = vmatpush1.msra.mxu0 %v323
        %6168 = vmatprep.subr.mxu0 0.0
        %6169 = vmatpush1.msra.mxu0 %v324
        %6170 = vmatprep.subr.mxu0 0.0
        %6171 = vmatpush1.msra.mxu0 %v325
        %6172 = vmatprep.subr.mxu0 0.0
        %6173 = vmatpush1.msra.mxu0 %v326
        %6174 = vmatprep.subr.mxu0 0.0
        %6175 = vmatpush1.msra.mxu0 %v327
        %6176 = vmatprep.subr.mxu0 0.0
        %6177 = vmatpush1.msra.mxu0 %v328
        %6178 = vmatprep.subr.mxu0 0.0
        %6179 = vmatpush1.msra.mxu0 %v329
        %6180 = vmatprep.subr.mxu0 0.0
        %6181 = vmatpush1.msra.mxu0 %v330
        %6182 = vmatprep.subr.mxu0 0.0
        %6183 = vmatpush1.msra.mxu0 %v331
        %6184 = vmatprep.subr.mxu0 0.0
        %6185 = vmatpush1.msra.mxu0 %v332
        %6186 = vmatprep.subr.mxu0 0.0
        %6187 = vmatpush1.msra.mxu0 %v333
        %6188 = vmatprep.subr.mxu0 0.0
        %6189 = vmatpush1.msra.mxu0 %v334
        %6190 = vmatprep.subr.mxu0 0.0
        %6191 = vmatpush1.msra.mxu0 %v335
        %6192 = vmatprep.subr.mxu0 0.0
        %6193 = vmatpush1.msra.mxu0 %v336
        %6194 = vmatprep.mubr.f32.mxu0 %v6067
        %6195 = vmatmul.mubr.f32.gmra.mrb[0].mxu0 %v6066
        %v6196 = vpop.f32.mrb[0].mxu0
        %v6197 = vadd.f32 0.0, %v6196
        %v6198 = vpop.f32.mrb[0].mxu0
        %6199 = vmatprep.mubr.f32.mxu0 %v6069
        %6200 = vmatmul.mubr.f32.gmra.mrb[0].mxu0 %v6068
        %v6201 = vpop.f32.mrb[0].mxu0
        %v6202 = vadd.f32 0.0, %v6201
        %v6203 = vpop.f32.mrb[0].mxu0
        %6204 = vmatprep.mubr.f32.mxu0 %v6071
        %6205 = vmatmul.mubr.f32.gmra.mrb[0].mxu0 %v6070
        %v6206 = vpop.f32.mrb[0].mxu0
        %v6207 = vadd.f32 0.0, %v6206
        %v6208 = vpop.f32.mrb[0].mxu0
        %6209 = vmatprep.mubr.f32.mxu0 %v6073
        %6210 = vmatmul.mubr.f32.gmra.mrb[0].mxu0 %v6072
        %v6211 = vpop.f32.mrb[0].mxu0
        %v6212 = vadd.f32 0.0, %v6211
        %v6213 = vpop.f32.mrb[0].mxu0
        %6214 = vmatprep.mubr.f32.mxu0 %v6075
        %6215 = vmatmul.mubr.f32.gmra.mrb[0].mxu0 %v6074
        %v6216 = vpop.f32.mrb[0].mxu0
        %v6217 = vadd.f32 0.0, %v6216
        %v6218 = vpop.f32.mrb[0].mxu0
        %6219 = vmatprep.mubr.f32.mxu0 %v6077
        %6220 = vmatmul.mubr.f32.gmra.mrb[0].mxu0 %v6076
        %v6221 = vpop.f32.mrb[0].mxu0
        %v6222 = vadd.f32 0.0, %v6221
        %v6223 = vpop.f32.mrb[0].mxu0
        %6224 = vmatprep.mubr.f32.mxu0 %v6079
        %6225 = vmatmul.mubr.f32.gmra.mrb[0].mxu0 %v6078
        %v6226 = vpop.f32.mrb[0].mxu0
        %v6227 = vadd.f32 0.0, %v6226
        %v6228 = vpop.f32.mrb[0].mxu0
        %6229 = vmatprep.mubr.f32.mxu0 %v6081
        %6230 = vmatmul.mubr.f32.gmra.mrb[0].mxu0 %v6080
        %v6231 = vpop.f32.mrb[0].mxu0
        %v6232 = vadd.f32 0.0, %v6231
        %v6233 = vpop.f32.mrb[0].mxu0
        %6234 = vmatprep.mubr.f32.mxu0 %v6083
        %6235 = vmatmul.mubr.f32.gmra.mrb[0].mxu0 %v6082
        %v6236 = vpop.f32.mrb[0].mxu0
        %v6237 = vadd.f32 0.0, %v6236
        %v6238 = vpop.f32.mrb[0].mxu0
        %6239 = vmatprep.mubr.f32.mxu0 %v6085
        %6240 = vmatmul.mubr.f32.gmra.mrb[0].mxu0 %v6084
        %v6241 = vpop.f32.mrb[0].mxu0
        %v6242 = vadd.f32 0.0, %v6241
        %v6243 = vpop.f32.mrb[0].mxu0
        %6244 = vmatprep.mubr.f32.mxu0 %v6087
        %6245 = vmatmul.mubr.f32.gmra.mrb[0].mxu0 %v6086
        %v6246 = vpop.f32.mrb[0].mxu0
        %v6247 = vadd.f32 0.0, %v6246
        %v6248 = vpop.f32.mrb[0].mxu0
        %6249 = vmatprep.mubr.f32.mxu0 %v6089
        %6250 = vmatmul.mubr.f32.gmra.mrb[0].mxu0 %v6088
        %v6251 = vpop.f32.mrb[0].mxu0
        %v6252 = vadd.f32 0.0, %v6251
        %v6253 = vpop.f32.mrb[0].mxu0
        %6254 = vmatprep.mubr.f32.mxu0 %v6091
        %6255 = vmatmul.mubr.f32.gmra.mrb[0].mxu0 %v6090
        %v6256 = vpop.f32.mrb[0].mxu0
        %v6257 = vadd.f32 0.0, %v6256
        %v6258 = vpop.f32.mrb[0].mxu0
        %6259 = vmatprep.mubr.f32.mxu0 %v6093
        %6260 = vmatmul.mubr.f32.gmra.mrb[0].mxu0 %v6092
        %v6261 = vpop.f32.mrb[0].mxu0
        %v6262 = vadd.f32 0.0, %v6261
        %v6263 = vpop.f32.mrb[0].mxu0
        %6264 = vmatprep.mubr.f32.mxu0 %v6095
        %6265 = vmatmul.mubr.f32.gmra.mrb[0].mxu0 %v6094
        %v6266 = vpop.f32.mrb[0].mxu0
        %v6267 = vadd.f32 0.0, %v6266
        %v6268 = vpop.f32.mrb[0].mxu0
        %6269 = vmatprep.mubr.f32.mxu0 %v6097
        %6270 = vmatmul.mubr.f32.gmra.mrb[0].mxu0 %v6096
        %v6271 = vpop.f32.mrb[0].mxu0
        %v6272 = vadd.f32 0.0, %v6271
        %v6273 = vpop.f32.mrb[0].mxu0
        %6274 = vmatprep.mubr.f32.mxu0 %v6099
        %6275 = vmatmul.mubr.f32.gmra.mrb[0].mxu0 %v6098
        %v6276 = vpop.f32.mrb[0].mxu0
        %v6277 = vadd.f32 0.0, %v6276
        %v6278 = vpop.f32.mrb[0].mxu0
        %6279 = vmatprep.mubr.f32.mxu0 %v6101
        %6280 = vmatmul.mubr.f32.gmra.mrb[0].mxu0 %v6100
        %v6281 = vpop.f32.mrb[0].mxu0
        %v6282 = vadd.f32 0.0, %v6281
        %v6283 = vpop.f32.mrb[0].mxu0
        %6284 = vmatprep.mubr.f32.mxu0 %v6103
        %6285 = vmatmul.mubr.f32.gmra.mrb[0].mxu0 %v6102
        %v6286 = vpop.f32.mrb[0].mxu0
        %v6287 = vadd.f32 0.0, %v6286
        %v6288 = vpop.f32.mrb[0].mxu0
        %6289 = vmatprep.mubr.f32.mxu0 %v6105
        %6290 = vmatmul.mubr.f32.gmra.mrb[0].mxu0 %v6104
        %v6291 = vpop.f32.mrb[0].mxu0
        %v6292 = vadd.f32 0.0, %v6291
        %v6293 = vpop.f32.mrb[0].mxu0
        %6294 = vmatprep.mubr.f32.mxu0 %v6107
        %6295 = vmatmul.mubr.f32.gmra.mrb[0].mxu0 %v6106
        %v6296 = vpop.f32.mrb[0].mxu0
        %v6297 = vadd.f32 0.0, %v6296
        %v6298 = vpop.f32.mrb[0].mxu0
        %6299 = vmatprep.mubr.f32.mxu0 %v6109
        %6300 = vmatmul.mubr.f32.gmra.mrb[0].mxu0 %v6108
        %v6301 = vpop.f32.mrb[0].mxu0
        %v6302 = vadd.f32 0.0, %v6301
        %v6303 = vpop.f32.mrb[0].mxu0
        %6304 = vmatprep.mubr.f32.mxu0 %v6111
        %6305 = vmatmul.mubr.f32.gmra.mrb[0].mxu0 %v6110
        %v6306 = vpop.f32.mrb[0].mxu0
        %v6307 = vadd.f32 0.0, %v6306
        %v6308 = vpop.f32.mrb[0].mxu0
        %6309 = vmatprep.mubr.f32.mxu0 %v6113
        %6310 = vmatmul.mubr.f32.gmra.mrb[0].mxu0 %v6112
        %v6311 = vpop.f32.mrb[0].mxu0
        %v6312 = vadd.f32 0.0, %v6311
        %v6313 = vpop.f32.mrb[0].mxu0
        %6314 = vmatprep.mubr.f32.mxu0 %v6115
        %6315 = vmatmul.mubr.f32.gmra.mrb[0].mxu0 %v6114
        %v6316 = vpop.f32.mrb[0].mxu0
        %v6317 = vadd.f32 0.0, %v6316
        %v6318 = vpop.f32.mrb[0].mxu0
        %6319 = vmatprep.mubr.f32.mxu0 %v6117
        %6320 = vmatmul.mubr.f32.gmra.mrb[0].mxu0 %v6116
        %v6321 = vpop.f32.mrb[0].mxu0
        %v6322 = vadd.f32 0.0, %v6321
        %v6323 = vpop.f32.mrb[0].mxu0
        %6324 = vmatprep.mubr.f32.mxu0 %v6119
        %6325 = vmatmul.mubr.f32.gmra.mrb[0].mxu0 %v6118
        %v6326 = vpop.f32.mrb[0].mxu0
        %v6327 = vadd.f32 0.0, %v6326
        %v6328 = vpop.f32.mrb[0].mxu0
        %6329 = vmatprep.mubr.f32.mxu0 %v6121
        %6330 = vmatmul.mubr.f32.gmra.mrb[0].mxu0 %v6120
        %v6331 = vpop.f32.mrb[0].mxu0
        %v6332 = vadd.f32 0.0, %v6331
        %v6333 = vpop.f32.mrb[0].mxu0
        %6334 = vmatprep.mubr.f32.mxu0 %v6123
        %6335 = vmatmul.mubr.f32.gmra.mrb[0].mxu0 %v6122
        %v6336 = vpop.f32.mrb[0].mxu0
        %v6337 = vadd.f32 0.0, %v6336
        %v6338 = vpop.f32.mrb[0].mxu0
        %6339 = vmatprep.mubr.f32.mxu0 %v6125
        %6340 = vmatmul.mubr.f32.gmra.mrb[0].mxu0 %v6124
        %v6341 = vpop.f32.mrb[0].mxu0
        %v6342 = vadd.f32 0.0, %v6341
        %v6343 = vpop.f32.mrb[0].mxu0
        %6344 = vmatprep.mubr.f32.mxu0 %v6127
        %6345 = vmatmul.mubr.f32.gmra.mrb[0].mxu0 %v6126
        %v6346 = vpop.f32.mrb[0].mxu0
        %v6347 = vadd.f32 0.0, %v6346
        %v6348 = vpop.f32.mrb[0].mxu0
        %6349 = vmatprep.mubr.f32.mxu0 %v6129
        %6350 = vmatmul.mubr.f32.gmra.mrb[0].mxu0 %v6128
        %v6351 = vpop.f32.mrb[0].mxu0
        %v6352 = vadd.f32 0.0, %v6351
        %v6353 = vpop.f32.mrb[0].mxu0
        %6354 = vdwg.mxu0
        %v6355 = vld [vmem:[#allocation2] sm:$0xff]
        %v6356 = vld [vmem:[#allocation2 + $0x8] sm:$0xff]
        %v6357 = vld [vmem:[#allocation2 + $0x10] sm:$0xff]
        %v6358 = vld [vmem:[#allocation2 + $0x18] sm:$0xff]
        %v6359 = vld [vmem:[#allocation2 + $0x20] sm:$0xff]
        %v6360 = vld [vmem:[#allocation2 + $0x28] sm:$0xff]
        %v6361 = vld [vmem:[#allocation2 + $0x30] sm:$0xff]
        %v6362 = vld [vmem:[#allocation2 + $0x38] sm:$0xff]
        %v6363 = vld [vmem:[#allocation2 + $0x40] sm:$0xff]
        %v6364 = vld [vmem:[#allocation2 + $0x48] sm:$0xff]
        %v6365 = vld [vmem:[#allocation2 + $0x50] sm:$0xff]
        %v6366 = vld [vmem:[#allocation2 + $0x58] sm:$0xff]
        %v6367 = vld [vmem:[#allocation2 + $0x60] sm:$0xff]
        %v6368 = vld [vmem:[#allocation2 + $0x68] sm:$0xff]
        %v6369 = vld [vmem:[#allocation2 + $0x70] sm:$0xff]
        %v6370 = vld [vmem:[#allocation2 + $0x78] sm:$0xff]
        %v6371 = vld [vmem:[#allocation2 + $0x80] sm:$0xff]
        %v6372 = vld [vmem:[#allocation2 + $0x88] sm:$0xff]
        %v6373 = vld [vmem:[#allocation2 + $0x90] sm:$0xff]
        %v6374 = vld [vmem:[#allocation2 + $0x98] sm:$0xff]
        %v6375 = vld [vmem:[#allocation2 + $0xa0] sm:$0xff]
        %v6376 = vld [vmem:[#allocation2 + $0xa8] sm:$0xff]
        %v6377 = vld [vmem:[#allocation2 + $0xb0] sm:$0xff]
        %v6378 = vld [vmem:[#allocation2 + $0xb8] sm:$0xff]
        %v6379 = vld [vmem:[#allocation2 + $0xc0] sm:$0xff]
        %v6380 = vld [vmem:[#allocation2 + $0xc8] sm:$0xff]
        %v6381 = vld [vmem:[#allocation2 + $0xd0] sm:$0xff]
        %v6382 = vld [vmem:[#allocation2 + $0xd8] sm:$0xff]
        %v6383 = vld [vmem:[#allocation2 + $0xe0] sm:$0xff]
        %v6384 = vld [vmem:[#allocation2 + $0xe8] sm:$0xff]
        %v6385 = vld [vmem:[#allocation2 + $0xf0] sm:$0xff]
        %v6386 = vld [vmem:[#allocation2 + $0xf8] sm:$0xff]
        %s6387 = scalar_lea.vmem [#allocation6], 32
        %v6388 = vld [vmem:[%s6387] sm:$0xf]
        %v6390 = vsel %vm691, %v6197, 0
        %v6393 = vsel %vm691, %v6202, 0
        %v6396 = vsel %vm691, %v6207, 0
        %v6399 = vsel %vm691, %v6212, 0
        %v6402 = vsel %vm691, %v6217, 0
        %v6405 = vsel %vm691, %v6222, 0
        %v6408 = vsel %vm691, %v6227, 0
        %v6411 = vsel %vm691, %v6232, 0
        %v6414 = vsel %vm691, %v6237, 0
        %v6417 = vsel %vm691, %v6242, 0
        %v6420 = vsel %vm691, %v6247, 0
        %v6423 = vsel %vm691, %v6252, 0
        %v6426 = vsel %vm691, %v6257, 0
        %v6429 = vsel %vm691, %v6262, 0
        %v6432 = vsel %vm691, %v6267, 0
        %v6435 = vsel %vm691, %v6272, 0
        %v6438 = vsel %vm691, %v6277, 0
        %v6441 = vsel %vm691, %v6282, 0
        %v6444 = vsel %vm691, %v6287, 0
        %v6447 = vsel %vm691, %v6292, 0
        %v6450 = vsel %vm691, %v6297, 0
        %v6453 = vsel %vm691, %v6302, 0
        %v6456 = vsel %vm691, %v6307, 0
        %v6459 = vsel %vm691, %v6312, 0
        %v6462 = vsel %vm691, %v6317, 0
        %v6465 = vsel %vm691, %v6322, 0
        %v6468 = vsel %vm691, %v6327, 0
        %v6471 = vsel %vm691, %v6332, 0
        %v6474 = vsel %vm691, %v6337, 0
        %v6477 = vsel %vm691, %v6342, 0
        %v6480 = vsel %vm691, %v6347, 0
        %v6483 = vsel %vm691, %v6352, 0
        %v6486 = vsel %vm788, %v6388, 0
        %6488 = vmatprep.subr.mxu0 0.0
        %6489 = vmatpush1.msra.mxu0 %v6486
        %6490 = vmatprep.subr.mxu0 0.0
        %6491 = vmatpush1.msra.mxu0 0.0
        %6492 = vmatprep.subr.mxu0 0.0
        %6493 = vmatpush1.msra.mxu0 0.0
        %6494 = vmatprep.subr.mxu0 0.0
        %6495 = vmatpush1.msra.mxu0 0.0
        %6496 = vmatprep.subr.mxu0 0.0
        %6497 = vmatpush1.msra.mxu0 0.0
        %6498 = vmatprep.subr.mxu0 0.0
        %6499 = vmatpush1.msra.mxu0 0.0
        %6500 = vmatprep.subr.mxu0 0.0
        %6501 = vmatpush1.msra.mxu0 0.0
        %6502 = vmatprep.subr.mxu0 0.0
        %6503 = vmatpush1.msra.mxu0 0.0
        %6504 = vmatprep.subr.mxu0 0.0
        %6505 = vmatpush1.msra.mxu0 0.0
        %6506 = vmatprep.subr.mxu0 0.0
        %6507 = vmatpush1.msra.mxu0 0.0
        %6508 = vmatprep.subr.mxu0 0.0
        %6509 = vmatpush1.msra.mxu0 0.0
        %6510 = vmatprep.subr.mxu0 0.0
        %6511 = vmatpush1.msra.mxu0 0.0
        %6512 = vmatprep.subr.mxu0 0.0
        %6513 = vmatpush1.msra.mxu0 0.0
        %6514 = vmatprep.subr.mxu0 0.0
        %6515 = vmatpush1.msra.mxu0 0.0
        %6516 = vmatprep.subr.mxu0 0.0
        %6517 = vmatpush1.msra.mxu0 0.0
        %6518 = vmatprep.subr.mxu0 0.0
        %6519 = vmatpush1.msra.mxu0 0.0
        %6520 = vmatprep.subr.mxu0 0.0
        %6521 = vmatpush1.msra.mxu0 0.0
        %6522 = vmatprep.subr.mxu0 0.0
        %6523 = vmatpush1.msra.mxu0 0.0
        %6524 = vmatprep.subr.mxu0 0.0
        %6525 = vmatpush1.msra.mxu0 0.0
        %6526 = vmatprep.subr.mxu0 0.0
        %6527 = vmatpush1.msra.mxu0 0.0
        %6528 = vmatprep.subr.mxu0 0.0
        %6529 = vmatpush1.msra.mxu0 0.0
        %6530 = vmatprep.subr.mxu0 0.0
        %6531 = vmatpush1.msra.mxu0 0.0
        %6532 = vmatprep.subr.mxu0 0.0
        %6533 = vmatpush1.msra.mxu0 0.0
        %6534 = vmatprep.subr.mxu0 0.0
        %6535 = vmatpush1.msra.mxu0 0.0
        %6536 = vmatprep.subr.mxu0 0.0
        %6537 = vmatpush1.msra.mxu0 0.0
        %6538 = vmatprep.subr.mxu0 0.0
        %6539 = vmatpush1.msra.mxu0 0.0
        %6540 = vmatprep.subr.mxu0 0.0
        %6541 = vmatpush1.msra.mxu0 0.0
        %6542 = vmatprep.subr.mxu0 0.0
        %6543 = vmatpush1.msra.mxu0 0.0
        %6544 = vmatprep.subr.mxu0 0.0
        %6545 = vmatpush1.msra.mxu0 0.0
        %6546 = vmatprep.subr.mxu0 0.0
        %6547 = vmatpush1.msra.mxu0 0.0
        %6548 = vmatprep.subr.mxu0 0.0
        %6549 = vmatpush1.msra.mxu0 0.0
        %6550 = vmatprep.subr.mxu0 0.0
        %6551 = vmatpush1.msra.mxu0 0.0
        %6552 = vmatprep.mubr.f32.mxu0 0.0
        %6553 = vmatmul.mubr.f32.gmra.mrb[0].mxu0 %v6390
        %v6554 = vpop.f32.mrb[0].mxu0
        %v6555 = vadd.f32 0.0, %v6554
        %v6556 = vpop.f32.mrb[0].mxu0
        %6557 = vmatprep.mubr.f32.mxu0 0.0
        %6558 = vmatmul.mubr.f32.gmra.mrb[0].mxu0 %v6393
        %v6559 = vpop.f32.mrb[0].mxu0
        %v6560 = vadd.f32 0.0, %v6559
        %v6561 = vpop.f32.mrb[0].mxu0
        %6562 = vmatprep.mubr.f32.mxu0 0.0
        %6563 = vmatmul.mubr.f32.gmra.mrb[0].mxu0 %v6396
        %v6564 = vpop.f32.mrb[0].mxu0
        %v6565 = vadd.f32 0.0, %v6564
        %v6566 = vpop.f32.mrb[0].mxu0
        %6567 = vmatprep.mubr.f32.mxu0 0.0
        %6568 = vmatmul.mubr.f32.gmra.mrb[0].mxu0 %v6399
        %v6569 = vpop.f32.mrb[0].mxu0
        %v6570 = vadd.f32 0.0, %v6569
        %v6571 = vpop.f32.mrb[0].mxu0
        %6572 = vmatprep.mubr.f32.mxu0 0.0
        %6573 = vmatmul.mubr.f32.gmra.mrb[0].mxu0 %v6402
        %v6574 = vpop.f32.mrb[0].mxu0
        %v6575 = vadd.f32 0.0, %v6574
        %v6576 = vpop.f32.mrb[0].mxu0
        %6577 = vmatprep.mubr.f32.mxu0 0.0
        %6578 = vmatmul.mubr.f32.gmra.mrb[0].mxu0 %v6405
        %v6579 = vpop.f32.mrb[0].mxu0
        %v6580 = vadd.f32 0.0, %v6579
        %v6581 = vpop.f32.mrb[0].mxu0
        %6582 = vmatprep.mubr.f32.mxu0 0.0
        %6583 = vmatmul.mubr.f32.gmra.mrb[0].mxu0 %v6408
        %v6584 = vpop.f32.mrb[0].mxu0
        %v6585 = vadd.f32 0.0, %v6584
        %v6586 = vpop.f32.mrb[0].mxu0
        %6587 = vmatprep.mubr.f32.mxu0 0.0
        %6588 = vmatmul.mubr.f32.gmra.mrb[0].mxu0 %v6411
        %v6589 = vpop.f32.mrb[0].mxu0
        %v6590 = vadd.f32 0.0, %v6589
        %v6591 = vpop.f32.mrb[0].mxu0
        %6592 = vmatprep.mubr.f32.mxu0 0.0
        %6593 = vmatmul.mubr.f32.gmra.mrb[0].mxu0 %v6414
        %v6594 = vpop.f32.mrb[0].mxu0
        %v6595 = vadd.f32 0.0, %v6594
        %v6596 = vpop.f32.mrb[0].mxu0
        %6597 = vmatprep.mubr.f32.mxu0 0.0
        %6598 = vmatmul.mubr.f32.gmra.mrb[0].mxu0 %v6417
        %v6599 = vpop.f32.mrb[0].mxu0
        %v6600 = vadd.f32 0.0, %v6599
        %v6601 = vpop.f32.mrb[0].mxu0
        %6602 = vmatprep.mubr.f32.mxu0 0.0
        %6603 = vmatmul.mubr.f32.gmra.mrb[0].mxu0 %v6420
        %v6604 = vpop.f32.mrb[0].mxu0
        %v6605 = vadd.f32 0.0, %v6604
        %v6606 = vpop.f32.mrb[0].mxu0
        %6607 = vmatprep.mubr.f32.mxu0 0.0
        %6608 = vmatmul.mubr.f32.gmra.mrb[0].mxu0 %v6423
        %v6609 = vpop.f32.mrb[0].mxu0
        %v6610 = vadd.f32 0.0, %v6609
        %v6611 = vpop.f32.mrb[0].mxu0
        %6612 = vmatprep.mubr.f32.mxu0 0.0
        %6613 = vmatmul.mubr.f32.gmra.mrb[0].mxu0 %v6426
        %v6614 = vpop.f32.mrb[0].mxu0
        %v6615 = vadd.f32 0.0, %v6614
        %v6616 = vpop.f32.mrb[0].mxu0
        %6617 = vmatprep.mubr.f32.mxu0 0.0
        %6618 = vmatmul.mubr.f32.gmra.mrb[0].mxu0 %v6429
        %v6619 = vpop.f32.mrb[0].mxu0
        %v6620 = vadd.f32 0.0, %v6619
        %v6621 = vpop.f32.mrb[0].mxu0
        %6622 = vmatprep.mubr.f32.mxu0 0.0
        %6623 = vmatmul.mubr.f32.gmra.mrb[0].mxu0 %v6432
        %v6624 = vpop.f32.mrb[0].mxu0
        %v6625 = vadd.f32 0.0, %v6624
        %v6626 = vpop.f32.mrb[0].mxu0
        %6627 = vmatprep.mubr.f32.mxu0 0.0
        %6628 = vmatmul.mubr.f32.gmra.mrb[0].mxu0 %v6435
        %v6629 = vpop.f32.mrb[0].mxu0
        %v6630 = vadd.f32 0.0, %v6629
        %v6631 = vpop.f32.mrb[0].mxu0
        %6632 = vmatprep.mubr.f32.mxu0 0.0
        %6633 = vmatmul.mubr.f32.gmra.mrb[0].mxu0 %v6438
        %v6634 = vpop.f32.mrb[0].mxu0
        %v6635 = vadd.f32 0.0, %v6634
        %v6636 = vpop.f32.mrb[0].mxu0
        %6637 = vmatprep.mubr.f32.mxu0 0.0
        %6638 = vmatmul.mubr.f32.gmra.mrb[0].mxu0 %v6441
        %v6639 = vpop.f32.mrb[0].mxu0
        %v6640 = vadd.f32 0.0, %v6639
        %v6641 = vpop.f32.mrb[0].mxu0
        %6642 = vmatprep.mubr.f32.mxu0 0.0
        %6643 = vmatmul.mubr.f32.gmra.mrb[0].mxu0 %v6444
        %v6644 = vpop.f32.mrb[0].mxu0
        %v6645 = vadd.f32 0.0, %v6644
        %v6646 = vpop.f32.mrb[0].mxu0
        %6647 = vmatprep.mubr.f32.mxu0 0.0
        %6648 = vmatmul.mubr.f32.gmra.mrb[0].mxu0 %v6447
        %v6649 = vpop.f32.mrb[0].mxu0
        %v6650 = vadd.f32 0.0, %v6649
        %v6651 = vpop.f32.mrb[0].mxu0
        %6652 = vmatprep.mubr.f32.mxu0 0.0
        %6653 = vmatmul.mubr.f32.gmra.mrb[0].mxu0 %v6450
        %v6654 = vpop.f32.mrb[0].mxu0
        %v6655 = vadd.f32 0.0, %v6654
        %v6656 = vpop.f32.mrb[0].mxu0
        %6657 = vmatprep.mubr.f32.mxu0 0.0
        %6658 = vmatmul.mubr.f32.gmra.mrb[0].mxu0 %v6453
        %v6659 = vpop.f32.mrb[0].mxu0
        %v6660 = vadd.f32 0.0, %v6659
        %v6661 = vpop.f32.mrb[0].mxu0
        %6662 = vmatprep.mubr.f32.mxu0 0.0
        %6663 = vmatmul.mubr.f32.gmra.mrb[0].mxu0 %v6456
        %v6664 = vpop.f32.mrb[0].mxu0
        %v6665 = vadd.f32 0.0, %v6664
        %v6666 = vpop.f32.mrb[0].mxu0
        %6667 = vmatprep.mubr.f32.mxu0 0.0
        %6668 = vmatmul.mubr.f32.gmra.mrb[0].mxu0 %v6459
        %v6669 = vpop.f32.mrb[0].mxu0
        %v6670 = vadd.f32 0.0, %v6669
        %v6671 = vpop.f32.mrb[0].mxu0
        %6672 = vmatprep.mubr.f32.mxu0 0.0
        %6673 = vmatmul.mubr.f32.gmra.mrb[0].mxu0 %v6462
        %v6674 = vpop.f32.mrb[0].mxu0
        %v6675 = vadd.f32 0.0, %v6674
        %v6676 = vpop.f32.mrb[0].mxu0
        %6677 = vmatprep.mubr.f32.mxu0 0.0
        %6678 = vmatmul.mubr.f32.gmra.mrb[0].mxu0 %v6465
        %v6679 = vpop.f32.mrb[0].mxu0
        %v6680 = vadd.f32 0.0, %v6679
        %v6681 = vpop.f32.mrb[0].mxu0
        %6682 = vmatprep.mubr.f32.mxu0 0.0
        %6683 = vmatmul.mubr.f32.gmra.mrb[0].mxu0 %v6468
        %v6684 = vpop.f32.mrb[0].mxu0
        %v6685 = vadd.f32 0.0, %v6684
        %v6686 = vpop.f32.mrb[0].mxu0
        %6687 = vmatprep.mubr.f32.mxu0 0.0
        %6688 = vmatmul.mubr.f32.gmra.mrb[0].mxu0 %v6471
        %v6689 = vpop.f32.mrb[0].mxu0
        %v6690 = vadd.f32 0.0, %v6689
        %v6691 = vpop.f32.mrb[0].mxu0
        %6692 = vmatprep.mubr.f32.mxu0 0.0
        %6693 = vmatmul.mubr.f32.gmra.mrb[0].mxu0 %v6474
        %v6694 = vpop.f32.mrb[0].mxu0
        %v6695 = vadd.f32 0.0, %v6694
        %v6696 = vpop.f32.mrb[0].mxu0
        %6697 = vmatprep.mubr.f32.mxu0 0.0
        %6698 = vmatmul.mubr.f32.gmra.mrb[0].mxu0 %v6477
        %v6699 = vpop.f32.mrb[0].mxu0
        %v6700 = vadd.f32 0.0, %v6699
        %v6701 = vpop.f32.mrb[0].mxu0
        %6702 = vmatprep.mubr.f32.mxu0 0.0
        %6703 = vmatmul.mubr.f32.gmra.mrb[0].mxu0 %v6480
        %v6704 = vpop.f32.mrb[0].mxu0
        %v6705 = vadd.f32 0.0, %v6704
        %v6706 = vpop.f32.mrb[0].mxu0
        %6707 = vmatprep.mubr.f32.mxu0 0.0
        %6708 = vmatmul.mubr.f32.gmra.mrb[0].mxu0 %v6483
        %v6709 = vpop.f32.mrb[0].mxu0
        %v6710 = vadd.f32 0.0, %v6709
        %v6711 = vpop.f32.mrb[0].mxu0
        %6712 = vdwg.mxu0
        %v6713 = vadd.f32 %v6355, %v6555
        %v6714 = vadd.f32 %v6356, %v6560
        %v6715 = vadd.f32 %v6357, %v6565
        %v6716 = vadd.f32 %v6358, %v6570
        %v6717 = vadd.f32 %v6359, %v6575
        %v6718 = vadd.f32 %v6360, %v6580
        %v6719 = vadd.f32 %v6361, %v6585
        %v6720 = vadd.f32 %v6362, %v6590
        %v6721 = vadd.f32 %v6363, %v6595
        %v6722 = vadd.f32 %v6364, %v6600
        %v6723 = vadd.f32 %v6365, %v6605
        %v6724 = vadd.f32 %v6366, %v6610
        %v6725 = vadd.f32 %v6367, %v6615
        %v6726 = vadd.f32 %v6368, %v6620
        %v6727 = vadd.f32 %v6369, %v6625
        %v6728 = vadd.f32 %v6370, %v6630
        %v6729 = vadd.f32 %v6371, %v6635
        %v6730 = vadd.f32 %v6372, %v6640
        %v6731 = vadd.f32 %v6373, %v6645
        %v6732 = vadd.f32 %v6374, %v6650
        %v6733 = vadd.f32 %v6375, %v6655
        %v6734 = vadd.f32 %v6376, %v6660
        %v6735 = vadd.f32 %v6377, %v6665
        %v6736 = vadd.f32 %v6378, %v6670
        %v6737 = vadd.f32 %v6379, %v6675
        %v6738 = vadd.f32 %v6380, %v6680
        %v6739 = vadd.f32 %v6381, %v6685
        %v6740 = vadd.f32 %v6382, %v6690
        %v6741 = vadd.f32 %v6383, %v6695
        %v6742 = vadd.f32 %v6384, %v6700
        %v6743 = vadd.f32 %v6385, %v6705
        %v6744 = vadd.f32 %v6386, %v6710
        %6745 = vst [vmem:[#allocation2] sm:$0xff] %v6713
        %6746 = vst [vmem:[#allocation2 + $0x8] sm:$0xff] %v6714
        %6747 = vst [vmem:[#allocation2 + $0x10] sm:$0xff] %v6715
        %6748 = vst [vmem:[#allocation2 + $0x18] sm:$0xff] %v6716
        %6749 = vst [vmem:[#allocation2 + $0x20] sm:$0xff] %v6717
        %6750 = vst [vmem:[#allocation2 + $0x28] sm:$0xff] %v6718
        %6751 = vst [vmem:[#allocation2 + $0x30] sm:$0xff] %v6719
        %6752 = vst [vmem:[#allocation2 + $0x38] sm:$0xff] %v6720
        %6753 = vst [vmem:[#allocation2 + $0x40] sm:$0xff] %v6721
        %6754 = vst [vmem:[#allocation2 + $0x48] sm:$0xff] %v6722
        %6755 = vst [vmem:[#allocation2 + $0x50] sm:$0xff] %v6723
        %6756 = vst [vmem:[#allocation2 + $0x58] sm:$0xff] %v6724
        %6757 = vst [vmem:[#allocation2 + $0x60] sm:$0xff] %v6725
        %6758 = vst [vmem:[#allocation2 + $0x68] sm:$0xff] %v6726
        %6759 = vst [vmem:[#allocation2 + $0x70] sm:$0xff] %v6727
        %6760 = vst [vmem:[#allocation2 + $0x78] sm:$0xff] %v6728
        %6761 = vst [vmem:[#allocation2 + $0x80] sm:$0xff] %v6729
        %6762 = vst [vmem:[#allocation2 + $0x88] sm:$0xff] %v6730
        %6763 = vst [vmem:[#allocation2 + $0x90] sm:$0xff] %v6731
        %6764 = vst [vmem:[#allocation2 + $0x98] sm:$0xff] %v6732
        %6765 = vst [vmem:[#allocation2 + $0xa0] sm:$0xff] %v6733
        %6766 = vst [vmem:[#allocation2 + $0xa8] sm:$0xff] %v6734
        %6767 = vst [vmem:[#allocation2 + $0xb0] sm:$0xff] %v6735
        %6768 = vst [vmem:[#allocation2 + $0xb8] sm:$0xff] %v6736
        %6769 = vst [vmem:[#allocation2 + $0xc0] sm:$0xff] %v6737
        %6770 = vst [vmem:[#allocation2 + $0xc8] sm:$0xff] %v6738
        %6771 = vst [vmem:[#allocation2 + $0xd0] sm:$0xff] %v6739
        %6772 = vst [vmem:[#allocation2 + $0xd8] sm:$0xff] %v6740
        %6773 = vst [vmem:[#allocation2 + $0xe0] sm:$0xff] %v6741
        %6774 = vst [vmem:[#allocation2 + $0xe8] sm:$0xff] %v6742
        %6775 = vst [vmem:[#allocation2 + $0xf0] sm:$0xff] %v6743
        %6776 = vst [vmem:[#allocation2 + $0xf8] sm:$0xff] %v6744
        %v6777 = vld [vmem:[#allocation2] sm:$0xff]
        %v6778 = vld [vmem:[#allocation2 + $0x8] sm:$0xff]
        %v6779 = vld [vmem:[#allocation2 + $0x10] sm:$0xff]
        %v6780 = vld [vmem:[#allocation2 + $0x18] sm:$0xff]
        %v6781 = vld [vmem:[#allocation2 + $0x20] sm:$0xff]
        %v6782 = vld [vmem:[#allocation2 + $0x28] sm:$0xff]
        %v6783 = vld [vmem:[#allocation2 + $0x30] sm:$0xff]
        %v6784 = vld [vmem:[#allocation2 + $0x38] sm:$0xff]
        %v6785 = vld [vmem:[#allocation2 + $0x40] sm:$0xff]
        %v6786 = vld [vmem:[#allocation2 + $0x48] sm:$0xff]
        %v6787 = vld [vmem:[#allocation2 + $0x50] sm:$0xff]
        %v6788 = vld [vmem:[#allocation2 + $0x58] sm:$0xff]
        %v6789 = vld [vmem:[#allocation2 + $0x60] sm:$0xff]
        %v6790 = vld [vmem:[#allocation2 + $0x68] sm:$0xff]
        %v6791 = vld [vmem:[#allocation2 + $0x70] sm:$0xff]
        %v6792 = vld [vmem:[#allocation2 + $0x78] sm:$0xff]
        %v6793 = vld [vmem:[#allocation2 + $0x80] sm:$0xff]
        %v6794 = vld [vmem:[#allocation2 + $0x88] sm:$0xff]
        %v6795 = vld [vmem:[#allocation2 + $0x90] sm:$0xff]
        %v6796 = vld [vmem:[#allocation2 + $0x98] sm:$0xff]
        %v6797 = vld [vmem:[#allocation2 + $0xa0] sm:$0xff]
        %v6798 = vld [vmem:[#allocation2 + $0xa8] sm:$0xff]
        %v6799 = vld [vmem:[#allocation2 + $0xb0] sm:$0xff]
        %v6800 = vld [vmem:[#allocation2 + $0xb8] sm:$0xff]
        %v6801 = vld [vmem:[#allocation2 + $0xc0] sm:$0xff]
        %v6802 = vld [vmem:[#allocation2 + $0xc8] sm:$0xff]
        %v6803 = vld [vmem:[#allocation2 + $0xd0] sm:$0xff]
        %v6804 = vld [vmem:[#allocation2 + $0xd8] sm:$0xff]
        %v6805 = vld [vmem:[#allocation2 + $0xe0] sm:$0xff]
        %v6806 = vld [vmem:[#allocation2 + $0xe8] sm:$0xff]
        %v6807 = vld [vmem:[#allocation2 + $0xf0] sm:$0xff]
        %v6808 = vld [vmem:[#allocation2 + $0xf8] sm:$0xff]
        %v6809 = vld [vmem:[#allocation8] sm:$0x1]
        %v6811 = vlaneseq
        %v6812 = vshrl.u32 %v6811, 7
        %v6813 = vsub.s32 0, %v6812
        %v6814 = vrot.slane %v6809, %v6813
        %v6816 = vadd.f32 %v6777, %v6814
        %v6817 = vadd.f32 %v6778, %v6814
        %v6818 = vadd.f32 %v6779, %v6814
        %v6819 = vadd.f32 %v6780, %v6814
        %v6820 = vadd.f32 %v6781, %v6814
        %v6821 = vadd.f32 %v6782, %v6814
        %v6822 = vadd.f32 %v6783, %v6814
        %v6823 = vadd.f32 %v6784, %v6814
        %v6824 = vadd.f32 %v6785, %v6814
        %v6825 = vadd.f32 %v6786, %v6814
        %v6826 = vadd.f32 %v6787, %v6814
        %v6827 = vadd.f32 %v6788, %v6814
        %v6828 = vadd.f32 %v6789, %v6814
        %v6829 = vadd.f32 %v6790, %v6814
        %v6830 = vadd.f32 %v6791, %v6814
        %v6831 = vadd.f32 %v6792, %v6814
        %v6832 = vadd.f32 %v6793, %v6814
        %v6833 = vadd.f32 %v6794, %v6814
        %v6834 = vadd.f32 %v6795, %v6814
        %v6835 = vadd.f32 %v6796, %v6814
        %v6836 = vadd.f32 %v6797, %v6814
        %v6837 = vadd.f32 %v6798, %v6814
        %v6838 = vadd.f32 %v6799, %v6814
        %v6839 = vadd.f32 %v6800, %v6814
        %v6840 = vadd.f32 %v6801, %v6814
        %v6841 = vadd.f32 %v6802, %v6814
        %v6842 = vadd.f32 %v6803, %v6814
        %v6843 = vadd.f32 %v6804, %v6814
        %v6844 = vadd.f32 %v6805, %v6814
        %v6845 = vadd.f32 %v6806, %v6814
        %v6846 = vadd.f32 %v6807, %v6814
        %v6847 = vadd.f32 %v6808, %v6814
        %6848 = vst [vmem:[%s297] sm:$0xff] %v6816
        %6849 = vst [vmem:[%s297 + $0x8] sm:$0xff] %v6817
        %6850 = vst [vmem:[%s297 + $0x10] sm:$0xff] %v6818
        %6851 = vst [vmem:[%s297 + $0x18] sm:$0xff] %v6819
        %6852 = vst [vmem:[%s297 + $0x20] sm:$0xff] %v6820
        %6853 = vst [vmem:[%s297 + $0x28] sm:$0xff] %v6821
        %6854 = vst [vmem:[%s297 + $0x30] sm:$0xff] %v6822
        %6855 = vst [vmem:[%s297 + $0x38] sm:$0xff] %v6823
        %6856 = vst [vmem:[%s297 + $0x40] sm:$0xff] %v6824
        %6857 = vst [vmem:[%s297 + $0x48] sm:$0xff] %v6825
        %6858 = vst [vmem:[%s297 + $0x50] sm:$0xff] %v6826
        %6859 = vst [vmem:[%s297 + $0x58] sm:$0xff] %v6827
        %6860 = vst [vmem:[%s297 + $0x60] sm:$0xff] %v6828
        %6861 = vst [vmem:[%s297 + $0x68] sm:$0xff] %v6829
        %6862 = vst [vmem:[%s297 + $0x70] sm:$0xff] %v6830
        %6863 = vst [vmem:[%s297 + $0x78] sm:$0xff] %v6831
        %6864 = vst [vmem:[%s297 + $0x80] sm:$0xff] %v6832
        %6865 = vst [vmem:[%s297 + $0x88] sm:$0xff] %v6833
        %6866 = vst [vmem:[%s297 + $0x90] sm:$0xff] %v6834
        %6867 = vst [vmem:[%s297 + $0x98] sm:$0xff] %v6835
        %6868 = vst [vmem:[%s297 + $0xa0] sm:$0xff] %v6836
        %6869 = vst [vmem:[%s297 + $0xa8] sm:$0xff] %v6837
        %6870 = vst [vmem:[%s297 + $0xb0] sm:$0xff] %v6838
        %6871 = vst [vmem:[%s297 + $0xb8] sm:$0xff] %v6839
        %6872 = vst [vmem:[%s297 + $0xc0] sm:$0xff] %v6840
        %6873 = vst [vmem:[%s297 + $0xc8] sm:$0xff] %v6841
        %6874 = vst [vmem:[%s297 + $0xd0] sm:$0xff] %v6842
        %6875 = vst [vmem:[%s297 + $0xd8] sm:$0xff] %v6843
        %6876 = vst [vmem:[%s297 + $0xe0] sm:$0xff] %v6844
        %6877 = vst [vmem:[%s297 + $0xe8] sm:$0xff] %v6845
        %6878 = vst [vmem:[%s297 + $0xf0] sm:$0xff] %v6846
        %6879 = vst [vmem:[%s297 + $0xf8] sm:$0xff] %v6847
        %s6880 = sand.u32 %s138, 1
        %s6881 = scalar_lea.sflag [#allocation5], %s6880
        %s6882 = sand.u32 %s138, 1
        %s6883 = smul.addr %s6882, 256
        %s6884 = scalar_lea.vmem [#allocation9], %s6883
        // Predicated region
        $region49: #{tpu_custom_call.1} parent=35 // pred_check
          %p6885 = pneg %p148
        $region50: #{tpu_custom_call.1} parent=35 // pred_check_branch
          %6887 = sbr.rel (%p6885) target = $region52
        $region51: #{tpu_custom_call.1} parent=35 // pred_region
          %s6888 = smul.u32 32, %s27
          %s6890 = ssub.s32 4096, 4096
          %6891 = vsyncadd %s6881, %s6890
          %s6892 = smul.addr %s26, 128
          %s6893 = sadd.s32 %s6888, %s6892
          %s6894 = smul.addr %s6893, 128
          %s6895 = scalar_lea.hbm %s4, %s6894
          %s6896 = sshll.u32 %s6884, 4
          %s6897 = int_to_ptr.vmem [resolvable:$true] %s6896
          %6902 = dma.vmem_to_hbm [thread:$0]  %s6897, 4096, %s6895, %s6881, 128, 128, 8
        $region52: #{tpu_custom_call.1} parent=35 // pred_fallthru
          _
      $region36: #{tpu_custom_call.1} parent=5 // pred_fallthru
        _
      %p6903 = scmp.le.s32.totalorder 2, %s17
      // Predicated region
      $region53: #{tpu_custom_call.1} parent=5 // pred_check
        %p6904 = pneg %p6903
      $region54: #{tpu_custom_call.1} parent=5 // pred_check_branch
        %6906 = sbr.rel (%p6904) target = $region56
      $region55: #{tpu_custom_call.1} parent=5 // pred_region
        %s6907 = ssub.s32 %s17, 2
        // Predicated region
        $region57: #{tpu_custom_call.1} parent=55 // pred_check
          %p6908 = pneg %p154
        $region58: #{tpu_custom_call.1} parent=55 // pred_check_branch
          %6910 = sbr.rel (%p6908) target = $region60
        $region59: #{tpu_custom_call.1} parent=55 // pred_region
          %s6911 = sand.u32 %s139, 1
          %s6912 = scalar_lea.sflag [#allocation5], %s6911
          %s6913 = sand.u32 %s139, 1
          %s6914 = smul.addr %s6913, 256
          %s6915 = scalar_lea.vmem [#allocation9], %s6914
          %6916 = dma.done %s6912, 4096
        $region60: #{tpu_custom_call.1} parent=55 // pred_fallthru
          _
      $region56: #{tpu_custom_call.1} parent=5 // pred_fallthru
        _
    $region6: #{tpu_custom_call.1} parent=1 // loop_footer
      %s21 = sadd.s32 1, %s17
    $region7: #{tpu_custom_call.1} parent=1 // loop_footer_branch
      %16 = sbr.rel target = $region3
    $region8: #{tpu_custom_call.1} parent=1 // loop_exit
      _
    %6917 = vsyncpa [#allocation4], 1
    %s6918 = scalar_lea.sflag [#allocation4], 1
    %6919 = vsyncpa %s6918, 1
    %6920 = vsyncpa [#allocation7], 1
    %6921 = vsyncpa [#allocation5], 1
    %s6922 = scalar_lea.sflag [#allocation5], 1
    %6923 = vsyncpa %s6922, 1

</llo_original>
